<compile_context>
chip_gen: v5e
topology: v5e:2x2
jax: 0.10.0
libtpu: 0.0.40
codegen_flags: <defaults>
</compile_context>

<pallas_src>
import jax
import jax.numpy as jnp
from jax import lax
from jax.experimental import pallas as pl
from jax.experimental.pallas import tpu as pltpu

# Static MNIST-Net geometry (fc1 in_features = 9216 = 64*12*12  =>  28x28x1 input).
H0 = 28                 # input spatial
H1 = H0 - 2             # 26 = conv1 output spatial
H1P = 680               # conv1 rows per sample, padded 676 -> 680 so shifted conv2 slabs fit
R2 = 24 * 26            # 624 conv2 rows computed per sample (h=0..23, w=0..25; w=24,25 scrap)
HP = 12                 # pooled spatial
FEAT = HP * HP * 64     # 9216
NCLS = 10


# ---------------------------------------------------------------------------
# Kernel A: conv1 + relu + conv2 + bias + 2x2 max-pool (one sample per grid step)
# ---------------------------------------------------------------------------
def _conv_pool_kernel(p1_ref, w1_ref, b1_ref, w2_ref, b2_ref, o_ref, acc_ref):
    # conv1: im2col patches (680, 9) @ (9, 32) + bias, relu.  Rows r = h*26 + w.
    a1 = jnp.dot(p1_ref[...], w1_ref[...], preferred_element_type=jnp.float32)
    a1 = jnp.maximum(a1 + b1_ref[...], 0.0)                       # (680, 32) f32

    # conv2 (no relu in the reference net): in-kernel im2col as 9 shifted matmuls.
    # conv2[h, w] = sum_{i,j} conv1[h+i, w+j] @ W2[i, j]; in flat rows the (i, j) tap is
    # the contiguous slab a1[i*26 + j : i*26 + j + 624].  Padded rows 676..679 only
    # reach the scrap output columns (w = 24, 25), which the pool never reads.
    acc = jnp.zeros((R2, 64), jnp.float32)
    for k in range(9):
        off = (k // 3) * H1 + (k % 3)
        lhs = a1[off:off + R2, :].astype(jnp.bfloat16)
        acc = acc + jnp.dot(lhs, w2_ref[k], preferred_element_type=jnp.float32)
    acc_ref[...] = acc + b2_ref[...]                              # (624, 64) f32 in VMEM

    # 2x2 max-pool, stage 1: pool along w via sublane-strided loads
    # (row parity == w parity since 26 is even).  Result rows = h*13 + pw.
    w_even = acc_ref[pl.ds(0, R2 // 2, stride=2), :]
    w_odd = acc_ref[pl.ds(1, R2 // 2, stride=2), :]
    wmax = jnp.maximum(w_even, w_odd)                             # (312, 64)

    # stage 2: pool along h (rows 26*ph + pw and 26*ph + 13 + pw); the scrap column
    # group pw == 12 (built from w = 24, 25) is never read.
    blocks = []
    for ph in range(HP):
        r0 = 26 * ph
        blocks.append(jnp.maximum(wmax[r0:r0 + HP, :], wmax[r0 + 13:r0 + 13 + HP, :]))
    pooled = jnp.concatenate(blocks, axis=0)                      # (144, 64), rows = ph*12 + pw
    o_ref[...] = pooled.astype(o_ref.dtype)


def _conv_pool(p1, w1, b1, w2, b2, n):
    return pl.pallas_call(
        _conv_pool_kernel,
        out_shape=jax.ShapeDtypeStruct((n * HP * HP, 64), jnp.bfloat16),
        grid_spec=pltpu.PrefetchScalarGridSpec(
            num_scalar_prefetch=0,
            grid=(n,),
            in_specs=[
                pl.BlockSpec((H1P, 9), lambda b: (b, 0)),
                pl.BlockSpec((9, 32), lambda b: (0, 0)),
                pl.BlockSpec((1, 32), lambda b: (0, 0)),
                pl.BlockSpec((9, 32, 64), lambda b: (0, 0, 0)),
                pl.BlockSpec((1, 64), lambda b: (0, 0)),
            ],
            out_specs=pl.BlockSpec((HP * HP, 64), lambda b: (b, 0)),
            scratch_shapes=[pltpu.VMEM((R2, 64), jnp.float32)],
        ),
        compiler_params=pltpu.CompilerParams(dimension_semantics=("parallel",)),
    )(p1, w1, b1, w2, b2)


# ---------------------------------------------------------------------------
# Kernel B: fc1 + relu + fc2 (padded to 128 lanes) + log_softmax
# ---------------------------------------------------------------------------
def _fc_kernel(x_ref, w1_ref, b1_ref, w2_ref, b2_ref, o_ref):
    h = jnp.dot(x_ref[...], w1_ref[...], preferred_element_type=jnp.float32) + b1_ref[...]
    h = jnp.maximum(h, 0.0)
    logits = jnp.dot(h.astype(jnp.bfloat16), w2_ref[...],
                     preferred_element_type=jnp.float32) + b2_ref[...]
    # Mask the 118 pad columns so they don't contribute to the softmax normalization.
    col = lax.broadcasted_iota(jnp.int32, logits.shape, 1)
    logits = jnp.where(col < NCLS, logits, jnp.float32(-1e30))
    m = jnp.max(logits, axis=-1, keepdims=True)
    s = logits - m
    lse = jnp.log(jnp.sum(jnp.exp(s), axis=-1, keepdims=True))
    o_ref[...] = (s - lse).astype(o_ref.dtype)


def _fc_head(xf, fc1_w, fc1_b, fc2_w, fc2_b):
    n = xf.shape[0]
    # Row tile: whole batch when small, else 128 rows.  128 keeps the double-buffered
    # (bm, 9216) bf16 activation tile + the 2.3 MB fc1 weight comfortably inside the
    # default scoped-VMEM limit on v5e/v6e/v7x while still giving the MXU a full M dim.
    if n <= 128:
        bm, n_pad = n, n
    else:
        bm = 128
        n_pad = ((n + bm - 1) // bm) * bm
        if n_pad != n:
            xf = jnp.pad(xf, ((0, n_pad - n), (0, 0)))
    out = pl.pallas_call(
        _fc_kernel,
        out_shape=jax.ShapeDtypeStruct((n_pad, 128), jnp.float32),
        grid_spec=pltpu.PrefetchScalarGridSpec(
            num_scalar_prefetch=0,
            grid=(n_pad // bm,),
            in_specs=[
                pl.BlockSpec((bm, FEAT), lambda r: (r, 0)),
                pl.BlockSpec((FEAT, 128), lambda r: (0, 0)),
                pl.BlockSpec((1, 128), lambda r: (0, 0)),
                pl.BlockSpec((128, 128), lambda r: (0, 0)),
                pl.BlockSpec((1, 128), lambda r: (0, 0)),
            ],
            out_specs=pl.BlockSpec((bm, 128), lambda r: (r, 0)),
        ),
        compiler_params=pltpu.CompilerParams(dimension_semantics=("parallel",)),
    )(xf, fc1_w, fc1_b, fc2_w, fc2_b)
    return out[:n]


# ---------------------------------------------------------------------------
# Parameters (deterministic, in-script).  Conventions (== one-time torch permutes):
#   w1[(i*3+j), cout]            <- conv1.weight[cout, 0, i, j]
#   w2[(i*3+j), cin, cout]       <- conv2.weight[cout, cin, i, j]
#   fc1_w[(h*12+w)*64 + c, out]  <- fc1.weight[out, c*144 + h*12 + w]   (NHWC-flatten order)
#   fc2_w padded (128,10)->(128,128) with zero columns (masked in-kernel).
# ---------------------------------------------------------------------------
def init_params(key):
    ks = jax.random.split(key, 8)

    def nrm(k, shape, scale):
        return scale * jax.random.normal(k, shape, jnp.float32)

    fc2_w = nrm(ks[6], (128, NCLS), 0.05)
    fc2_b = nrm(ks[7], (1, NCLS), 0.05)
    fc2_w_p = jnp.zeros((128, 128), jnp.float32).at[:, :NCLS].set(fc2_w)
    fc2_b_p = jnp.zeros((1, 128), jnp.float32).at[:, :NCLS].set(fc2_b)
    return {
        "w1": nrm(ks[0], (9, 32), 0.10).astype(jnp.bfloat16),
        "b1": nrm(ks[1], (1, 32), 0.10),
        "w2": nrm(ks[2], (9, 32, 64), 0.05).astype(jnp.bfloat16),
        "b2": nrm(ks[3], (1, 64), 0.05),
        "fc1_w": nrm(ks[4], (FEAT, 128), 0.01).astype(jnp.bfloat16),
        "fc1_b": nrm(ks[5], (1, 128), 0.01),
        "fc2_w": fc2_w_p.astype(jnp.bfloat16),
        "fc2_b": fc2_b_p,
    }


# ---------------------------------------------------------------------------
# TrainerNet.forward (== ParameterServer.forward == Net.forward)
# ---------------------------------------------------------------------------
@jax.jit
def trainer_net_forward(x_nchw, params):
    # TODO(synk): Dropout2d is stochastic in train mode; implemented as eval-mode identity.
    n = x_nchw.shape[0]
    x = x_nchw[:, 0, :, :].astype(jnp.float32)                    # (N, 28, 28), Cin == 1

    # conv1 im2col (tiny XLA glue, ~12 KB/sample bf16; conv2's 9x-expanded im2col is in-kernel).
    taps = [x[:, i:i + H1, j:j + H1] for i in range(3) for j in range(3)]
    p1 = jnp.stack(taps, axis=-1).reshape(n, H1 * H1, 9)
    p1 = jnp.pad(p1, ((0, 0), (0, H1P - H1 * H1), (0, 0)))
    p1 = p1.reshape(n * H1P, 9).astype(jnp.bfloat16)

    pooled = _conv_pool(p1, params["w1"], params["b1"],
                        params["w2"], params["b2"], n)            # (N*144, 64) bf16
    xf = pooled.reshape(n, FEAT)                                  # free row-major reshape (NHWC flatten)

    out_pad = _fc_head(xf, params["fc1_w"], params["fc1_b"],
                       params["fc2_w"], params["fc2_b"])          # (N, 128) f32 log-probs (padded)
    return out_pad[:, :NCLS]


if __name__ == "__main__":
    key = jax.random.PRNGKey(0)
    kp, kx = jax.random.split(key)
    params = init_params(kp)
    # fc1 expects 9216 = 64*12*12 features -> 28x28 single-channel input.
    x = jax.random.normal(kx, (2, 1, 28, 28), jnp.float32)

    out = jax.block_until_ready(trainer_net_forward(x, params))

    assert out.shape == (2, 10), out.shape
    assert bool(jnp.all(jnp.isfinite(out)))
    # log_softmax rows must exponentiate-sum to 1
    assert bool(jnp.allclose(jnp.sum(jnp.exp(out), axis=1), 1.0, atol=2e-3))
    print("KERNEL_OK")
</pallas_src>

<mosaic_0001>
module attributes {stable_mosaic.version = 11 : i64} {
  func.func @_fc_kernel(%arg0: i32, %arg1: memref<2x9216xbf16, #tpu.memory_space<vmem>>, %arg2: memref<9216x128xbf16, #tpu.memory_space<vmem>>, %arg3: memref<1x128xf32, #tpu.memory_space<vmem>>, %arg4: memref<128x128xbf16, #tpu.memory_space<vmem>>, %arg5: memref<1x128xf32, #tpu.memory_space<vmem>>, %arg6: memref<2x128xf32, #tpu.memory_space<vmem>>) attributes {dimension_semantics = [#tpu.dimension_semantics<parallel>], iteration_bounds = array<i64: 1>, scalar_prefetch = 0 : i64, scratch_operands = 0 : i64, tpu.core_type = #tpu.core_type<tc>, window_params = [{transform_indices = @transform_0, window_bounds = array<i64: 2, 9216>}, {pipeline_mode = #tpu.pipeline_mode<synchronous>, transform_indices = @transform_1, window_bounds = array<i64: 9216, 128>}, {pipeline_mode = #tpu.pipeline_mode<synchronous>, transform_indices = @transform_2, window_bounds = array<i64: 1, 128>}, {pipeline_mode = #tpu.pipeline_mode<synchronous>, transform_indices = @transform_3, window_bounds = array<i64: 128, 128>}, {pipeline_mode = #tpu.pipeline_mode<synchronous>, transform_indices = @transform_4, window_bounds = array<i64: 1, 128>}, {transform_indices = @transform_5, window_bounds = array<i64: 2, 128>}]} {
    %c0 = arith.constant 0 : index
    %c0_0 = arith.constant 0 : index
    %0 = vector.load %arg1[%c0, %c0_0] : memref<2x9216xbf16, #tpu.memory_space<vmem>>, vector<2x9216xbf16>
    %c0_1 = arith.constant 0 : index
    %c0_2 = arith.constant 0 : index
    %1 = vector.load %arg2[%c0_1, %c0_2] : memref<9216x128xbf16, #tpu.memory_space<vmem>>, vector<9216x128xbf16>
    %cst = arith.constant dense<0.000000e+00> : vector<2x128xf32>
    %2 = tpu.matmul %0, %1, %cst {dimension_numbers = #tpu.dot_dimension_numbers<[1], [0], [0], [1], [0, 0, 1, 1], [], []>} : vector<2x9216xbf16>, vector<9216x128xbf16>, vector<2x128xf32> -> vector<2x128xf32>
    %c0_3 = arith.constant 0 : index
    %c0_4 = arith.constant 0 : index
    %3 = vector.load %arg3[%c0_3, %c0_4] : memref<1x128xf32, #tpu.memory_space<vmem>>, vector<1x128xf32>
    %4 = vector.broadcast %3 : vector<1x128xf32> to vector<2x128xf32>
    %5 = arith.addf %2, %4 : vector<2x128xf32>
    %cst_5 = arith.constant 0.000000e+00 : f32
    %6 = vector.broadcast %cst_5 : f32 to vector<2x128xf32>
    %7 = arith.maximumf %5, %6 : vector<2x128xf32>
    %8 = arith.truncf %7 : vector<2x128xf32> to vector<2x128xbf16>
    %c0_6 = arith.constant 0 : index
    %c0_7 = arith.constant 0 : index
    %9 = vector.load %arg4[%c0_6, %c0_7] : memref<128x128xbf16, #tpu.memory_space<vmem>>, vector<128x128xbf16>
    %cst_8 = arith.constant dense<0.000000e+00> : vector<2x128xf32>
    %10 = tpu.matmul %8, %9, %cst_8 {dimension_numbers = #tpu.dot_dimension_numbers<[1], [0], [0], [1], [0, 0, 1, 1], [], []>} : vector<2x128xbf16>, vector<128x128xbf16>, vector<2x128xf32> -> vector<2x128xf32>
    %c0_9 = arith.constant 0 : index
    %c0_10 = arith.constant 0 : index
    %11 = vector.load %arg5[%c0_9, %c0_10] : memref<1x128xf32, #tpu.memory_space<vmem>>, vector<1x128xf32>
    %12 = vector.broadcast %11 : vector<1x128xf32> to vector<2x128xf32>
    %13 = arith.addf %10, %12 : vector<2x128xf32>
    %14 = tpu.iota {dimensions = array<i32: 1>} : vector<2x128xi32>
    %c10_i32 = arith.constant 10 : i32
    %15 = vector.broadcast %c10_i32 : i32 to vector<2x128xi32>
    %16 = arith.cmpi slt, %14, %15 : vector<2x128xi32>
    %cst_11 = arith.constant -1.000000e+30 : f32
    %17 = vector.broadcast %cst_11 : f32 to vector<2x128xf32>
    %18 = arith.select %16, %13, %17 : vector<2x128xi1>, vector<2x128xf32>
    %cst_12 = arith.constant dense<0xFF800000> : vector<2xf32>
    %19 = vector.multi_reduction <maximumf>, %18, %cst_12 [1] : vector<2x128xf32> to vector<2xf32>
    %20 = vector.shape_cast %19 : vector<2xf32> to vector<2x1xf32>
    %21 = vector.broadcast %20 : vector<2x1xf32> to vector<2x128xf32>
    %22 = arith.subf %18, %21 : vector<2x128xf32>
    %23 = math.exp %22 : vector<2x128xf32>
    %cst_13 = arith.constant dense<0.000000e+00> : vector<2xf32>
    %24 = vector.multi_reduction <add>, %23, %cst_13 [1] : vector<2x128xf32> to vector<2xf32>
    %25 = vector.shape_cast %24 : vector<2xf32> to vector<2x1xf32>
    %26 = math.log %25 : vector<2x1xf32>
    %27 = vector.broadcast %26 : vector<2x1xf32> to vector<2x128xf32>
    %28 = arith.subf %22, %27 : vector<2x128xf32>
    %c0_14 = arith.constant 0 : index
    %c0_15 = arith.constant 0 : index
    %29 = vector.load %arg6[%c0_14, %c0_15] : memref<2x128xf32, #tpu.memory_space<vmem>>, vector<2x128xf32>
    tpu.vector_store %arg6[%c0_14, %c0_15], %28 {strides = array<i32>} : memref<2x128xf32, #tpu.memory_space<vmem>>, vector<2x128xf32>,
    return
  }
  func.func @transform_0(%arg0: i32) -> (i32, i32) {
    %c0_i32 = arith.constant 0 : i32
    %c0_i32_0 = arith.constant 0 : i32
    return %arg0, %c0_i32 : i32, i32
  }
  func.func @transform_1(%arg0: i32) -> (i32, i32) {
    %c0_i32 = arith.constant 0 : i32
    %c0_i32_0 = arith.constant 0 : i32
    %c0_i32_1 = arith.constant 0 : i32
    return %c0_i32, %c0_i32_0 : i32, i32
  }
  func.func @transform_2(%arg0: i32) -> (i32, i32) {
    %c0_i32 = arith.constant 0 : i32
    %c0_i32_0 = arith.constant 0 : i32
    %c0_i32_1 = arith.constant 0 : i32
    return %c0_i32, %c0_i32_0 : i32, i32
  }
  func.func @transform_3(%arg0: i32) -> (i32, i32) {
    %c0_i32 = arith.constant 0 : i32
    %c0_i32_0 = arith.constant 0 : i32
    %c0_i32_1 = arith.constant 0 : i32
    return %c0_i32, %c0_i32_0 : i32, i32
  }
  func.func @transform_4(%arg0: i32) -> (i32, i32) {
    %c0_i32 = arith.constant 0 : i32
    %c0_i32_0 = arith.constant 0 : i32
    %c0_i32_1 = arith.constant 0 : i32
    return %c0_i32, %c0_i32_0 : i32, i32
  }
  func.func @transform_5(%arg0: i32) -> (i32, i32) {
    %c0_i32 = arith.constant 0 : i32
    %c0_i32_0 = arith.constant 0 : i32
    return %arg0, %c0_i32 : i32, i32
  }
}

module attributes {stable_mosaic.version = 11 : i64} {
  func.func @_conv_pool_kernel(%arg0: i32, %arg1: memref<680x9xbf16, #tpu.memory_space<vmem>>, %arg2: memref<9x32xbf16, #tpu.memory_space<vmem>>, %arg3: memref<1x32xf32, #tpu.memory_space<vmem>>, %arg4: memref<9x32x64xbf16, #tpu.memory_space<vmem>>, %arg5: memref<1x64xf32, #tpu.memory_space<vmem>>, %arg6: memref<144x64xbf16, #tpu.memory_space<vmem>>, %arg7: memref<624x64xf32, #tpu.memory_space<vmem>>) attributes {dimension_semantics = [#tpu.dimension_semantics<parallel>], iteration_bounds = array<i64: 2>, scalar_prefetch = 0 : i64, scratch_operands = 1 : i64, tpu.core_type = #tpu.core_type<tc>, window_params = [{transform_indices = @transform_0, window_bounds = array<i64: 680, 9>}, {pipeline_mode = #tpu.pipeline_mode<synchronous>, transform_indices = @transform_1, window_bounds = array<i64: 9, 32>}, {pipeline_mode = #tpu.pipeline_mode<synchronous>, transform_indices = @transform_2, window_bounds = array<i64: 1, 32>}, {pipeline_mode = #tpu.pipeline_mode<synchronous>, transform_indices = @transform_3, window_bounds = array<i64: 9, 32, 64>}, {pipeline_mode = #tpu.pipeline_mode<synchronous>, transform_indices = @transform_4, window_bounds = array<i64: 1, 64>}, {transform_indices = @transform_5, window_bounds = array<i64: 144, 64>}]} {
    %c0 = arith.constant 0 : index
    %c0_0 = arith.constant 0 : index
    %0 = vector.load %arg1[%c0, %c0_0] : memref<680x9xbf16, #tpu.memory_space<vmem>>, vector<680x9xbf16>
    %c0_1 = arith.constant 0 : index
    %c0_2 = arith.constant 0 : index
    %1 = vector.load %arg2[%c0_1, %c0_2] : memref<9x32xbf16, #tpu.memory_space<vmem>>, vector<9x32xbf16>
    %cst = arith.constant dense<0.000000e+00> : vector<680x32xf32>
    %2 = tpu.matmul %0, %1, %cst {dimension_numbers = #tpu.dot_dimension_numbers<[1], [0], [0], [1], [0, 0, 1, 1], [], []>} : vector<680x9xbf16>, vector<9x32xbf16>, vector<680x32xf32> -> vector<680x32xf32>
    %c0_3 = arith.constant 0 : index
    %c0_4 = arith.constant 0 : index
    %3 = vector.load %arg3[%c0_3, %c0_4] : memref<1x32xf32, #tpu.memory_space<vmem>>, vector<1x32xf32>
    %4 = vector.broadcast %3 : vector<1x32xf32> to vector<680x32xf32>
    %5 = arith.addf %2, %4 : vector<680x32xf32>
    %cst_5 = arith.constant 0.000000e+00 : f32
    %6 = vector.broadcast %cst_5 : f32 to vector<680x32xf32>
    %7 = arith.maximumf %5, %6 : vector<680x32xf32>
    %cst_6 = arith.constant 0.000000e+00 : f32
    %8 = vector.broadcast %cst_6 : f32 to vector<624x64xf32>
    %9 = vector.extract_strided_slice %7 {offsets = [0, 0], sizes = [624, 32], strides = [1, 1]} : vector<680x32xf32> to vector<624x32xf32>
    %10 = arith.truncf %9 : vector<624x32xf32> to vector<624x32xbf16>
    %c0_7 = arith.constant 0 : index
    %c0_8 = arith.constant 0 : index
    %c0_9 = arith.constant 0 : index
    %11 = vector.load %arg4[%c0_7, %c0_8, %c0_9] : memref<9x32x64xbf16, #tpu.memory_space<vmem>>, vector<1x32x64xbf16>
    %12 = vector.shape_cast %11 : vector<1x32x64xbf16> to vector<32x64xbf16>
    %cst_10 = arith.constant dense<0.000000e+00> : vector<624x64xf32>
    %13 = tpu.matmul %10, %12, %cst_10 {dimension_numbers = #tpu.dot_dimension_numbers<[1], [0], [0], [1], [0, 0, 1, 1], [], []>} : vector<624x32xbf16>, vector<32x64xbf16>, vector<624x64xf32> -> vector<624x64xf32>
    %14 = arith.addf %8, %13 : vector<624x64xf32>
    %15 = vector.extract_strided_slice %7 {offsets = [1, 0], sizes = [624, 32], strides = [1, 1]} : vector<680x32xf32> to vector<624x32xf32>
    %16 = arith.truncf %15 : vector<624x32xf32> to vector<624x32xbf16>
    %c1 = arith.constant 1 : index
    %c0_11 = arith.constant 0 : index
    %c0_12 = arith.constant 0 : index
    %17 = vector.load %arg4[%c1, %c0_11, %c0_12] : memref<9x32x64xbf16, #tpu.memory_space<vmem>>, vector<1x32x64xbf16>
    %18 = vector.shape_cast %17 : vector<1x32x64xbf16> to vector<32x64xbf16>
    %cst_13 = arith.constant dense<0.000000e+00> : vector<624x64xf32>
    %19 = tpu.matmul %16, %18, %cst_13 {dimension_numbers = #tpu.dot_dimension_numbers<[1], [0], [0], [1], [0, 0, 1, 1], [], []>} : vector<624x32xbf16>, vector<32x64xbf16>, vector<624x64xf32> -> vector<624x64xf32>
    %20 = arith.addf %14, %19 : vector<624x64xf32>
    %21 = vector.extract_strided_slice %7 {offsets = [2, 0], sizes = [624, 32], strides = [1, 1]} : vector<680x32xf32> to vector<624x32xf32>
    %22 = arith.truncf %21 : vector<624x32xf32> to vector<624x32xbf16>
    %c2 = arith.constant 2 : index
    %c0_14 = arith.constant 0 : index
    %c0_15 = arith.constant 0 : index
    %23 = vector.load %arg4[%c2, %c0_14, %c0_15] : memref<9x32x64xbf16, #tpu.memory_space<vmem>>, vector<1x32x64xbf16>
    %24 = vector.shape_cast %23 : vector<1x32x64xbf16> to vector<32x64xbf16>
    %cst_16 = arith.constant dense<0.000000e+00> : vector<624x64xf32>
    %25 = tpu.matmul %22, %24, %cst_16 {dimension_numbers = #tpu.dot_dimension_numbers<[1], [0], [0], [1], [0, 0, 1, 1], [], []>} : vector<624x32xbf16>, vector<32x64xbf16>, vector<624x64xf32> -> vector<624x64xf32>
    %26 = arith.addf %20, %25 : vector<624x64xf32>
    %27 = vector.extract_strided_slice %7 {offsets = [26, 0], sizes = [624, 32], strides = [1, 1]} : vector<680x32xf32> to vector<624x32xf32>
    %28 = arith.truncf %27 : vector<624x32xf32> to vector<624x32xbf16>
    %c3 = arith.constant 3 : index
    %c0_17 = arith.constant 0 : index
    %c0_18 = arith.constant 0 : index
    %29 = vector.load %arg4[%c3, %c0_17, %c0_18] : memref<9x32x64xbf16, #tpu.memory_space<vmem>>, vector<1x32x64xbf16>
    %30 = vector.shape_cast %29 : vector<1x32x64xbf16> to vector<32x64xbf16>
    %cst_19 = arith.constant dense<0.000000e+00> : vector<624x64xf32>
    %31 = tpu.matmul %28, %30, %cst_19 {dimension_numbers = #tpu.dot_dimension_numbers<[1], [0], [0], [1], [0, 0, 1, 1], [], []>} : vector<624x32xbf16>, vector<32x64xbf16>, vector<624x64xf32> -> vector<624x64xf32>
    %32 = arith.addf %26, %31 : vector<624x64xf32>
    %33 = vector.extract_strided_slice %7 {offsets = [27, 0], sizes = [624, 32], strides = [1, 1]} : vector<680x32xf32> to vector<624x32xf32>
    %34 = arith.truncf %33 : vector<624x32xf32> to vector<624x32xbf16>
    %c4 = arith.constant 4 : index
    %c0_20 = arith.constant 0 : index
    %c0_21 = arith.constant 0 : index
    %35 = vector.load %arg4[%c4, %c0_20, %c0_21] : memref<9x32x64xbf16, #tpu.memory_space<vmem>>, vector<1x32x64xbf16>
    %36 = vector.shape_cast %35 : vector<1x32x64xbf16> to vector<32x64xbf16>
    %cst_22 = arith.constant dense<0.000000e+00> : vector<624x64xf32>
    %37 = tpu.matmul %34, %36, %cst_22 {dimension_numbers = #tpu.dot_dimension_numbers<[1], [0], [0], [1], [0, 0, 1, 1], [], []>} : vector<624x32xbf16>, vector<32x64xbf16>, vector<624x64xf32> -> vector<624x64xf32>
    %38 = arith.addf %32, %37 : vector<624x64xf32>
    %39 = vector.extract_strided_slice %7 {offsets = [28, 0], sizes = [624, 32], strides = [1, 1]} : vector<680x32xf32> to vector<624x32xf32>
    %40 = arith.truncf %39 : vector<624x32xf32> to vector<624x32xbf16>
    %c5 = arith.constant 5 : index
    %c0_23 = arith.constant 0 : index
    %c0_24 = arith.constant 0 : index
    %41 = vector.load %arg4[%c5, %c0_23, %c0_24] : memref<9x32x64xbf16, #tpu.memory_space<vmem>>, vector<1x32x64xbf16>
    %42 = vector.shape_cast %41 : vector<1x32x64xbf16> to vector<32x64xbf16>
    %cst_25 = arith.constant dense<0.000000e+00> : vector<624x64xf32>
    %43 = tpu.matmul %40, %42, %cst_25 {dimension_numbers = #tpu.dot_dimension_numbers<[1], [0], [0], [1], [0, 0, 1, 1], [], []>} : vector<624x32xbf16>, vector<32x64xbf16>, vector<624x64xf32> -> vector<624x64xf32>
    %44 = arith.addf %38, %43 : vector<624x64xf32>
    %45 = vector.extract_strided_slice %7 {offsets = [52, 0], sizes = [624, 32], strides = [1, 1]} : vector<680x32xf32> to vector<624x32xf32>
    %46 = arith.truncf %45 : vector<624x32xf32> to vector<624x32xbf16>
    %c6 = arith.constant 6 : index
    %c0_26 = arith.constant 0 : index
    %c0_27 = arith.constant 0 : index
    %47 = vector.load %arg4[%c6, %c0_26, %c0_27] : memref<9x32x64xbf16, #tpu.memory_space<vmem>>, vector<1x32x64xbf16>
    %48 = vector.shape_cast %47 : vector<1x32x64xbf16> to vector<32x64xbf16>
    %cst_28 = arith.constant dense<0.000000e+00> : vector<624x64xf32>
    %49 = tpu.matmul %46, %48, %cst_28 {dimension_numbers = #tpu.dot_dimension_numbers<[1], [0], [0], [1], [0, 0, 1, 1], [], []>} : vector<624x32xbf16>, vector<32x64xbf16>, vector<624x64xf32> -> vector<624x64xf32>
    %50 = arith.addf %44, %49 : vector<624x64xf32>
    %51 = vector.extract_strided_slice %7 {offsets = [53, 0], sizes = [624, 32], strides = [1, 1]} : vector<680x32xf32> to vector<624x32xf32>
    %52 = arith.truncf %51 : vector<624x32xf32> to vector<624x32xbf16>
    %c7 = arith.constant 7 : index
    %c0_29 = arith.constant 0 : index
    %c0_30 = arith.constant 0 : index
    %53 = vector.load %arg4[%c7, %c0_29, %c0_30] : memref<9x32x64xbf16, #tpu.memory_space<vmem>>, vector<1x32x64xbf16>
    %54 = vector.shape_cast %53 : vector<1x32x64xbf16> to vector<32x64xbf16>
    %cst_31 = arith.constant dense<0.000000e+00> : vector<624x64xf32>
    %55 = tpu.matmul %52, %54, %cst_31 {dimension_numbers = #tpu.dot_dimension_numbers<[1], [0], [0], [1], [0, 0, 1, 1], [], []>} : vector<624x32xbf16>, vector<32x64xbf16>, vector<624x64xf32> -> vector<624x64xf32>
    %56 = arith.addf %50, %55 : vector<624x64xf32>
    %57 = vector.extract_strided_slice %7 {offsets = [54, 0], sizes = [624, 32], strides = [1, 1]} : vector<680x32xf32> to vector<624x32xf32>
    %58 = arith.truncf %57 : vector<624x32xf32> to vector<624x32xbf16>
    %c8 = arith.constant 8 : index
    %c0_32 = arith.constant 0 : index
    %c0_33 = arith.constant 0 : index
    %59 = vector.load %arg4[%c8, %c0_32, %c0_33] : memref<9x32x64xbf16, #tpu.memory_space<vmem>>, vector<1x32x64xbf16>
    %60 = vector.shape_cast %59 : vector<1x32x64xbf16> to vector<32x64xbf16>
    %cst_34 = arith.constant dense<0.000000e+00> : vector<624x64xf32>
    %61 = tpu.matmul %58, %60, %cst_34 {dimension_numbers = #tpu.dot_dimension_numbers<[1], [0], [0], [1], [0, 0, 1, 1], [], []>} : vector<624x32xbf16>, vector<32x64xbf16>, vector<624x64xf32> -> vector<624x64xf32>
    %62 = arith.addf %56, %61 : vector<624x64xf32>
    %c0_35 = arith.constant 0 : index
    %c0_36 = arith.constant 0 : index
    %63 = vector.load %arg5[%c0_35, %c0_36] : memref<1x64xf32, #tpu.memory_space<vmem>>, vector<1x64xf32>
    %64 = vector.broadcast %63 : vector<1x64xf32> to vector<624x64xf32>
    %65 = arith.addf %62, %64 : vector<624x64xf32>
    %c0_37 = arith.constant 0 : index
    %c0_38 = arith.constant 0 : index
    %66 = vector.load %arg7[%c0_37, %c0_38] : memref<624x64xf32, #tpu.memory_space<vmem>>, vector<624x64xf32>
    tpu.vector_store %arg7[%c0_37, %c0_38], %65 {strides = array<i32>} : memref<624x64xf32, #tpu.memory_space<vmem>>, vector<624x64xf32>,
    %c0_39 = arith.constant 0 : index
    %c0_40 = arith.constant 0 : index
    %67 = tpu.strided_load %arg7[%c0_39, %c0_40] {strides = array<i32: 2, 1>} : memref<624x64xf32, #tpu.memory_space<vmem>>, vector<312x64xf32>
    %c1_41 = arith.constant 1 : index
    %c0_42 = arith.constant 0 : index
    %68 = tpu.strided_load %arg7[%c1_41, %c0_42] {strides = array<i32: 2, 1>} : memref<624x64xf32, #tpu.memory_space<vmem>>, vector<312x64xf32>
    %69 = arith.maximumf %67, %68 : vector<312x64xf32>
    %70 = vector.extract_strided_slice %69 {offsets = [0, 0], sizes = [12, 64], strides = [1, 1]} : vector<312x64xf32> to vector<12x64xf32>
    %71 = vector.extract_strided_slice %69 {offsets = [13, 0], sizes = [12, 64], strides = [1, 1]} : vector<312x64xf32> to vector<12x64xf32>
    %72 = arith.maximumf %70, %71 : vector<12x64xf32>
    %73 = vector.extract_strided_slice %69 {offsets = [26, 0], sizes = [12, 64], strides = [1, 1]} : vector<312x64xf32> to vector<12x64xf32>
    %74 = vector.extract_strided_slice %69 {offsets = [39, 0], sizes = [12, 64], strides = [1, 1]} : vector<312x64xf32> to vector<12x64xf32>
    %75 = arith.maximumf %73, %74 : vector<12x64xf32>
    %76 = vector.extract_strided_slice %69 {offsets = [52, 0], sizes = [12, 64], strides = [1, 1]} : vector<312x64xf32> to vector<12x64xf32>
    %77 = vector.extract_strided_slice %69 {offsets = [65, 0], sizes = [12, 64], strides = [1, 1]} : vector<312x64xf32> to vector<12x64xf32>
    %78 = arith.maximumf %76, %77 : vector<12x64xf32>
    %79 = vector.extract_strided_slice %69 {offsets = [78, 0], sizes = [12, 64], strides = [1, 1]} : vector<312x64xf32> to vector<12x64xf32>
    %80 = vector.extract_strided_slice %69 {offsets = [91, 0], sizes = [12, 64], strides = [1, 1]} : vector<312x64xf32> to vector<12x64xf32>
    %81 = arith.maximumf %79, %80 : vector<12x64xf32>
    %82 = vector.extract_strided_slice %69 {offsets = [104, 0], sizes = [12, 64], strides = [1, 1]} : vector<312x64xf32> to vector<12x64xf32>
    %83 = vector.extract_strided_slice %69 {offsets = [117, 0], sizes = [12, 64], strides = [1, 1]} : vector<312x64xf32> to vector<12x64xf32>
    %84 = arith.maximumf %82, %83 : vector<12x64xf32>
    %85 = vector.extract_strided_slice %69 {offsets = [130, 0], sizes = [12, 64], strides = [1, 1]} : vector<312x64xf32> to vector<12x64xf32>
    %86 = vector.extract_strided_slice %69 {offsets = [143, 0], sizes = [12, 64], strides = [1, 1]} : vector<312x64xf32> to vector<12x64xf32>
    %87 = arith.maximumf %85, %86 : vector<12x64xf32>
    %88 = vector.extract_strided_slice %69 {offsets = [156, 0], sizes = [12, 64], strides = [1, 1]} : vector<312x64xf32> to vector<12x64xf32>
    %89 = vector.extract_strided_slice %69 {offsets = [169, 0], sizes = [12, 64], strides = [1, 1]} : vector<312x64xf32> to vector<12x64xf32>
    %90 = arith.maximumf %88, %89 : vector<12x64xf32>
    %91 = vector.extract_strided_slice %69 {offsets = [182, 0], sizes = [12, 64], strides = [1, 1]} : vector<312x64xf32> to vector<12x64xf32>
    %92 = vector.extract_strided_slice %69 {offsets = [195, 0], sizes = [12, 64], strides = [1, 1]} : vector<312x64xf32> to vector<12x64xf32>
    %93 = arith.maximumf %91, %92 : vector<12x64xf32>
    %94 = vector.extract_strided_slice %69 {offsets = [208, 0], sizes = [12, 64], strides = [1, 1]} : vector<312x64xf32> to vector<12x64xf32>
    %95 = vector.extract_strided_slice %69 {offsets = [221, 0], sizes = [12, 64], strides = [1, 1]} : vector<312x64xf32> to vector<12x64xf32>
    %96 = arith.maximumf %94, %95 : vector<12x64xf32>
    %97 = vector.extract_strided_slice %69 {offsets = [234, 0], sizes = [12, 64], strides = [1, 1]} : vector<312x64xf32> to vector<12x64xf32>
    %98 = vector.extract_strided_slice %69 {offsets = [247, 0], sizes = [12, 64], strides = [1, 1]} : vector<312x64xf32> to vector<12x64xf32>
    %99 = arith.maximumf %97, %98 : vector<12x64xf32>
    %100 = vector.extract_strided_slice %69 {offsets = [260, 0], sizes = [12, 64], strides = [1, 1]} : vector<312x64xf32> to vector<12x64xf32>
    %101 = vector.extract_strided_slice %69 {offsets = [273, 0], sizes = [12, 64], strides = [1, 1]} : vector<312x64xf32> to vector<12x64xf32>
    %102 = arith.maximumf %100, %101 : vector<12x64xf32>
    %103 = vector.extract_strided_slice %69 {offsets = [286, 0], sizes = [12, 64], strides = [1, 1]} : vector<312x64xf32> to vector<12x64xf32>
    %104 = vector.extract_strided_slice %69 {offsets = [299, 0], sizes = [12, 64], strides = [1, 1]} : vector<312x64xf32> to vector<12x64xf32>
    %105 = arith.maximumf %103, %104 : vector<12x64xf32>
    %106 = tpu.concatenate %72, %75, %78, %81, %84, %87, %90, %93, %96, %99, %102, %105 in 0 : vector<12x64xf32>, vector<12x64xf32>, vector<12x64xf32>, vector<12x64xf32>, vector<12x64xf32>, vector<12x64xf32>, vector<12x64xf32>, vector<12x64xf32>, vector<12x64xf32>, vector<12x64xf32>, vector<12x64xf32>, vector<12x64xf32> -> vector<144x64xf32>
    %107 = arith.truncf %106 : vector<144x64xf32> to vector<144x64xbf16>
    %c0_43 = arith.constant 0 : index
    %c0_44 = arith.constant 0 : index
    %108 = vector.load %arg6[%c0_43, %c0_44] : memref<144x64xbf16, #tpu.memory_space<vmem>>, vector<144x64xbf16>
    tpu.vector_store %arg6[%c0_43, %c0_44], %107 {strides = array<i32>} : memref<144x64xbf16, #tpu.memory_space<vmem>>, vector<144x64xbf16>,
    return
  }
  func.func @transform_0(%arg0: i32) -> (i32, i32) {
    %c0_i32 = arith.constant 0 : i32
    %c0_i32_0 = arith.constant 0 : i32
    return %arg0, %c0_i32 : i32, i32
  }
  func.func @transform_1(%arg0: i32) -> (i32, i32) {
    %c0_i32 = arith.constant 0 : i32
    %c0_i32_0 = arith.constant 0 : i32
    %c0_i32_1 = arith.constant 0 : i32
    return %c0_i32, %c0_i32_0 : i32, i32
  }
  func.func @transform_2(%arg0: i32) -> (i32, i32) {
    %c0_i32 = arith.constant 0 : i32
    %c0_i32_0 = arith.constant 0 : i32
    %c0_i32_1 = arith.constant 0 : i32
    return %c0_i32, %c0_i32_0 : i32, i32
  }
  func.func @transform_3(%arg0: i32) -> (i32, i32, i32) {
    %c0_i32 = arith.constant 0 : i32
    %c0_i32_0 = arith.constant 0 : i32
    %c0_i32_1 = arith.constant 0 : i32
    %c0_i32_2 = arith.constant 0 : i32
    return %c0_i32, %c0_i32_0, %c0_i32_1 : i32, i32, i32
  }
  func.func @transform_4(%arg0: i32) -> (i32, i32) {
    %c0_i32 = arith.constant 0 : i32
    %c0_i32_0 = arith.constant 0 : i32
    %c0_i32_1 = arith.constant 0 : i32
    return %c0_i32, %c0_i32_0 : i32, i32
  }
  func.func @transform_5(%arg0: i32) -> (i32, i32) {
    %c0_i32 = arith.constant 0 : i32
    %c0_i32_0 = arith.constant 0 : i32
    return %arg0, %c0_i32 : i32, i32
  }
}

</mosaic_0001>

<llo_original>
// kernel: trainer_net_forward.3
$region0: #{trainer_net_forward.3}
  #allocation0 [shape = 'u32[]', space=smem, size = 0x4, offset = 0x4, fixed_abs, tag = 'smem constant byte address 0x4 - core index']
  #allocation1 [shape = 'u32[72,128]{1,0:T(1,128)}', space=vmem, size = 0x9000, scoped, tag = 'internal scratch']
  %s0 = inlined_call_operand.vmem [shape: bf16[2,9216], index: 0, kind: input, shape index: {}]
  %s1 = inlined_call_operand.hbm [shape: bf16[9216,128], index: 1, kind: input, shape index: {}]
  %s2 = inlined_call_operand.hbm [shape: f32[1,128], index: 2, kind: input, shape index: {}]
  %s3 = inlined_call_operand.hbm [shape: bf16[128,128], index: 3, kind: input, shape index: {}]
  %s4 = inlined_call_operand.hbm [shape: f32[1,128], index: 4, kind: input, shape index: {}]
  %s5 = inlined_call_operand.hbm [shape: f32[2,128], index: 5, kind: output, shape index: {}]
  %s6 = sld [smem:[#allocation0]]
  $region46: #{trainer_net_forward.3} parent=0
    _
  %s8 = ssub.s32 1, %s6
  %s9 = scalar_select 0, %s8, %s6
  $region1: #{trainer_net_forward.3} parent=0
    #allocation2 [shape = 'u8[2359296]{0}', space=vmem, size = 0x240000, scoped, tag = 'input window, operand 1, single buffered']
    #allocation3 [shape = 's32[1]{0}', space=sflag, size = 0x4, scoped, tag = 'scoped memory for trainer_net_forward.3']
    #allocation4 [shape = 's32[1]{0}', space=sflag, size = 0x4, scoped, tag = 'scoped memory for trainer_net_forward.3']
    #allocation5 [shape = 'u8[512]{0}', space=vmem, size = 0x400, scoped, tag = 'input window, operand 2, single buffered']
    #allocation6 [shape = 's32[1]{0}', space=sflag, size = 0x4, scoped, tag = 'scoped memory for trainer_net_forward.3']
    #allocation7 [shape = 'u8[32768]{0}', space=vmem, size = 0x8000, scoped, tag = 'input window, operand 3, single buffered']
    #allocation8 [shape = 'u8[512]{0}', space=vmem, size = 0x400, scoped, tag = 'input window, operand 4, single buffered']
    #allocation9 [shape = 's32[1]{0}', space=sflag, size = 0x4, scoped, tag = 'scoped memory for trainer_net_forward.3']
    #allocation10 [shape = 'u8[1024]{0}', space=vmem, size = 0x400, scoped, tag = 'output window, operand 0, single buffered']
    %10 = vsyncpa [#allocation3], 0
    %11 = vsyncpa [#allocation6], 0
    %12 = vsyncpa [#allocation9], 0
    %13 = vsyncpa [#allocation4], 0
    // Predicated region
    $region2: #{trainer_net_forward.3} parent=1 // pred_check
      _
    $region3: #{trainer_net_forward.3} parent=1 // pred_check_branch
      %15 = sbr.rel (0) target = $region5
    $region4: #{trainer_net_forward.3} parent=1 // pred_region
      _
    $region5: #{trainer_net_forward.3} parent=1 // pred_fallthru
      _
    // Predicated region
    $region6: #{trainer_net_forward.3} parent=1 // pred_check
      _
    $region7: #{trainer_net_forward.3} parent=1 // pred_check_branch
      %17 = sbr.rel (0) target = $region9
    $region8: #{trainer_net_forward.3} parent=1 // pred_region
      %19 = vsyncadd [#allocation3], 0
      %s20 = sshll.u32 %s1, 4
      %s21 = int_to_ptr.hbm [resolvable:$true] %s20
      %s22 = sshll.u32 [#allocation2], 4
      %s23 = int_to_ptr.vmem [resolvable:$true] %s22
      %28 = dma.hbm_to_vmem [thread:$0]  %s21, 73728, %s23, [#allocation3], 64, 64, 4
    $region9: #{trainer_net_forward.3} parent=1 // pred_fallthru
      _
    // Predicated region
    $region10: #{trainer_net_forward.3} parent=1 // pred_check
      _
    $region11: #{trainer_net_forward.3} parent=1 // pred_check_branch
      %30 = sbr.rel (0) target = $region13
    $region12: #{trainer_net_forward.3} parent=1 // pred_region
      %32 = vsyncadd [#allocation6], 0
      %s34 = sshll.u32 %s2, 4
      %s35 = int_to_ptr.hbm [resolvable:$true] %s34
      %s36 = sshll.u32 [#allocation5], 4
      %s37 = int_to_ptr.vmem [resolvable:$true] %s36
      %39 = dma.hbm_to_vmem [thread:$0]  %s35, 16, %s37, [#allocation6]
    $region13: #{trainer_net_forward.3} parent=1 // pred_fallthru
      _
    // Predicated region
    $region14: #{trainer_net_forward.3} parent=1 // pred_check
      _
    $region15: #{trainer_net_forward.3} parent=1 // pred_check_branch
      %41 = sbr.rel (0) target = $region17
    $region16: #{trainer_net_forward.3} parent=1 // pred_region
      %43 = vsyncadd [#allocation6], 0
      %s44 = sshll.u32 %s3, 4
      %s45 = int_to_ptr.hbm [resolvable:$true] %s44
      %s46 = sshll.u32 [#allocation7], 4
      %s47 = int_to_ptr.vmem [resolvable:$true] %s46
      %52 = dma.hbm_to_vmem [thread:$0]  %s45, 1024, %s47, [#allocation6], 64, 64, 4
    $region17: #{trainer_net_forward.3} parent=1 // pred_fallthru
      _
    // Predicated region
    $region18: #{trainer_net_forward.3} parent=1 // pred_check
      _
    $region19: #{trainer_net_forward.3} parent=1 // pred_check_branch
      %54 = sbr.rel (0) target = $region21
    $region20: #{trainer_net_forward.3} parent=1 // pred_region
      %56 = vsyncadd [#allocation9], 0
      %s58 = sshll.u32 %s4, 4
      %s59 = int_to_ptr.hbm [resolvable:$true] %s58
      %s60 = sshll.u32 [#allocation8], 4
      %s61 = int_to_ptr.vmem [resolvable:$true] %s60
      %63 = dma.hbm_to_vmem [thread:$0]  %s59, 16, %s61, [#allocation9]
    $region21: #{trainer_net_forward.3} parent=1 // pred_fallthru
      _
    // Predicated region
    $region22: #{trainer_net_forward.3} parent=1 // pred_check
      _
    $region23: #{trainer_net_forward.3} parent=1 // pred_check_branch
      %65 = sbr.rel (0) target = $region25
    $region24: #{trainer_net_forward.3} parent=1 // pred_region
      %67 = dma.done [#allocation3], 73728
    $region25: #{trainer_net_forward.3} parent=1 // pred_fallthru
      _
    // Predicated region
    $region26: #{trainer_net_forward.3} parent=1 // pred_check
      _
    $region27: #{trainer_net_forward.3} parent=1 // pred_check_branch
      %69 = sbr.rel (0) target = $region29
    $region28: #{trainer_net_forward.3} parent=1 // pred_region
      %71 = dma.done [#allocation6], 16
    $region29: #{trainer_net_forward.3} parent=1 // pred_fallthru
      _
    // Predicated region
    $region30: #{trainer_net_forward.3} parent=1 // pred_check
      _
    $region31: #{trainer_net_forward.3} parent=1 // pred_check_branch
      %73 = sbr.rel (0) target = $region33
    $region32: #{trainer_net_forward.3} parent=1 // pred_region
      %75 = dma.done [#allocation6], 1024
    $region33: #{trainer_net_forward.3} parent=1 // pred_fallthru
      _
    // Predicated region
    $region34: #{trainer_net_forward.3} parent=1 // pred_check
      _
    $region35: #{trainer_net_forward.3} parent=1 // pred_check_branch
      %77 = sbr.rel (0) target = $region37
    $region36: #{trainer_net_forward.3} parent=1 // pred_region
      %79 = dma.done [#allocation9], 16
    $region37: #{trainer_net_forward.3} parent=1 // pred_fallthru
      _
    %v80 = vld [vmem:[%s0] sm:$0xff]
    %v81 = vld [vmem:[%s0 + $0x8] sm:$0xff]
    %v82 = vld [vmem:[%s0 + $0x10] sm:$0xff]
    %v83 = vld [vmem:[%s0 + $0x18] sm:$0xff]
    %v84 = vld [vmem:[%s0 + $0x20] sm:$0xff]
    %v85 = vld [vmem:[%s0 + $0x28] sm:$0xff]
    %v86 = vld [vmem:[%s0 + $0x30] sm:$0xff]
    %v87 = vld [vmem:[%s0 + $0x38] sm:$0xff]
    %v88 = vld [vmem:[%s0 + $0x40] sm:$0xff]
    %v89 = vld [vmem:[#allocation2] sm:$0xf]
    %v90 = vld [vmem:[#allocation2 + $0x4] sm:$0xf]
    %v91 = vld [vmem:[#allocation2 + $0x8] sm:$0xf]
    %v92 = vld [vmem:[#allocation2 + $0xc] sm:$0xf]
    %v93 = vld [vmem:[#allocation2 + $0x10] sm:$0xf]
    %v94 = vld [vmem:[#allocation2 + $0x14] sm:$0xf]
    %v95 = vld [vmem:[#allocation2 + $0x18] sm:$0xf]
    %v96 = vld [vmem:[#allocation2 + $0x1c] sm:$0xf]
    %v97 = vld [vmem:[#allocation2 + $0x20] sm:$0xf]
    %v98 = vld [vmem:[#allocation2 + $0x24] sm:$0xf]
    %v99 = vld [vmem:[#allocation2 + $0x28] sm:$0xf]
    %v100 = vld [vmem:[#allocation2 + $0x2c] sm:$0xf]
    %v101 = vld [vmem:[#allocation2 + $0x30] sm:$0xf]
    %v102 = vld [vmem:[#allocation2 + $0x34] sm:$0xf]
    %v103 = vld [vmem:[#allocation2 + $0x38] sm:$0xf]
    %v104 = vld [vmem:[#allocation2 + $0x3c] sm:$0xf]
    %v105 = vld [vmem:[#allocation2 + $0x40] sm:$0xf]
    %v106 = vld [vmem:[#allocation2 + $0x44] sm:$0xf]
    %v107 = vld [vmem:[#allocation2 + $0x48] sm:$0xf]
    %v108 = vld [vmem:[#allocation2 + $0x4c] sm:$0xf]
    %v109 = vld [vmem:[#allocation2 + $0x50] sm:$0xf]
    %v110 = vld [vmem:[#allocation2 + $0x54] sm:$0xf]
    %v111 = vld [vmem:[#allocation2 + $0x58] sm:$0xf]
    %v112 = vld [vmem:[#allocation2 + $0x5c] sm:$0xf]
    %v113 = vld [vmem:[#allocation2 + $0x60] sm:$0xf]
    %v114 = vld [vmem:[#allocation2 + $0x64] sm:$0xf]
    %v115 = vld [vmem:[#allocation2 + $0x68] sm:$0xf]
    %v116 = vld [vmem:[#allocation2 + $0x6c] sm:$0xf]
    %v117 = vld [vmem:[#allocation2 + $0x70] sm:$0xf]
    %v118 = vld [vmem:[#allocation2 + $0x74] sm:$0xf]
    %v119 = vld [vmem:[#allocation2 + $0x78] sm:$0xf]
    %v120 = vld [vmem:[#allocation2 + $0x7c] sm:$0xf]
    %v121 = vld [vmem:[#allocation2 + $0x80] sm:$0xf]
    %v122 = vld [vmem:[#allocation2 + $0x84] sm:$0xf]
    %v123 = vld [vmem:[#allocation2 + $0x88] sm:$0xf]
    %v124 = vld [vmem:[#allocation2 + $0x8c] sm:$0xf]
    %v125 = vld [vmem:[#allocation2 + $0x90] sm:$0xf]
    %v126 = vld [vmem:[#allocation2 + $0x94] sm:$0xf]
    %v127 = vld [vmem:[#allocation2 + $0x98] sm:$0xf]
    %v128 = vld [vmem:[#allocation2 + $0x9c] sm:$0xf]
    %v129 = vld [vmem:[#allocation2 + $0xa0] sm:$0xf]
    %v130 = vld [vmem:[#allocation2 + $0xa4] sm:$0xf]
    %v131 = vld [vmem:[#allocation2 + $0xa8] sm:$0xf]
    %v132 = vld [vmem:[#allocation2 + $0xac] sm:$0xf]
    %v133 = vld [vmem:[#allocation2 + $0xb0] sm:$0xf]
    %v134 = vld [vmem:[#allocation2 + $0xb4] sm:$0xf]
    %v135 = vld [vmem:[#allocation2 + $0xb8] sm:$0xf]
    %v136 = vld [vmem:[#allocation2 + $0xbc] sm:$0xf]
    %v137 = vld [vmem:[#allocation2 + $0xc0] sm:$0xf]
    %v138 = vld [vmem:[#allocation2 + $0xc4] sm:$0xf]
    %v139 = vld [vmem:[#allocation2 + $0xc8] sm:$0xf]
    %v140 = vld [vmem:[#allocation2 + $0xcc] sm:$0xf]
    %v141 = vld [vmem:[#allocation2 + $0xd0] sm:$0xf]
    %v142 = vld [vmem:[#allocation2 + $0xd4] sm:$0xf]
    %v143 = vld [vmem:[#allocation2 + $0xd8] sm:$0xf]
    %v144 = vld [vmem:[#allocation2 + $0xdc] sm:$0xf]
    %v145 = vld [vmem:[#allocation2 + $0xe0] sm:$0xf]
    %v146 = vld [vmem:[#allocation2 + $0xe4] sm:$0xf]
    %v147 = vld [vmem:[#allocation2 + $0xe8] sm:$0xf]
    %v148 = vld [vmem:[#allocation2 + $0xec] sm:$0xf]
    %v149 = vld [vmem:[#allocation2 + $0xf0] sm:$0xf]
    %v150 = vld [vmem:[#allocation2 + $0xf4] sm:$0xf]
    %v151 = vld [vmem:[#allocation2 + $0xf8] sm:$0xf]
    %v152 = vld [vmem:[#allocation2 + $0xfc] sm:$0xf]
    %v153 = vld [vmem:[#allocation2 + $0x100] sm:$0xf]
    %v154 = vld [vmem:[#allocation2 + $0x104] sm:$0xf]
    %v155 = vld [vmem:[#allocation2 + $0x108] sm:$0xf]
    %v156 = vld [vmem:[#allocation2 + $0x10c] sm:$0xf]
    %v157 = vld [vmem:[#allocation2 + $0x110] sm:$0xf]
    %v158 = vld [vmem:[#allocation2 + $0x114] sm:$0xf]
    %v159 = vld [vmem:[#allocation2 + $0x118] sm:$0xf]
    %v160 = vld [vmem:[#allocation2 + $0x11c] sm:$0xf]
    %v161 = vld [vmem:[#allocation2 + $0x120] sm:$0xf]
    %v162 = vld [vmem:[#allocation2 + $0x124] sm:$0xf]
    %v163 = vld [vmem:[#allocation2 + $0x128] sm:$0xf]
    %v164 = vld [vmem:[#allocation2 + $0x12c] sm:$0xf]
    %v165 = vld [vmem:[#allocation2 + $0x130] sm:$0xf]
    %v166 = vld [vmem:[#allocation2 + $0x134] sm:$0xf]
    %v167 = vld [vmem:[#allocation2 + $0x138] sm:$0xf]
    %v168 = vld [vmem:[#allocation2 + $0x13c] sm:$0xf]
    %v169 = vld [vmem:[#allocation2 + $0x140] sm:$0xf]
    %v170 = vld [vmem:[#allocation2 + $0x144] sm:$0xf]
    %v171 = vld [vmem:[#allocation2 + $0x148] sm:$0xf]
    %v172 = vld [vmem:[#allocation2 + $0x14c] sm:$0xf]
    %v173 = vld [vmem:[#allocation2 + $0x150] sm:$0xf]
    %v174 = vld [vmem:[#allocation2 + $0x154] sm:$0xf]
    %v175 = vld [vmem:[#allocation2 + $0x158] sm:$0xf]
    %v176 = vld [vmem:[#allocation2 + $0x15c] sm:$0xf]
    %v177 = vld [vmem:[#allocation2 + $0x160] sm:$0xf]
    %v178 = vld [vmem:[#allocation2 + $0x164] sm:$0xf]
    %v179 = vld [vmem:[#allocation2 + $0x168] sm:$0xf]
    %v180 = vld [vmem:[#allocation2 + $0x16c] sm:$0xf]
    %v181 = vld [vmem:[#allocation2 + $0x170] sm:$0xf]
    %v182 = vld [vmem:[#allocation2 + $0x174] sm:$0xf]
    %v183 = vld [vmem:[#allocation2 + $0x178] sm:$0xf]
    %v184 = vld [vmem:[#allocation2 + $0x17c] sm:$0xf]
    %v185 = vld [vmem:[#allocation2 + $0x180] sm:$0xf]
    %v186 = vld [vmem:[#allocation2 + $0x184] sm:$0xf]
    %v187 = vld [vmem:[#allocation2 + $0x188] sm:$0xf]
    %v188 = vld [vmem:[#allocation2 + $0x18c] sm:$0xf]
    %v189 = vld [vmem:[#allocation2 + $0x190] sm:$0xf]
    %v190 = vld [vmem:[#allocation2 + $0x194] sm:$0xf]
    %v191 = vld [vmem:[#allocation2 + $0x198] sm:$0xf]
    %v192 = vld [vmem:[#allocation2 + $0x19c] sm:$0xf]
    %v193 = vld [vmem:[#allocation2 + $0x1a0] sm:$0xf]
    %v194 = vld [vmem:[#allocation2 + $0x1a4] sm:$0xf]
    %v195 = vld [vmem:[#allocation2 + $0x1a8] sm:$0xf]
    %v196 = vld [vmem:[#allocation2 + $0x1ac] sm:$0xf]
    %v197 = vld [vmem:[#allocation2 + $0x1b0] sm:$0xf]
    %v198 = vld [vmem:[#allocation2 + $0x1b4] sm:$0xf]
    %v199 = vld [vmem:[#allocation2 + $0x1b8] sm:$0xf]
    %v200 = vld [vmem:[#allocation2 + $0x1bc] sm:$0xf]
    %v201 = vld [vmem:[#allocation2 + $0x1c0] sm:$0xf]
    %v202 = vld [vmem:[#allocation2 + $0x1c4] sm:$0xf]
    %v203 = vld [vmem:[#allocation2 + $0x1c8] sm:$0xf]
    %v204 = vld [vmem:[#allocation2 + $0x1cc] sm:$0xf]
    %v205 = vld [vmem:[#allocation2 + $0x1d0] sm:$0xf]
    %v206 = vld [vmem:[#allocation2 + $0x1d4] sm:$0xf]
    %v207 = vld [vmem:[#allocation2 + $0x1d8] sm:$0xf]
    %v208 = vld [vmem:[#allocation2 + $0x1dc] sm:$0xf]
    %v209 = vld [vmem:[#allocation2 + $0x1e0] sm:$0xf]
    %v210 = vld [vmem:[#allocation2 + $0x1e4] sm:$0xf]
    %v211 = vld [vmem:[#allocation2 + $0x1e8] sm:$0xf]
    %v212 = vld [vmem:[#allocation2 + $0x1ec] sm:$0xf]
    %v213 = vld [vmem:[#allocation2 + $0x1f0] sm:$0xf]
    %v214 = vld [vmem:[#allocation2 + $0x1f4] sm:$0xf]
    %v215 = vld [vmem:[#allocation2 + $0x1f8] sm:$0xf]
    %v216 = vld [vmem:[#allocation2 + $0x1fc] sm:$0xf]
    %v217 = vld [vmem:[#allocation2 + $0x200] sm:$0xf]
    %v218 = vld [vmem:[#allocation2 + $0x204] sm:$0xf]
    %v219 = vld [vmem:[#allocation2 + $0x208] sm:$0xf]
    %v220 = vld [vmem:[#allocation2 + $0x20c] sm:$0xf]
    %v221 = vld [vmem:[#allocation2 + $0x210] sm:$0xf]
    %v222 = vld [vmem:[#allocation2 + $0x214] sm:$0xf]
    %v223 = vld [vmem:[#allocation2 + $0x218] sm:$0xf]
    %v224 = vld [vmem:[#allocation2 + $0x21c] sm:$0xf]
    %v225 = vld [vmem:[#allocation2 + $0x220] sm:$0xf]
    %v226 = vld [vmem:[#allocation2 + $0x224] sm:$0xf]
    %v227 = vld [vmem:[#allocation2 + $0x228] sm:$0xf]
    %v228 = vld [vmem:[#allocation2 + $0x22c] sm:$0xf]
    %v229 = vld [vmem:[#allocation2 + $0x230] sm:$0xf]
    %v230 = vld [vmem:[#allocation2 + $0x234] sm:$0xf]
    %v231 = vld [vmem:[#allocation2 + $0x238] sm:$0xf]
    %v232 = vld [vmem:[#allocation2 + $0x23c] sm:$0xf]
    %v233 = vld [vmem:[#allocation2 + $0x240] sm:$0xf]
    %v234 = vld [vmem:[#allocation2 + $0x244] sm:$0xf]
    %v235 = vld [vmem:[#allocation2 + $0x248] sm:$0xf]
    %v236 = vld [vmem:[#allocation2 + $0x24c] sm:$0xf]
    %v237 = vld [vmem:[#allocation2 + $0x250] sm:$0xf]
    %v238 = vld [vmem:[#allocation2 + $0x254] sm:$0xf]
    %v239 = vld [vmem:[#allocation2 + $0x258] sm:$0xf]
    %v240 = vld [vmem:[#allocation2 + $0x25c] sm:$0xf]
    %v241 = vld [vmem:[#allocation2 + $0x260] sm:$0xf]
    %v242 = vld [vmem:[#allocation2 + $0x264] sm:$0xf]
    %v243 = vld [vmem:[#allocation2 + $0x268] sm:$0xf]
    %v244 = vld [vmem:[#allocation2 + $0x26c] sm:$0xf]
    %v245 = vld [vmem:[#allocation2 + $0x270] sm:$0xf]
    %v246 = vld [vmem:[#allocation2 + $0x274] sm:$0xf]
    %v247 = vld [vmem:[#allocation2 + $0x278] sm:$0xf]
    %v248 = vld [vmem:[#allocation2 + $0x27c] sm:$0xf]
    %v249 = vld [vmem:[#allocation2 + $0x280] sm:$0xf]
    %v250 = vld [vmem:[#allocation2 + $0x284] sm:$0xf]
    %v251 = vld [vmem:[#allocation2 + $0x288] sm:$0xf]
    %v252 = vld [vmem:[#allocation2 + $0x28c] sm:$0xf]
    %v253 = vld [vmem:[#allocation2 + $0x290] sm:$0xf]
    %v254 = vld [vmem:[#allocation2 + $0x294] sm:$0xf]
    %v255 = vld [vmem:[#allocation2 + $0x298] sm:$0xf]
    %v256 = vld [vmem:[#allocation2 + $0x29c] sm:$0xf]
    %v257 = vld [vmem:[#allocation2 + $0x2a0] sm:$0xf]
    %v258 = vld [vmem:[#allocation2 + $0x2a4] sm:$0xf]
    %v259 = vld [vmem:[#allocation2 + $0x2a8] sm:$0xf]
    %v260 = vld [vmem:[#allocation2 + $0x2ac] sm:$0xf]
    %v261 = vld [vmem:[#allocation2 + $0x2b0] sm:$0xf]
    %v262 = vld [vmem:[#allocation2 + $0x2b4] sm:$0xf]
    %v263 = vld [vmem:[#allocation2 + $0x2b8] sm:$0xf]
    %v264 = vld [vmem:[#allocation2 + $0x2bc] sm:$0xf]
    %v265 = vld [vmem:[#allocation2 + $0x2c0] sm:$0xf]
    %v266 = vld [vmem:[#allocation2 + $0x2c4] sm:$0xf]
    %v267 = vld [vmem:[#allocation2 + $0x2c8] sm:$0xf]
    %v268 = vld [vmem:[#allocation2 + $0x2cc] sm:$0xf]
    %v269 = vld [vmem:[#allocation2 + $0x2d0] sm:$0xf]
    %v270 = vld [vmem:[#allocation2 + $0x2d4] sm:$0xf]
    %v271 = vld [vmem:[#allocation2 + $0x2d8] sm:$0xf]
    %v272 = vld [vmem:[#allocation2 + $0x2dc] sm:$0xf]
    %v273 = vld [vmem:[#allocation2 + $0x2e0] sm:$0xf]
    %v274 = vld [vmem:[#allocation2 + $0x2e4] sm:$0xf]
    %v275 = vld [vmem:[#allocation2 + $0x2e8] sm:$0xf]
    %v276 = vld [vmem:[#allocation2 + $0x2ec] sm:$0xf]
    %v277 = vld [vmem:[#allocation2 + $0x2f0] sm:$0xf]
    %v278 = vld [vmem:[#allocation2 + $0x2f4] sm:$0xf]
    %v279 = vld [vmem:[#allocation2 + $0x2f8] sm:$0xf]
    %v280 = vld [vmem:[#allocation2 + $0x2fc] sm:$0xf]
    %v281 = vld [vmem:[#allocation2 + $0x300] sm:$0xf]
    %v282 = vld [vmem:[#allocation2 + $0x304] sm:$0xf]
    %v283 = vld [vmem:[#allocation2 + $0x308] sm:$0xf]
    %v284 = vld [vmem:[#allocation2 + $0x30c] sm:$0xf]
    %v285 = vld [vmem:[#allocation2 + $0x310] sm:$0xf]
    %v286 = vld [vmem:[#allocation2 + $0x314] sm:$0xf]
    %v287 = vld [vmem:[#allocation2 + $0x318] sm:$0xf]
    %v288 = vld [vmem:[#allocation2 + $0x31c] sm:$0xf]
    %v289 = vld [vmem:[#allocation2 + $0x320] sm:$0xf]
    %v290 = vld [vmem:[#allocation2 + $0x324] sm:$0xf]
    %v291 = vld [vmem:[#allocation2 + $0x328] sm:$0xf]
    %v292 = vld [vmem:[#allocation2 + $0x32c] sm:$0xf]
    %v293 = vld [vmem:[#allocation2 + $0x330] sm:$0xf]
    %v294 = vld [vmem:[#allocation2 + $0x334] sm:$0xf]
    %v295 = vld [vmem:[#allocation2 + $0x338] sm:$0xf]
    %v296 = vld [vmem:[#allocation2 + $0x33c] sm:$0xf]
    %v297 = vld [vmem:[#allocation2 + $0x340] sm:$0xf]
    %v298 = vld [vmem:[#allocation2 + $0x344] sm:$0xf]
    %v299 = vld [vmem:[#allocation2 + $0x348] sm:$0xf]
    %v300 = vld [vmem:[#allocation2 + $0x34c] sm:$0xf]
    %v301 = vld [vmem:[#allocation2 + $0x350] sm:$0xf]
    %v302 = vld [vmem:[#allocation2 + $0x354] sm:$0xf]
    %v303 = vld [vmem:[#allocation2 + $0x358] sm:$0xf]
    %v304 = vld [vmem:[#allocation2 + $0x35c] sm:$0xf]
    %v305 = vld [vmem:[#allocation2 + $0x360] sm:$0xf]
    %v306 = vld [vmem:[#allocation2 + $0x364] sm:$0xf]
    %v307 = vld [vmem:[#allocation2 + $0x368] sm:$0xf]
    %v308 = vld [vmem:[#allocation2 + $0x36c] sm:$0xf]
    %v309 = vld [vmem:[#allocation2 + $0x370] sm:$0xf]
    %v310 = vld [vmem:[#allocation2 + $0x374] sm:$0xf]
    %v311 = vld [vmem:[#allocation2 + $0x378] sm:$0xf]
    %v312 = vld [vmem:[#allocation2 + $0x37c] sm:$0xf]
    %v313 = vld [vmem:[#allocation2 + $0x380] sm:$0xf]
    %v314 = vld [vmem:[#allocation2 + $0x384] sm:$0xf]
    %v315 = vld [vmem:[#allocation2 + $0x388] sm:$0xf]
    %v316 = vld [vmem:[#allocation2 + $0x38c] sm:$0xf]
    %v317 = vld [vmem:[#allocation2 + $0x390] sm:$0xf]
    %v318 = vld [vmem:[#allocation2 + $0x394] sm:$0xf]
    %v319 = vld [vmem:[#allocation2 + $0x398] sm:$0xf]
    %v320 = vld [vmem:[#allocation2 + $0x39c] sm:$0xf]
    %v321 = vld [vmem:[#allocation2 + $0x3a0] sm:$0xf]
    %v322 = vld [vmem:[#allocation2 + $0x3a4] sm:$0xf]
    %v323 = vld [vmem:[#allocation2 + $0x3a8] sm:$0xf]
    %v324 = vld [vmem:[#allocation2 + $0x3ac] sm:$0xf]
    %v325 = vld [vmem:[#allocation2 + $0x3b0] sm:$0xf]
    %v326 = vld [vmem:[#allocation2 + $0x3b4] sm:$0xf]
    %v327 = vld [vmem:[#allocation2 + $0x3b8] sm:$0xf]
    %v328 = vld [vmem:[#allocation2 + $0x3bc] sm:$0xf]
    %v329 = vld [vmem:[#allocation2 + $0x3c0] sm:$0xf]
    %v330 = vld [vmem:[#allocation2 + $0x3c4] sm:$0xf]
    %v331 = vld [vmem:[#allocation2 + $0x3c8] sm:$0xf]
    %v332 = vld [vmem:[#allocation2 + $0x3cc] sm:$0xf]
    %v333 = vld [vmem:[#allocation2 + $0x3d0] sm:$0xf]
    %v334 = vld [vmem:[#allocation2 + $0x3d4] sm:$0xf]
    %v335 = vld [vmem:[#allocation2 + $0x3d8] sm:$0xf]
    %v336 = vld [vmem:[#allocation2 + $0x3dc] sm:$0xf]
    %v337 = vld [vmem:[#allocation2 + $0x3e0] sm:$0xf]
    %v338 = vld [vmem:[#allocation2 + $0x3e4] sm:$0xf]
    %v339 = vld [vmem:[#allocation2 + $0x3e8] sm:$0xf]
    %v340 = vld [vmem:[#allocation2 + $0x3ec] sm:$0xf]
    %v341 = vld [vmem:[#allocation2 + $0x3f0] sm:$0xf]
    %v342 = vld [vmem:[#allocation2 + $0x3f4] sm:$0xf]
    %v343 = vld [vmem:[#allocation2 + $0x3f8] sm:$0xf]
    %v344 = vld [vmem:[#allocation2 + $0x3fc] sm:$0xf]
    %v345 = vld [vmem:[#allocation2 + $0x400] sm:$0xf]
    %v346 = vld [vmem:[#allocation2 + $0x404] sm:$0xf]
    %v347 = vld [vmem:[#allocation2 + $0x408] sm:$0xf]
    %v348 = vld [vmem:[#allocation2 + $0x40c] sm:$0xf]
    %v349 = vld [vmem:[#allocation2 + $0x410] sm:$0xf]
    %v350 = vld [vmem:[#allocation2 + $0x414] sm:$0xf]
    %v351 = vld [vmem:[#allocation2 + $0x418] sm:$0xf]
    %v352 = vld [vmem:[#allocation2 + $0x41c] sm:$0xf]
    %v353 = vld [vmem:[#allocation2 + $0x420] sm:$0xf]
    %v354 = vld [vmem:[#allocation2 + $0x424] sm:$0xf]
    %v355 = vld [vmem:[#allocation2 + $0x428] sm:$0xf]
    %v356 = vld [vmem:[#allocation2 + $0x42c] sm:$0xf]
    %v357 = vld [vmem:[#allocation2 + $0x430] sm:$0xf]
    %v358 = vld [vmem:[#allocation2 + $0x434] sm:$0xf]
    %v359 = vld [vmem:[#allocation2 + $0x438] sm:$0xf]
    %v360 = vld [vmem:[#allocation2 + $0x43c] sm:$0xf]
    %v361 = vld [vmem:[#allocation2 + $0x440] sm:$0xf]
    %v362 = vld [vmem:[#allocation2 + $0x444] sm:$0xf]
    %v363 = vld [vmem:[#allocation2 + $0x448] sm:$0xf]
    %v364 = vld [vmem:[#allocation2 + $0x44c] sm:$0xf]
    %v365 = vld [vmem:[#allocation2 + $0x450] sm:$0xf]
    %v366 = vld [vmem:[#allocation2 + $0x454] sm:$0xf]
    %v367 = vld [vmem:[#allocation2 + $0x458] sm:$0xf]
    %v368 = vld [vmem:[#allocation2 + $0x45c] sm:$0xf]
    %v369 = vld [vmem:[#allocation2 + $0x460] sm:$0xf]
    %v370 = vld [vmem:[#allocation2 + $0x464] sm:$0xf]
    %v371 = vld [vmem:[#allocation2 + $0x468] sm:$0xf]
    %v372 = vld [vmem:[#allocation2 + $0x46c] sm:$0xf]
    %v373 = vld [vmem:[#allocation2 + $0x470] sm:$0xf]
    %v374 = vld [vmem:[#allocation2 + $0x474] sm:$0xf]
    %v375 = vld [vmem:[#allocation2 + $0x478] sm:$0xf]
    %v376 = vld [vmem:[#allocation2 + $0x47c] sm:$0xf]
    %v377 = vld [vmem:[#allocation2 + $0x480] sm:$0xf]
    %v378 = vld [vmem:[#allocation2 + $0x484] sm:$0xf]
    %v379 = vld [vmem:[#allocation2 + $0x488] sm:$0xf]
    %v380 = vld [vmem:[#allocation2 + $0x48c] sm:$0xf]
    %v381 = vld [vmem:[#allocation2 + $0x490] sm:$0xf]
    %v382 = vld [vmem:[#allocation2 + $0x494] sm:$0xf]
    %v383 = vld [vmem:[#allocation2 + $0x498] sm:$0xf]
    %v384 = vld [vmem:[#allocation2 + $0x49c] sm:$0xf]
    %v385 = vld [vmem:[#allocation2 + $0x4a0] sm:$0xf]
    %v386 = vld [vmem:[#allocation2 + $0x4a4] sm:$0xf]
    %v387 = vld [vmem:[#allocation2 + $0x4a8] sm:$0xf]
    %v388 = vld [vmem:[#allocation2 + $0x4ac] sm:$0xf]
    %v389 = vld [vmem:[#allocation2 + $0x4b0] sm:$0xf]
    %v390 = vld [vmem:[#allocation2 + $0x4b4] sm:$0xf]
    %v391 = vld [vmem:[#allocation2 + $0x4b8] sm:$0xf]
    %v392 = vld [vmem:[#allocation2 + $0x4bc] sm:$0xf]
    %v393 = vld [vmem:[#allocation2 + $0x4c0] sm:$0xf]
    %v394 = vld [vmem:[#allocation2 + $0x4c4] sm:$0xf]
    %v395 = vld [vmem:[#allocation2 + $0x4c8] sm:$0xf]
    %v396 = vld [vmem:[#allocation2 + $0x4cc] sm:$0xf]
    %v397 = vld [vmem:[#allocation2 + $0x4d0] sm:$0xf]
    %v398 = vld [vmem:[#allocation2 + $0x4d4] sm:$0xf]
    %v399 = vld [vmem:[#allocation2 + $0x4d8] sm:$0xf]
    %v400 = vld [vmem:[#allocation2 + $0x4dc] sm:$0xf]
    %v401 = vld [vmem:[#allocation2 + $0x4e0] sm:$0xf]
    %v402 = vld [vmem:[#allocation2 + $0x4e4] sm:$0xf]
    %v403 = vld [vmem:[#allocation2 + $0x4e8] sm:$0xf]
    %v404 = vld [vmem:[#allocation2 + $0x4ec] sm:$0xf]
    %v405 = vld [vmem:[#allocation2 + $0x4f0] sm:$0xf]
    %v406 = vld [vmem:[#allocation2 + $0x4f4] sm:$0xf]
    %v407 = vld [vmem:[#allocation2 + $0x4f8] sm:$0xf]
    %v408 = vld [vmem:[#allocation2 + $0x4fc] sm:$0xf]
    %v409 = vld [vmem:[#allocation2 + $0x500] sm:$0xf]
    %v410 = vld [vmem:[#allocation2 + $0x504] sm:$0xf]
    %v411 = vld [vmem:[#allocation2 + $0x508] sm:$0xf]
    %v412 = vld [vmem:[#allocation2 + $0x50c] sm:$0xf]
    %v413 = vld [vmem:[#allocation2 + $0x510] sm:$0xf]
    %v414 = vld [vmem:[#allocation2 + $0x514] sm:$0xf]
    %v415 = vld [vmem:[#allocation2 + $0x518] sm:$0xf]
    %v416 = vld [vmem:[#allocation2 + $0x51c] sm:$0xf]
    %v417 = vld [vmem:[#allocation2 + $0x520] sm:$0xf]
    %v418 = vld [vmem:[#allocation2 + $0x524] sm:$0xf]
    %v419 = vld [vmem:[#allocation2 + $0x528] sm:$0xf]
    %v420 = vld [vmem:[#allocation2 + $0x52c] sm:$0xf]
    %v421 = vld [vmem:[#allocation2 + $0x530] sm:$0xf]
    %v422 = vld [vmem:[#allocation2 + $0x534] sm:$0xf]
    %v423 = vld [vmem:[#allocation2 + $0x538] sm:$0xf]
    %v424 = vld [vmem:[#allocation2 + $0x53c] sm:$0xf]
    %v425 = vld [vmem:[#allocation2 + $0x540] sm:$0xf]
    %v426 = vld [vmem:[#allocation2 + $0x544] sm:$0xf]
    %v427 = vld [vmem:[#allocation2 + $0x548] sm:$0xf]
    %v428 = vld [vmem:[#allocation2 + $0x54c] sm:$0xf]
    %v429 = vld [vmem:[#allocation2 + $0x550] sm:$0xf]
    %v430 = vld [vmem:[#allocation2 + $0x554] sm:$0xf]
    %v431 = vld [vmem:[#allocation2 + $0x558] sm:$0xf]
    %v432 = vld [vmem:[#allocation2 + $0x55c] sm:$0xf]
    %v433 = vld [vmem:[#allocation2 + $0x560] sm:$0xf]
    %v434 = vld [vmem:[#allocation2 + $0x564] sm:$0xf]
    %v435 = vld [vmem:[#allocation2 + $0x568] sm:$0xf]
    %v436 = vld [vmem:[#allocation2 + $0x56c] sm:$0xf]
    %v437 = vld [vmem:[#allocation2 + $0x570] sm:$0xf]
    %v438 = vld [vmem:[#allocation2 + $0x574] sm:$0xf]
    %v439 = vld [vmem:[#allocation2 + $0x578] sm:$0xf]
    %v440 = vld [vmem:[#allocation2 + $0x57c] sm:$0xf]
    %v441 = vld [vmem:[#allocation2 + $0x580] sm:$0xf]
    %v442 = vld [vmem:[#allocation2 + $0x584] sm:$0xf]
    %v443 = vld [vmem:[#allocation2 + $0x588] sm:$0xf]
    %v444 = vld [vmem:[#allocation2 + $0x58c] sm:$0xf]
    %v445 = vld [vmem:[#allocation2 + $0x590] sm:$0xf]
    %v446 = vld [vmem:[#allocation2 + $0x594] sm:$0xf]
    %v447 = vld [vmem:[#allocation2 + $0x598] sm:$0xf]
    %v448 = vld [vmem:[#allocation2 + $0x59c] sm:$0xf]
    %v449 = vld [vmem:[#allocation2 + $0x5a0] sm:$0xf]
    %v450 = vld [vmem:[#allocation2 + $0x5a4] sm:$0xf]
    %v451 = vld [vmem:[#allocation2 + $0x5a8] sm:$0xf]
    %v452 = vld [vmem:[#allocation2 + $0x5ac] sm:$0xf]
    %v453 = vld [vmem:[#allocation2 + $0x5b0] sm:$0xf]
    %v454 = vld [vmem:[#allocation2 + $0x5b4] sm:$0xf]
    %v455 = vld [vmem:[#allocation2 + $0x5b8] sm:$0xf]
    %v456 = vld [vmem:[#allocation2 + $0x5bc] sm:$0xf]
    %v457 = vld [vmem:[#allocation2 + $0x5c0] sm:$0xf]
    %v458 = vld [vmem:[#allocation2 + $0x5c4] sm:$0xf]
    %v459 = vld [vmem:[#allocation2 + $0x5c8] sm:$0xf]
    %v460 = vld [vmem:[#allocation2 + $0x5cc] sm:$0xf]
    %v461 = vld [vmem:[#allocation2 + $0x5d0] sm:$0xf]
    %v462 = vld [vmem:[#allocation2 + $0x5d4] sm:$0xf]
    %v463 = vld [vmem:[#allocation2 + $0x5d8] sm:$0xf]
    %v464 = vld [vmem:[#allocation2 + $0x5dc] sm:$0xf]
    %v465 = vld [vmem:[#allocation2 + $0x5e0] sm:$0xf]
    %v466 = vld [vmem:[#allocation2 + $0x5e4] sm:$0xf]
    %v467 = vld [vmem:[#allocation2 + $0x5e8] sm:$0xf]
    %v468 = vld [vmem:[#allocation2 + $0x5ec] sm:$0xf]
    %v469 = vld [vmem:[#allocation2 + $0x5f0] sm:$0xf]
    %v470 = vld [vmem:[#allocation2 + $0x5f4] sm:$0xf]
    %v471 = vld [vmem:[#allocation2 + $0x5f8] sm:$0xf]
    %v472 = vld [vmem:[#allocation2 + $0x5fc] sm:$0xf]
    %v473 = vld [vmem:[#allocation2 + $0x600] sm:$0xf]
    %v474 = vld [vmem:[#allocation2 + $0x604] sm:$0xf]
    %v475 = vld [vmem:[#allocation2 + $0x608] sm:$0xf]
    %v476 = vld [vmem:[#allocation2 + $0x60c] sm:$0xf]
    %v477 = vld [vmem:[#allocation2 + $0x610] sm:$0xf]
    %v478 = vld [vmem:[#allocation2 + $0x614] sm:$0xf]
    %v479 = vld [vmem:[#allocation2 + $0x618] sm:$0xf]
    %v480 = vld [vmem:[#allocation2 + $0x61c] sm:$0xf]
    %v481 = vld [vmem:[#allocation2 + $0x620] sm:$0xf]
    %v482 = vld [vmem:[#allocation2 + $0x624] sm:$0xf]
    %v483 = vld [vmem:[#allocation2 + $0x628] sm:$0xf]
    %v484 = vld [vmem:[#allocation2 + $0x62c] sm:$0xf]
    %v485 = vld [vmem:[#allocation2 + $0x630] sm:$0xf]
    %v486 = vld [vmem:[#allocation2 + $0x634] sm:$0xf]
    %v487 = vld [vmem:[#allocation2 + $0x638] sm:$0xf]
    %v488 = vld [vmem:[#allocation2 + $0x63c] sm:$0xf]
    %v489 = vld [vmem:[#allocation2 + $0x640] sm:$0xf]
    %v490 = vld [vmem:[#allocation2 + $0x644] sm:$0xf]
    %v491 = vld [vmem:[#allocation2 + $0x648] sm:$0xf]
    %v492 = vld [vmem:[#allocation2 + $0x64c] sm:$0xf]
    %v493 = vld [vmem:[#allocation2 + $0x650] sm:$0xf]
    %v494 = vld [vmem:[#allocation2 + $0x654] sm:$0xf]
    %v495 = vld [vmem:[#allocation2 + $0x658] sm:$0xf]
    %v496 = vld [vmem:[#allocation2 + $0x65c] sm:$0xf]
    %v497 = vld [vmem:[#allocation2 + $0x660] sm:$0xf]
    %v498 = vld [vmem:[#allocation2 + $0x664] sm:$0xf]
    %v499 = vld [vmem:[#allocation2 + $0x668] sm:$0xf]
    %v500 = vld [vmem:[#allocation2 + $0x66c] sm:$0xf]
    %v501 = vld [vmem:[#allocation2 + $0x670] sm:$0xf]
    %v502 = vld [vmem:[#allocation2 + $0x674] sm:$0xf]
    %v503 = vld [vmem:[#allocation2 + $0x678] sm:$0xf]
    %v504 = vld [vmem:[#allocation2 + $0x67c] sm:$0xf]
    %v505 = vld [vmem:[#allocation2 + $0x680] sm:$0xf]
    %v506 = vld [vmem:[#allocation2 + $0x684] sm:$0xf]
    %v507 = vld [vmem:[#allocation2 + $0x688] sm:$0xf]
    %v508 = vld [vmem:[#allocation2 + $0x68c] sm:$0xf]
    %v509 = vld [vmem:[#allocation2 + $0x690] sm:$0xf]
    %v510 = vld [vmem:[#allocation2 + $0x694] sm:$0xf]
    %v511 = vld [vmem:[#allocation2 + $0x698] sm:$0xf]
    %v512 = vld [vmem:[#allocation2 + $0x69c] sm:$0xf]
    %v513 = vld [vmem:[#allocation2 + $0x6a0] sm:$0xf]
    %v514 = vld [vmem:[#allocation2 + $0x6a4] sm:$0xf]
    %v515 = vld [vmem:[#allocation2 + $0x6a8] sm:$0xf]
    %v516 = vld [vmem:[#allocation2 + $0x6ac] sm:$0xf]
    %v517 = vld [vmem:[#allocation2 + $0x6b0] sm:$0xf]
    %v518 = vld [vmem:[#allocation2 + $0x6b4] sm:$0xf]
    %v519 = vld [vmem:[#allocation2 + $0x6b8] sm:$0xf]
    %v520 = vld [vmem:[#allocation2 + $0x6bc] sm:$0xf]
    %v521 = vld [vmem:[#allocation2 + $0x6c0] sm:$0xf]
    %v522 = vld [vmem:[#allocation2 + $0x6c4] sm:$0xf]
    %v523 = vld [vmem:[#allocation2 + $0x6c8] sm:$0xf]
    %v524 = vld [vmem:[#allocation2 + $0x6cc] sm:$0xf]
    %v525 = vld [vmem:[#allocation2 + $0x6d0] sm:$0xf]
    %v526 = vld [vmem:[#allocation2 + $0x6d4] sm:$0xf]
    %v527 = vld [vmem:[#allocation2 + $0x6d8] sm:$0xf]
    %v528 = vld [vmem:[#allocation2 + $0x6dc] sm:$0xf]
    %v529 = vld [vmem:[#allocation2 + $0x6e0] sm:$0xf]
    %v530 = vld [vmem:[#allocation2 + $0x6e4] sm:$0xf]
    %v531 = vld [vmem:[#allocation2 + $0x6e8] sm:$0xf]
    %v532 = vld [vmem:[#allocation2 + $0x6ec] sm:$0xf]
    %v533 = vld [vmem:[#allocation2 + $0x6f0] sm:$0xf]
    %v534 = vld [vmem:[#allocation2 + $0x6f4] sm:$0xf]
    %v535 = vld [vmem:[#allocation2 + $0x6f8] sm:$0xf]
    %v536 = vld [vmem:[#allocation2 + $0x6fc] sm:$0xf]
    %v537 = vld [vmem:[#allocation2 + $0x700] sm:$0xf]
    %v538 = vld [vmem:[#allocation2 + $0x704] sm:$0xf]
    %v539 = vld [vmem:[#allocation2 + $0x708] sm:$0xf]
    %v540 = vld [vmem:[#allocation2 + $0x70c] sm:$0xf]
    %v541 = vld [vmem:[#allocation2 + $0x710] sm:$0xf]
    %v542 = vld [vmem:[#allocation2 + $0x714] sm:$0xf]
    %v543 = vld [vmem:[#allocation2 + $0x718] sm:$0xf]
    %v544 = vld [vmem:[#allocation2 + $0x71c] sm:$0xf]
    %v545 = vld [vmem:[#allocation2 + $0x720] sm:$0xf]
    %v546 = vld [vmem:[#allocation2 + $0x724] sm:$0xf]
    %v547 = vld [vmem:[#allocation2 + $0x728] sm:$0xf]
    %v548 = vld [vmem:[#allocation2 + $0x72c] sm:$0xf]
    %v549 = vld [vmem:[#allocation2 + $0x730] sm:$0xf]
    %v550 = vld [vmem:[#allocation2 + $0x734] sm:$0xf]
    %v551 = vld [vmem:[#allocation2 + $0x738] sm:$0xf]
    %v552 = vld [vmem:[#allocation2 + $0x73c] sm:$0xf]
    %v553 = vld [vmem:[#allocation2 + $0x740] sm:$0xf]
    %v554 = vld [vmem:[#allocation2 + $0x744] sm:$0xf]
    %v555 = vld [vmem:[#allocation2 + $0x748] sm:$0xf]
    %v556 = vld [vmem:[#allocation2 + $0x74c] sm:$0xf]
    %v557 = vld [vmem:[#allocation2 + $0x750] sm:$0xf]
    %v558 = vld [vmem:[#allocation2 + $0x754] sm:$0xf]
    %v559 = vld [vmem:[#allocation2 + $0x758] sm:$0xf]
    %v560 = vld [vmem:[#allocation2 + $0x75c] sm:$0xf]
    %v561 = vld [vmem:[#allocation2 + $0x760] sm:$0xf]
    %v562 = vld [vmem:[#allocation2 + $0x764] sm:$0xf]
    %v563 = vld [vmem:[#allocation2 + $0x768] sm:$0xf]
    %v564 = vld [vmem:[#allocation2 + $0x76c] sm:$0xf]
    %v565 = vld [vmem:[#allocation2 + $0x770] sm:$0xf]
    %v566 = vld [vmem:[#allocation2 + $0x774] sm:$0xf]
    %v567 = vld [vmem:[#allocation2 + $0x778] sm:$0xf]
    %v568 = vld [vmem:[#allocation2 + $0x77c] sm:$0xf]
    %v569 = vld [vmem:[#allocation2 + $0x780] sm:$0xf]
    %v570 = vld [vmem:[#allocation2 + $0x784] sm:$0xf]
    %v571 = vld [vmem:[#allocation2 + $0x788] sm:$0xf]
    %v572 = vld [vmem:[#allocation2 + $0x78c] sm:$0xf]
    %v573 = vld [vmem:[#allocation2 + $0x790] sm:$0xf]
    %v574 = vld [vmem:[#allocation2 + $0x794] sm:$0xf]
    %v575 = vld [vmem:[#allocation2 + $0x798] sm:$0xf]
    %v576 = vld [vmem:[#allocation2 + $0x79c] sm:$0xf]
    %v577 = vld [vmem:[#allocation2 + $0x7a0] sm:$0xf]
    %v578 = vld [vmem:[#allocation2 + $0x7a4] sm:$0xf]
    %v579 = vld [vmem:[#allocation2 + $0x7a8] sm:$0xf]
    %v580 = vld [vmem:[#allocation2 + $0x7ac] sm:$0xf]
    %v581 = vld [vmem:[#allocation2 + $0x7b0] sm:$0xf]
    %v582 = vld [vmem:[#allocation2 + $0x7b4] sm:$0xf]
    %v583 = vld [vmem:[#allocation2 + $0x7b8] sm:$0xf]
    %v584 = vld [vmem:[#allocation2 + $0x7bc] sm:$0xf]
    %v585 = vld [vmem:[#allocation2 + $0x7c0] sm:$0xf]
    %v586 = vld [vmem:[#allocation2 + $0x7c4] sm:$0xf]
    %v587 = vld [vmem:[#allocation2 + $0x7c8] sm:$0xf]
    %v588 = vld [vmem:[#allocation2 + $0x7cc] sm:$0xf]
    %v589 = vld [vmem:[#allocation2 + $0x7d0] sm:$0xf]
    %v590 = vld [vmem:[#allocation2 + $0x7d4] sm:$0xf]
    %v591 = vld [vmem:[#allocation2 + $0x7d8] sm:$0xf]
    %v592 = vld [vmem:[#allocation2 + $0x7dc] sm:$0xf]
    %v593 = vld [vmem:[#allocation2 + $0x7e0] sm:$0xf]
    %v594 = vld [vmem:[#allocation2 + $0x7e4] sm:$0xf]
    %v595 = vld [vmem:[#allocation2 + $0x7e8] sm:$0xf]
    %v596 = vld [vmem:[#allocation2 + $0x7ec] sm:$0xf]
    %v597 = vld [vmem:[#allocation2 + $0x7f0] sm:$0xf]
    %v598 = vld [vmem:[#allocation2 + $0x7f4] sm:$0xf]
    %v599 = vld [vmem:[#allocation2 + $0x7f8] sm:$0xf]
    %v600 = vld [vmem:[#allocation2 + $0x7fc] sm:$0xf]
    %v601 = vld [vmem:[#allocation2 + $0x800] sm:$0xf]
    %v602 = vld [vmem:[#allocation2 + $0x804] sm:$0xf]
    %v603 = vld [vmem:[#allocation2 + $0x808] sm:$0xf]
    %v604 = vld [vmem:[#allocation2 + $0x80c] sm:$0xf]
    %v605 = vld [vmem:[#allocation2 + $0x810] sm:$0xf]
    %v606 = vld [vmem:[#allocation2 + $0x814] sm:$0xf]
    %v607 = vld [vmem:[#allocation2 + $0x818] sm:$0xf]
    %v608 = vld [vmem:[#allocation2 + $0x81c] sm:$0xf]
    %v609 = vld [vmem:[#allocation2 + $0x820] sm:$0xf]
    %v610 = vld [vmem:[#allocation2 + $0x824] sm:$0xf]
    %v611 = vld [vmem:[#allocation2 + $0x828] sm:$0xf]
    %v612 = vld [vmem:[#allocation2 + $0x82c] sm:$0xf]
    %v613 = vld [vmem:[#allocation2 + $0x830] sm:$0xf]
    %v614 = vld [vmem:[#allocation2 + $0x834] sm:$0xf]
    %v615 = vld [vmem:[#allocation2 + $0x838] sm:$0xf]
    %v616 = vld [vmem:[#allocation2 + $0x83c] sm:$0xf]
    %v617 = vld [vmem:[#allocation2 + $0x840] sm:$0xf]
    %v618 = vld [vmem:[#allocation2 + $0x844] sm:$0xf]
    %v619 = vld [vmem:[#allocation2 + $0x848] sm:$0xf]
    %v620 = vld [vmem:[#allocation2 + $0x84c] sm:$0xf]
    %v621 = vld [vmem:[#allocation2 + $0x850] sm:$0xf]
    %v622 = vld [vmem:[#allocation2 + $0x854] sm:$0xf]
    %v623 = vld [vmem:[#allocation2 + $0x858] sm:$0xf]
    %v624 = vld [vmem:[#allocation2 + $0x85c] sm:$0xf]
    %v625 = vld [vmem:[#allocation2 + $0x860] sm:$0xf]
    %v626 = vld [vmem:[#allocation2 + $0x864] sm:$0xf]
    %v627 = vld [vmem:[#allocation2 + $0x868] sm:$0xf]
    %v628 = vld [vmem:[#allocation2 + $0x86c] sm:$0xf]
    %v629 = vld [vmem:[#allocation2 + $0x870] sm:$0xf]
    %v630 = vld [vmem:[#allocation2 + $0x874] sm:$0xf]
    %v631 = vld [vmem:[#allocation2 + $0x878] sm:$0xf]
    %v632 = vld [vmem:[#allocation2 + $0x87c] sm:$0xf]
    %v633 = vld [vmem:[#allocation2 + $0x880] sm:$0xf]
    %v634 = vld [vmem:[#allocation2 + $0x884] sm:$0xf]
    %v635 = vld [vmem:[#allocation2 + $0x888] sm:$0xf]
    %v636 = vld [vmem:[#allocation2 + $0x88c] sm:$0xf]
    %v637 = vld [vmem:[#allocation2 + $0x890] sm:$0xf]
    %v638 = vld [vmem:[#allocation2 + $0x894] sm:$0xf]
    %v639 = vld [vmem:[#allocation2 + $0x898] sm:$0xf]
    %v640 = vld [vmem:[#allocation2 + $0x89c] sm:$0xf]
    %v641 = vld [vmem:[#allocation2 + $0x8a0] sm:$0xf]
    %v642 = vld [vmem:[#allocation2 + $0x8a4] sm:$0xf]
    %v643 = vld [vmem:[#allocation2 + $0x8a8] sm:$0xf]
    %v644 = vld [vmem:[#allocation2 + $0x8ac] sm:$0xf]
    %v645 = vld [vmem:[#allocation2 + $0x8b0] sm:$0xf]
    %v646 = vld [vmem:[#allocation2 + $0x8b4] sm:$0xf]
    %v647 = vld [vmem:[#allocation2 + $0x8b8] sm:$0xf]
    %v648 = vld [vmem:[#allocation2 + $0x8bc] sm:$0xf]
    %v649 = vld [vmem:[#allocation2 + $0x8c0] sm:$0xf]
    %v650 = vld [vmem:[#allocation2 + $0x8c4] sm:$0xf]
    %v651 = vld [vmem:[#allocation2 + $0x8c8] sm:$0xf]
    %v652 = vld [vmem:[#allocation2 + $0x8cc] sm:$0xf]
    %v653 = vld [vmem:[#allocation2 + $0x8d0] sm:$0xf]
    %v654 = vld [vmem:[#allocation2 + $0x8d4] sm:$0xf]
    %v655 = vld [vmem:[#allocation2 + $0x8d8] sm:$0xf]
    %v656 = vld [vmem:[#allocation2 + $0x8dc] sm:$0xf]
    %v657 = vld [vmem:[#allocation2 + $0x8e0] sm:$0xf]
    %v658 = vld [vmem:[#allocation2 + $0x8e4] sm:$0xf]
    %v659 = vld [vmem:[#allocation2 + $0x8e8] sm:$0xf]
    %v660 = vld [vmem:[#allocation2 + $0x8ec] sm:$0xf]
    %v661 = vld [vmem:[#allocation2 + $0x8f0] sm:$0xf]
    %v662 = vld [vmem:[#allocation2 + $0x8f4] sm:$0xf]
    %v663 = vld [vmem:[#allocation2 + $0x8f8] sm:$0xf]
    %v664 = vld [vmem:[#allocation2 + $0x8fc] sm:$0xf]
    %v665 = vld [vmem:[#allocation2 + $0x900] sm:$0xf]
    %v666 = vld [vmem:[#allocation2 + $0x904] sm:$0xf]
    %v667 = vld [vmem:[#allocation2 + $0x908] sm:$0xf]
    %v668 = vld [vmem:[#allocation2 + $0x90c] sm:$0xf]
    %v669 = vld [vmem:[#allocation2 + $0x910] sm:$0xf]
    %v670 = vld [vmem:[#allocation2 + $0x914] sm:$0xf]
    %v671 = vld [vmem:[#allocation2 + $0x918] sm:$0xf]
    %v672 = vld [vmem:[#allocation2 + $0x91c] sm:$0xf]
    %v673 = vld [vmem:[#allocation2 + $0x920] sm:$0xf]
    %v674 = vld [vmem:[#allocation2 + $0x924] sm:$0xf]
    %v675 = vld [vmem:[#allocation2 + $0x928] sm:$0xf]
    %v676 = vld [vmem:[#allocation2 + $0x92c] sm:$0xf]
    %v677 = vld [vmem:[#allocation2 + $0x930] sm:$0xf]
    %v678 = vld [vmem:[#allocation2 + $0x934] sm:$0xf]
    %v679 = vld [vmem:[#allocation2 + $0x938] sm:$0xf]
    %v680 = vld [vmem:[#allocation2 + $0x93c] sm:$0xf]
    %v681 = vld [vmem:[#allocation2 + $0x940] sm:$0xf]
    %v682 = vld [vmem:[#allocation2 + $0x944] sm:$0xf]
    %v683 = vld [vmem:[#allocation2 + $0x948] sm:$0xf]
    %v684 = vld [vmem:[#allocation2 + $0x94c] sm:$0xf]
    %v685 = vld [vmem:[#allocation2 + $0x950] sm:$0xf]
    %v686 = vld [vmem:[#allocation2 + $0x954] sm:$0xf]
    %v687 = vld [vmem:[#allocation2 + $0x958] sm:$0xf]
    %v688 = vld [vmem:[#allocation2 + $0x95c] sm:$0xf]
    %v689 = vld [vmem:[#allocation2 + $0x960] sm:$0xf]
    %v690 = vld [vmem:[#allocation2 + $0x964] sm:$0xf]
    %v691 = vld [vmem:[#allocation2 + $0x968] sm:$0xf]
    %v692 = vld [vmem:[#allocation2 + $0x96c] sm:$0xf]
    %v693 = vld [vmem:[#allocation2 + $0x970] sm:$0xf]
    %v694 = vld [vmem:[#allocation2 + $0x974] sm:$0xf]
    %v695 = vld [vmem:[#allocation2 + $0x978] sm:$0xf]
    %v696 = vld [vmem:[#allocation2 + $0x97c] sm:$0xf]
    %v697 = vld [vmem:[#allocation2 + $0x980] sm:$0xf]
    %v698 = vld [vmem:[#allocation2 + $0x984] sm:$0xf]
    %v699 = vld [vmem:[#allocation2 + $0x988] sm:$0xf]
    %v700 = vld [vmem:[#allocation2 + $0x98c] sm:$0xf]
    %v701 = vld [vmem:[#allocation2 + $0x990] sm:$0xf]
    %v702 = vld [vmem:[#allocation2 + $0x994] sm:$0xf]
    %v703 = vld [vmem:[#allocation2 + $0x998] sm:$0xf]
    %v704 = vld [vmem:[#allocation2 + $0x99c] sm:$0xf]
    %v705 = vld [vmem:[#allocation2 + $0x9a0] sm:$0xf]
    %v706 = vld [vmem:[#allocation2 + $0x9a4] sm:$0xf]
    %v707 = vld [vmem:[#allocation2 + $0x9a8] sm:$0xf]
    %v708 = vld [vmem:[#allocation2 + $0x9ac] sm:$0xf]
    %v709 = vld [vmem:[#allocation2 + $0x9b0] sm:$0xf]
    %v710 = vld [vmem:[#allocation2 + $0x9b4] sm:$0xf]
    %v711 = vld [vmem:[#allocation2 + $0x9b8] sm:$0xf]
    %v712 = vld [vmem:[#allocation2 + $0x9bc] sm:$0xf]
    %v713 = vld [vmem:[#allocation2 + $0x9c0] sm:$0xf]
    %v714 = vld [vmem:[#allocation2 + $0x9c4] sm:$0xf]
    %v715 = vld [vmem:[#allocation2 + $0x9c8] sm:$0xf]
    %v716 = vld [vmem:[#allocation2 + $0x9cc] sm:$0xf]
    %v717 = vld [vmem:[#allocation2 + $0x9d0] sm:$0xf]
    %v718 = vld [vmem:[#allocation2 + $0x9d4] sm:$0xf]
    %v719 = vld [vmem:[#allocation2 + $0x9d8] sm:$0xf]
    %v720 = vld [vmem:[#allocation2 + $0x9dc] sm:$0xf]
    %v721 = vld [vmem:[#allocation2 + $0x9e0] sm:$0xf]
    %v722 = vld [vmem:[#allocation2 + $0x9e4] sm:$0xf]
    %v723 = vld [vmem:[#allocation2 + $0x9e8] sm:$0xf]
    %v724 = vld [vmem:[#allocation2 + $0x9ec] sm:$0xf]
    %v725 = vld [vmem:[#allocation2 + $0x9f0] sm:$0xf]
    %v726 = vld [vmem:[#allocation2 + $0x9f4] sm:$0xf]
    %v727 = vld [vmem:[#allocation2 + $0x9f8] sm:$0xf]
    %v728 = vld [vmem:[#allocation2 + $0x9fc] sm:$0xf]
    %v729 = vld [vmem:[#allocation2 + $0xa00] sm:$0xf]
    %v730 = vld [vmem:[#allocation2 + $0xa04] sm:$0xf]
    %v731 = vld [vmem:[#allocation2 + $0xa08] sm:$0xf]
    %v732 = vld [vmem:[#allocation2 + $0xa0c] sm:$0xf]
    %v733 = vld [vmem:[#allocation2 + $0xa10] sm:$0xf]
    %v734 = vld [vmem:[#allocation2 + $0xa14] sm:$0xf]
    %v735 = vld [vmem:[#allocation2 + $0xa18] sm:$0xf]
    %v736 = vld [vmem:[#allocation2 + $0xa1c] sm:$0xf]
    %v737 = vld [vmem:[#allocation2 + $0xa20] sm:$0xf]
    %v738 = vld [vmem:[#allocation2 + $0xa24] sm:$0xf]
    %v739 = vld [vmem:[#allocation2 + $0xa28] sm:$0xf]
    %v740 = vld [vmem:[#allocation2 + $0xa2c] sm:$0xf]
    %v741 = vld [vmem:[#allocation2 + $0xa30] sm:$0xf]
    %v742 = vld [vmem:[#allocation2 + $0xa34] sm:$0xf]
    %v743 = vld [vmem:[#allocation2 + $0xa38] sm:$0xf]
    %v744 = vld [vmem:[#allocation2 + $0xa3c] sm:$0xf]
    %v745 = vld [vmem:[#allocation2 + $0xa40] sm:$0xf]
    %v746 = vld [vmem:[#allocation2 + $0xa44] sm:$0xf]
    %v747 = vld [vmem:[#allocation2 + $0xa48] sm:$0xf]
    %v748 = vld [vmem:[#allocation2 + $0xa4c] sm:$0xf]
    %v749 = vld [vmem:[#allocation2 + $0xa50] sm:$0xf]
    %v750 = vld [vmem:[#allocation2 + $0xa54] sm:$0xf]
    %v751 = vld [vmem:[#allocation2 + $0xa58] sm:$0xf]
    %v752 = vld [vmem:[#allocation2 + $0xa5c] sm:$0xf]
    %v753 = vld [vmem:[#allocation2 + $0xa60] sm:$0xf]
    %v754 = vld [vmem:[#allocation2 + $0xa64] sm:$0xf]
    %v755 = vld [vmem:[#allocation2 + $0xa68] sm:$0xf]
    %v756 = vld [vmem:[#allocation2 + $0xa6c] sm:$0xf]
    %v757 = vld [vmem:[#allocation2 + $0xa70] sm:$0xf]
    %v758 = vld [vmem:[#allocation2 + $0xa74] sm:$0xf]
    %v759 = vld [vmem:[#allocation2 + $0xa78] sm:$0xf]
    %v760 = vld [vmem:[#allocation2 + $0xa7c] sm:$0xf]
    %v761 = vld [vmem:[#allocation2 + $0xa80] sm:$0xf]
    %v762 = vld [vmem:[#allocation2 + $0xa84] sm:$0xf]
    %v763 = vld [vmem:[#allocation2 + $0xa88] sm:$0xf]
    %v764 = vld [vmem:[#allocation2 + $0xa8c] sm:$0xf]
    %v765 = vld [vmem:[#allocation2 + $0xa90] sm:$0xf]
    %v766 = vld [vmem:[#allocation2 + $0xa94] sm:$0xf]
    %v767 = vld [vmem:[#allocation2 + $0xa98] sm:$0xf]
    %v768 = vld [vmem:[#allocation2 + $0xa9c] sm:$0xf]
    %v769 = vld [vmem:[#allocation2 + $0xaa0] sm:$0xf]
    %v770 = vld [vmem:[#allocation2 + $0xaa4] sm:$0xf]
    %v771 = vld [vmem:[#allocation2 + $0xaa8] sm:$0xf]
    %v772 = vld [vmem:[#allocation2 + $0xaac] sm:$0xf]
    %v773 = vld [vmem:[#allocation2 + $0xab0] sm:$0xf]
    %v774 = vld [vmem:[#allocation2 + $0xab4] sm:$0xf]
    %v775 = vld [vmem:[#allocation2 + $0xab8] sm:$0xf]
    %v776 = vld [vmem:[#allocation2 + $0xabc] sm:$0xf]
    %v777 = vld [vmem:[#allocation2 + $0xac0] sm:$0xf]
    %v778 = vld [vmem:[#allocation2 + $0xac4] sm:$0xf]
    %v779 = vld [vmem:[#allocation2 + $0xac8] sm:$0xf]
    %v780 = vld [vmem:[#allocation2 + $0xacc] sm:$0xf]
    %v781 = vld [vmem:[#allocation2 + $0xad0] sm:$0xf]
    %v782 = vld [vmem:[#allocation2 + $0xad4] sm:$0xf]
    %v783 = vld [vmem:[#allocation2 + $0xad8] sm:$0xf]
    %v784 = vld [vmem:[#allocation2 + $0xadc] sm:$0xf]
    %v785 = vld [vmem:[#allocation2 + $0xae0] sm:$0xf]
    %v786 = vld [vmem:[#allocation2 + $0xae4] sm:$0xf]
    %v787 = vld [vmem:[#allocation2 + $0xae8] sm:$0xf]
    %v788 = vld [vmem:[#allocation2 + $0xaec] sm:$0xf]
    %v789 = vld [vmem:[#allocation2 + $0xaf0] sm:$0xf]
    %v790 = vld [vmem:[#allocation2 + $0xaf4] sm:$0xf]
    %v791 = vld [vmem:[#allocation2 + $0xaf8] sm:$0xf]
    %v792 = vld [vmem:[#allocation2 + $0xafc] sm:$0xf]
    %v793 = vld [vmem:[#allocation2 + $0xb00] sm:$0xf]
    %v794 = vld [vmem:[#allocation2 + $0xb04] sm:$0xf]
    %v795 = vld [vmem:[#allocation2 + $0xb08] sm:$0xf]
    %v796 = vld [vmem:[#allocation2 + $0xb0c] sm:$0xf]
    %v797 = vld [vmem:[#allocation2 + $0xb10] sm:$0xf]
    %v798 = vld [vmem:[#allocation2 + $0xb14] sm:$0xf]
    %v799 = vld [vmem:[#allocation2 + $0xb18] sm:$0xf]
    %v800 = vld [vmem:[#allocation2 + $0xb1c] sm:$0xf]
    %v801 = vld [vmem:[#allocation2 + $0xb20] sm:$0xf]
    %v802 = vld [vmem:[#allocation2 + $0xb24] sm:$0xf]
    %v803 = vld [vmem:[#allocation2 + $0xb28] sm:$0xf]
    %v804 = vld [vmem:[#allocation2 + $0xb2c] sm:$0xf]
    %v805 = vld [vmem:[#allocation2 + $0xb30] sm:$0xf]
    %v806 = vld [vmem:[#allocation2 + $0xb34] sm:$0xf]
    %v807 = vld [vmem:[#allocation2 + $0xb38] sm:$0xf]
    %v808 = vld [vmem:[#allocation2 + $0xb3c] sm:$0xf]
    %v809 = vld [vmem:[#allocation2 + $0xb40] sm:$0xf]
    %v810 = vld [vmem:[#allocation2 + $0xb44] sm:$0xf]
    %v811 = vld [vmem:[#allocation2 + $0xb48] sm:$0xf]
    %v812 = vld [vmem:[#allocation2 + $0xb4c] sm:$0xf]
    %v813 = vld [vmem:[#allocation2 + $0xb50] sm:$0xf]
    %v814 = vld [vmem:[#allocation2 + $0xb54] sm:$0xf]
    %v815 = vld [vmem:[#allocation2 + $0xb58] sm:$0xf]
    %v816 = vld [vmem:[#allocation2 + $0xb5c] sm:$0xf]
    %v817 = vld [vmem:[#allocation2 + $0xb60] sm:$0xf]
    %v818 = vld [vmem:[#allocation2 + $0xb64] sm:$0xf]
    %v819 = vld [vmem:[#allocation2 + $0xb68] sm:$0xf]
    %v820 = vld [vmem:[#allocation2 + $0xb6c] sm:$0xf]
    %v821 = vld [vmem:[#allocation2 + $0xb70] sm:$0xf]
    %v822 = vld [vmem:[#allocation2 + $0xb74] sm:$0xf]
    %v823 = vld [vmem:[#allocation2 + $0xb78] sm:$0xf]
    %v824 = vld [vmem:[#allocation2 + $0xb7c] sm:$0xf]
    %v825 = vld [vmem:[#allocation2 + $0xb80] sm:$0xf]
    %v826 = vld [vmem:[#allocation2 + $0xb84] sm:$0xf]
    %v827 = vld [vmem:[#allocation2 + $0xb88] sm:$0xf]
    %v828 = vld [vmem:[#allocation2 + $0xb8c] sm:$0xf]
    %v829 = vld [vmem:[#allocation2 + $0xb90] sm:$0xf]
    %v830 = vld [vmem:[#allocation2 + $0xb94] sm:$0xf]
    %v831 = vld [vmem:[#allocation2 + $0xb98] sm:$0xf]
    %v832 = vld [vmem:[#allocation2 + $0xb9c] sm:$0xf]
    %v833 = vld [vmem:[#allocation2 + $0xba0] sm:$0xf]
    %v834 = vld [vmem:[#allocation2 + $0xba4] sm:$0xf]
    %v835 = vld [vmem:[#allocation2 + $0xba8] sm:$0xf]
    %v836 = vld [vmem:[#allocation2 + $0xbac] sm:$0xf]
    %v837 = vld [vmem:[#allocation2 + $0xbb0] sm:$0xf]
    %v838 = vld [vmem:[#allocation2 + $0xbb4] sm:$0xf]
    %v839 = vld [vmem:[#allocation2 + $0xbb8] sm:$0xf]
    %v840 = vld [vmem:[#allocation2 + $0xbbc] sm:$0xf]
    %v841 = vld [vmem:[#allocation2 + $0xbc0] sm:$0xf]
    %v842 = vld [vmem:[#allocation2 + $0xbc4] sm:$0xf]
    %v843 = vld [vmem:[#allocation2 + $0xbc8] sm:$0xf]
    %v844 = vld [vmem:[#allocation2 + $0xbcc] sm:$0xf]
    %v845 = vld [vmem:[#allocation2 + $0xbd0] sm:$0xf]
    %v846 = vld [vmem:[#allocation2 + $0xbd4] sm:$0xf]
    %v847 = vld [vmem:[#allocation2 + $0xbd8] sm:$0xf]
    %v848 = vld [vmem:[#allocation2 + $0xbdc] sm:$0xf]
    %v849 = vld [vmem:[#allocation2 + $0xbe0] sm:$0xf]
    %v850 = vld [vmem:[#allocation2 + $0xbe4] sm:$0xf]
    %v851 = vld [vmem:[#allocation2 + $0xbe8] sm:$0xf]
    %v852 = vld [vmem:[#allocation2 + $0xbec] sm:$0xf]
    %v853 = vld [vmem:[#allocation2 + $0xbf0] sm:$0xf]
    %v854 = vld [vmem:[#allocation2 + $0xbf4] sm:$0xf]
    %v855 = vld [vmem:[#allocation2 + $0xbf8] sm:$0xf]
    %v856 = vld [vmem:[#allocation2 + $0xbfc] sm:$0xf]
    %v857 = vld [vmem:[#allocation2 + $0xc00] sm:$0xf]
    %v858 = vld [vmem:[#allocation2 + $0xc04] sm:$0xf]
    %v859 = vld [vmem:[#allocation2 + $0xc08] sm:$0xf]
    %v860 = vld [vmem:[#allocation2 + $0xc0c] sm:$0xf]
    %v861 = vld [vmem:[#allocation2 + $0xc10] sm:$0xf]
    %v862 = vld [vmem:[#allocation2 + $0xc14] sm:$0xf]
    %v863 = vld [vmem:[#allocation2 + $0xc18] sm:$0xf]
    %v864 = vld [vmem:[#allocation2 + $0xc1c] sm:$0xf]
    %v865 = vld [vmem:[#allocation2 + $0xc20] sm:$0xf]
    %v866 = vld [vmem:[#allocation2 + $0xc24] sm:$0xf]
    %v867 = vld [vmem:[#allocation2 + $0xc28] sm:$0xf]
    %v868 = vld [vmem:[#allocation2 + $0xc2c] sm:$0xf]
    %v869 = vld [vmem:[#allocation2 + $0xc30] sm:$0xf]
    %v870 = vld [vmem:[#allocation2 + $0xc34] sm:$0xf]
    %v871 = vld [vmem:[#allocation2 + $0xc38] sm:$0xf]
    %v872 = vld [vmem:[#allocation2 + $0xc3c] sm:$0xf]
    %v873 = vld [vmem:[#allocation2 + $0xc40] sm:$0xf]
    %v874 = vld [vmem:[#allocation2 + $0xc44] sm:$0xf]
    %v875 = vld [vmem:[#allocation2 + $0xc48] sm:$0xf]
    %v876 = vld [vmem:[#allocation2 + $0xc4c] sm:$0xf]
    %v877 = vld [vmem:[#allocation2 + $0xc50] sm:$0xf]
    %v878 = vld [vmem:[#allocation2 + $0xc54] sm:$0xf]
    %v879 = vld [vmem:[#allocation2 + $0xc58] sm:$0xf]
    %v880 = vld [vmem:[#allocation2 + $0xc5c] sm:$0xf]
    %v881 = vld [vmem:[#allocation2 + $0xc60] sm:$0xf]
    %v882 = vld [vmem:[#allocation2 + $0xc64] sm:$0xf]
    %v883 = vld [vmem:[#allocation2 + $0xc68] sm:$0xf]
    %v884 = vld [vmem:[#allocation2 + $0xc6c] sm:$0xf]
    %v885 = vld [vmem:[#allocation2 + $0xc70] sm:$0xf]
    %v886 = vld [vmem:[#allocation2 + $0xc74] sm:$0xf]
    %v887 = vld [vmem:[#allocation2 + $0xc78] sm:$0xf]
    %v888 = vld [vmem:[#allocation2 + $0xc7c] sm:$0xf]
    %v889 = vld [vmem:[#allocation2 + $0xc80] sm:$0xf]
    %v890 = vld [vmem:[#allocation2 + $0xc84] sm:$0xf]
    %v891 = vld [vmem:[#allocation2 + $0xc88] sm:$0xf]
    %v892 = vld [vmem:[#allocation2 + $0xc8c] sm:$0xf]
    %v893 = vld [vmem:[#allocation2 + $0xc90] sm:$0xf]
    %v894 = vld [vmem:[#allocation2 + $0xc94] sm:$0xf]
    %v895 = vld [vmem:[#allocation2 + $0xc98] sm:$0xf]
    %v896 = vld [vmem:[#allocation2 + $0xc9c] sm:$0xf]
    %v897 = vld [vmem:[#allocation2 + $0xca0] sm:$0xf]
    %v898 = vld [vmem:[#allocation2 + $0xca4] sm:$0xf]
    %v899 = vld [vmem:[#allocation2 + $0xca8] sm:$0xf]
    %v900 = vld [vmem:[#allocation2 + $0xcac] sm:$0xf]
    %v901 = vld [vmem:[#allocation2 + $0xcb0] sm:$0xf]
    %v902 = vld [vmem:[#allocation2 + $0xcb4] sm:$0xf]
    %v903 = vld [vmem:[#allocation2 + $0xcb8] sm:$0xf]
    %v904 = vld [vmem:[#allocation2 + $0xcbc] sm:$0xf]
    %v905 = vld [vmem:[#allocation2 + $0xcc0] sm:$0xf]
    %v906 = vld [vmem:[#allocation2 + $0xcc4] sm:$0xf]
    %v907 = vld [vmem:[#allocation2 + $0xcc8] sm:$0xf]
    %v908 = vld [vmem:[#allocation2 + $0xccc] sm:$0xf]
    %v909 = vld [vmem:[#allocation2 + $0xcd0] sm:$0xf]
    %v910 = vld [vmem:[#allocation2 + $0xcd4] sm:$0xf]
    %v911 = vld [vmem:[#allocation2 + $0xcd8] sm:$0xf]
    %v912 = vld [vmem:[#allocation2 + $0xcdc] sm:$0xf]
    %v913 = vld [vmem:[#allocation2 + $0xce0] sm:$0xf]
    %v914 = vld [vmem:[#allocation2 + $0xce4] sm:$0xf]
    %v915 = vld [vmem:[#allocation2 + $0xce8] sm:$0xf]
    %v916 = vld [vmem:[#allocation2 + $0xcec] sm:$0xf]
    %v917 = vld [vmem:[#allocation2 + $0xcf0] sm:$0xf]
    %v918 = vld [vmem:[#allocation2 + $0xcf4] sm:$0xf]
    %v919 = vld [vmem:[#allocation2 + $0xcf8] sm:$0xf]
    %v920 = vld [vmem:[#allocation2 + $0xcfc] sm:$0xf]
    %v921 = vld [vmem:[#allocation2 + $0xd00] sm:$0xf]
    %v922 = vld [vmem:[#allocation2 + $0xd04] sm:$0xf]
    %v923 = vld [vmem:[#allocation2 + $0xd08] sm:$0xf]
    %v924 = vld [vmem:[#allocation2 + $0xd0c] sm:$0xf]
    %v925 = vld [vmem:[#allocation2 + $0xd10] sm:$0xf]
    %v926 = vld [vmem:[#allocation2 + $0xd14] sm:$0xf]
    %v927 = vld [vmem:[#allocation2 + $0xd18] sm:$0xf]
    %v928 = vld [vmem:[#allocation2 + $0xd1c] sm:$0xf]
    %v929 = vld [vmem:[#allocation2 + $0xd20] sm:$0xf]
    %v930 = vld [vmem:[#allocation2 + $0xd24] sm:$0xf]
    %v931 = vld [vmem:[#allocation2 + $0xd28] sm:$0xf]
    %v932 = vld [vmem:[#allocation2 + $0xd2c] sm:$0xf]
    %v933 = vld [vmem:[#allocation2 + $0xd30] sm:$0xf]
    %v934 = vld [vmem:[#allocation2 + $0xd34] sm:$0xf]
    %v935 = vld [vmem:[#allocation2 + $0xd38] sm:$0xf]
    %v936 = vld [vmem:[#allocation2 + $0xd3c] sm:$0xf]
    %v937 = vld [vmem:[#allocation2 + $0xd40] sm:$0xf]
    %v938 = vld [vmem:[#allocation2 + $0xd44] sm:$0xf]
    %v939 = vld [vmem:[#allocation2 + $0xd48] sm:$0xf]
    %v940 = vld [vmem:[#allocation2 + $0xd4c] sm:$0xf]
    %v941 = vld [vmem:[#allocation2 + $0xd50] sm:$0xf]
    %v942 = vld [vmem:[#allocation2 + $0xd54] sm:$0xf]
    %v943 = vld [vmem:[#allocation2 + $0xd58] sm:$0xf]
    %v944 = vld [vmem:[#allocation2 + $0xd5c] sm:$0xf]
    %v945 = vld [vmem:[#allocation2 + $0xd60] sm:$0xf]
    %v946 = vld [vmem:[#allocation2 + $0xd64] sm:$0xf]
    %v947 = vld [vmem:[#allocation2 + $0xd68] sm:$0xf]
    %v948 = vld [vmem:[#allocation2 + $0xd6c] sm:$0xf]
    %v949 = vld [vmem:[#allocation2 + $0xd70] sm:$0xf]
    %v950 = vld [vmem:[#allocation2 + $0xd74] sm:$0xf]
    %v951 = vld [vmem:[#allocation2 + $0xd78] sm:$0xf]
    %v952 = vld [vmem:[#allocation2 + $0xd7c] sm:$0xf]
    %v953 = vld [vmem:[#allocation2 + $0xd80] sm:$0xf]
    %v954 = vld [vmem:[#allocation2 + $0xd84] sm:$0xf]
    %v955 = vld [vmem:[#allocation2 + $0xd88] sm:$0xf]
    %v956 = vld [vmem:[#allocation2 + $0xd8c] sm:$0xf]
    %v957 = vld [vmem:[#allocation2 + $0xd90] sm:$0xf]
    %v958 = vld [vmem:[#allocation2 + $0xd94] sm:$0xf]
    %v959 = vld [vmem:[#allocation2 + $0xd98] sm:$0xf]
    %v960 = vld [vmem:[#allocation2 + $0xd9c] sm:$0xf]
    %v961 = vld [vmem:[#allocation2 + $0xda0] sm:$0xf]
    %v962 = vld [vmem:[#allocation2 + $0xda4] sm:$0xf]
    %v963 = vld [vmem:[#allocation2 + $0xda8] sm:$0xf]
    %v964 = vld [vmem:[#allocation2 + $0xdac] sm:$0xf]
    %v965 = vld [vmem:[#allocation2 + $0xdb0] sm:$0xf]
    %v966 = vld [vmem:[#allocation2 + $0xdb4] sm:$0xf]
    %v967 = vld [vmem:[#allocation2 + $0xdb8] sm:$0xf]
    %v968 = vld [vmem:[#allocation2 + $0xdbc] sm:$0xf]
    %v969 = vld [vmem:[#allocation2 + $0xdc0] sm:$0xf]
    %v970 = vld [vmem:[#allocation2 + $0xdc4] sm:$0xf]
    %v971 = vld [vmem:[#allocation2 + $0xdc8] sm:$0xf]
    %v972 = vld [vmem:[#allocation2 + $0xdcc] sm:$0xf]
    %v973 = vld [vmem:[#allocation2 + $0xdd0] sm:$0xf]
    %v974 = vld [vmem:[#allocation2 + $0xdd4] sm:$0xf]
    %v975 = vld [vmem:[#allocation2 + $0xdd8] sm:$0xf]
    %v976 = vld [vmem:[#allocation2 + $0xddc] sm:$0xf]
    %v977 = vld [vmem:[#allocation2 + $0xde0] sm:$0xf]
    %v978 = vld [vmem:[#allocation2 + $0xde4] sm:$0xf]
    %v979 = vld [vmem:[#allocation2 + $0xde8] sm:$0xf]
    %v980 = vld [vmem:[#allocation2 + $0xdec] sm:$0xf]
    %v981 = vld [vmem:[#allocation2 + $0xdf0] sm:$0xf]
    %v982 = vld [vmem:[#allocation2 + $0xdf4] sm:$0xf]
    %v983 = vld [vmem:[#allocation2 + $0xdf8] sm:$0xf]
    %v984 = vld [vmem:[#allocation2 + $0xdfc] sm:$0xf]
    %v985 = vld [vmem:[#allocation2 + $0xe00] sm:$0xf]
    %v986 = vld [vmem:[#allocation2 + $0xe04] sm:$0xf]
    %v987 = vld [vmem:[#allocation2 + $0xe08] sm:$0xf]
    %v988 = vld [vmem:[#allocation2 + $0xe0c] sm:$0xf]
    %v989 = vld [vmem:[#allocation2 + $0xe10] sm:$0xf]
    %v990 = vld [vmem:[#allocation2 + $0xe14] sm:$0xf]
    %v991 = vld [vmem:[#allocation2 + $0xe18] sm:$0xf]
    %v992 = vld [vmem:[#allocation2 + $0xe1c] sm:$0xf]
    %v993 = vld [vmem:[#allocation2 + $0xe20] sm:$0xf]
    %v994 = vld [vmem:[#allocation2 + $0xe24] sm:$0xf]
    %v995 = vld [vmem:[#allocation2 + $0xe28] sm:$0xf]
    %v996 = vld [vmem:[#allocation2 + $0xe2c] sm:$0xf]
    %v997 = vld [vmem:[#allocation2 + $0xe30] sm:$0xf]
    %v998 = vld [vmem:[#allocation2 + $0xe34] sm:$0xf]
    %v999 = vld [vmem:[#allocation2 + $0xe38] sm:$0xf]
    %v1000 = vld [vmem:[#allocation2 + $0xe3c] sm:$0xf]
    %v1001 = vld [vmem:[#allocation2 + $0xe40] sm:$0xf]
    %v1002 = vld [vmem:[#allocation2 + $0xe44] sm:$0xf]
    %v1003 = vld [vmem:[#allocation2 + $0xe48] sm:$0xf]
    %v1004 = vld [vmem:[#allocation2 + $0xe4c] sm:$0xf]
    %v1005 = vld [vmem:[#allocation2 + $0xe50] sm:$0xf]
    %v1006 = vld [vmem:[#allocation2 + $0xe54] sm:$0xf]
    %v1007 = vld [vmem:[#allocation2 + $0xe58] sm:$0xf]
    %v1008 = vld [vmem:[#allocation2 + $0xe5c] sm:$0xf]
    %v1009 = vld [vmem:[#allocation2 + $0xe60] sm:$0xf]
    %v1010 = vld [vmem:[#allocation2 + $0xe64] sm:$0xf]
    %v1011 = vld [vmem:[#allocation2 + $0xe68] sm:$0xf]
    %v1012 = vld [vmem:[#allocation2 + $0xe6c] sm:$0xf]
    %v1013 = vld [vmem:[#allocation2 + $0xe70] sm:$0xf]
    %v1014 = vld [vmem:[#allocation2 + $0xe74] sm:$0xf]
    %v1015 = vld [vmem:[#allocation2 + $0xe78] sm:$0xf]
    %v1016 = vld [vmem:[#allocation2 + $0xe7c] sm:$0xf]
    %v1017 = vld [vmem:[#allocation2 + $0xe80] sm:$0xf]
    %v1018 = vld [vmem:[#allocation2 + $0xe84] sm:$0xf]
    %v1019 = vld [vmem:[#allocation2 + $0xe88] sm:$0xf]
    %v1020 = vld [vmem:[#allocation2 + $0xe8c] sm:$0xf]
    %v1021 = vld [vmem:[#allocation2 + $0xe90] sm:$0xf]
    %v1022 = vld [vmem:[#allocation2 + $0xe94] sm:$0xf]
    %v1023 = vld [vmem:[#allocation2 + $0xe98] sm:$0xf]
    %v1024 = vld [vmem:[#allocation2 + $0xe9c] sm:$0xf]
    %v1025 = vld [vmem:[#allocation2 + $0xea0] sm:$0xf]
    %v1026 = vld [vmem:[#allocation2 + $0xea4] sm:$0xf]
    %v1027 = vld [vmem:[#allocation2 + $0xea8] sm:$0xf]
    %v1028 = vld [vmem:[#allocation2 + $0xeac] sm:$0xf]
    %v1029 = vld [vmem:[#allocation2 + $0xeb0] sm:$0xf]
    %v1030 = vld [vmem:[#allocation2 + $0xeb4] sm:$0xf]
    %v1031 = vld [vmem:[#allocation2 + $0xeb8] sm:$0xf]
    %v1032 = vld [vmem:[#allocation2 + $0xebc] sm:$0xf]
    %v1033 = vld [vmem:[#allocation2 + $0xec0] sm:$0xf]
    %v1034 = vld [vmem:[#allocation2 + $0xec4] sm:$0xf]
    %v1035 = vld [vmem:[#allocation2 + $0xec8] sm:$0xf]
    %v1036 = vld [vmem:[#allocation2 + $0xecc] sm:$0xf]
    %v1037 = vld [vmem:[#allocation2 + $0xed0] sm:$0xf]
    %v1038 = vld [vmem:[#allocation2 + $0xed4] sm:$0xf]
    %v1039 = vld [vmem:[#allocation2 + $0xed8] sm:$0xf]
    %v1040 = vld [vmem:[#allocation2 + $0xedc] sm:$0xf]
    %v1041 = vld [vmem:[#allocation2 + $0xee0] sm:$0xf]
    %v1042 = vld [vmem:[#allocation2 + $0xee4] sm:$0xf]
    %v1043 = vld [vmem:[#allocation2 + $0xee8] sm:$0xf]
    %v1044 = vld [vmem:[#allocation2 + $0xeec] sm:$0xf]
    %v1045 = vld [vmem:[#allocation2 + $0xef0] sm:$0xf]
    %v1046 = vld [vmem:[#allocation2 + $0xef4] sm:$0xf]
    %v1047 = vld [vmem:[#allocation2 + $0xef8] sm:$0xf]
    %v1048 = vld [vmem:[#allocation2 + $0xefc] sm:$0xf]
    %v1049 = vld [vmem:[#allocation2 + $0xf00] sm:$0xf]
    %v1050 = vld [vmem:[#allocation2 + $0xf04] sm:$0xf]
    %v1051 = vld [vmem:[#allocation2 + $0xf08] sm:$0xf]
    %v1052 = vld [vmem:[#allocation2 + $0xf0c] sm:$0xf]
    %v1053 = vld [vmem:[#allocation2 + $0xf10] sm:$0xf]
    %v1054 = vld [vmem:[#allocation2 + $0xf14] sm:$0xf]
    %v1055 = vld [vmem:[#allocation2 + $0xf18] sm:$0xf]
    %v1056 = vld [vmem:[#allocation2 + $0xf1c] sm:$0xf]
    %v1057 = vld [vmem:[#allocation2 + $0xf20] sm:$0xf]
    %v1058 = vld [vmem:[#allocation2 + $0xf24] sm:$0xf]
    %v1059 = vld [vmem:[#allocation2 + $0xf28] sm:$0xf]
    %v1060 = vld [vmem:[#allocation2 + $0xf2c] sm:$0xf]
    %v1061 = vld [vmem:[#allocation2 + $0xf30] sm:$0xf]
    %v1062 = vld [vmem:[#allocation2 + $0xf34] sm:$0xf]
    %v1063 = vld [vmem:[#allocation2 + $0xf38] sm:$0xf]
    %v1064 = vld [vmem:[#allocation2 + $0xf3c] sm:$0xf]
    %v1065 = vld [vmem:[#allocation2 + $0xf40] sm:$0xf]
    %v1066 = vld [vmem:[#allocation2 + $0xf44] sm:$0xf]
    %v1067 = vld [vmem:[#allocation2 + $0xf48] sm:$0xf]
    %v1068 = vld [vmem:[#allocation2 + $0xf4c] sm:$0xf]
    %v1069 = vld [vmem:[#allocation2 + $0xf50] sm:$0xf]
    %v1070 = vld [vmem:[#allocation2 + $0xf54] sm:$0xf]
    %v1071 = vld [vmem:[#allocation2 + $0xf58] sm:$0xf]
    %v1072 = vld [vmem:[#allocation2 + $0xf5c] sm:$0xf]
    %v1073 = vld [vmem:[#allocation2 + $0xf60] sm:$0xf]
    %v1074 = vld [vmem:[#allocation2 + $0xf64] sm:$0xf]
    %v1075 = vld [vmem:[#allocation2 + $0xf68] sm:$0xf]
    %v1076 = vld [vmem:[#allocation2 + $0xf6c] sm:$0xf]
    %v1077 = vld [vmem:[#allocation2 + $0xf70] sm:$0xf]
    %v1078 = vld [vmem:[#allocation2 + $0xf74] sm:$0xf]
    %v1079 = vld [vmem:[#allocation2 + $0xf78] sm:$0xf]
    %v1080 = vld [vmem:[#allocation2 + $0xf7c] sm:$0xf]
    %v1081 = vld [vmem:[#allocation2 + $0xf80] sm:$0xf]
    %v1082 = vld [vmem:[#allocation2 + $0xf84] sm:$0xf]
    %v1083 = vld [vmem:[#allocation2 + $0xf88] sm:$0xf]
    %v1084 = vld [vmem:[#allocation2 + $0xf8c] sm:$0xf]
    %v1085 = vld [vmem:[#allocation2 + $0xf90] sm:$0xf]
    %v1086 = vld [vmem:[#allocation2 + $0xf94] sm:$0xf]
    %v1087 = vld [vmem:[#allocation2 + $0xf98] sm:$0xf]
    %v1088 = vld [vmem:[#allocation2 + $0xf9c] sm:$0xf]
    %v1089 = vld [vmem:[#allocation2 + $0xfa0] sm:$0xf]
    %v1090 = vld [vmem:[#allocation2 + $0xfa4] sm:$0xf]
    %v1091 = vld [vmem:[#allocation2 + $0xfa8] sm:$0xf]
    %v1092 = vld [vmem:[#allocation2 + $0xfac] sm:$0xf]
    %v1093 = vld [vmem:[#allocation2 + $0xfb0] sm:$0xf]
    %v1094 = vld [vmem:[#allocation2 + $0xfb4] sm:$0xf]
    %v1095 = vld [vmem:[#allocation2 + $0xfb8] sm:$0xf]
    %v1096 = vld [vmem:[#allocation2 + $0xfbc] sm:$0xf]
    %v1097 = vld [vmem:[#allocation2 + $0xfc0] sm:$0xf]
    %v1098 = vld [vmem:[#allocation2 + $0xfc4] sm:$0xf]
    %v1099 = vld [vmem:[#allocation2 + $0xfc8] sm:$0xf]
    %v1100 = vld [vmem:[#allocation2 + $0xfcc] sm:$0xf]
    %v1101 = vld [vmem:[#allocation2 + $0xfd0] sm:$0xf]
    %v1102 = vld [vmem:[#allocation2 + $0xfd4] sm:$0xf]
    %v1103 = vld [vmem:[#allocation2 + $0xfd8] sm:$0xf]
    %v1104 = vld [vmem:[#allocation2 + $0xfdc] sm:$0xf]
    %v1105 = vld [vmem:[#allocation2 + $0xfe0] sm:$0xf]
    %v1106 = vld [vmem:[#allocation2 + $0xfe4] sm:$0xf]
    %v1107 = vld [vmem:[#allocation2 + $0xfe8] sm:$0xf]
    %v1108 = vld [vmem:[#allocation2 + $0xfec] sm:$0xf]
    %v1109 = vld [vmem:[#allocation2 + $0xff0] sm:$0xf]
    %v1110 = vld [vmem:[#allocation2 + $0xff4] sm:$0xf]
    %v1111 = vld [vmem:[#allocation2 + $0xff8] sm:$0xf]
    %v1112 = vld [vmem:[#allocation2 + $0xffc] sm:$0xf]
    %v1113 = vld [vmem:[#allocation2 + $0x1000] sm:$0xf]
    %v1114 = vld [vmem:[#allocation2 + $0x1004] sm:$0xf]
    %v1115 = vld [vmem:[#allocation2 + $0x1008] sm:$0xf]
    %v1116 = vld [vmem:[#allocation2 + $0x100c] sm:$0xf]
    %v1117 = vld [vmem:[#allocation2 + $0x1010] sm:$0xf]
    %v1118 = vld [vmem:[#allocation2 + $0x1014] sm:$0xf]
    %v1119 = vld [vmem:[#allocation2 + $0x1018] sm:$0xf]
    %v1120 = vld [vmem:[#allocation2 + $0x101c] sm:$0xf]
    %v1121 = vld [vmem:[#allocation2 + $0x1020] sm:$0xf]
    %v1122 = vld [vmem:[#allocation2 + $0x1024] sm:$0xf]
    %v1123 = vld [vmem:[#allocation2 + $0x1028] sm:$0xf]
    %v1124 = vld [vmem:[#allocation2 + $0x102c] sm:$0xf]
    %v1125 = vld [vmem:[#allocation2 + $0x1030] sm:$0xf]
    %v1126 = vld [vmem:[#allocation2 + $0x1034] sm:$0xf]
    %v1127 = vld [vmem:[#allocation2 + $0x1038] sm:$0xf]
    %v1128 = vld [vmem:[#allocation2 + $0x103c] sm:$0xf]
    %v1129 = vld [vmem:[#allocation2 + $0x1040] sm:$0xf]
    %v1130 = vld [vmem:[#allocation2 + $0x1044] sm:$0xf]
    %v1131 = vld [vmem:[#allocation2 + $0x1048] sm:$0xf]
    %v1132 = vld [vmem:[#allocation2 + $0x104c] sm:$0xf]
    %v1133 = vld [vmem:[#allocation2 + $0x1050] sm:$0xf]
    %v1134 = vld [vmem:[#allocation2 + $0x1054] sm:$0xf]
    %v1135 = vld [vmem:[#allocation2 + $0x1058] sm:$0xf]
    %v1136 = vld [vmem:[#allocation2 + $0x105c] sm:$0xf]
    %v1137 = vld [vmem:[#allocation2 + $0x1060] sm:$0xf]
    %v1138 = vld [vmem:[#allocation2 + $0x1064] sm:$0xf]
    %v1139 = vld [vmem:[#allocation2 + $0x1068] sm:$0xf]
    %v1140 = vld [vmem:[#allocation2 + $0x106c] sm:$0xf]
    %v1141 = vld [vmem:[#allocation2 + $0x1070] sm:$0xf]
    %v1142 = vld [vmem:[#allocation2 + $0x1074] sm:$0xf]
    %v1143 = vld [vmem:[#allocation2 + $0x1078] sm:$0xf]
    %v1144 = vld [vmem:[#allocation2 + $0x107c] sm:$0xf]
    %v1145 = vld [vmem:[#allocation2 + $0x1080] sm:$0xf]
    %v1146 = vld [vmem:[#allocation2 + $0x1084] sm:$0xf]
    %v1147 = vld [vmem:[#allocation2 + $0x1088] sm:$0xf]
    %v1148 = vld [vmem:[#allocation2 + $0x108c] sm:$0xf]
    %v1149 = vld [vmem:[#allocation2 + $0x1090] sm:$0xf]
    %v1150 = vld [vmem:[#allocation2 + $0x1094] sm:$0xf]
    %v1151 = vld [vmem:[#allocation2 + $0x1098] sm:$0xf]
    %v1152 = vld [vmem:[#allocation2 + $0x109c] sm:$0xf]
    %v1153 = vld [vmem:[#allocation2 + $0x10a0] sm:$0xf]
    %v1154 = vld [vmem:[#allocation2 + $0x10a4] sm:$0xf]
    %v1155 = vld [vmem:[#allocation2 + $0x10a8] sm:$0xf]
    %v1156 = vld [vmem:[#allocation2 + $0x10ac] sm:$0xf]
    %v1157 = vld [vmem:[#allocation2 + $0x10b0] sm:$0xf]
    %v1158 = vld [vmem:[#allocation2 + $0x10b4] sm:$0xf]
    %v1159 = vld [vmem:[#allocation2 + $0x10b8] sm:$0xf]
    %v1160 = vld [vmem:[#allocation2 + $0x10bc] sm:$0xf]
    %v1161 = vld [vmem:[#allocation2 + $0x10c0] sm:$0xf]
    %v1162 = vld [vmem:[#allocation2 + $0x10c4] sm:$0xf]
    %v1163 = vld [vmem:[#allocation2 + $0x10c8] sm:$0xf]
    %v1164 = vld [vmem:[#allocation2 + $0x10cc] sm:$0xf]
    %v1165 = vld [vmem:[#allocation2 + $0x10d0] sm:$0xf]
    %v1166 = vld [vmem:[#allocation2 + $0x10d4] sm:$0xf]
    %v1167 = vld [vmem:[#allocation2 + $0x10d8] sm:$0xf]
    %v1168 = vld [vmem:[#allocation2 + $0x10dc] sm:$0xf]
    %v1169 = vld [vmem:[#allocation2 + $0x10e0] sm:$0xf]
    %v1170 = vld [vmem:[#allocation2 + $0x10e4] sm:$0xf]
    %v1171 = vld [vmem:[#allocation2 + $0x10e8] sm:$0xf]
    %v1172 = vld [vmem:[#allocation2 + $0x10ec] sm:$0xf]
    %v1173 = vld [vmem:[#allocation2 + $0x10f0] sm:$0xf]
    %v1174 = vld [vmem:[#allocation2 + $0x10f4] sm:$0xf]
    %v1175 = vld [vmem:[#allocation2 + $0x10f8] sm:$0xf]
    %v1176 = vld [vmem:[#allocation2 + $0x10fc] sm:$0xf]
    %v1177 = vld [vmem:[#allocation2 + $0x1100] sm:$0xf]
    %v1178 = vld [vmem:[#allocation2 + $0x1104] sm:$0xf]
    %v1179 = vld [vmem:[#allocation2 + $0x1108] sm:$0xf]
    %v1180 = vld [vmem:[#allocation2 + $0x110c] sm:$0xf]
    %v1181 = vld [vmem:[#allocation2 + $0x1110] sm:$0xf]
    %v1182 = vld [vmem:[#allocation2 + $0x1114] sm:$0xf]
    %v1183 = vld [vmem:[#allocation2 + $0x1118] sm:$0xf]
    %v1184 = vld [vmem:[#allocation2 + $0x111c] sm:$0xf]
    %v1185 = vld [vmem:[#allocation2 + $0x1120] sm:$0xf]
    %v1186 = vld [vmem:[#allocation2 + $0x1124] sm:$0xf]
    %v1187 = vld [vmem:[#allocation2 + $0x1128] sm:$0xf]
    %v1188 = vld [vmem:[#allocation2 + $0x112c] sm:$0xf]
    %v1189 = vld [vmem:[#allocation2 + $0x1130] sm:$0xf]
    %v1190 = vld [vmem:[#allocation2 + $0x1134] sm:$0xf]
    %v1191 = vld [vmem:[#allocation2 + $0x1138] sm:$0xf]
    %v1192 = vld [vmem:[#allocation2 + $0x113c] sm:$0xf]
    %v1193 = vld [vmem:[#allocation2 + $0x1140] sm:$0xf]
    %v1194 = vld [vmem:[#allocation2 + $0x1144] sm:$0xf]
    %v1195 = vld [vmem:[#allocation2 + $0x1148] sm:$0xf]
    %v1196 = vld [vmem:[#allocation2 + $0x114c] sm:$0xf]
    %v1197 = vld [vmem:[#allocation2 + $0x1150] sm:$0xf]
    %v1198 = vld [vmem:[#allocation2 + $0x1154] sm:$0xf]
    %v1199 = vld [vmem:[#allocation2 + $0x1158] sm:$0xf]
    %v1200 = vld [vmem:[#allocation2 + $0x115c] sm:$0xf]
    %v1201 = vld [vmem:[#allocation2 + $0x1160] sm:$0xf]
    %v1202 = vld [vmem:[#allocation2 + $0x1164] sm:$0xf]
    %v1203 = vld [vmem:[#allocation2 + $0x1168] sm:$0xf]
    %v1204 = vld [vmem:[#allocation2 + $0x116c] sm:$0xf]
    %v1205 = vld [vmem:[#allocation2 + $0x1170] sm:$0xf]
    %v1206 = vld [vmem:[#allocation2 + $0x1174] sm:$0xf]
    %v1207 = vld [vmem:[#allocation2 + $0x1178] sm:$0xf]
    %v1208 = vld [vmem:[#allocation2 + $0x117c] sm:$0xf]
    %v1209 = vld [vmem:[#allocation2 + $0x1180] sm:$0xf]
    %v1210 = vld [vmem:[#allocation2 + $0x1184] sm:$0xf]
    %v1211 = vld [vmem:[#allocation2 + $0x1188] sm:$0xf]
    %v1212 = vld [vmem:[#allocation2 + $0x118c] sm:$0xf]
    %v1213 = vld [vmem:[#allocation2 + $0x1190] sm:$0xf]
    %v1214 = vld [vmem:[#allocation2 + $0x1194] sm:$0xf]
    %v1215 = vld [vmem:[#allocation2 + $0x1198] sm:$0xf]
    %v1216 = vld [vmem:[#allocation2 + $0x119c] sm:$0xf]
    %v1217 = vld [vmem:[#allocation2 + $0x11a0] sm:$0xf]
    %v1218 = vld [vmem:[#allocation2 + $0x11a4] sm:$0xf]
    %v1219 = vld [vmem:[#allocation2 + $0x11a8] sm:$0xf]
    %v1220 = vld [vmem:[#allocation2 + $0x11ac] sm:$0xf]
    %v1221 = vld [vmem:[#allocation2 + $0x11b0] sm:$0xf]
    %v1222 = vld [vmem:[#allocation2 + $0x11b4] sm:$0xf]
    %v1223 = vld [vmem:[#allocation2 + $0x11b8] sm:$0xf]
    %v1224 = vld [vmem:[#allocation2 + $0x11bc] sm:$0xf]
    %v1225 = vld [vmem:[#allocation2 + $0x11c0] sm:$0xf]
    %v1226 = vld [vmem:[#allocation2 + $0x11c4] sm:$0xf]
    %v1227 = vld [vmem:[#allocation2 + $0x11c8] sm:$0xf]
    %v1228 = vld [vmem:[#allocation2 + $0x11cc] sm:$0xf]
    %v1229 = vld [vmem:[#allocation2 + $0x11d0] sm:$0xf]
    %v1230 = vld [vmem:[#allocation2 + $0x11d4] sm:$0xf]
    %v1231 = vld [vmem:[#allocation2 + $0x11d8] sm:$0xf]
    %v1232 = vld [vmem:[#allocation2 + $0x11dc] sm:$0xf]
    %v1233 = vld [vmem:[#allocation2 + $0x11e0] sm:$0xf]
    %v1234 = vld [vmem:[#allocation2 + $0x11e4] sm:$0xf]
    %v1235 = vld [vmem:[#allocation2 + $0x11e8] sm:$0xf]
    %v1236 = vld [vmem:[#allocation2 + $0x11ec] sm:$0xf]
    %v1237 = vld [vmem:[#allocation2 + $0x11f0] sm:$0xf]
    %v1238 = vld [vmem:[#allocation2 + $0x11f4] sm:$0xf]
    %v1239 = vld [vmem:[#allocation2 + $0x11f8] sm:$0xf]
    %v1240 = vld [vmem:[#allocation2 + $0x11fc] sm:$0xf]
    %v1241 = vld [vmem:[#allocation5] sm:$0x1]
    %v1243 = vperm.slane %v1241, 0
    %1246 = vst [vmem:[#allocation1] ss:$9 sm:$0xff] %v80
    %v1247 = vld [vmem:[#allocation1] sm:$0xff]
    %v1248 = vld [vmem:[#allocation1 + $0x9] sm:$0xff]
    %v1249 = vld [vmem:[#allocation1 + $0x12] sm:$0xff]
    %v1250 = vld [vmem:[#allocation1 + $0x1b] sm:$0xff]
    %v1251 = vld [vmem:[#allocation1 + $0x24] sm:$0xff]
    %v1252 = vld [vmem:[#allocation1 + $0x2d] sm:$0xff]
    %v1253 = vld [vmem:[#allocation1 + $0x36] sm:$0xff]
    %v1254 = vld [vmem:[#allocation1 + $0x3f] sm:$0xff]
    %1256 = vst [vmem:[#allocation1] ss:$9 sm:$0xff] %v81
    %v1257 = vld [vmem:[#allocation1] sm:$0xff]
    %v1258 = vld [vmem:[#allocation1 + $0x9] sm:$0xff]
    %v1259 = vld [vmem:[#allocation1 + $0x12] sm:$0xff]
    %v1260 = vld [vmem:[#allocation1 + $0x1b] sm:$0xff]
    %v1261 = vld [vmem:[#allocation1 + $0x24] sm:$0xff]
    %v1262 = vld [vmem:[#allocation1 + $0x2d] sm:$0xff]
    %v1263 = vld [vmem:[#allocation1 + $0x36] sm:$0xff]
    %v1264 = vld [vmem:[#allocation1 + $0x3f] sm:$0xff]
    %1266 = vst [vmem:[#allocation1] ss:$9 sm:$0xff] %v82
    %v1267 = vld [vmem:[#allocation1] sm:$0xff]
    %v1268 = vld [vmem:[#allocation1 + $0x9] sm:$0xff]
    %v1269 = vld [vmem:[#allocation1 + $0x12] sm:$0xff]
    %v1270 = vld [vmem:[#allocation1 + $0x1b] sm:$0xff]
    %v1271 = vld [vmem:[#allocation1 + $0x24] sm:$0xff]
    %v1272 = vld [vmem:[#allocation1 + $0x2d] sm:$0xff]
    %v1273 = vld [vmem:[#allocation1 + $0x36] sm:$0xff]
    %v1274 = vld [vmem:[#allocation1 + $0x3f] sm:$0xff]
    %1276 = vst [vmem:[#allocation1] ss:$9 sm:$0xff] %v83
    %v1277 = vld [vmem:[#allocation1] sm:$0xff]
    %v1278 = vld [vmem:[#allocation1 + $0x9] sm:$0xff]
    %v1279 = vld [vmem:[#allocation1 + $0x12] sm:$0xff]
    %v1280 = vld [vmem:[#allocation1 + $0x1b] sm:$0xff]
    %v1281 = vld [vmem:[#allocation1 + $0x24] sm:$0xff]
    %v1282 = vld [vmem:[#allocation1 + $0x2d] sm:$0xff]
    %v1283 = vld [vmem:[#allocation1 + $0x36] sm:$0xff]
    %v1284 = vld [vmem:[#allocation1 + $0x3f] sm:$0xff]
    %1286 = vst [vmem:[#allocation1] ss:$9 sm:$0xff] %v84
    %v1287 = vld [vmem:[#allocation1] sm:$0xff]
    %v1288 = vld [vmem:[#allocation1 + $0x9] sm:$0xff]
    %v1289 = vld [vmem:[#allocation1 + $0x12] sm:$0xff]
    %v1290 = vld [vmem:[#allocation1 + $0x1b] sm:$0xff]
    %v1291 = vld [vmem:[#allocation1 + $0x24] sm:$0xff]
    %v1292 = vld [vmem:[#allocation1 + $0x2d] sm:$0xff]
    %v1293 = vld [vmem:[#allocation1 + $0x36] sm:$0xff]
    %v1294 = vld [vmem:[#allocation1 + $0x3f] sm:$0xff]
    %1296 = vst [vmem:[#allocation1] ss:$9 sm:$0xff] %v85
    %v1297 = vld [vmem:[#allocation1] sm:$0xff]
    %v1298 = vld [vmem:[#allocation1 + $0x9] sm:$0xff]
    %v1299 = vld [vmem:[#allocation1 + $0x12] sm:$0xff]
    %v1300 = vld [vmem:[#allocation1 + $0x1b] sm:$0xff]
    %v1301 = vld [vmem:[#allocation1 + $0x24] sm:$0xff]
    %v1302 = vld [vmem:[#allocation1 + $0x2d] sm:$0xff]
    %v1303 = vld [vmem:[#allocation1 + $0x36] sm:$0xff]
    %v1304 = vld [vmem:[#allocation1 + $0x3f] sm:$0xff]
    %1306 = vst [vmem:[#allocation1] ss:$9 sm:$0xff] %v86
    %v1307 = vld [vmem:[#allocation1] sm:$0xff]
    %v1308 = vld [vmem:[#allocation1 + $0x9] sm:$0xff]
    %v1309 = vld [vmem:[#allocation1 + $0x12] sm:$0xff]
    %v1310 = vld [vmem:[#allocation1 + $0x1b] sm:$0xff]
    %v1311 = vld [vmem:[#allocation1 + $0x24] sm:$0xff]
    %v1312 = vld [vmem:[#allocation1 + $0x2d] sm:$0xff]
    %v1313 = vld [vmem:[#allocation1 + $0x36] sm:$0xff]
    %v1314 = vld [vmem:[#allocation1 + $0x3f] sm:$0xff]
    %1316 = vst [vmem:[#allocation1] ss:$9 sm:$0xff] %v87
    %v1317 = vld [vmem:[#allocation1] sm:$0xff]
    %v1318 = vld [vmem:[#allocation1 + $0x9] sm:$0xff]
    %v1319 = vld [vmem:[#allocation1 + $0x12] sm:$0xff]
    %v1320 = vld [vmem:[#allocation1 + $0x1b] sm:$0xff]
    %v1321 = vld [vmem:[#allocation1 + $0x24] sm:$0xff]
    %v1322 = vld [vmem:[#allocation1 + $0x2d] sm:$0xff]
    %v1323 = vld [vmem:[#allocation1 + $0x36] sm:$0xff]
    %v1324 = vld [vmem:[#allocation1 + $0x3f] sm:$0xff]
    %1326 = vst [vmem:[#allocation1] ss:$9 sm:$0xff] %v88
    %v1327 = vld [vmem:[#allocation1] sm:$0xff]
    %v1328 = vld [vmem:[#allocation1 + $0x9] sm:$0xff]
    %v1329 = vld [vmem:[#allocation1 + $0x12] sm:$0xff]
    %v1330 = vld [vmem:[#allocation1 + $0x1b] sm:$0xff]
    %v1331 = vld [vmem:[#allocation1 + $0x24] sm:$0xff]
    %v1332 = vld [vmem:[#allocation1 + $0x2d] sm:$0xff]
    %v1333 = vld [vmem:[#allocation1 + $0x36] sm:$0xff]
    %v1334 = vld [vmem:[#allocation1 + $0x3f] sm:$0xff]
    %v2559 = vunpack.c.l.b16 %v89
    %v2560 = vunpack.c.l.b16 %v90
    %v2561 = vunpack.c.l.b16 %v91
    %v2562 = vunpack.c.l.b16 %v92
    %v2563 = vunpack.c.l.b16 %v93
    %v2564 = vunpack.c.l.b16 %v94
    %v2565 = vunpack.c.l.b16 %v95
    %v2566 = vunpack.c.l.b16 %v96
    %v2567 = vunpack.c.l.b16 %v97
    %v2568 = vunpack.c.l.b16 %v98
    %v2569 = vunpack.c.l.b16 %v99
    %v2570 = vunpack.c.l.b16 %v100
    %v2571 = vunpack.c.l.b16 %v101
    %v2572 = vunpack.c.l.b16 %v102
    %v2573 = vunpack.c.l.b16 %v103
    %v2574 = vunpack.c.l.b16 %v104
    %v2575 = vunpack.c.l.b16 %v105
    %v2576 = vunpack.c.l.b16 %v106
    %v2577 = vunpack.c.l.b16 %v107
    %v2578 = vunpack.c.l.b16 %v108
    %v2579 = vunpack.c.l.b16 %v109
    %v2580 = vunpack.c.l.b16 %v110
    %v2581 = vunpack.c.l.b16 %v111
    %v2582 = vunpack.c.l.b16 %v112
    %v2583 = vunpack.c.l.b16 %v113
    %v2584 = vunpack.c.l.b16 %v114
    %v2585 = vunpack.c.l.b16 %v115
    %v2586 = vunpack.c.l.b16 %v116
    %v2587 = vunpack.c.l.b16 %v117
    %v2588 = vunpack.c.l.b16 %v118
    %v2589 = vunpack.c.l.b16 %v119
    %v2590 = vunpack.c.l.b16 %v120
    %v2591 = vunpack.c.l.b16 %v121
    %v2592 = vunpack.c.l.b16 %v122
    %v2593 = vunpack.c.l.b16 %v123
    %v2594 = vunpack.c.l.b16 %v124
    %v2595 = vunpack.c.l.b16 %v125
    %v2596 = vunpack.c.l.b16 %v126
    %v2597 = vunpack.c.l.b16 %v127
    %v2598 = vunpack.c.l.b16 %v128
    %v2599 = vunpack.c.l.b16 %v129
    %v2600 = vunpack.c.l.b16 %v130
    %v2601 = vunpack.c.l.b16 %v131
    %v2602 = vunpack.c.l.b16 %v132
    %v2603 = vunpack.c.l.b16 %v133
    %v2604 = vunpack.c.l.b16 %v134
    %v2605 = vunpack.c.l.b16 %v135
    %v2606 = vunpack.c.l.b16 %v136
    %v2607 = vunpack.c.l.b16 %v137
    %v2608 = vunpack.c.l.b16 %v138
    %v2609 = vunpack.c.l.b16 %v139
    %v2610 = vunpack.c.l.b16 %v140
    %v2611 = vunpack.c.l.b16 %v141
    %v2612 = vunpack.c.l.b16 %v142
    %v2613 = vunpack.c.l.b16 %v143
    %v2614 = vunpack.c.l.b16 %v144
    %v2615 = vunpack.c.l.b16 %v145
    %v2616 = vunpack.c.l.b16 %v146
    %v2617 = vunpack.c.l.b16 %v147
    %v2618 = vunpack.c.l.b16 %v148
    %v2619 = vunpack.c.l.b16 %v149
    %v2620 = vunpack.c.l.b16 %v150
    %v2621 = vunpack.c.l.b16 %v151
    %v2622 = vunpack.c.l.b16 %v152
    %v2623 = vunpack.c.l.b16 %v153
    %v2624 = vunpack.c.l.b16 %v154
    %v2625 = vunpack.c.l.b16 %v155
    %v2626 = vunpack.c.l.b16 %v156
    %v2627 = vunpack.c.l.b16 %v157
    %v2628 = vunpack.c.l.b16 %v158
    %v2629 = vunpack.c.l.b16 %v159
    %v2630 = vunpack.c.l.b16 %v160
    %v2631 = vunpack.c.l.b16 %v161
    %v2632 = vunpack.c.l.b16 %v162
    %v2633 = vunpack.c.l.b16 %v163
    %v2634 = vunpack.c.l.b16 %v164
    %v2635 = vunpack.c.l.b16 %v165
    %v2636 = vunpack.c.l.b16 %v166
    %v2637 = vunpack.c.l.b16 %v167
    %v2638 = vunpack.c.l.b16 %v168
    %v2639 = vunpack.c.l.b16 %v169
    %v2640 = vunpack.c.l.b16 %v170
    %v2641 = vunpack.c.l.b16 %v171
    %v2642 = vunpack.c.l.b16 %v172
    %v2643 = vunpack.c.l.b16 %v173
    %v2644 = vunpack.c.l.b16 %v174
    %v2645 = vunpack.c.l.b16 %v175
    %v2646 = vunpack.c.l.b16 %v176
    %v2647 = vunpack.c.l.b16 %v177
    %v2648 = vunpack.c.l.b16 %v178
    %v2649 = vunpack.c.l.b16 %v179
    %v2650 = vunpack.c.l.b16 %v180
    %v2651 = vunpack.c.l.b16 %v181
    %v2652 = vunpack.c.l.b16 %v182
    %v2653 = vunpack.c.l.b16 %v183
    %v2654 = vunpack.c.l.b16 %v184
    %v2655 = vunpack.c.l.b16 %v185
    %v2656 = vunpack.c.l.b16 %v186
    %v2657 = vunpack.c.l.b16 %v187
    %v2658 = vunpack.c.l.b16 %v188
    %v2659 = vunpack.c.l.b16 %v189
    %v2660 = vunpack.c.l.b16 %v190
    %v2661 = vunpack.c.l.b16 %v191
    %v2662 = vunpack.c.l.b16 %v192
    %v2663 = vunpack.c.l.b16 %v193
    %v2664 = vunpack.c.l.b16 %v194
    %v2665 = vunpack.c.l.b16 %v195
    %v2666 = vunpack.c.l.b16 %v196
    %v2667 = vunpack.c.l.b16 %v197
    %v2668 = vunpack.c.l.b16 %v198
    %v2669 = vunpack.c.l.b16 %v199
    %v2670 = vunpack.c.l.b16 %v200
    %v2671 = vunpack.c.l.b16 %v201
    %v2672 = vunpack.c.l.b16 %v202
    %v2673 = vunpack.c.l.b16 %v203
    %v2674 = vunpack.c.l.b16 %v204
    %v2675 = vunpack.c.l.b16 %v205
    %v2676 = vunpack.c.l.b16 %v206
    %v2677 = vunpack.c.l.b16 %v207
    %v2678 = vunpack.c.l.b16 %v208
    %v2679 = vunpack.c.l.b16 %v209
    %v2680 = vunpack.c.l.b16 %v210
    %v2681 = vunpack.c.l.b16 %v211
    %v2682 = vunpack.c.l.b16 %v212
    %v2683 = vunpack.c.l.b16 %v213
    %v2684 = vunpack.c.l.b16 %v214
    %v2685 = vunpack.c.l.b16 %v215
    %v2686 = vunpack.c.l.b16 %v216
    %v2687 = vunpack.c.l.b16 %v217
    %v2688 = vunpack.c.l.b16 %v218
    %v2689 = vunpack.c.l.b16 %v219
    %v2690 = vunpack.c.l.b16 %v220
    %v2691 = vunpack.c.l.b16 %v221
    %v2692 = vunpack.c.l.b16 %v222
    %v2693 = vunpack.c.l.b16 %v223
    %v2694 = vunpack.c.l.b16 %v224
    %v2695 = vunpack.c.l.b16 %v225
    %v2696 = vunpack.c.l.b16 %v226
    %v2697 = vunpack.c.l.b16 %v227
    %v2698 = vunpack.c.l.b16 %v228
    %v2699 = vunpack.c.l.b16 %v229
    %v2700 = vunpack.c.l.b16 %v230
    %v2701 = vunpack.c.l.b16 %v231
    %v2702 = vunpack.c.l.b16 %v232
    %v2703 = vunpack.c.l.b16 %v233
    %v2704 = vunpack.c.l.b16 %v234
    %v2705 = vunpack.c.l.b16 %v235
    %v2706 = vunpack.c.l.b16 %v236
    %v2707 = vunpack.c.l.b16 %v237
    %v2708 = vunpack.c.l.b16 %v238
    %v2709 = vunpack.c.l.b16 %v239
    %v2710 = vunpack.c.l.b16 %v240
    %v2711 = vunpack.c.l.b16 %v241
    %v2712 = vunpack.c.l.b16 %v242
    %v2713 = vunpack.c.l.b16 %v243
    %v2714 = vunpack.c.l.b16 %v244
    %v2715 = vunpack.c.l.b16 %v245
    %v2716 = vunpack.c.l.b16 %v246
    %v2717 = vunpack.c.l.b16 %v247
    %v2718 = vunpack.c.l.b16 %v248
    %v2719 = vunpack.c.l.b16 %v249
    %v2720 = vunpack.c.l.b16 %v250
    %v2721 = vunpack.c.l.b16 %v251
    %v2722 = vunpack.c.l.b16 %v252
    %v2723 = vunpack.c.l.b16 %v253
    %v2724 = vunpack.c.l.b16 %v254
    %v2725 = vunpack.c.l.b16 %v255
    %v2726 = vunpack.c.l.b16 %v256
    %v2727 = vunpack.c.l.b16 %v257
    %v2728 = vunpack.c.l.b16 %v258
    %v2729 = vunpack.c.l.b16 %v259
    %v2730 = vunpack.c.l.b16 %v260
    %v2731 = vunpack.c.l.b16 %v261
    %v2732 = vunpack.c.l.b16 %v262
    %v2733 = vunpack.c.l.b16 %v263
    %v2734 = vunpack.c.l.b16 %v264
    %v2735 = vunpack.c.l.b16 %v265
    %v2736 = vunpack.c.l.b16 %v266
    %v2737 = vunpack.c.l.b16 %v267
    %v2738 = vunpack.c.l.b16 %v268
    %v2739 = vunpack.c.l.b16 %v269
    %v2740 = vunpack.c.l.b16 %v270
    %v2741 = vunpack.c.l.b16 %v271
    %v2742 = vunpack.c.l.b16 %v272
    %v2743 = vunpack.c.l.b16 %v273
    %v2744 = vunpack.c.l.b16 %v274
    %v2745 = vunpack.c.l.b16 %v275
    %v2746 = vunpack.c.l.b16 %v276
    %v2747 = vunpack.c.l.b16 %v277
    %v2748 = vunpack.c.l.b16 %v278
    %v2749 = vunpack.c.l.b16 %v279
    %v2750 = vunpack.c.l.b16 %v280
    %v2751 = vunpack.c.l.b16 %v281
    %v2752 = vunpack.c.l.b16 %v282
    %v2753 = vunpack.c.l.b16 %v283
    %v2754 = vunpack.c.l.b16 %v284
    %v2755 = vunpack.c.l.b16 %v285
    %v2756 = vunpack.c.l.b16 %v286
    %v2757 = vunpack.c.l.b16 %v287
    %v2758 = vunpack.c.l.b16 %v288
    %v2759 = vunpack.c.l.b16 %v289
    %v2760 = vunpack.c.l.b16 %v290
    %v2761 = vunpack.c.l.b16 %v291
    %v2762 = vunpack.c.l.b16 %v292
    %v2763 = vunpack.c.l.b16 %v293
    %v2764 = vunpack.c.l.b16 %v294
    %v2765 = vunpack.c.l.b16 %v295
    %v2766 = vunpack.c.l.b16 %v296
    %v2767 = vunpack.c.l.b16 %v297
    %v2768 = vunpack.c.l.b16 %v298
    %v2769 = vunpack.c.l.b16 %v299
    %v2770 = vunpack.c.l.b16 %v300
    %v2771 = vunpack.c.l.b16 %v301
    %v2772 = vunpack.c.l.b16 %v302
    %v2773 = vunpack.c.l.b16 %v303
    %v2774 = vunpack.c.l.b16 %v304
    %v2775 = vunpack.c.l.b16 %v305
    %v2776 = vunpack.c.l.b16 %v306
    %v2777 = vunpack.c.l.b16 %v307
    %v2778 = vunpack.c.l.b16 %v308
    %v2779 = vunpack.c.l.b16 %v309
    %v2780 = vunpack.c.l.b16 %v310
    %v2781 = vunpack.c.l.b16 %v311
    %v2782 = vunpack.c.l.b16 %v312
    %v2783 = vunpack.c.l.b16 %v313
    %v2784 = vunpack.c.l.b16 %v314
    %v2785 = vunpack.c.l.b16 %v315
    %v2786 = vunpack.c.l.b16 %v316
    %v2787 = vunpack.c.l.b16 %v317
    %v2788 = vunpack.c.l.b16 %v318
    %v2789 = vunpack.c.l.b16 %v319
    %v2790 = vunpack.c.l.b16 %v320
    %v2791 = vunpack.c.l.b16 %v321
    %v2792 = vunpack.c.l.b16 %v322
    %v2793 = vunpack.c.l.b16 %v323
    %v2794 = vunpack.c.l.b16 %v324
    %v2795 = vunpack.c.l.b16 %v325
    %v2796 = vunpack.c.l.b16 %v326
    %v2797 = vunpack.c.l.b16 %v327
    %v2798 = vunpack.c.l.b16 %v328
    %v2799 = vunpack.c.l.b16 %v329
    %v2800 = vunpack.c.l.b16 %v330
    %v2801 = vunpack.c.l.b16 %v331
    %v2802 = vunpack.c.l.b16 %v332
    %v2803 = vunpack.c.l.b16 %v333
    %v2804 = vunpack.c.l.b16 %v334
    %v2805 = vunpack.c.l.b16 %v335
    %v2806 = vunpack.c.l.b16 %v336
    %v2807 = vunpack.c.l.b16 %v337
    %v2808 = vunpack.c.l.b16 %v338
    %v2809 = vunpack.c.l.b16 %v339
    %v2810 = vunpack.c.l.b16 %v340
    %v2811 = vunpack.c.l.b16 %v341
    %v2812 = vunpack.c.l.b16 %v342
    %v2813 = vunpack.c.l.b16 %v343
    %v2814 = vunpack.c.l.b16 %v344
    %v2815 = vunpack.c.l.b16 %v345
    %v2816 = vunpack.c.l.b16 %v346
    %v2817 = vunpack.c.l.b16 %v347
    %v2818 = vunpack.c.l.b16 %v348
    %v2819 = vunpack.c.l.b16 %v349
    %v2820 = vunpack.c.l.b16 %v350
    %v2821 = vunpack.c.l.b16 %v351
    %v2822 = vunpack.c.l.b16 %v352
    %v2823 = vunpack.c.l.b16 %v353
    %v2824 = vunpack.c.l.b16 %v354
    %v2825 = vunpack.c.l.b16 %v355
    %v2826 = vunpack.c.l.b16 %v356
    %v2827 = vunpack.c.l.b16 %v357
    %v2828 = vunpack.c.l.b16 %v358
    %v2829 = vunpack.c.l.b16 %v359
    %v2830 = vunpack.c.l.b16 %v360
    %v2831 = vunpack.c.l.b16 %v361
    %v2832 = vunpack.c.l.b16 %v362
    %v2833 = vunpack.c.l.b16 %v363
    %v2834 = vunpack.c.l.b16 %v364
    %v2835 = vunpack.c.l.b16 %v365
    %v2836 = vunpack.c.l.b16 %v366
    %v2837 = vunpack.c.l.b16 %v367
    %v2838 = vunpack.c.l.b16 %v368
    %v2839 = vunpack.c.l.b16 %v369
    %v2840 = vunpack.c.l.b16 %v370
    %v2841 = vunpack.c.l.b16 %v371
    %v2842 = vunpack.c.l.b16 %v372
    %v2843 = vunpack.c.l.b16 %v373
    %v2844 = vunpack.c.l.b16 %v374
    %v2845 = vunpack.c.l.b16 %v375
    %v2846 = vunpack.c.l.b16 %v376
    %v2847 = vunpack.c.l.b16 %v377
    %v2848 = vunpack.c.l.b16 %v378
    %v2849 = vunpack.c.l.b16 %v379
    %v2850 = vunpack.c.l.b16 %v380
    %v2851 = vunpack.c.l.b16 %v381
    %v2852 = vunpack.c.l.b16 %v382
    %v2853 = vunpack.c.l.b16 %v383
    %v2854 = vunpack.c.l.b16 %v384
    %v2855 = vunpack.c.l.b16 %v385
    %v2856 = vunpack.c.l.b16 %v386
    %v2857 = vunpack.c.l.b16 %v387
    %v2858 = vunpack.c.l.b16 %v388
    %v2859 = vunpack.c.l.b16 %v389
    %v2860 = vunpack.c.l.b16 %v390
    %v2861 = vunpack.c.l.b16 %v391
    %v2862 = vunpack.c.l.b16 %v392
    %v2863 = vunpack.c.l.b16 %v393
    %v2864 = vunpack.c.l.b16 %v394
    %v2865 = vunpack.c.l.b16 %v395
    %v2866 = vunpack.c.l.b16 %v396
    %v2867 = vunpack.c.l.b16 %v397
    %v2868 = vunpack.c.l.b16 %v398
    %v2869 = vunpack.c.l.b16 %v399
    %v2870 = vunpack.c.l.b16 %v400
    %v2871 = vunpack.c.l.b16 %v401
    %v2872 = vunpack.c.l.b16 %v402
    %v2873 = vunpack.c.l.b16 %v403
    %v2874 = vunpack.c.l.b16 %v404
    %v2875 = vunpack.c.l.b16 %v405
    %v2876 = vunpack.c.l.b16 %v406
    %v2877 = vunpack.c.l.b16 %v407
    %v2878 = vunpack.c.l.b16 %v408
    %v2879 = vunpack.c.l.b16 %v409
    %v2880 = vunpack.c.l.b16 %v410
    %v2881 = vunpack.c.l.b16 %v411
    %v2882 = vunpack.c.l.b16 %v412
    %v2883 = vunpack.c.l.b16 %v413
    %v2884 = vunpack.c.l.b16 %v414
    %v2885 = vunpack.c.l.b16 %v415
    %v2886 = vunpack.c.l.b16 %v416
    %v2887 = vunpack.c.l.b16 %v417
    %v2888 = vunpack.c.l.b16 %v418
    %v2889 = vunpack.c.l.b16 %v419
    %v2890 = vunpack.c.l.b16 %v420
    %v2891 = vunpack.c.l.b16 %v421
    %v2892 = vunpack.c.l.b16 %v422
    %v2893 = vunpack.c.l.b16 %v423
    %v2894 = vunpack.c.l.b16 %v424
    %v2895 = vunpack.c.l.b16 %v425
    %v2896 = vunpack.c.l.b16 %v426
    %v2897 = vunpack.c.l.b16 %v427
    %v2898 = vunpack.c.l.b16 %v428
    %v2899 = vunpack.c.l.b16 %v429
    %v2900 = vunpack.c.l.b16 %v430
    %v2901 = vunpack.c.l.b16 %v431
    %v2902 = vunpack.c.l.b16 %v432
    %v2903 = vunpack.c.l.b16 %v433
    %v2904 = vunpack.c.l.b16 %v434
    %v2905 = vunpack.c.l.b16 %v435
    %v2906 = vunpack.c.l.b16 %v436
    %v2907 = vunpack.c.l.b16 %v437
    %v2908 = vunpack.c.l.b16 %v438
    %v2909 = vunpack.c.l.b16 %v439
    %v2910 = vunpack.c.l.b16 %v440
    %v2911 = vunpack.c.l.b16 %v441
    %v2912 = vunpack.c.l.b16 %v442
    %v2913 = vunpack.c.l.b16 %v443
    %v2914 = vunpack.c.l.b16 %v444
    %v2915 = vunpack.c.l.b16 %v445
    %v2916 = vunpack.c.l.b16 %v446
    %v2917 = vunpack.c.l.b16 %v447
    %v2918 = vunpack.c.l.b16 %v448
    %v2919 = vunpack.c.l.b16 %v449
    %v2920 = vunpack.c.l.b16 %v450
    %v2921 = vunpack.c.l.b16 %v451
    %v2922 = vunpack.c.l.b16 %v452
    %v2923 = vunpack.c.l.b16 %v453
    %v2924 = vunpack.c.l.b16 %v454
    %v2925 = vunpack.c.l.b16 %v455
    %v2926 = vunpack.c.l.b16 %v456
    %v2927 = vunpack.c.l.b16 %v457
    %v2928 = vunpack.c.l.b16 %v458
    %v2929 = vunpack.c.l.b16 %v459
    %v2930 = vunpack.c.l.b16 %v460
    %v2931 = vunpack.c.l.b16 %v461
    %v2932 = vunpack.c.l.b16 %v462
    %v2933 = vunpack.c.l.b16 %v463
    %v2934 = vunpack.c.l.b16 %v464
    %v2935 = vunpack.c.l.b16 %v465
    %v2936 = vunpack.c.l.b16 %v466
    %v2937 = vunpack.c.l.b16 %v467
    %v2938 = vunpack.c.l.b16 %v468
    %v2939 = vunpack.c.l.b16 %v469
    %v2940 = vunpack.c.l.b16 %v470
    %v2941 = vunpack.c.l.b16 %v471
    %v2942 = vunpack.c.l.b16 %v472
    %v2943 = vunpack.c.l.b16 %v473
    %v2944 = vunpack.c.l.b16 %v474
    %v2945 = vunpack.c.l.b16 %v475
    %v2946 = vunpack.c.l.b16 %v476
    %v2947 = vunpack.c.l.b16 %v477
    %v2948 = vunpack.c.l.b16 %v478
    %v2949 = vunpack.c.l.b16 %v479
    %v2950 = vunpack.c.l.b16 %v480
    %v2951 = vunpack.c.l.b16 %v481
    %v2952 = vunpack.c.l.b16 %v482
    %v2953 = vunpack.c.l.b16 %v483
    %v2954 = vunpack.c.l.b16 %v484
    %v2955 = vunpack.c.l.b16 %v485
    %v2956 = vunpack.c.l.b16 %v486
    %v2957 = vunpack.c.l.b16 %v487
    %v2958 = vunpack.c.l.b16 %v488
    %v2959 = vunpack.c.l.b16 %v489
    %v2960 = vunpack.c.l.b16 %v490
    %v2961 = vunpack.c.l.b16 %v491
    %v2962 = vunpack.c.l.b16 %v492
    %v2963 = vunpack.c.l.b16 %v493
    %v2964 = vunpack.c.l.b16 %v494
    %v2965 = vunpack.c.l.b16 %v495
    %v2966 = vunpack.c.l.b16 %v496
    %v2967 = vunpack.c.l.b16 %v497
    %v2968 = vunpack.c.l.b16 %v498
    %v2969 = vunpack.c.l.b16 %v499
    %v2970 = vunpack.c.l.b16 %v500
    %v2971 = vunpack.c.l.b16 %v501
    %v2972 = vunpack.c.l.b16 %v502
    %v2973 = vunpack.c.l.b16 %v503
    %v2974 = vunpack.c.l.b16 %v504
    %v2975 = vunpack.c.l.b16 %v505
    %v2976 = vunpack.c.l.b16 %v506
    %v2977 = vunpack.c.l.b16 %v507
    %v2978 = vunpack.c.l.b16 %v508
    %v2979 = vunpack.c.l.b16 %v509
    %v2980 = vunpack.c.l.b16 %v510
    %v2981 = vunpack.c.l.b16 %v511
    %v2982 = vunpack.c.l.b16 %v512
    %v2983 = vunpack.c.l.b16 %v513
    %v2984 = vunpack.c.l.b16 %v514
    %v2985 = vunpack.c.l.b16 %v515
    %v2986 = vunpack.c.l.b16 %v516
    %v2987 = vunpack.c.l.b16 %v517
    %v2988 = vunpack.c.l.b16 %v518
    %v2989 = vunpack.c.l.b16 %v519
    %v2990 = vunpack.c.l.b16 %v520
    %v2991 = vunpack.c.l.b16 %v521
    %v2992 = vunpack.c.l.b16 %v522
    %v2993 = vunpack.c.l.b16 %v523
    %v2994 = vunpack.c.l.b16 %v524
    %v2995 = vunpack.c.l.b16 %v525
    %v2996 = vunpack.c.l.b16 %v526
    %v2997 = vunpack.c.l.b16 %v527
    %v2998 = vunpack.c.l.b16 %v528
    %v2999 = vunpack.c.l.b16 %v529
    %v3000 = vunpack.c.l.b16 %v530
    %v3001 = vunpack.c.l.b16 %v531
    %v3002 = vunpack.c.l.b16 %v532
    %v3003 = vunpack.c.l.b16 %v533
    %v3004 = vunpack.c.l.b16 %v534
    %v3005 = vunpack.c.l.b16 %v535
    %v3006 = vunpack.c.l.b16 %v536
    %v3007 = vunpack.c.l.b16 %v537
    %v3008 = vunpack.c.l.b16 %v538
    %v3009 = vunpack.c.l.b16 %v539
    %v3010 = vunpack.c.l.b16 %v540
    %v3011 = vunpack.c.l.b16 %v541
    %v3012 = vunpack.c.l.b16 %v542
    %v3013 = vunpack.c.l.b16 %v543
    %v3014 = vunpack.c.l.b16 %v544
    %v3015 = vunpack.c.l.b16 %v545
    %v3016 = vunpack.c.l.b16 %v546
    %v3017 = vunpack.c.l.b16 %v547
    %v3018 = vunpack.c.l.b16 %v548
    %v3019 = vunpack.c.l.b16 %v549
    %v3020 = vunpack.c.l.b16 %v550
    %v3021 = vunpack.c.l.b16 %v551
    %v3022 = vunpack.c.l.b16 %v552
    %v3023 = vunpack.c.l.b16 %v553
    %v3024 = vunpack.c.l.b16 %v554
    %v3025 = vunpack.c.l.b16 %v555
    %v3026 = vunpack.c.l.b16 %v556
    %v3027 = vunpack.c.l.b16 %v557
    %v3028 = vunpack.c.l.b16 %v558
    %v3029 = vunpack.c.l.b16 %v559
    %v3030 = vunpack.c.l.b16 %v560
    %v3031 = vunpack.c.l.b16 %v561
    %v3032 = vunpack.c.l.b16 %v562
    %v3033 = vunpack.c.l.b16 %v563
    %v3034 = vunpack.c.l.b16 %v564
    %v3035 = vunpack.c.l.b16 %v565
    %v3036 = vunpack.c.l.b16 %v566
    %v3037 = vunpack.c.l.b16 %v567
    %v3038 = vunpack.c.l.b16 %v568
    %v3039 = vunpack.c.l.b16 %v569
    %v3040 = vunpack.c.l.b16 %v570
    %v3041 = vunpack.c.l.b16 %v571
    %v3042 = vunpack.c.l.b16 %v572
    %v3043 = vunpack.c.l.b16 %v573
    %v3044 = vunpack.c.l.b16 %v574
    %v3045 = vunpack.c.l.b16 %v575
    %v3046 = vunpack.c.l.b16 %v576
    %v3047 = vunpack.c.l.b16 %v577
    %v3048 = vunpack.c.l.b16 %v578
    %v3049 = vunpack.c.l.b16 %v579
    %v3050 = vunpack.c.l.b16 %v580
    %v3051 = vunpack.c.l.b16 %v581
    %v3052 = vunpack.c.l.b16 %v582
    %v3053 = vunpack.c.l.b16 %v583
    %v3054 = vunpack.c.l.b16 %v584
    %v3055 = vunpack.c.l.b16 %v585
    %v3056 = vunpack.c.l.b16 %v586
    %v3057 = vunpack.c.l.b16 %v587
    %v3058 = vunpack.c.l.b16 %v588
    %v3059 = vunpack.c.l.b16 %v589
    %v3060 = vunpack.c.l.b16 %v590
    %v3061 = vunpack.c.l.b16 %v591
    %v3062 = vunpack.c.l.b16 %v592
    %v3063 = vunpack.c.l.b16 %v593
    %v3064 = vunpack.c.l.b16 %v594
    %v3065 = vunpack.c.l.b16 %v595
    %v3066 = vunpack.c.l.b16 %v596
    %v3067 = vunpack.c.l.b16 %v597
    %v3068 = vunpack.c.l.b16 %v598
    %v3069 = vunpack.c.l.b16 %v599
    %v3070 = vunpack.c.l.b16 %v600
    %v3071 = vunpack.c.l.b16 %v601
    %v3072 = vunpack.c.l.b16 %v602
    %v3073 = vunpack.c.l.b16 %v603
    %v3074 = vunpack.c.l.b16 %v604
    %v3075 = vunpack.c.l.b16 %v605
    %v3076 = vunpack.c.l.b16 %v606
    %v3077 = vunpack.c.l.b16 %v607
    %v3078 = vunpack.c.l.b16 %v608
    %v3079 = vunpack.c.l.b16 %v609
    %v3080 = vunpack.c.l.b16 %v610
    %v3081 = vunpack.c.l.b16 %v611
    %v3082 = vunpack.c.l.b16 %v612
    %v3083 = vunpack.c.l.b16 %v613
    %v3084 = vunpack.c.l.b16 %v614
    %v3085 = vunpack.c.l.b16 %v615
    %v3086 = vunpack.c.l.b16 %v616
    %v3087 = vunpack.c.l.b16 %v617
    %v3088 = vunpack.c.l.b16 %v618
    %v3089 = vunpack.c.l.b16 %v619
    %v3090 = vunpack.c.l.b16 %v620
    %v3091 = vunpack.c.l.b16 %v621
    %v3092 = vunpack.c.l.b16 %v622
    %v3093 = vunpack.c.l.b16 %v623
    %v3094 = vunpack.c.l.b16 %v624
    %v3095 = vunpack.c.l.b16 %v625
    %v3096 = vunpack.c.l.b16 %v626
    %v3097 = vunpack.c.l.b16 %v627
    %v3098 = vunpack.c.l.b16 %v628
    %v3099 = vunpack.c.l.b16 %v629
    %v3100 = vunpack.c.l.b16 %v630
    %v3101 = vunpack.c.l.b16 %v631
    %v3102 = vunpack.c.l.b16 %v632
    %v3103 = vunpack.c.l.b16 %v633
    %v3104 = vunpack.c.l.b16 %v634
    %v3105 = vunpack.c.l.b16 %v635
    %v3106 = vunpack.c.l.b16 %v636
    %v3107 = vunpack.c.l.b16 %v637
    %v3108 = vunpack.c.l.b16 %v638
    %v3109 = vunpack.c.l.b16 %v639
    %v3110 = vunpack.c.l.b16 %v640
    %v3111 = vunpack.c.l.b16 %v641
    %v3112 = vunpack.c.l.b16 %v642
    %v3113 = vunpack.c.l.b16 %v643
    %v3114 = vunpack.c.l.b16 %v644
    %v3115 = vunpack.c.l.b16 %v645
    %v3116 = vunpack.c.l.b16 %v646
    %v3117 = vunpack.c.l.b16 %v647
    %v3118 = vunpack.c.l.b16 %v648
    %v3119 = vunpack.c.l.b16 %v649
    %v3120 = vunpack.c.l.b16 %v650
    %v3121 = vunpack.c.l.b16 %v651
    %v3122 = vunpack.c.l.b16 %v652
    %v3123 = vunpack.c.l.b16 %v653
    %v3124 = vunpack.c.l.b16 %v654
    %v3125 = vunpack.c.l.b16 %v655
    %v3126 = vunpack.c.l.b16 %v656
    %v3127 = vunpack.c.l.b16 %v657
    %v3128 = vunpack.c.l.b16 %v658
    %v3129 = vunpack.c.l.b16 %v659
    %v3130 = vunpack.c.l.b16 %v660
    %v3131 = vunpack.c.l.b16 %v661
    %v3132 = vunpack.c.l.b16 %v662
    %v3133 = vunpack.c.l.b16 %v663
    %v3134 = vunpack.c.l.b16 %v664
    %v3135 = vunpack.c.l.b16 %v665
    %v3136 = vunpack.c.l.b16 %v666
    %v3137 = vunpack.c.l.b16 %v667
    %v3138 = vunpack.c.l.b16 %v668
    %v3139 = vunpack.c.l.b16 %v669
    %v3140 = vunpack.c.l.b16 %v670
    %v3141 = vunpack.c.l.b16 %v671
    %v3142 = vunpack.c.l.b16 %v672
    %v3143 = vunpack.c.l.b16 %v673
    %v3144 = vunpack.c.l.b16 %v674
    %v3145 = vunpack.c.l.b16 %v675
    %v3146 = vunpack.c.l.b16 %v676
    %v3147 = vunpack.c.l.b16 %v677
    %v3148 = vunpack.c.l.b16 %v678
    %v3149 = vunpack.c.l.b16 %v679
    %v3150 = vunpack.c.l.b16 %v680
    %v3151 = vunpack.c.l.b16 %v681
    %v3152 = vunpack.c.l.b16 %v682
    %v3153 = vunpack.c.l.b16 %v683
    %v3154 = vunpack.c.l.b16 %v684
    %v3155 = vunpack.c.l.b16 %v685
    %v3156 = vunpack.c.l.b16 %v686
    %v3157 = vunpack.c.l.b16 %v687
    %v3158 = vunpack.c.l.b16 %v688
    %v3159 = vunpack.c.l.b16 %v689
    %v3160 = vunpack.c.l.b16 %v690
    %v3161 = vunpack.c.l.b16 %v691
    %v3162 = vunpack.c.l.b16 %v692
    %v3163 = vunpack.c.l.b16 %v693
    %v3164 = vunpack.c.l.b16 %v694
    %v3165 = vunpack.c.l.b16 %v695
    %v3166 = vunpack.c.l.b16 %v696
    %v3167 = vunpack.c.l.b16 %v697
    %v3168 = vunpack.c.l.b16 %v698
    %v3169 = vunpack.c.l.b16 %v699
    %v3170 = vunpack.c.l.b16 %v700
    %v3171 = vunpack.c.l.b16 %v701
    %v3172 = vunpack.c.l.b16 %v702
    %v3173 = vunpack.c.l.b16 %v703
    %v3174 = vunpack.c.l.b16 %v704
    %v3175 = vunpack.c.l.b16 %v705
    %v3176 = vunpack.c.l.b16 %v706
    %v3177 = vunpack.c.l.b16 %v707
    %v3178 = vunpack.c.l.b16 %v708
    %v3179 = vunpack.c.l.b16 %v709
    %v3180 = vunpack.c.l.b16 %v710
    %v3181 = vunpack.c.l.b16 %v711
    %v3182 = vunpack.c.l.b16 %v712
    %v3183 = vunpack.c.l.b16 %v713
    %v3184 = vunpack.c.l.b16 %v714
    %v3185 = vunpack.c.l.b16 %v715
    %v3186 = vunpack.c.l.b16 %v716
    %v3187 = vunpack.c.l.b16 %v717
    %v3188 = vunpack.c.l.b16 %v718
    %v3189 = vunpack.c.l.b16 %v719
    %v3190 = vunpack.c.l.b16 %v720
    %v3191 = vunpack.c.l.b16 %v721
    %v3192 = vunpack.c.l.b16 %v722
    %v3193 = vunpack.c.l.b16 %v723
    %v3194 = vunpack.c.l.b16 %v724
    %v3195 = vunpack.c.l.b16 %v725
    %v3196 = vunpack.c.l.b16 %v726
    %v3197 = vunpack.c.l.b16 %v727
    %v3198 = vunpack.c.l.b16 %v728
    %v3199 = vunpack.c.l.b16 %v729
    %v3200 = vunpack.c.l.b16 %v730
    %v3201 = vunpack.c.l.b16 %v731
    %v3202 = vunpack.c.l.b16 %v732
    %v3203 = vunpack.c.l.b16 %v733
    %v3204 = vunpack.c.l.b16 %v734
    %v3205 = vunpack.c.l.b16 %v735
    %v3206 = vunpack.c.l.b16 %v736
    %v3207 = vunpack.c.l.b16 %v737
    %v3208 = vunpack.c.l.b16 %v738
    %v3209 = vunpack.c.l.b16 %v739
    %v3210 = vunpack.c.l.b16 %v740
    %v3211 = vunpack.c.l.b16 %v741
    %v3212 = vunpack.c.l.b16 %v742
    %v3213 = vunpack.c.l.b16 %v743
    %v3214 = vunpack.c.l.b16 %v744
    %v3215 = vunpack.c.l.b16 %v745
    %v3216 = vunpack.c.l.b16 %v746
    %v3217 = vunpack.c.l.b16 %v747
    %v3218 = vunpack.c.l.b16 %v748
    %v3219 = vunpack.c.l.b16 %v749
    %v3220 = vunpack.c.l.b16 %v750
    %v3221 = vunpack.c.l.b16 %v751
    %v3222 = vunpack.c.l.b16 %v752
    %v3223 = vunpack.c.l.b16 %v753
    %v3224 = vunpack.c.l.b16 %v754
    %v3225 = vunpack.c.l.b16 %v755
    %v3226 = vunpack.c.l.b16 %v756
    %v3227 = vunpack.c.l.b16 %v757
    %v3228 = vunpack.c.l.b16 %v758
    %v3229 = vunpack.c.l.b16 %v759
    %v3230 = vunpack.c.l.b16 %v760
    %v3231 = vunpack.c.l.b16 %v761
    %v3232 = vunpack.c.l.b16 %v762
    %v3233 = vunpack.c.l.b16 %v763
    %v3234 = vunpack.c.l.b16 %v764
    %v3235 = vunpack.c.l.b16 %v765
    %v3236 = vunpack.c.l.b16 %v766
    %v3237 = vunpack.c.l.b16 %v767
    %v3238 = vunpack.c.l.b16 %v768
    %v3239 = vunpack.c.l.b16 %v769
    %v3240 = vunpack.c.l.b16 %v770
    %v3241 = vunpack.c.l.b16 %v771
    %v3242 = vunpack.c.l.b16 %v772
    %v3243 = vunpack.c.l.b16 %v773
    %v3244 = vunpack.c.l.b16 %v774
    %v3245 = vunpack.c.l.b16 %v775
    %v3246 = vunpack.c.l.b16 %v776
    %v3247 = vunpack.c.l.b16 %v777
    %v3248 = vunpack.c.l.b16 %v778
    %v3249 = vunpack.c.l.b16 %v779
    %v3250 = vunpack.c.l.b16 %v780
    %v3251 = vunpack.c.l.b16 %v781
    %v3252 = vunpack.c.l.b16 %v782
    %v3253 = vunpack.c.l.b16 %v783
    %v3254 = vunpack.c.l.b16 %v784
    %v3255 = vunpack.c.l.b16 %v785
    %v3256 = vunpack.c.l.b16 %v786
    %v3257 = vunpack.c.l.b16 %v787
    %v3258 = vunpack.c.l.b16 %v788
    %v3259 = vunpack.c.l.b16 %v789
    %v3260 = vunpack.c.l.b16 %v790
    %v3261 = vunpack.c.l.b16 %v791
    %v3262 = vunpack.c.l.b16 %v792
    %v3263 = vunpack.c.l.b16 %v793
    %v3264 = vunpack.c.l.b16 %v794
    %v3265 = vunpack.c.l.b16 %v795
    %v3266 = vunpack.c.l.b16 %v796
    %v3267 = vunpack.c.l.b16 %v797
    %v3268 = vunpack.c.l.b16 %v798
    %v3269 = vunpack.c.l.b16 %v799
    %v3270 = vunpack.c.l.b16 %v800
    %v3271 = vunpack.c.l.b16 %v801
    %v3272 = vunpack.c.l.b16 %v802
    %v3273 = vunpack.c.l.b16 %v803
    %v3274 = vunpack.c.l.b16 %v804
    %v3275 = vunpack.c.l.b16 %v805
    %v3276 = vunpack.c.l.b16 %v806
    %v3277 = vunpack.c.l.b16 %v807
    %v3278 = vunpack.c.l.b16 %v808
    %v3279 = vunpack.c.l.b16 %v809
    %v3280 = vunpack.c.l.b16 %v810
    %v3281 = vunpack.c.l.b16 %v811
    %v3282 = vunpack.c.l.b16 %v812
    %v3283 = vunpack.c.l.b16 %v813
    %v3284 = vunpack.c.l.b16 %v814
    %v3285 = vunpack.c.l.b16 %v815
    %v3286 = vunpack.c.l.b16 %v816
    %v3287 = vunpack.c.l.b16 %v817
    %v3288 = vunpack.c.l.b16 %v818
    %v3289 = vunpack.c.l.b16 %v819
    %v3290 = vunpack.c.l.b16 %v820
    %v3291 = vunpack.c.l.b16 %v821
    %v3292 = vunpack.c.l.b16 %v822
    %v3293 = vunpack.c.l.b16 %v823
    %v3294 = vunpack.c.l.b16 %v824
    %v3295 = vunpack.c.l.b16 %v825
    %v3296 = vunpack.c.l.b16 %v826
    %v3297 = vunpack.c.l.b16 %v827
    %v3298 = vunpack.c.l.b16 %v828
    %v3299 = vunpack.c.l.b16 %v829
    %v3300 = vunpack.c.l.b16 %v830
    %v3301 = vunpack.c.l.b16 %v831
    %v3302 = vunpack.c.l.b16 %v832
    %v3303 = vunpack.c.l.b16 %v833
    %v3304 = vunpack.c.l.b16 %v834
    %v3305 = vunpack.c.l.b16 %v835
    %v3306 = vunpack.c.l.b16 %v836
    %v3307 = vunpack.c.l.b16 %v837
    %v3308 = vunpack.c.l.b16 %v838
    %v3309 = vunpack.c.l.b16 %v839
    %v3310 = vunpack.c.l.b16 %v840
    %v3311 = vunpack.c.l.b16 %v841
    %v3312 = vunpack.c.l.b16 %v842
    %v3313 = vunpack.c.l.b16 %v843
    %v3314 = vunpack.c.l.b16 %v844
    %v3315 = vunpack.c.l.b16 %v845
    %v3316 = vunpack.c.l.b16 %v846
    %v3317 = vunpack.c.l.b16 %v847
    %v3318 = vunpack.c.l.b16 %v848
    %v3319 = vunpack.c.l.b16 %v849
    %v3320 = vunpack.c.l.b16 %v850
    %v3321 = vunpack.c.l.b16 %v851
    %v3322 = vunpack.c.l.b16 %v852
    %v3323 = vunpack.c.l.b16 %v853
    %v3324 = vunpack.c.l.b16 %v854
    %v3325 = vunpack.c.l.b16 %v855
    %v3326 = vunpack.c.l.b16 %v856
    %v3327 = vunpack.c.l.b16 %v857
    %v3328 = vunpack.c.l.b16 %v858
    %v3329 = vunpack.c.l.b16 %v859
    %v3330 = vunpack.c.l.b16 %v860
    %v3331 = vunpack.c.l.b16 %v861
    %v3332 = vunpack.c.l.b16 %v862
    %v3333 = vunpack.c.l.b16 %v863
    %v3334 = vunpack.c.l.b16 %v864
    %v3335 = vunpack.c.l.b16 %v865
    %v3336 = vunpack.c.l.b16 %v866
    %v3337 = vunpack.c.l.b16 %v867
    %v3338 = vunpack.c.l.b16 %v868
    %v3339 = vunpack.c.l.b16 %v869
    %v3340 = vunpack.c.l.b16 %v870
    %v3341 = vunpack.c.l.b16 %v871
    %v3342 = vunpack.c.l.b16 %v872
    %v3343 = vunpack.c.l.b16 %v873
    %v3344 = vunpack.c.l.b16 %v874
    %v3345 = vunpack.c.l.b16 %v875
    %v3346 = vunpack.c.l.b16 %v876
    %v3347 = vunpack.c.l.b16 %v877
    %v3348 = vunpack.c.l.b16 %v878
    %v3349 = vunpack.c.l.b16 %v879
    %v3350 = vunpack.c.l.b16 %v880
    %v3351 = vunpack.c.l.b16 %v881
    %v3352 = vunpack.c.l.b16 %v882
    %v3353 = vunpack.c.l.b16 %v883
    %v3354 = vunpack.c.l.b16 %v884
    %v3355 = vunpack.c.l.b16 %v885
    %v3356 = vunpack.c.l.b16 %v886
    %v3357 = vunpack.c.l.b16 %v887
    %v3358 = vunpack.c.l.b16 %v888
    %v3359 = vunpack.c.l.b16 %v889
    %v3360 = vunpack.c.l.b16 %v890
    %v3361 = vunpack.c.l.b16 %v891
    %v3362 = vunpack.c.l.b16 %v892
    %v3363 = vunpack.c.l.b16 %v893
    %v3364 = vunpack.c.l.b16 %v894
    %v3365 = vunpack.c.l.b16 %v895
    %v3366 = vunpack.c.l.b16 %v896
    %v3367 = vunpack.c.l.b16 %v897
    %v3368 = vunpack.c.l.b16 %v898
    %v3369 = vunpack.c.l.b16 %v899
    %v3370 = vunpack.c.l.b16 %v900
    %v3371 = vunpack.c.l.b16 %v901
    %v3372 = vunpack.c.l.b16 %v902
    %v3373 = vunpack.c.l.b16 %v903
    %v3374 = vunpack.c.l.b16 %v904
    %v3375 = vunpack.c.l.b16 %v905
    %v3376 = vunpack.c.l.b16 %v906
    %v3377 = vunpack.c.l.b16 %v907
    %v3378 = vunpack.c.l.b16 %v908
    %v3379 = vunpack.c.l.b16 %v909
    %v3380 = vunpack.c.l.b16 %v910
    %v3381 = vunpack.c.l.b16 %v911
    %v3382 = vunpack.c.l.b16 %v912
    %v3383 = vunpack.c.l.b16 %v913
    %v3384 = vunpack.c.l.b16 %v914
    %v3385 = vunpack.c.l.b16 %v915
    %v3386 = vunpack.c.l.b16 %v916
    %v3387 = vunpack.c.l.b16 %v917
    %v3388 = vunpack.c.l.b16 %v918
    %v3389 = vunpack.c.l.b16 %v919
    %v3390 = vunpack.c.l.b16 %v920
    %v3391 = vunpack.c.l.b16 %v921
    %v3392 = vunpack.c.l.b16 %v922
    %v3393 = vunpack.c.l.b16 %v923
    %v3394 = vunpack.c.l.b16 %v924
    %v3395 = vunpack.c.l.b16 %v925
    %v3396 = vunpack.c.l.b16 %v926
    %v3397 = vunpack.c.l.b16 %v927
    %v3398 = vunpack.c.l.b16 %v928
    %v3399 = vunpack.c.l.b16 %v929
    %v3400 = vunpack.c.l.b16 %v930
    %v3401 = vunpack.c.l.b16 %v931
    %v3402 = vunpack.c.l.b16 %v932
    %v3403 = vunpack.c.l.b16 %v933
    %v3404 = vunpack.c.l.b16 %v934
    %v3405 = vunpack.c.l.b16 %v935
    %v3406 = vunpack.c.l.b16 %v936
    %v3407 = vunpack.c.l.b16 %v937
    %v3408 = vunpack.c.l.b16 %v938
    %v3409 = vunpack.c.l.b16 %v939
    %v3410 = vunpack.c.l.b16 %v940
    %v3411 = vunpack.c.l.b16 %v941
    %v3412 = vunpack.c.l.b16 %v942
    %v3413 = vunpack.c.l.b16 %v943
    %v3414 = vunpack.c.l.b16 %v944
    %v3415 = vunpack.c.l.b16 %v945
    %v3416 = vunpack.c.l.b16 %v946
    %v3417 = vunpack.c.l.b16 %v947
    %v3418 = vunpack.c.l.b16 %v948
    %v3419 = vunpack.c.l.b16 %v949
    %v3420 = vunpack.c.l.b16 %v950
    %v3421 = vunpack.c.l.b16 %v951
    %v3422 = vunpack.c.l.b16 %v952
    %v3423 = vunpack.c.l.b16 %v953
    %v3424 = vunpack.c.l.b16 %v954
    %v3425 = vunpack.c.l.b16 %v955
    %v3426 = vunpack.c.l.b16 %v956
    %v3427 = vunpack.c.l.b16 %v957
    %v3428 = vunpack.c.l.b16 %v958
    %v3429 = vunpack.c.l.b16 %v959
    %v3430 = vunpack.c.l.b16 %v960
    %v3431 = vunpack.c.l.b16 %v961
    %v3432 = vunpack.c.l.b16 %v962
    %v3433 = vunpack.c.l.b16 %v963
    %v3434 = vunpack.c.l.b16 %v964
    %v3435 = vunpack.c.l.b16 %v965
    %v3436 = vunpack.c.l.b16 %v966
    %v3437 = vunpack.c.l.b16 %v967
    %v3438 = vunpack.c.l.b16 %v968
    %v3439 = vunpack.c.l.b16 %v969
    %v3440 = vunpack.c.l.b16 %v970
    %v3441 = vunpack.c.l.b16 %v971
    %v3442 = vunpack.c.l.b16 %v972
    %v3443 = vunpack.c.l.b16 %v973
    %v3444 = vunpack.c.l.b16 %v974
    %v3445 = vunpack.c.l.b16 %v975
    %v3446 = vunpack.c.l.b16 %v976
    %v3447 = vunpack.c.l.b16 %v977
    %v3448 = vunpack.c.l.b16 %v978
    %v3449 = vunpack.c.l.b16 %v979
    %v3450 = vunpack.c.l.b16 %v980
    %v3451 = vunpack.c.l.b16 %v981
    %v3452 = vunpack.c.l.b16 %v982
    %v3453 = vunpack.c.l.b16 %v983
    %v3454 = vunpack.c.l.b16 %v984
    %v3455 = vunpack.c.l.b16 %v985
    %v3456 = vunpack.c.l.b16 %v986
    %v3457 = vunpack.c.l.b16 %v987
    %v3458 = vunpack.c.l.b16 %v988
    %v3459 = vunpack.c.l.b16 %v989
    %v3460 = vunpack.c.l.b16 %v990
    %v3461 = vunpack.c.l.b16 %v991
    %v3462 = vunpack.c.l.b16 %v992
    %v3463 = vunpack.c.l.b16 %v993
    %v3464 = vunpack.c.l.b16 %v994
    %v3465 = vunpack.c.l.b16 %v995
    %v3466 = vunpack.c.l.b16 %v996
    %v3467 = vunpack.c.l.b16 %v997
    %v3468 = vunpack.c.l.b16 %v998
    %v3469 = vunpack.c.l.b16 %v999
    %v3470 = vunpack.c.l.b16 %v1000
    %v3471 = vunpack.c.l.b16 %v1001
    %v3472 = vunpack.c.l.b16 %v1002
    %v3473 = vunpack.c.l.b16 %v1003
    %v3474 = vunpack.c.l.b16 %v1004
    %v3475 = vunpack.c.l.b16 %v1005
    %v3476 = vunpack.c.l.b16 %v1006
    %v3477 = vunpack.c.l.b16 %v1007
    %v3478 = vunpack.c.l.b16 %v1008
    %v3479 = vunpack.c.l.b16 %v1009
    %v3480 = vunpack.c.l.b16 %v1010
    %v3481 = vunpack.c.l.b16 %v1011
    %v3482 = vunpack.c.l.b16 %v1012
    %v3483 = vunpack.c.l.b16 %v1013
    %v3484 = vunpack.c.l.b16 %v1014
    %v3485 = vunpack.c.l.b16 %v1015
    %v3486 = vunpack.c.l.b16 %v1016
    %v3487 = vunpack.c.l.b16 %v1017
    %v3488 = vunpack.c.l.b16 %v1018
    %v3489 = vunpack.c.l.b16 %v1019
    %v3490 = vunpack.c.l.b16 %v1020
    %v3491 = vunpack.c.l.b16 %v1021
    %v3492 = vunpack.c.l.b16 %v1022
    %v3493 = vunpack.c.l.b16 %v1023
    %v3494 = vunpack.c.l.b16 %v1024
    %v3495 = vunpack.c.l.b16 %v1025
    %v3496 = vunpack.c.l.b16 %v1026
    %v3497 = vunpack.c.l.b16 %v1027
    %v3498 = vunpack.c.l.b16 %v1028
    %v3499 = vunpack.c.l.b16 %v1029
    %v3500 = vunpack.c.l.b16 %v1030
    %v3501 = vunpack.c.l.b16 %v1031
    %v3502 = vunpack.c.l.b16 %v1032
    %v3503 = vunpack.c.l.b16 %v1033
    %v3504 = vunpack.c.l.b16 %v1034
    %v3505 = vunpack.c.l.b16 %v1035
    %v3506 = vunpack.c.l.b16 %v1036
    %v3507 = vunpack.c.l.b16 %v1037
    %v3508 = vunpack.c.l.b16 %v1038
    %v3509 = vunpack.c.l.b16 %v1039
    %v3510 = vunpack.c.l.b16 %v1040
    %v3511 = vunpack.c.l.b16 %v1041
    %v3512 = vunpack.c.l.b16 %v1042
    %v3513 = vunpack.c.l.b16 %v1043
    %v3514 = vunpack.c.l.b16 %v1044
    %v3515 = vunpack.c.l.b16 %v1045
    %v3516 = vunpack.c.l.b16 %v1046
    %v3517 = vunpack.c.l.b16 %v1047
    %v3518 = vunpack.c.l.b16 %v1048
    %v3519 = vunpack.c.l.b16 %v1049
    %v3520 = vunpack.c.l.b16 %v1050
    %v3521 = vunpack.c.l.b16 %v1051
    %v3522 = vunpack.c.l.b16 %v1052
    %v3523 = vunpack.c.l.b16 %v1053
    %v3524 = vunpack.c.l.b16 %v1054
    %v3525 = vunpack.c.l.b16 %v1055
    %v3526 = vunpack.c.l.b16 %v1056
    %v3527 = vunpack.c.l.b16 %v1057
    %v3528 = vunpack.c.l.b16 %v1058
    %v3529 = vunpack.c.l.b16 %v1059
    %v3530 = vunpack.c.l.b16 %v1060
    %v3531 = vunpack.c.l.b16 %v1061
    %v3532 = vunpack.c.l.b16 %v1062
    %v3533 = vunpack.c.l.b16 %v1063
    %v3534 = vunpack.c.l.b16 %v1064
    %v3535 = vunpack.c.l.b16 %v1065
    %v3536 = vunpack.c.l.b16 %v1066
    %v3537 = vunpack.c.l.b16 %v1067
    %v3538 = vunpack.c.l.b16 %v1068
    %v3539 = vunpack.c.l.b16 %v1069
    %v3540 = vunpack.c.l.b16 %v1070
    %v3541 = vunpack.c.l.b16 %v1071
    %v3542 = vunpack.c.l.b16 %v1072
    %v3543 = vunpack.c.l.b16 %v1073
    %v3544 = vunpack.c.l.b16 %v1074
    %v3545 = vunpack.c.l.b16 %v1075
    %v3546 = vunpack.c.l.b16 %v1076
    %v3547 = vunpack.c.l.b16 %v1077
    %v3548 = vunpack.c.l.b16 %v1078
    %v3549 = vunpack.c.l.b16 %v1079
    %v3550 = vunpack.c.l.b16 %v1080
    %v3551 = vunpack.c.l.b16 %v1081
    %v3552 = vunpack.c.l.b16 %v1082
    %v3553 = vunpack.c.l.b16 %v1083
    %v3554 = vunpack.c.l.b16 %v1084
    %v3555 = vunpack.c.l.b16 %v1085
    %v3556 = vunpack.c.l.b16 %v1086
    %v3557 = vunpack.c.l.b16 %v1087
    %v3558 = vunpack.c.l.b16 %v1088
    %v3559 = vunpack.c.l.b16 %v1089
    %v3560 = vunpack.c.l.b16 %v1090
    %v3561 = vunpack.c.l.b16 %v1091
    %v3562 = vunpack.c.l.b16 %v1092
    %v3563 = vunpack.c.l.b16 %v1093
    %v3564 = vunpack.c.l.b16 %v1094
    %v3565 = vunpack.c.l.b16 %v1095
    %v3566 = vunpack.c.l.b16 %v1096
    %v3567 = vunpack.c.l.b16 %v1097
    %v3568 = vunpack.c.l.b16 %v1098
    %v3569 = vunpack.c.l.b16 %v1099
    %v3570 = vunpack.c.l.b16 %v1100
    %v3571 = vunpack.c.l.b16 %v1101
    %v3572 = vunpack.c.l.b16 %v1102
    %v3573 = vunpack.c.l.b16 %v1103
    %v3574 = vunpack.c.l.b16 %v1104
    %v3575 = vunpack.c.l.b16 %v1105
    %v3576 = vunpack.c.l.b16 %v1106
    %v3577 = vunpack.c.l.b16 %v1107
    %v3578 = vunpack.c.l.b16 %v1108
    %v3579 = vunpack.c.l.b16 %v1109
    %v3580 = vunpack.c.l.b16 %v1110
    %v3581 = vunpack.c.l.b16 %v1111
    %v3582 = vunpack.c.l.b16 %v1112
    %v3583 = vunpack.c.l.b16 %v1113
    %v3584 = vunpack.c.l.b16 %v1114
    %v3585 = vunpack.c.l.b16 %v1115
    %v3586 = vunpack.c.l.b16 %v1116
    %v3587 = vunpack.c.l.b16 %v1117
    %v3588 = vunpack.c.l.b16 %v1118
    %v3589 = vunpack.c.l.b16 %v1119
    %v3590 = vunpack.c.l.b16 %v1120
    %v3591 = vunpack.c.l.b16 %v1121
    %v3592 = vunpack.c.l.b16 %v1122
    %v3593 = vunpack.c.l.b16 %v1123
    %v3594 = vunpack.c.l.b16 %v1124
    %v3595 = vunpack.c.l.b16 %v1125
    %v3596 = vunpack.c.l.b16 %v1126
    %v3597 = vunpack.c.l.b16 %v1127
    %v3598 = vunpack.c.l.b16 %v1128
    %v3599 = vunpack.c.l.b16 %v1129
    %v3600 = vunpack.c.l.b16 %v1130
    %v3601 = vunpack.c.l.b16 %v1131
    %v3602 = vunpack.c.l.b16 %v1132
    %v3603 = vunpack.c.l.b16 %v1133
    %v3604 = vunpack.c.l.b16 %v1134
    %v3605 = vunpack.c.l.b16 %v1135
    %v3606 = vunpack.c.l.b16 %v1136
    %v3607 = vunpack.c.l.b16 %v1137
    %v3608 = vunpack.c.l.b16 %v1138
    %v3609 = vunpack.c.l.b16 %v1139
    %v3610 = vunpack.c.l.b16 %v1140
    %v3611 = vunpack.c.l.b16 %v1141
    %v3612 = vunpack.c.l.b16 %v1142
    %v3613 = vunpack.c.l.b16 %v1143
    %v3614 = vunpack.c.l.b16 %v1144
    %v3615 = vunpack.c.l.b16 %v1145
    %v3616 = vunpack.c.l.b16 %v1146
    %v3617 = vunpack.c.l.b16 %v1147
    %v3618 = vunpack.c.l.b16 %v1148
    %v3619 = vunpack.c.l.b16 %v1149
    %v3620 = vunpack.c.l.b16 %v1150
    %v3621 = vunpack.c.l.b16 %v1151
    %v3622 = vunpack.c.l.b16 %v1152
    %v3623 = vunpack.c.l.b16 %v1153
    %v3624 = vunpack.c.l.b16 %v1154
    %v3625 = vunpack.c.l.b16 %v1155
    %v3626 = vunpack.c.l.b16 %v1156
    %v3627 = vunpack.c.l.b16 %v1157
    %v3628 = vunpack.c.l.b16 %v1158
    %v3629 = vunpack.c.l.b16 %v1159
    %v3630 = vunpack.c.l.b16 %v1160
    %v3631 = vunpack.c.l.b16 %v1161
    %v3632 = vunpack.c.l.b16 %v1162
    %v3633 = vunpack.c.l.b16 %v1163
    %v3634 = vunpack.c.l.b16 %v1164
    %v3635 = vunpack.c.l.b16 %v1165
    %v3636 = vunpack.c.l.b16 %v1166
    %v3637 = vunpack.c.l.b16 %v1167
    %v3638 = vunpack.c.l.b16 %v1168
    %v3639 = vunpack.c.l.b16 %v1169
    %v3640 = vunpack.c.l.b16 %v1170
    %v3641 = vunpack.c.l.b16 %v1171
    %v3642 = vunpack.c.l.b16 %v1172
    %v3643 = vunpack.c.l.b16 %v1173
    %v3644 = vunpack.c.l.b16 %v1174
    %v3645 = vunpack.c.l.b16 %v1175
    %v3646 = vunpack.c.l.b16 %v1176
    %v3647 = vunpack.c.l.b16 %v1177
    %v3648 = vunpack.c.l.b16 %v1178
    %v3649 = vunpack.c.l.b16 %v1179
    %v3650 = vunpack.c.l.b16 %v1180
    %v3651 = vunpack.c.l.b16 %v1181
    %v3652 = vunpack.c.l.b16 %v1182
    %v3653 = vunpack.c.l.b16 %v1183
    %v3654 = vunpack.c.l.b16 %v1184
    %v3655 = vunpack.c.l.b16 %v1185
    %v3656 = vunpack.c.l.b16 %v1186
    %v3657 = vunpack.c.l.b16 %v1187
    %v3658 = vunpack.c.l.b16 %v1188
    %v3659 = vunpack.c.l.b16 %v1189
    %v3660 = vunpack.c.l.b16 %v1190
    %v3661 = vunpack.c.l.b16 %v1191
    %v3662 = vunpack.c.l.b16 %v1192
    %v3663 = vunpack.c.l.b16 %v1193
    %v3664 = vunpack.c.l.b16 %v1194
    %v3665 = vunpack.c.l.b16 %v1195
    %v3666 = vunpack.c.l.b16 %v1196
    %v3667 = vunpack.c.l.b16 %v1197
    %v3668 = vunpack.c.l.b16 %v1198
    %v3669 = vunpack.c.l.b16 %v1199
    %v3670 = vunpack.c.l.b16 %v1200
    %v3671 = vunpack.c.l.b16 %v1201
    %v3672 = vunpack.c.l.b16 %v1202
    %v3673 = vunpack.c.l.b16 %v1203
    %v3674 = vunpack.c.l.b16 %v1204
    %v3675 = vunpack.c.l.b16 %v1205
    %v3676 = vunpack.c.l.b16 %v1206
    %v3677 = vunpack.c.l.b16 %v1207
    %v3678 = vunpack.c.l.b16 %v1208
    %v3679 = vunpack.c.l.b16 %v1209
    %v3680 = vunpack.c.l.b16 %v1210
    %v3681 = vunpack.c.l.b16 %v1211
    %v3682 = vunpack.c.l.b16 %v1212
    %v3683 = vunpack.c.l.b16 %v1213
    %v3684 = vunpack.c.l.b16 %v1214
    %v3685 = vunpack.c.l.b16 %v1215
    %v3686 = vunpack.c.l.b16 %v1216
    %v3687 = vunpack.c.l.b16 %v1217
    %v3688 = vunpack.c.l.b16 %v1218
    %v3689 = vunpack.c.l.b16 %v1219
    %v3690 = vunpack.c.l.b16 %v1220
    %v3691 = vunpack.c.l.b16 %v1221
    %v3692 = vunpack.c.l.b16 %v1222
    %v3693 = vunpack.c.l.b16 %v1223
    %v3694 = vunpack.c.l.b16 %v1224
    %v3695 = vunpack.c.l.b16 %v1225
    %v3696 = vunpack.c.l.b16 %v1226
    %v3697 = vunpack.c.l.b16 %v1227
    %v3698 = vunpack.c.l.b16 %v1228
    %v3699 = vunpack.c.l.b16 %v1229
    %v3700 = vunpack.c.l.b16 %v1230
    %v3701 = vunpack.c.l.b16 %v1231
    %v3702 = vunpack.c.l.b16 %v1232
    %v3703 = vunpack.c.l.b16 %v1233
    %v3704 = vunpack.c.l.b16 %v1234
    %v3705 = vunpack.c.l.b16 %v1235
    %v3706 = vunpack.c.l.b16 %v1236
    %v3707 = vunpack.c.l.b16 %v1237
    %v3708 = vunpack.c.l.b16 %v1238
    %v3709 = vunpack.c.l.b16 %v1239
    %v3710 = vunpack.c.l.b16 %v1240
    %v3711 = vpack.c.b16 %v2560, %v2559
    %v3712 = vpack.c.b16 %v2562, %v2561
    %v3713 = vpack.c.b16 %v2564, %v2563
    %v3714 = vpack.c.b16 %v2566, %v2565
    %v3715 = vpack.c.b16 %v2568, %v2567
    %v3716 = vpack.c.b16 %v2570, %v2569
    %v3717 = vpack.c.b16 %v2572, %v2571
    %v3718 = vpack.c.b16 %v2574, %v2573
    %v3719 = vpack.c.b16 %v2576, %v2575
    %v3720 = vpack.c.b16 %v2578, %v2577
    %v3721 = vpack.c.b16 %v2580, %v2579
    %v3722 = vpack.c.b16 %v2582, %v2581
    %v3723 = vpack.c.b16 %v2584, %v2583
    %v3724 = vpack.c.b16 %v2586, %v2585
    %v3725 = vpack.c.b16 %v2588, %v2587
    %v3726 = vpack.c.b16 %v2590, %v2589
    %v3727 = vpack.c.b16 %v2592, %v2591
    %v3728 = vpack.c.b16 %v2594, %v2593
    %v3729 = vpack.c.b16 %v2596, %v2595
    %v3730 = vpack.c.b16 %v2598, %v2597
    %v3731 = vpack.c.b16 %v2600, %v2599
    %v3732 = vpack.c.b16 %v2602, %v2601
    %v3733 = vpack.c.b16 %v2604, %v2603
    %v3734 = vpack.c.b16 %v2606, %v2605
    %v3735 = vpack.c.b16 %v2608, %v2607
    %v3736 = vpack.c.b16 %v2610, %v2609
    %v3737 = vpack.c.b16 %v2612, %v2611
    %v3738 = vpack.c.b16 %v2614, %v2613
    %v3739 = vpack.c.b16 %v2616, %v2615
    %v3740 = vpack.c.b16 %v2618, %v2617
    %v3741 = vpack.c.b16 %v2620, %v2619
    %v3742 = vpack.c.b16 %v2622, %v2621
    %v3743 = vpack.c.b16 %v2624, %v2623
    %v3744 = vpack.c.b16 %v2626, %v2625
    %v3745 = vpack.c.b16 %v2628, %v2627
    %v3746 = vpack.c.b16 %v2630, %v2629
    %v3747 = vpack.c.b16 %v2632, %v2631
    %v3748 = vpack.c.b16 %v2634, %v2633
    %v3749 = vpack.c.b16 %v2636, %v2635
    %v3750 = vpack.c.b16 %v2638, %v2637
    %v3751 = vpack.c.b16 %v2640, %v2639
    %v3752 = vpack.c.b16 %v2642, %v2641
    %v3753 = vpack.c.b16 %v2644, %v2643
    %v3754 = vpack.c.b16 %v2646, %v2645
    %v3755 = vpack.c.b16 %v2648, %v2647
    %v3756 = vpack.c.b16 %v2650, %v2649
    %v3757 = vpack.c.b16 %v2652, %v2651
    %v3758 = vpack.c.b16 %v2654, %v2653
    %v3759 = vpack.c.b16 %v2656, %v2655
    %v3760 = vpack.c.b16 %v2658, %v2657
    %v3761 = vpack.c.b16 %v2660, %v2659
    %v3762 = vpack.c.b16 %v2662, %v2661
    %v3763 = vpack.c.b16 %v2664, %v2663
    %v3764 = vpack.c.b16 %v2666, %v2665
    %v3765 = vpack.c.b16 %v2668, %v2667
    %v3766 = vpack.c.b16 %v2670, %v2669
    %v3767 = vpack.c.b16 %v2672, %v2671
    %v3768 = vpack.c.b16 %v2674, %v2673
    %v3769 = vpack.c.b16 %v2676, %v2675
    %v3770 = vpack.c.b16 %v2678, %v2677
    %v3771 = vpack.c.b16 %v2680, %v2679
    %v3772 = vpack.c.b16 %v2682, %v2681
    %v3773 = vpack.c.b16 %v2684, %v2683
    %v3774 = vpack.c.b16 %v2686, %v2685
    %v3775 = vpack.c.b16 %v2688, %v2687
    %v3776 = vpack.c.b16 %v2690, %v2689
    %v3777 = vpack.c.b16 %v2692, %v2691
    %v3778 = vpack.c.b16 %v2694, %v2693
    %v3779 = vpack.c.b16 %v2696, %v2695
    %v3780 = vpack.c.b16 %v2698, %v2697
    %v3781 = vpack.c.b16 %v2700, %v2699
    %v3782 = vpack.c.b16 %v2702, %v2701
    %v3783 = vpack.c.b16 %v2704, %v2703
    %v3784 = vpack.c.b16 %v2706, %v2705
    %v3785 = vpack.c.b16 %v2708, %v2707
    %v3786 = vpack.c.b16 %v2710, %v2709
    %v3787 = vpack.c.b16 %v2712, %v2711
    %v3788 = vpack.c.b16 %v2714, %v2713
    %v3789 = vpack.c.b16 %v2716, %v2715
    %v3790 = vpack.c.b16 %v2718, %v2717
    %v3791 = vpack.c.b16 %v2720, %v2719
    %v3792 = vpack.c.b16 %v2722, %v2721
    %v3793 = vpack.c.b16 %v2724, %v2723
    %v3794 = vpack.c.b16 %v2726, %v2725
    %v3795 = vpack.c.b16 %v2728, %v2727
    %v3796 = vpack.c.b16 %v2730, %v2729
    %v3797 = vpack.c.b16 %v2732, %v2731
    %v3798 = vpack.c.b16 %v2734, %v2733
    %v3799 = vpack.c.b16 %v2736, %v2735
    %v3800 = vpack.c.b16 %v2738, %v2737
    %v3801 = vpack.c.b16 %v2740, %v2739
    %v3802 = vpack.c.b16 %v2742, %v2741
    %v3803 = vpack.c.b16 %v2744, %v2743
    %v3804 = vpack.c.b16 %v2746, %v2745
    %v3805 = vpack.c.b16 %v2748, %v2747
    %v3806 = vpack.c.b16 %v2750, %v2749
    %v3807 = vpack.c.b16 %v2752, %v2751
    %v3808 = vpack.c.b16 %v2754, %v2753
    %v3809 = vpack.c.b16 %v2756, %v2755
    %v3810 = vpack.c.b16 %v2758, %v2757
    %v3811 = vpack.c.b16 %v2760, %v2759
    %v3812 = vpack.c.b16 %v2762, %v2761
    %v3813 = vpack.c.b16 %v2764, %v2763
    %v3814 = vpack.c.b16 %v2766, %v2765
    %v3815 = vpack.c.b16 %v2768, %v2767
    %v3816 = vpack.c.b16 %v2770, %v2769
    %v3817 = vpack.c.b16 %v2772, %v2771
    %v3818 = vpack.c.b16 %v2774, %v2773
    %v3819 = vpack.c.b16 %v2776, %v2775
    %v3820 = vpack.c.b16 %v2778, %v2777
    %v3821 = vpack.c.b16 %v2780, %v2779
    %v3822 = vpack.c.b16 %v2782, %v2781
    %v3823 = vpack.c.b16 %v2784, %v2783
    %v3824 = vpack.c.b16 %v2786, %v2785
    %v3825 = vpack.c.b16 %v2788, %v2787
    %v3826 = vpack.c.b16 %v2790, %v2789
    %v3827 = vpack.c.b16 %v2792, %v2791
    %v3828 = vpack.c.b16 %v2794, %v2793
    %v3829 = vpack.c.b16 %v2796, %v2795
    %v3830 = vpack.c.b16 %v2798, %v2797
    %v3831 = vpack.c.b16 %v2800, %v2799
    %v3832 = vpack.c.b16 %v2802, %v2801
    %v3833 = vpack.c.b16 %v2804, %v2803
    %v3834 = vpack.c.b16 %v2806, %v2805
    %v3835 = vpack.c.b16 %v2808, %v2807
    %v3836 = vpack.c.b16 %v2810, %v2809
    %v3837 = vpack.c.b16 %v2812, %v2811
    %v3838 = vpack.c.b16 %v2814, %v2813
    %v3839 = vpack.c.b16 %v2816, %v2815
    %v3840 = vpack.c.b16 %v2818, %v2817
    %v3841 = vpack.c.b16 %v2820, %v2819
    %v3842 = vpack.c.b16 %v2822, %v2821
    %v3843 = vpack.c.b16 %v2824, %v2823
    %v3844 = vpack.c.b16 %v2826, %v2825
    %v3845 = vpack.c.b16 %v2828, %v2827
    %v3846 = vpack.c.b16 %v2830, %v2829
    %v3847 = vpack.c.b16 %v2832, %v2831
    %v3848 = vpack.c.b16 %v2834, %v2833
    %v3849 = vpack.c.b16 %v2836, %v2835
    %v3850 = vpack.c.b16 %v2838, %v2837
    %v3851 = vpack.c.b16 %v2840, %v2839
    %v3852 = vpack.c.b16 %v2842, %v2841
    %v3853 = vpack.c.b16 %v2844, %v2843
    %v3854 = vpack.c.b16 %v2846, %v2845
    %v3855 = vpack.c.b16 %v2848, %v2847
    %v3856 = vpack.c.b16 %v2850, %v2849
    %v3857 = vpack.c.b16 %v2852, %v2851
    %v3858 = vpack.c.b16 %v2854, %v2853
    %v3859 = vpack.c.b16 %v2856, %v2855
    %v3860 = vpack.c.b16 %v2858, %v2857
    %v3861 = vpack.c.b16 %v2860, %v2859
    %v3862 = vpack.c.b16 %v2862, %v2861
    %v3863 = vpack.c.b16 %v2864, %v2863
    %v3864 = vpack.c.b16 %v2866, %v2865
    %v3865 = vpack.c.b16 %v2868, %v2867
    %v3866 = vpack.c.b16 %v2870, %v2869
    %v3867 = vpack.c.b16 %v2872, %v2871
    %v3868 = vpack.c.b16 %v2874, %v2873
    %v3869 = vpack.c.b16 %v2876, %v2875
    %v3870 = vpack.c.b16 %v2878, %v2877
    %v3871 = vpack.c.b16 %v2880, %v2879
    %v3872 = vpack.c.b16 %v2882, %v2881
    %v3873 = vpack.c.b16 %v2884, %v2883
    %v3874 = vpack.c.b16 %v2886, %v2885
    %v3875 = vpack.c.b16 %v2888, %v2887
    %v3876 = vpack.c.b16 %v2890, %v2889
    %v3877 = vpack.c.b16 %v2892, %v2891
    %v3878 = vpack.c.b16 %v2894, %v2893
    %v3879 = vpack.c.b16 %v2896, %v2895
    %v3880 = vpack.c.b16 %v2898, %v2897
    %v3881 = vpack.c.b16 %v2900, %v2899
    %v3882 = vpack.c.b16 %v2902, %v2901
    %v3883 = vpack.c.b16 %v2904, %v2903
    %v3884 = vpack.c.b16 %v2906, %v2905
    %v3885 = vpack.c.b16 %v2908, %v2907
    %v3886 = vpack.c.b16 %v2910, %v2909
    %v3887 = vpack.c.b16 %v2912, %v2911
    %v3888 = vpack.c.b16 %v2914, %v2913
    %v3889 = vpack.c.b16 %v2916, %v2915
    %v3890 = vpack.c.b16 %v2918, %v2917
    %v3891 = vpack.c.b16 %v2920, %v2919
    %v3892 = vpack.c.b16 %v2922, %v2921
    %v3893 = vpack.c.b16 %v2924, %v2923
    %v3894 = vpack.c.b16 %v2926, %v2925
    %v3895 = vpack.c.b16 %v2928, %v2927
    %v3896 = vpack.c.b16 %v2930, %v2929
    %v3897 = vpack.c.b16 %v2932, %v2931
    %v3898 = vpack.c.b16 %v2934, %v2933
    %v3899 = vpack.c.b16 %v2936, %v2935
    %v3900 = vpack.c.b16 %v2938, %v2937
    %v3901 = vpack.c.b16 %v2940, %v2939
    %v3902 = vpack.c.b16 %v2942, %v2941
    %v3903 = vpack.c.b16 %v2944, %v2943
    %v3904 = vpack.c.b16 %v2946, %v2945
    %v3905 = vpack.c.b16 %v2948, %v2947
    %v3906 = vpack.c.b16 %v2950, %v2949
    %v3907 = vpack.c.b16 %v2952, %v2951
    %v3908 = vpack.c.b16 %v2954, %v2953
    %v3909 = vpack.c.b16 %v2956, %v2955
    %v3910 = vpack.c.b16 %v2958, %v2957
    %v3911 = vpack.c.b16 %v2960, %v2959
    %v3912 = vpack.c.b16 %v2962, %v2961
    %v3913 = vpack.c.b16 %v2964, %v2963
    %v3914 = vpack.c.b16 %v2966, %v2965
    %v3915 = vpack.c.b16 %v2968, %v2967
    %v3916 = vpack.c.b16 %v2970, %v2969
    %v3917 = vpack.c.b16 %v2972, %v2971
    %v3918 = vpack.c.b16 %v2974, %v2973
    %v3919 = vpack.c.b16 %v2976, %v2975
    %v3920 = vpack.c.b16 %v2978, %v2977
    %v3921 = vpack.c.b16 %v2980, %v2979
    %v3922 = vpack.c.b16 %v2982, %v2981
    %v3923 = vpack.c.b16 %v2984, %v2983
    %v3924 = vpack.c.b16 %v2986, %v2985
    %v3925 = vpack.c.b16 %v2988, %v2987
    %v3926 = vpack.c.b16 %v2990, %v2989
    %v3927 = vpack.c.b16 %v2992, %v2991
    %v3928 = vpack.c.b16 %v2994, %v2993
    %v3929 = vpack.c.b16 %v2996, %v2995
    %v3930 = vpack.c.b16 %v2998, %v2997
    %v3931 = vpack.c.b16 %v3000, %v2999
    %v3932 = vpack.c.b16 %v3002, %v3001
    %v3933 = vpack.c.b16 %v3004, %v3003
    %v3934 = vpack.c.b16 %v3006, %v3005
    %v3935 = vpack.c.b16 %v3008, %v3007
    %v3936 = vpack.c.b16 %v3010, %v3009
    %v3937 = vpack.c.b16 %v3012, %v3011
    %v3938 = vpack.c.b16 %v3014, %v3013
    %v3939 = vpack.c.b16 %v3016, %v3015
    %v3940 = vpack.c.b16 %v3018, %v3017
    %v3941 = vpack.c.b16 %v3020, %v3019
    %v3942 = vpack.c.b16 %v3022, %v3021
    %v3943 = vpack.c.b16 %v3024, %v3023
    %v3944 = vpack.c.b16 %v3026, %v3025
    %v3945 = vpack.c.b16 %v3028, %v3027
    %v3946 = vpack.c.b16 %v3030, %v3029
    %v3947 = vpack.c.b16 %v3032, %v3031
    %v3948 = vpack.c.b16 %v3034, %v3033
    %v3949 = vpack.c.b16 %v3036, %v3035
    %v3950 = vpack.c.b16 %v3038, %v3037
    %v3951 = vpack.c.b16 %v3040, %v3039
    %v3952 = vpack.c.b16 %v3042, %v3041
    %v3953 = vpack.c.b16 %v3044, %v3043
    %v3954 = vpack.c.b16 %v3046, %v3045
    %v3955 = vpack.c.b16 %v3048, %v3047
    %v3956 = vpack.c.b16 %v3050, %v3049
    %v3957 = vpack.c.b16 %v3052, %v3051
    %v3958 = vpack.c.b16 %v3054, %v3053
    %v3959 = vpack.c.b16 %v3056, %v3055
    %v3960 = vpack.c.b16 %v3058, %v3057
    %v3961 = vpack.c.b16 %v3060, %v3059
    %v3962 = vpack.c.b16 %v3062, %v3061
    %v3963 = vpack.c.b16 %v3064, %v3063
    %v3964 = vpack.c.b16 %v3066, %v3065
    %v3965 = vpack.c.b16 %v3068, %v3067
    %v3966 = vpack.c.b16 %v3070, %v3069
    %v3967 = vpack.c.b16 %v3072, %v3071
    %v3968 = vpack.c.b16 %v3074, %v3073
    %v3969 = vpack.c.b16 %v3076, %v3075
    %v3970 = vpack.c.b16 %v3078, %v3077
    %v3971 = vpack.c.b16 %v3080, %v3079
    %v3972 = vpack.c.b16 %v3082, %v3081
    %v3973 = vpack.c.b16 %v3084, %v3083
    %v3974 = vpack.c.b16 %v3086, %v3085
    %v3975 = vpack.c.b16 %v3088, %v3087
    %v3976 = vpack.c.b16 %v3090, %v3089
    %v3977 = vpack.c.b16 %v3092, %v3091
    %v3978 = vpack.c.b16 %v3094, %v3093
    %v3979 = vpack.c.b16 %v3096, %v3095
    %v3980 = vpack.c.b16 %v3098, %v3097
    %v3981 = vpack.c.b16 %v3100, %v3099
    %v3982 = vpack.c.b16 %v3102, %v3101
    %v3983 = vpack.c.b16 %v3104, %v3103
    %v3984 = vpack.c.b16 %v3106, %v3105
    %v3985 = vpack.c.b16 %v3108, %v3107
    %v3986 = vpack.c.b16 %v3110, %v3109
    %v3987 = vpack.c.b16 %v3112, %v3111
    %v3988 = vpack.c.b16 %v3114, %v3113
    %v3989 = vpack.c.b16 %v3116, %v3115
    %v3990 = vpack.c.b16 %v3118, %v3117
    %v3991 = vpack.c.b16 %v3120, %v3119
    %v3992 = vpack.c.b16 %v3122, %v3121
    %v3993 = vpack.c.b16 %v3124, %v3123
    %v3994 = vpack.c.b16 %v3126, %v3125
    %v3995 = vpack.c.b16 %v3128, %v3127
    %v3996 = vpack.c.b16 %v3130, %v3129
    %v3997 = vpack.c.b16 %v3132, %v3131
    %v3998 = vpack.c.b16 %v3134, %v3133
    %v3999 = vpack.c.b16 %v3136, %v3135
    %v4000 = vpack.c.b16 %v3138, %v3137
    %v4001 = vpack.c.b16 %v3140, %v3139
    %v4002 = vpack.c.b16 %v3142, %v3141
    %v4003 = vpack.c.b16 %v3144, %v3143
    %v4004 = vpack.c.b16 %v3146, %v3145
    %v4005 = vpack.c.b16 %v3148, %v3147
    %v4006 = vpack.c.b16 %v3150, %v3149
    %v4007 = vpack.c.b16 %v3152, %v3151
    %v4008 = vpack.c.b16 %v3154, %v3153
    %v4009 = vpack.c.b16 %v3156, %v3155
    %v4010 = vpack.c.b16 %v3158, %v3157
    %v4011 = vpack.c.b16 %v3160, %v3159
    %v4012 = vpack.c.b16 %v3162, %v3161
    %v4013 = vpack.c.b16 %v3164, %v3163
    %v4014 = vpack.c.b16 %v3166, %v3165
    %v4015 = vpack.c.b16 %v3168, %v3167
    %v4016 = vpack.c.b16 %v3170, %v3169
    %v4017 = vpack.c.b16 %v3172, %v3171
    %v4018 = vpack.c.b16 %v3174, %v3173
    %v4019 = vpack.c.b16 %v3176, %v3175
    %v4020 = vpack.c.b16 %v3178, %v3177
    %v4021 = vpack.c.b16 %v3180, %v3179
    %v4022 = vpack.c.b16 %v3182, %v3181
    %v4023 = vpack.c.b16 %v3184, %v3183
    %v4024 = vpack.c.b16 %v3186, %v3185
    %v4025 = vpack.c.b16 %v3188, %v3187
    %v4026 = vpack.c.b16 %v3190, %v3189
    %v4027 = vpack.c.b16 %v3192, %v3191
    %v4028 = vpack.c.b16 %v3194, %v3193
    %v4029 = vpack.c.b16 %v3196, %v3195
    %v4030 = vpack.c.b16 %v3198, %v3197
    %v4031 = vpack.c.b16 %v3200, %v3199
    %v4032 = vpack.c.b16 %v3202, %v3201
    %v4033 = vpack.c.b16 %v3204, %v3203
    %v4034 = vpack.c.b16 %v3206, %v3205
    %v4035 = vpack.c.b16 %v3208, %v3207
    %v4036 = vpack.c.b16 %v3210, %v3209
    %v4037 = vpack.c.b16 %v3212, %v3211
    %v4038 = vpack.c.b16 %v3214, %v3213
    %v4039 = vpack.c.b16 %v3216, %v3215
    %v4040 = vpack.c.b16 %v3218, %v3217
    %v4041 = vpack.c.b16 %v3220, %v3219
    %v4042 = vpack.c.b16 %v3222, %v3221
    %v4043 = vpack.c.b16 %v3224, %v3223
    %v4044 = vpack.c.b16 %v3226, %v3225
    %v4045 = vpack.c.b16 %v3228, %v3227
    %v4046 = vpack.c.b16 %v3230, %v3229
    %v4047 = vpack.c.b16 %v3232, %v3231
    %v4048 = vpack.c.b16 %v3234, %v3233
    %v4049 = vpack.c.b16 %v3236, %v3235
    %v4050 = vpack.c.b16 %v3238, %v3237
    %v4051 = vpack.c.b16 %v3240, %v3239
    %v4052 = vpack.c.b16 %v3242, %v3241
    %v4053 = vpack.c.b16 %v3244, %v3243
    %v4054 = vpack.c.b16 %v3246, %v3245
    %v4055 = vpack.c.b16 %v3248, %v3247
    %v4056 = vpack.c.b16 %v3250, %v3249
    %v4057 = vpack.c.b16 %v3252, %v3251
    %v4058 = vpack.c.b16 %v3254, %v3253
    %v4059 = vpack.c.b16 %v3256, %v3255
    %v4060 = vpack.c.b16 %v3258, %v3257
    %v4061 = vpack.c.b16 %v3260, %v3259
    %v4062 = vpack.c.b16 %v3262, %v3261
    %v4063 = vpack.c.b16 %v3264, %v3263
    %v4064 = vpack.c.b16 %v3266, %v3265
    %v4065 = vpack.c.b16 %v3268, %v3267
    %v4066 = vpack.c.b16 %v3270, %v3269
    %v4067 = vpack.c.b16 %v3272, %v3271
    %v4068 = vpack.c.b16 %v3274, %v3273
    %v4069 = vpack.c.b16 %v3276, %v3275
    %v4070 = vpack.c.b16 %v3278, %v3277
    %v4071 = vpack.c.b16 %v3280, %v3279
    %v4072 = vpack.c.b16 %v3282, %v3281
    %v4073 = vpack.c.b16 %v3284, %v3283
    %v4074 = vpack.c.b16 %v3286, %v3285
    %v4075 = vpack.c.b16 %v3288, %v3287
    %v4076 = vpack.c.b16 %v3290, %v3289
    %v4077 = vpack.c.b16 %v3292, %v3291
    %v4078 = vpack.c.b16 %v3294, %v3293
    %v4079 = vpack.c.b16 %v3296, %v3295
    %v4080 = vpack.c.b16 %v3298, %v3297
    %v4081 = vpack.c.b16 %v3300, %v3299
    %v4082 = vpack.c.b16 %v3302, %v3301
    %v4083 = vpack.c.b16 %v3304, %v3303
    %v4084 = vpack.c.b16 %v3306, %v3305
    %v4085 = vpack.c.b16 %v3308, %v3307
    %v4086 = vpack.c.b16 %v3310, %v3309
    %v4087 = vpack.c.b16 %v3312, %v3311
    %v4088 = vpack.c.b16 %v3314, %v3313
    %v4089 = vpack.c.b16 %v3316, %v3315
    %v4090 = vpack.c.b16 %v3318, %v3317
    %v4091 = vpack.c.b16 %v3320, %v3319
    %v4092 = vpack.c.b16 %v3322, %v3321
    %v4093 = vpack.c.b16 %v3324, %v3323
    %v4094 = vpack.c.b16 %v3326, %v3325
    %v4095 = vpack.c.b16 %v3328, %v3327
    %v4096 = vpack.c.b16 %v3330, %v3329
    %v4097 = vpack.c.b16 %v3332, %v3331
    %v4098 = vpack.c.b16 %v3334, %v3333
    %v4099 = vpack.c.b16 %v3336, %v3335
    %v4100 = vpack.c.b16 %v3338, %v3337
    %v4101 = vpack.c.b16 %v3340, %v3339
    %v4102 = vpack.c.b16 %v3342, %v3341
    %v4103 = vpack.c.b16 %v3344, %v3343
    %v4104 = vpack.c.b16 %v3346, %v3345
    %v4105 = vpack.c.b16 %v3348, %v3347
    %v4106 = vpack.c.b16 %v3350, %v3349
    %v4107 = vpack.c.b16 %v3352, %v3351
    %v4108 = vpack.c.b16 %v3354, %v3353
    %v4109 = vpack.c.b16 %v3356, %v3355
    %v4110 = vpack.c.b16 %v3358, %v3357
    %v4111 = vpack.c.b16 %v3360, %v3359
    %v4112 = vpack.c.b16 %v3362, %v3361
    %v4113 = vpack.c.b16 %v3364, %v3363
    %v4114 = vpack.c.b16 %v3366, %v3365
    %v4115 = vpack.c.b16 %v3368, %v3367
    %v4116 = vpack.c.b16 %v3370, %v3369
    %v4117 = vpack.c.b16 %v3372, %v3371
    %v4118 = vpack.c.b16 %v3374, %v3373
    %v4119 = vpack.c.b16 %v3376, %v3375
    %v4120 = vpack.c.b16 %v3378, %v3377
    %v4121 = vpack.c.b16 %v3380, %v3379
    %v4122 = vpack.c.b16 %v3382, %v3381
    %v4123 = vpack.c.b16 %v3384, %v3383
    %v4124 = vpack.c.b16 %v3386, %v3385
    %v4125 = vpack.c.b16 %v3388, %v3387
    %v4126 = vpack.c.b16 %v3390, %v3389
    %v4127 = vpack.c.b16 %v3392, %v3391
    %v4128 = vpack.c.b16 %v3394, %v3393
    %v4129 = vpack.c.b16 %v3396, %v3395
    %v4130 = vpack.c.b16 %v3398, %v3397
    %v4131 = vpack.c.b16 %v3400, %v3399
    %v4132 = vpack.c.b16 %v3402, %v3401
    %v4133 = vpack.c.b16 %v3404, %v3403
    %v4134 = vpack.c.b16 %v3406, %v3405
    %v4135 = vpack.c.b16 %v3408, %v3407
    %v4136 = vpack.c.b16 %v3410, %v3409
    %v4137 = vpack.c.b16 %v3412, %v3411
    %v4138 = vpack.c.b16 %v3414, %v3413
    %v4139 = vpack.c.b16 %v3416, %v3415
    %v4140 = vpack.c.b16 %v3418, %v3417
    %v4141 = vpack.c.b16 %v3420, %v3419
    %v4142 = vpack.c.b16 %v3422, %v3421
    %v4143 = vpack.c.b16 %v3424, %v3423
    %v4144 = vpack.c.b16 %v3426, %v3425
    %v4145 = vpack.c.b16 %v3428, %v3427
    %v4146 = vpack.c.b16 %v3430, %v3429
    %v4147 = vpack.c.b16 %v3432, %v3431
    %v4148 = vpack.c.b16 %v3434, %v3433
    %v4149 = vpack.c.b16 %v3436, %v3435
    %v4150 = vpack.c.b16 %v3438, %v3437
    %v4151 = vpack.c.b16 %v3440, %v3439
    %v4152 = vpack.c.b16 %v3442, %v3441
    %v4153 = vpack.c.b16 %v3444, %v3443
    %v4154 = vpack.c.b16 %v3446, %v3445
    %v4155 = vpack.c.b16 %v3448, %v3447
    %v4156 = vpack.c.b16 %v3450, %v3449
    %v4157 = vpack.c.b16 %v3452, %v3451
    %v4158 = vpack.c.b16 %v3454, %v3453
    %v4159 = vpack.c.b16 %v3456, %v3455
    %v4160 = vpack.c.b16 %v3458, %v3457
    %v4161 = vpack.c.b16 %v3460, %v3459
    %v4162 = vpack.c.b16 %v3462, %v3461
    %v4163 = vpack.c.b16 %v3464, %v3463
    %v4164 = vpack.c.b16 %v3466, %v3465
    %v4165 = vpack.c.b16 %v3468, %v3467
    %v4166 = vpack.c.b16 %v3470, %v3469
    %v4167 = vpack.c.b16 %v3472, %v3471
    %v4168 = vpack.c.b16 %v3474, %v3473
    %v4169 = vpack.c.b16 %v3476, %v3475
    %v4170 = vpack.c.b16 %v3478, %v3477
    %v4171 = vpack.c.b16 %v3480, %v3479
    %v4172 = vpack.c.b16 %v3482, %v3481
    %v4173 = vpack.c.b16 %v3484, %v3483
    %v4174 = vpack.c.b16 %v3486, %v3485
    %v4175 = vpack.c.b16 %v3488, %v3487
    %v4176 = vpack.c.b16 %v3490, %v3489
    %v4177 = vpack.c.b16 %v3492, %v3491
    %v4178 = vpack.c.b16 %v3494, %v3493
    %v4179 = vpack.c.b16 %v3496, %v3495
    %v4180 = vpack.c.b16 %v3498, %v3497
    %v4181 = vpack.c.b16 %v3500, %v3499
    %v4182 = vpack.c.b16 %v3502, %v3501
    %v4183 = vpack.c.b16 %v3504, %v3503
    %v4184 = vpack.c.b16 %v3506, %v3505
    %v4185 = vpack.c.b16 %v3508, %v3507
    %v4186 = vpack.c.b16 %v3510, %v3509
    %v4187 = vpack.c.b16 %v3512, %v3511
    %v4188 = vpack.c.b16 %v3514, %v3513
    %v4189 = vpack.c.b16 %v3516, %v3515
    %v4190 = vpack.c.b16 %v3518, %v3517
    %v4191 = vpack.c.b16 %v3520, %v3519
    %v4192 = vpack.c.b16 %v3522, %v3521
    %v4193 = vpack.c.b16 %v3524, %v3523
    %v4194 = vpack.c.b16 %v3526, %v3525
    %v4195 = vpack.c.b16 %v3528, %v3527
    %v4196 = vpack.c.b16 %v3530, %v3529
    %v4197 = vpack.c.b16 %v3532, %v3531
    %v4198 = vpack.c.b16 %v3534, %v3533
    %v4199 = vpack.c.b16 %v3536, %v3535
    %v4200 = vpack.c.b16 %v3538, %v3537
    %v4201 = vpack.c.b16 %v3540, %v3539
    %v4202 = vpack.c.b16 %v3542, %v3541
    %v4203 = vpack.c.b16 %v3544, %v3543
    %v4204 = vpack.c.b16 %v3546, %v3545
    %v4205 = vpack.c.b16 %v3548, %v3547
    %v4206 = vpack.c.b16 %v3550, %v3549
    %v4207 = vpack.c.b16 %v3552, %v3551
    %v4208 = vpack.c.b16 %v3554, %v3553
    %v4209 = vpack.c.b16 %v3556, %v3555
    %v4210 = vpack.c.b16 %v3558, %v3557
    %v4211 = vpack.c.b16 %v3560, %v3559
    %v4212 = vpack.c.b16 %v3562, %v3561
    %v4213 = vpack.c.b16 %v3564, %v3563
    %v4214 = vpack.c.b16 %v3566, %v3565
    %v4215 = vpack.c.b16 %v3568, %v3567
    %v4216 = vpack.c.b16 %v3570, %v3569
    %v4217 = vpack.c.b16 %v3572, %v3571
    %v4218 = vpack.c.b16 %v3574, %v3573
    %v4219 = vpack.c.b16 %v3576, %v3575
    %v4220 = vpack.c.b16 %v3578, %v3577
    %v4221 = vpack.c.b16 %v3580, %v3579
    %v4222 = vpack.c.b16 %v3582, %v3581
    %v4223 = vpack.c.b16 %v3584, %v3583
    %v4224 = vpack.c.b16 %v3586, %v3585
    %v4225 = vpack.c.b16 %v3588, %v3587
    %v4226 = vpack.c.b16 %v3590, %v3589
    %v4227 = vpack.c.b16 %v3592, %v3591
    %v4228 = vpack.c.b16 %v3594, %v3593
    %v4229 = vpack.c.b16 %v3596, %v3595
    %v4230 = vpack.c.b16 %v3598, %v3597
    %v4231 = vpack.c.b16 %v3600, %v3599
    %v4232 = vpack.c.b16 %v3602, %v3601
    %v4233 = vpack.c.b16 %v3604, %v3603
    %v4234 = vpack.c.b16 %v3606, %v3605
    %v4235 = vpack.c.b16 %v3608, %v3607
    %v4236 = vpack.c.b16 %v3610, %v3609
    %v4237 = vpack.c.b16 %v3612, %v3611
    %v4238 = vpack.c.b16 %v3614, %v3613
    %v4239 = vpack.c.b16 %v3616, %v3615
    %v4240 = vpack.c.b16 %v3618, %v3617
    %v4241 = vpack.c.b16 %v3620, %v3619
    %v4242 = vpack.c.b16 %v3622, %v3621
    %v4243 = vpack.c.b16 %v3624, %v3623
    %v4244 = vpack.c.b16 %v3626, %v3625
    %v4245 = vpack.c.b16 %v3628, %v3627
    %v4246 = vpack.c.b16 %v3630, %v3629
    %v4247 = vpack.c.b16 %v3632, %v3631
    %v4248 = vpack.c.b16 %v3634, %v3633
    %v4249 = vpack.c.b16 %v3636, %v3635
    %v4250 = vpack.c.b16 %v3638, %v3637
    %v4251 = vpack.c.b16 %v3640, %v3639
    %v4252 = vpack.c.b16 %v3642, %v3641
    %v4253 = vpack.c.b16 %v3644, %v3643
    %v4254 = vpack.c.b16 %v3646, %v3645
    %v4255 = vpack.c.b16 %v3648, %v3647
    %v4256 = vpack.c.b16 %v3650, %v3649
    %v4257 = vpack.c.b16 %v3652, %v3651
    %v4258 = vpack.c.b16 %v3654, %v3653
    %v4259 = vpack.c.b16 %v3656, %v3655
    %v4260 = vpack.c.b16 %v3658, %v3657
    %v4261 = vpack.c.b16 %v3660, %v3659
    %v4262 = vpack.c.b16 %v3662, %v3661
    %v4263 = vpack.c.b16 %v3664, %v3663
    %v4264 = vpack.c.b16 %v3666, %v3665
    %v4265 = vpack.c.b16 %v3668, %v3667
    %v4266 = vpack.c.b16 %v3670, %v3669
    %v4267 = vpack.c.b16 %v3672, %v3671
    %v4268 = vpack.c.b16 %v3674, %v3673
    %v4269 = vpack.c.b16 %v3676, %v3675
    %v4270 = vpack.c.b16 %v3678, %v3677
    %v4271 = vpack.c.b16 %v3680, %v3679
    %v4272 = vpack.c.b16 %v3682, %v3681
    %v4273 = vpack.c.b16 %v3684, %v3683
    %v4274 = vpack.c.b16 %v3686, %v3685
    %v4275 = vpack.c.b16 %v3688, %v3687
    %v4276 = vpack.c.b16 %v3690, %v3689
    %v4277 = vpack.c.b16 %v3692, %v3691
    %v4278 = vpack.c.b16 %v3694, %v3693
    %v4279 = vpack.c.b16 %v3696, %v3695
    %v4280 = vpack.c.b16 %v3698, %v3697
    %v4281 = vpack.c.b16 %v3700, %v3699
    %v4282 = vpack.c.b16 %v3702, %v3701
    %v4283 = vpack.c.b16 %v3704, %v3703
    %v4284 = vpack.c.b16 %v3706, %v3705
    %v4285 = vpack.c.b16 %v3708, %v3707
    %v4286 = vpack.c.b16 %v3710, %v3709
    %4863 = vmatpush.bf16.msra.mxu0 %v3718
    %4864 = vmatpush.bf16.msra.mxu0 %v3717
    %4865 = vmatpush.bf16.msra.mxu0 %v3716
    %4866 = vmatpush.bf16.msra.mxu0 %v3715
    %4867 = vmatpush.bf16.msra.mxu0 %v3714
    %4868 = vmatpush.bf16.msra.mxu0 %v3713
    %4869 = vmatpush.bf16.msra.mxu0 %v3712
    %4870 = vmatpush.bf16.msra.mxu0 %v3711
    %4871 = vmatmul.bf16.gmra.mxu0 %v1247
    %v4872 = vpop.f32.mrf.mxu0
    %v4873 = vadd.f32 %v1243, %v4872
    %v4874 = vpop.f32.mrf.mxu0
    %4875 = vdwg.mxu0
    %4876 = vmatpush.bf16.msra.mxu0 %v3726
    %4877 = vmatpush.bf16.msra.mxu0 %v3725
    %4878 = vmatpush.bf16.msra.mxu0 %v3724
    %4879 = vmatpush.bf16.msra.mxu0 %v3723
    %4880 = vmatpush.bf16.msra.mxu0 %v3722
    %4881 = vmatpush.bf16.msra.mxu0 %v3721
    %4882 = vmatpush.bf16.msra.mxu0 %v3720
    %4883 = vmatpush.bf16.msra.mxu0 %v3719
    %4884 = vmatmul.bf16.gmra.mxu0 %v1248
    %v4885 = vpop.f32.mrf.mxu0
    %v4886 = vadd.f32 %v4873, %v4885
    %v4887 = vpop.f32.mrf.mxu0
    %4888 = vdwg.mxu0
    %4889 = vmatpush.bf16.msra.mxu0 %v3734
    %4890 = vmatpush.bf16.msra.mxu0 %v3733
    %4891 = vmatpush.bf16.msra.mxu0 %v3732
    %4892 = vmatpush.bf16.msra.mxu0 %v3731
    %4893 = vmatpush.bf16.msra.mxu0 %v3730
    %4894 = vmatpush.bf16.msra.mxu0 %v3729
    %4895 = vmatpush.bf16.msra.mxu0 %v3728
    %4896 = vmatpush.bf16.msra.mxu0 %v3727
    %4897 = vmatmul.bf16.gmra.mxu0 %v1249
    %v4898 = vpop.f32.mrf.mxu0
    %v4899 = vadd.f32 %v4886, %v4898
    %v4900 = vpop.f32.mrf.mxu0
    %4901 = vdwg.mxu0
    %4902 = vmatpush.bf16.msra.mxu0 %v3742
    %4903 = vmatpush.bf16.msra.mxu0 %v3741
    %4904 = vmatpush.bf16.msra.mxu0 %v3740
    %4905 = vmatpush.bf16.msra.mxu0 %v3739
    %4906 = vmatpush.bf16.msra.mxu0 %v3738
    %4907 = vmatpush.bf16.msra.mxu0 %v3737
    %4908 = vmatpush.bf16.msra.mxu0 %v3736
    %4909 = vmatpush.bf16.msra.mxu0 %v3735
    %4910 = vmatmul.bf16.gmra.mxu0 %v1250
    %v4911 = vpop.f32.mrf.mxu0
    %v4912 = vadd.f32 %v4899, %v4911
    %v4913 = vpop.f32.mrf.mxu0
    %4914 = vdwg.mxu0
    %4915 = vmatpush.bf16.msra.mxu0 %v3750
    %4916 = vmatpush.bf16.msra.mxu0 %v3749
    %4917 = vmatpush.bf16.msra.mxu0 %v3748
    %4918 = vmatpush.bf16.msra.mxu0 %v3747
    %4919 = vmatpush.bf16.msra.mxu0 %v3746
    %4920 = vmatpush.bf16.msra.mxu0 %v3745
    %4921 = vmatpush.bf16.msra.mxu0 %v3744
    %4922 = vmatpush.bf16.msra.mxu0 %v3743
    %4923 = vmatmul.bf16.gmra.mxu0 %v1251
    %v4924 = vpop.f32.mrf.mxu0
    %v4925 = vadd.f32 %v4912, %v4924
    %v4926 = vpop.f32.mrf.mxu0
    %4927 = vdwg.mxu0
    %4928 = vmatpush.bf16.msra.mxu0 %v3758
    %4929 = vmatpush.bf16.msra.mxu0 %v3757
    %4930 = vmatpush.bf16.msra.mxu0 %v3756
    %4931 = vmatpush.bf16.msra.mxu0 %v3755
    %4932 = vmatpush.bf16.msra.mxu0 %v3754
    %4933 = vmatpush.bf16.msra.mxu0 %v3753
    %4934 = vmatpush.bf16.msra.mxu0 %v3752
    %4935 = vmatpush.bf16.msra.mxu0 %v3751
    %4936 = vmatmul.bf16.gmra.mxu0 %v1252
    %v4937 = vpop.f32.mrf.mxu0
    %v4938 = vadd.f32 %v4925, %v4937
    %v4939 = vpop.f32.mrf.mxu0
    %4940 = vdwg.mxu0
    %4941 = vmatpush.bf16.msra.mxu0 %v3766
    %4942 = vmatpush.bf16.msra.mxu0 %v3765
    %4943 = vmatpush.bf16.msra.mxu0 %v3764
    %4944 = vmatpush.bf16.msra.mxu0 %v3763
    %4945 = vmatpush.bf16.msra.mxu0 %v3762
    %4946 = vmatpush.bf16.msra.mxu0 %v3761
    %4947 = vmatpush.bf16.msra.mxu0 %v3760
    %4948 = vmatpush.bf16.msra.mxu0 %v3759
    %4949 = vmatmul.bf16.gmra.mxu0 %v1253
    %v4950 = vpop.f32.mrf.mxu0
    %v4951 = vadd.f32 %v4938, %v4950
    %v4952 = vpop.f32.mrf.mxu0
    %4953 = vdwg.mxu0
    %4954 = vmatpush.bf16.msra.mxu0 %v3774
    %4955 = vmatpush.bf16.msra.mxu0 %v3773
    %4956 = vmatpush.bf16.msra.mxu0 %v3772
    %4957 = vmatpush.bf16.msra.mxu0 %v3771
    %4958 = vmatpush.bf16.msra.mxu0 %v3770
    %4959 = vmatpush.bf16.msra.mxu0 %v3769
    %4960 = vmatpush.bf16.msra.mxu0 %v3768
    %4961 = vmatpush.bf16.msra.mxu0 %v3767
    %4962 = vmatmul.bf16.gmra.mxu0 %v1254
    %v4963 = vpop.f32.mrf.mxu0
    %v4964 = vadd.f32 %v4951, %v4963
    %v4965 = vpop.f32.mrf.mxu0
    %4966 = vdwg.mxu0
    %4967 = vmatpush.bf16.msra.mxu0 %v3782
    %4968 = vmatpush.bf16.msra.mxu0 %v3781
    %4969 = vmatpush.bf16.msra.mxu0 %v3780
    %4970 = vmatpush.bf16.msra.mxu0 %v3779
    %4971 = vmatpush.bf16.msra.mxu0 %v3778
    %4972 = vmatpush.bf16.msra.mxu0 %v3777
    %4973 = vmatpush.bf16.msra.mxu0 %v3776
    %4974 = vmatpush.bf16.msra.mxu0 %v3775
    %4975 = vmatmul.bf16.gmra.mxu0 %v1257
    %v4976 = vpop.f32.mrf.mxu0
    %v4977 = vadd.f32 %v4964, %v4976
    %v4978 = vpop.f32.mrf.mxu0
    %4979 = vdwg.mxu0
    %4980 = vmatpush.bf16.msra.mxu0 %v3790
    %4981 = vmatpush.bf16.msra.mxu0 %v3789
    %4982 = vmatpush.bf16.msra.mxu0 %v3788
    %4983 = vmatpush.bf16.msra.mxu0 %v3787
    %4984 = vmatpush.bf16.msra.mxu0 %v3786
    %4985 = vmatpush.bf16.msra.mxu0 %v3785
    %4986 = vmatpush.bf16.msra.mxu0 %v3784
    %4987 = vmatpush.bf16.msra.mxu0 %v3783
    %4988 = vmatmul.bf16.gmra.mxu0 %v1258
    %v4989 = vpop.f32.mrf.mxu0
    %v4990 = vadd.f32 %v4977, %v4989
    %v4991 = vpop.f32.mrf.mxu0
    %4992 = vdwg.mxu0
    %4993 = vmatpush.bf16.msra.mxu0 %v3798
    %4994 = vmatpush.bf16.msra.mxu0 %v3797
    %4995 = vmatpush.bf16.msra.mxu0 %v3796
    %4996 = vmatpush.bf16.msra.mxu0 %v3795
    %4997 = vmatpush.bf16.msra.mxu0 %v3794
    %4998 = vmatpush.bf16.msra.mxu0 %v3793
    %4999 = vmatpush.bf16.msra.mxu0 %v3792
    %5000 = vmatpush.bf16.msra.mxu0 %v3791
    %5001 = vmatmul.bf16.gmra.mxu0 %v1259
    %v5002 = vpop.f32.mrf.mxu0
    %v5003 = vadd.f32 %v4990, %v5002
    %v5004 = vpop.f32.mrf.mxu0
    %5005 = vdwg.mxu0
    %5006 = vmatpush.bf16.msra.mxu0 %v3806
    %5007 = vmatpush.bf16.msra.mxu0 %v3805
    %5008 = vmatpush.bf16.msra.mxu0 %v3804
    %5009 = vmatpush.bf16.msra.mxu0 %v3803
    %5010 = vmatpush.bf16.msra.mxu0 %v3802
    %5011 = vmatpush.bf16.msra.mxu0 %v3801
    %5012 = vmatpush.bf16.msra.mxu0 %v3800
    %5013 = vmatpush.bf16.msra.mxu0 %v3799
    %5014 = vmatmul.bf16.gmra.mxu0 %v1260
    %v5015 = vpop.f32.mrf.mxu0
    %v5016 = vadd.f32 %v5003, %v5015
    %v5017 = vpop.f32.mrf.mxu0
    %5018 = vdwg.mxu0
    %5019 = vmatpush.bf16.msra.mxu0 %v3814
    %5020 = vmatpush.bf16.msra.mxu0 %v3813
    %5021 = vmatpush.bf16.msra.mxu0 %v3812
    %5022 = vmatpush.bf16.msra.mxu0 %v3811
    %5023 = vmatpush.bf16.msra.mxu0 %v3810
    %5024 = vmatpush.bf16.msra.mxu0 %v3809
    %5025 = vmatpush.bf16.msra.mxu0 %v3808
    %5026 = vmatpush.bf16.msra.mxu0 %v3807
    %5027 = vmatmul.bf16.gmra.mxu0 %v1261
    %v5028 = vpop.f32.mrf.mxu0
    %v5029 = vadd.f32 %v5016, %v5028
    %v5030 = vpop.f32.mrf.mxu0
    %5031 = vdwg.mxu0
    %5032 = vmatpush.bf16.msra.mxu0 %v3822
    %5033 = vmatpush.bf16.msra.mxu0 %v3821
    %5034 = vmatpush.bf16.msra.mxu0 %v3820
    %5035 = vmatpush.bf16.msra.mxu0 %v3819
    %5036 = vmatpush.bf16.msra.mxu0 %v3818
    %5037 = vmatpush.bf16.msra.mxu0 %v3817
    %5038 = vmatpush.bf16.msra.mxu0 %v3816
    %5039 = vmatpush.bf16.msra.mxu0 %v3815
    %5040 = vmatmul.bf16.gmra.mxu0 %v1262
    %v5041 = vpop.f32.mrf.mxu0
    %v5042 = vadd.f32 %v5029, %v5041
    %v5043 = vpop.f32.mrf.mxu0
    %5044 = vdwg.mxu0
    %5045 = vmatpush.bf16.msra.mxu0 %v3830
    %5046 = vmatpush.bf16.msra.mxu0 %v3829
    %5047 = vmatpush.bf16.msra.mxu0 %v3828
    %5048 = vmatpush.bf16.msra.mxu0 %v3827
    %5049 = vmatpush.bf16.msra.mxu0 %v3826
    %5050 = vmatpush.bf16.msra.mxu0 %v3825
    %5051 = vmatpush.bf16.msra.mxu0 %v3824
    %5052 = vmatpush.bf16.msra.mxu0 %v3823
    %5053 = vmatmul.bf16.gmra.mxu0 %v1263
    %v5054 = vpop.f32.mrf.mxu0
    %v5055 = vadd.f32 %v5042, %v5054
    %v5056 = vpop.f32.mrf.mxu0
    %5057 = vdwg.mxu0
    %5058 = vmatpush.bf16.msra.mxu0 %v3838
    %5059 = vmatpush.bf16.msra.mxu0 %v3837
    %5060 = vmatpush.bf16.msra.mxu0 %v3836
    %5061 = vmatpush.bf16.msra.mxu0 %v3835
    %5062 = vmatpush.bf16.msra.mxu0 %v3834
    %5063 = vmatpush.bf16.msra.mxu0 %v3833
    %5064 = vmatpush.bf16.msra.mxu0 %v3832
    %5065 = vmatpush.bf16.msra.mxu0 %v3831
    %5066 = vmatmul.bf16.gmra.mxu0 %v1264
    %v5067 = vpop.f32.mrf.mxu0
    %v5068 = vadd.f32 %v5055, %v5067
    %v5069 = vpop.f32.mrf.mxu0
    %5070 = vdwg.mxu0
    %5071 = vmatpush.bf16.msra.mxu0 %v3846
    %5072 = vmatpush.bf16.msra.mxu0 %v3845
    %5073 = vmatpush.bf16.msra.mxu0 %v3844
    %5074 = vmatpush.bf16.msra.mxu0 %v3843
    %5075 = vmatpush.bf16.msra.mxu0 %v3842
    %5076 = vmatpush.bf16.msra.mxu0 %v3841
    %5077 = vmatpush.bf16.msra.mxu0 %v3840
    %5078 = vmatpush.bf16.msra.mxu0 %v3839
    %5079 = vmatmul.bf16.gmra.mxu0 %v1267
    %v5080 = vpop.f32.mrf.mxu0
    %v5081 = vadd.f32 %v5068, %v5080
    %v5082 = vpop.f32.mrf.mxu0
    %5083 = vdwg.mxu0
    %5084 = vmatpush.bf16.msra.mxu0 %v3854
    %5085 = vmatpush.bf16.msra.mxu0 %v3853
    %5086 = vmatpush.bf16.msra.mxu0 %v3852
    %5087 = vmatpush.bf16.msra.mxu0 %v3851
    %5088 = vmatpush.bf16.msra.mxu0 %v3850
    %5089 = vmatpush.bf16.msra.mxu0 %v3849
    %5090 = vmatpush.bf16.msra.mxu0 %v3848
    %5091 = vmatpush.bf16.msra.mxu0 %v3847
    %5092 = vmatmul.bf16.gmra.mxu0 %v1268
    %v5093 = vpop.f32.mrf.mxu0
    %v5094 = vadd.f32 %v5081, %v5093
    %v5095 = vpop.f32.mrf.mxu0
    %5096 = vdwg.mxu0
    %5097 = vmatpush.bf16.msra.mxu0 %v3862
    %5098 = vmatpush.bf16.msra.mxu0 %v3861
    %5099 = vmatpush.bf16.msra.mxu0 %v3860
    %5100 = vmatpush.bf16.msra.mxu0 %v3859
    %5101 = vmatpush.bf16.msra.mxu0 %v3858
    %5102 = vmatpush.bf16.msra.mxu0 %v3857
    %5103 = vmatpush.bf16.msra.mxu0 %v3856
    %5104 = vmatpush.bf16.msra.mxu0 %v3855
    %5105 = vmatmul.bf16.gmra.mxu0 %v1269
    %v5106 = vpop.f32.mrf.mxu0
    %v5107 = vadd.f32 %v5094, %v5106
    %v5108 = vpop.f32.mrf.mxu0
    %5109 = vdwg.mxu0
    %5110 = vmatpush.bf16.msra.mxu0 %v3870
    %5111 = vmatpush.bf16.msra.mxu0 %v3869
    %5112 = vmatpush.bf16.msra.mxu0 %v3868
    %5113 = vmatpush.bf16.msra.mxu0 %v3867
    %5114 = vmatpush.bf16.msra.mxu0 %v3866
    %5115 = vmatpush.bf16.msra.mxu0 %v3865
    %5116 = vmatpush.bf16.msra.mxu0 %v3864
    %5117 = vmatpush.bf16.msra.mxu0 %v3863
    %5118 = vmatmul.bf16.gmra.mxu0 %v1270
    %v5119 = vpop.f32.mrf.mxu0
    %v5120 = vadd.f32 %v5107, %v5119
    %v5121 = vpop.f32.mrf.mxu0
    %5122 = vdwg.mxu0
    %5123 = vmatpush.bf16.msra.mxu0 %v3878
    %5124 = vmatpush.bf16.msra.mxu0 %v3877
    %5125 = vmatpush.bf16.msra.mxu0 %v3876
    %5126 = vmatpush.bf16.msra.mxu0 %v3875
    %5127 = vmatpush.bf16.msra.mxu0 %v3874
    %5128 = vmatpush.bf16.msra.mxu0 %v3873
    %5129 = vmatpush.bf16.msra.mxu0 %v3872
    %5130 = vmatpush.bf16.msra.mxu0 %v3871
    %5131 = vmatmul.bf16.gmra.mxu0 %v1271
    %v5132 = vpop.f32.mrf.mxu0
    %v5133 = vadd.f32 %v5120, %v5132
    %v5134 = vpop.f32.mrf.mxu0
    %5135 = vdwg.mxu0
    %5136 = vmatpush.bf16.msra.mxu0 %v3886
    %5137 = vmatpush.bf16.msra.mxu0 %v3885
    %5138 = vmatpush.bf16.msra.mxu0 %v3884
    %5139 = vmatpush.bf16.msra.mxu0 %v3883
    %5140 = vmatpush.bf16.msra.mxu0 %v3882
    %5141 = vmatpush.bf16.msra.mxu0 %v3881
    %5142 = vmatpush.bf16.msra.mxu0 %v3880
    %5143 = vmatpush.bf16.msra.mxu0 %v3879
    %5144 = vmatmul.bf16.gmra.mxu0 %v1272
    %v5145 = vpop.f32.mrf.mxu0
    %v5146 = vadd.f32 %v5133, %v5145
    %v5147 = vpop.f32.mrf.mxu0
    %5148 = vdwg.mxu0
    %5149 = vmatpush.bf16.msra.mxu0 %v3894
    %5150 = vmatpush.bf16.msra.mxu0 %v3893
    %5151 = vmatpush.bf16.msra.mxu0 %v3892
    %5152 = vmatpush.bf16.msra.mxu0 %v3891
    %5153 = vmatpush.bf16.msra.mxu0 %v3890
    %5154 = vmatpush.bf16.msra.mxu0 %v3889
    %5155 = vmatpush.bf16.msra.mxu0 %v3888
    %5156 = vmatpush.bf16.msra.mxu0 %v3887
    %5157 = vmatmul.bf16.gmra.mxu0 %v1273
    %v5158 = vpop.f32.mrf.mxu0
    %v5159 = vadd.f32 %v5146, %v5158
    %v5160 = vpop.f32.mrf.mxu0
    %5161 = vdwg.mxu0
    %5162 = vmatpush.bf16.msra.mxu0 %v3902
    %5163 = vmatpush.bf16.msra.mxu0 %v3901
    %5164 = vmatpush.bf16.msra.mxu0 %v3900
    %5165 = vmatpush.bf16.msra.mxu0 %v3899
    %5166 = vmatpush.bf16.msra.mxu0 %v3898
    %5167 = vmatpush.bf16.msra.mxu0 %v3897
    %5168 = vmatpush.bf16.msra.mxu0 %v3896
    %5169 = vmatpush.bf16.msra.mxu0 %v3895
    %5170 = vmatmul.bf16.gmra.mxu0 %v1274
    %v5171 = vpop.f32.mrf.mxu0
    %v5172 = vadd.f32 %v5159, %v5171
    %v5173 = vpop.f32.mrf.mxu0
    %5174 = vdwg.mxu0
    %5175 = vmatpush.bf16.msra.mxu0 %v3910
    %5176 = vmatpush.bf16.msra.mxu0 %v3909
    %5177 = vmatpush.bf16.msra.mxu0 %v3908
    %5178 = vmatpush.bf16.msra.mxu0 %v3907
    %5179 = vmatpush.bf16.msra.mxu0 %v3906
    %5180 = vmatpush.bf16.msra.mxu0 %v3905
    %5181 = vmatpush.bf16.msra.mxu0 %v3904
    %5182 = vmatpush.bf16.msra.mxu0 %v3903
    %5183 = vmatmul.bf16.gmra.mxu0 %v1277
    %v5184 = vpop.f32.mrf.mxu0
    %v5185 = vadd.f32 %v5172, %v5184
    %v5186 = vpop.f32.mrf.mxu0
    %5187 = vdwg.mxu0
    %5188 = vmatpush.bf16.msra.mxu0 %v3918
    %5189 = vmatpush.bf16.msra.mxu0 %v3917
    %5190 = vmatpush.bf16.msra.mxu0 %v3916
    %5191 = vmatpush.bf16.msra.mxu0 %v3915
    %5192 = vmatpush.bf16.msra.mxu0 %v3914
    %5193 = vmatpush.bf16.msra.mxu0 %v3913
    %5194 = vmatpush.bf16.msra.mxu0 %v3912
    %5195 = vmatpush.bf16.msra.mxu0 %v3911
    %5196 = vmatmul.bf16.gmra.mxu0 %v1278
    %v5197 = vpop.f32.mrf.mxu0
    %v5198 = vadd.f32 %v5185, %v5197
    %v5199 = vpop.f32.mrf.mxu0
    %5200 = vdwg.mxu0
    %5201 = vmatpush.bf16.msra.mxu0 %v3926
    %5202 = vmatpush.bf16.msra.mxu0 %v3925
    %5203 = vmatpush.bf16.msra.mxu0 %v3924
    %5204 = vmatpush.bf16.msra.mxu0 %v3923
    %5205 = vmatpush.bf16.msra.mxu0 %v3922
    %5206 = vmatpush.bf16.msra.mxu0 %v3921
    %5207 = vmatpush.bf16.msra.mxu0 %v3920
    %5208 = vmatpush.bf16.msra.mxu0 %v3919
    %5209 = vmatmul.bf16.gmra.mxu0 %v1279
    %v5210 = vpop.f32.mrf.mxu0
    %v5211 = vadd.f32 %v5198, %v5210
    %v5212 = vpop.f32.mrf.mxu0
    %5213 = vdwg.mxu0
    %5214 = vmatpush.bf16.msra.mxu0 %v3934
    %5215 = vmatpush.bf16.msra.mxu0 %v3933
    %5216 = vmatpush.bf16.msra.mxu0 %v3932
    %5217 = vmatpush.bf16.msra.mxu0 %v3931
    %5218 = vmatpush.bf16.msra.mxu0 %v3930
    %5219 = vmatpush.bf16.msra.mxu0 %v3929
    %5220 = vmatpush.bf16.msra.mxu0 %v3928
    %5221 = vmatpush.bf16.msra.mxu0 %v3927
    %5222 = vmatmul.bf16.gmra.mxu0 %v1280
    %v5223 = vpop.f32.mrf.mxu0
    %v5224 = vadd.f32 %v5211, %v5223
    %v5225 = vpop.f32.mrf.mxu0
    %5226 = vdwg.mxu0
    %5227 = vmatpush.bf16.msra.mxu0 %v3942
    %5228 = vmatpush.bf16.msra.mxu0 %v3941
    %5229 = vmatpush.bf16.msra.mxu0 %v3940
    %5230 = vmatpush.bf16.msra.mxu0 %v3939
    %5231 = vmatpush.bf16.msra.mxu0 %v3938
    %5232 = vmatpush.bf16.msra.mxu0 %v3937
    %5233 = vmatpush.bf16.msra.mxu0 %v3936
    %5234 = vmatpush.bf16.msra.mxu0 %v3935
    %5235 = vmatmul.bf16.gmra.mxu0 %v1281
    %v5236 = vpop.f32.mrf.mxu0
    %v5237 = vadd.f32 %v5224, %v5236
    %v5238 = vpop.f32.mrf.mxu0
    %5239 = vdwg.mxu0
    %5240 = vmatpush.bf16.msra.mxu0 %v3950
    %5241 = vmatpush.bf16.msra.mxu0 %v3949
    %5242 = vmatpush.bf16.msra.mxu0 %v3948
    %5243 = vmatpush.bf16.msra.mxu0 %v3947
    %5244 = vmatpush.bf16.msra.mxu0 %v3946
    %5245 = vmatpush.bf16.msra.mxu0 %v3945
    %5246 = vmatpush.bf16.msra.mxu0 %v3944
    %5247 = vmatpush.bf16.msra.mxu0 %v3943
    %5248 = vmatmul.bf16.gmra.mxu0 %v1282
    %v5249 = vpop.f32.mrf.mxu0
    %v5250 = vadd.f32 %v5237, %v5249
    %v5251 = vpop.f32.mrf.mxu0
    %5252 = vdwg.mxu0
    %5253 = vmatpush.bf16.msra.mxu0 %v3958
    %5254 = vmatpush.bf16.msra.mxu0 %v3957
    %5255 = vmatpush.bf16.msra.mxu0 %v3956
    %5256 = vmatpush.bf16.msra.mxu0 %v3955
    %5257 = vmatpush.bf16.msra.mxu0 %v3954
    %5258 = vmatpush.bf16.msra.mxu0 %v3953
    %5259 = vmatpush.bf16.msra.mxu0 %v3952
    %5260 = vmatpush.bf16.msra.mxu0 %v3951
    %5261 = vmatmul.bf16.gmra.mxu0 %v1283
    %v5262 = vpop.f32.mrf.mxu0
    %v5263 = vadd.f32 %v5250, %v5262
    %v5264 = vpop.f32.mrf.mxu0
    %5265 = vdwg.mxu0
    %5266 = vmatpush.bf16.msra.mxu0 %v3966
    %5267 = vmatpush.bf16.msra.mxu0 %v3965
    %5268 = vmatpush.bf16.msra.mxu0 %v3964
    %5269 = vmatpush.bf16.msra.mxu0 %v3963
    %5270 = vmatpush.bf16.msra.mxu0 %v3962
    %5271 = vmatpush.bf16.msra.mxu0 %v3961
    %5272 = vmatpush.bf16.msra.mxu0 %v3960
    %5273 = vmatpush.bf16.msra.mxu0 %v3959
    %5274 = vmatmul.bf16.gmra.mxu0 %v1284
    %v5275 = vpop.f32.mrf.mxu0
    %v5276 = vadd.f32 %v5263, %v5275
    %v5277 = vpop.f32.mrf.mxu0
    %5278 = vdwg.mxu0
    %5279 = vmatpush.bf16.msra.mxu0 %v3974
    %5280 = vmatpush.bf16.msra.mxu0 %v3973
    %5281 = vmatpush.bf16.msra.mxu0 %v3972
    %5282 = vmatpush.bf16.msra.mxu0 %v3971
    %5283 = vmatpush.bf16.msra.mxu0 %v3970
    %5284 = vmatpush.bf16.msra.mxu0 %v3969
    %5285 = vmatpush.bf16.msra.mxu0 %v3968
    %5286 = vmatpush.bf16.msra.mxu0 %v3967
    %5287 = vmatmul.bf16.gmra.mxu0 %v1287
    %v5288 = vpop.f32.mrf.mxu0
    %v5289 = vadd.f32 %v5276, %v5288
    %v5290 = vpop.f32.mrf.mxu0
    %5291 = vdwg.mxu0
    %5292 = vmatpush.bf16.msra.mxu0 %v3982
    %5293 = vmatpush.bf16.msra.mxu0 %v3981
    %5294 = vmatpush.bf16.msra.mxu0 %v3980
    %5295 = vmatpush.bf16.msra.mxu0 %v3979
    %5296 = vmatpush.bf16.msra.mxu0 %v3978
    %5297 = vmatpush.bf16.msra.mxu0 %v3977
    %5298 = vmatpush.bf16.msra.mxu0 %v3976
    %5299 = vmatpush.bf16.msra.mxu0 %v3975
    %5300 = vmatmul.bf16.gmra.mxu0 %v1288
    %v5301 = vpop.f32.mrf.mxu0
    %v5302 = vadd.f32 %v5289, %v5301
    %v5303 = vpop.f32.mrf.mxu0
    %5304 = vdwg.mxu0
    %5305 = vmatpush.bf16.msra.mxu0 %v3990
    %5306 = vmatpush.bf16.msra.mxu0 %v3989
    %5307 = vmatpush.bf16.msra.mxu0 %v3988
    %5308 = vmatpush.bf16.msra.mxu0 %v3987
    %5309 = vmatpush.bf16.msra.mxu0 %v3986
    %5310 = vmatpush.bf16.msra.mxu0 %v3985
    %5311 = vmatpush.bf16.msra.mxu0 %v3984
    %5312 = vmatpush.bf16.msra.mxu0 %v3983
    %5313 = vmatmul.bf16.gmra.mxu0 %v1289
    %v5314 = vpop.f32.mrf.mxu0
    %v5315 = vadd.f32 %v5302, %v5314
    %v5316 = vpop.f32.mrf.mxu0
    %5317 = vdwg.mxu0
    %5318 = vmatpush.bf16.msra.mxu0 %v3998
    %5319 = vmatpush.bf16.msra.mxu0 %v3997
    %5320 = vmatpush.bf16.msra.mxu0 %v3996
    %5321 = vmatpush.bf16.msra.mxu0 %v3995
    %5322 = vmatpush.bf16.msra.mxu0 %v3994
    %5323 = vmatpush.bf16.msra.mxu0 %v3993
    %5324 = vmatpush.bf16.msra.mxu0 %v3992
    %5325 = vmatpush.bf16.msra.mxu0 %v3991
    %5326 = vmatmul.bf16.gmra.mxu0 %v1290
    %v5327 = vpop.f32.mrf.mxu0
    %v5328 = vadd.f32 %v5315, %v5327
    %v5329 = vpop.f32.mrf.mxu0
    %5330 = vdwg.mxu0
    %5331 = vmatpush.bf16.msra.mxu0 %v4006
    %5332 = vmatpush.bf16.msra.mxu0 %v4005
    %5333 = vmatpush.bf16.msra.mxu0 %v4004
    %5334 = vmatpush.bf16.msra.mxu0 %v4003
    %5335 = vmatpush.bf16.msra.mxu0 %v4002
    %5336 = vmatpush.bf16.msra.mxu0 %v4001
    %5337 = vmatpush.bf16.msra.mxu0 %v4000
    %5338 = vmatpush.bf16.msra.mxu0 %v3999
    %5339 = vmatmul.bf16.gmra.mxu0 %v1291
    %v5340 = vpop.f32.mrf.mxu0
    %v5341 = vadd.f32 %v5328, %v5340
    %v5342 = vpop.f32.mrf.mxu0
    %5343 = vdwg.mxu0
    %5344 = vmatpush.bf16.msra.mxu0 %v4014
    %5345 = vmatpush.bf16.msra.mxu0 %v4013
    %5346 = vmatpush.bf16.msra.mxu0 %v4012
    %5347 = vmatpush.bf16.msra.mxu0 %v4011
    %5348 = vmatpush.bf16.msra.mxu0 %v4010
    %5349 = vmatpush.bf16.msra.mxu0 %v4009
    %5350 = vmatpush.bf16.msra.mxu0 %v4008
    %5351 = vmatpush.bf16.msra.mxu0 %v4007
    %5352 = vmatmul.bf16.gmra.mxu0 %v1292
    %v5353 = vpop.f32.mrf.mxu0
    %v5354 = vadd.f32 %v5341, %v5353
    %v5355 = vpop.f32.mrf.mxu0
    %5356 = vdwg.mxu0
    %5357 = vmatpush.bf16.msra.mxu0 %v4022
    %5358 = vmatpush.bf16.msra.mxu0 %v4021
    %5359 = vmatpush.bf16.msra.mxu0 %v4020
    %5360 = vmatpush.bf16.msra.mxu0 %v4019
    %5361 = vmatpush.bf16.msra.mxu0 %v4018
    %5362 = vmatpush.bf16.msra.mxu0 %v4017
    %5363 = vmatpush.bf16.msra.mxu0 %v4016
    %5364 = vmatpush.bf16.msra.mxu0 %v4015
    %5365 = vmatmul.bf16.gmra.mxu0 %v1293
    %v5366 = vpop.f32.mrf.mxu0
    %v5367 = vadd.f32 %v5354, %v5366
    %v5368 = vpop.f32.mrf.mxu0
    %5369 = vdwg.mxu0
    %5370 = vmatpush.bf16.msra.mxu0 %v4030
    %5371 = vmatpush.bf16.msra.mxu0 %v4029
    %5372 = vmatpush.bf16.msra.mxu0 %v4028
    %5373 = vmatpush.bf16.msra.mxu0 %v4027
    %5374 = vmatpush.bf16.msra.mxu0 %v4026
    %5375 = vmatpush.bf16.msra.mxu0 %v4025
    %5376 = vmatpush.bf16.msra.mxu0 %v4024
    %5377 = vmatpush.bf16.msra.mxu0 %v4023
    %5378 = vmatmul.bf16.gmra.mxu0 %v1294
    %v5379 = vpop.f32.mrf.mxu0
    %v5380 = vadd.f32 %v5367, %v5379
    %v5381 = vpop.f32.mrf.mxu0
    %5382 = vdwg.mxu0
    %5383 = vmatpush.bf16.msra.mxu0 %v4038
    %5384 = vmatpush.bf16.msra.mxu0 %v4037
    %5385 = vmatpush.bf16.msra.mxu0 %v4036
    %5386 = vmatpush.bf16.msra.mxu0 %v4035
    %5387 = vmatpush.bf16.msra.mxu0 %v4034
    %5388 = vmatpush.bf16.msra.mxu0 %v4033
    %5389 = vmatpush.bf16.msra.mxu0 %v4032
    %5390 = vmatpush.bf16.msra.mxu0 %v4031
    %5391 = vmatmul.bf16.gmra.mxu0 %v1297
    %v5392 = vpop.f32.mrf.mxu0
    %v5393 = vadd.f32 %v5380, %v5392
    %v5394 = vpop.f32.mrf.mxu0
    %5395 = vdwg.mxu0
    %5396 = vmatpush.bf16.msra.mxu0 %v4046
    %5397 = vmatpush.bf16.msra.mxu0 %v4045
    %5398 = vmatpush.bf16.msra.mxu0 %v4044
    %5399 = vmatpush.bf16.msra.mxu0 %v4043
    %5400 = vmatpush.bf16.msra.mxu0 %v4042
    %5401 = vmatpush.bf16.msra.mxu0 %v4041
    %5402 = vmatpush.bf16.msra.mxu0 %v4040
    %5403 = vmatpush.bf16.msra.mxu0 %v4039
    %5404 = vmatmul.bf16.gmra.mxu0 %v1298
    %v5405 = vpop.f32.mrf.mxu0
    %v5406 = vadd.f32 %v5393, %v5405
    %v5407 = vpop.f32.mrf.mxu0
    %5408 = vdwg.mxu0
    %5409 = vmatpush.bf16.msra.mxu0 %v4054
    %5410 = vmatpush.bf16.msra.mxu0 %v4053
    %5411 = vmatpush.bf16.msra.mxu0 %v4052
    %5412 = vmatpush.bf16.msra.mxu0 %v4051
    %5413 = vmatpush.bf16.msra.mxu0 %v4050
    %5414 = vmatpush.bf16.msra.mxu0 %v4049
    %5415 = vmatpush.bf16.msra.mxu0 %v4048
    %5416 = vmatpush.bf16.msra.mxu0 %v4047
    %5417 = vmatmul.bf16.gmra.mxu0 %v1299
    %v5418 = vpop.f32.mrf.mxu0
    %v5419 = vadd.f32 %v5406, %v5418
    %v5420 = vpop.f32.mrf.mxu0
    %5421 = vdwg.mxu0
    %5422 = vmatpush.bf16.msra.mxu0 %v4062
    %5423 = vmatpush.bf16.msra.mxu0 %v4061
    %5424 = vmatpush.bf16.msra.mxu0 %v4060
    %5425 = vmatpush.bf16.msra.mxu0 %v4059
    %5426 = vmatpush.bf16.msra.mxu0 %v4058
    %5427 = vmatpush.bf16.msra.mxu0 %v4057
    %5428 = vmatpush.bf16.msra.mxu0 %v4056
    %5429 = vmatpush.bf16.msra.mxu0 %v4055
    %5430 = vmatmul.bf16.gmra.mxu0 %v1300
    %v5431 = vpop.f32.mrf.mxu0
    %v5432 = vadd.f32 %v5419, %v5431
    %v5433 = vpop.f32.mrf.mxu0
    %5434 = vdwg.mxu0
    %5435 = vmatpush.bf16.msra.mxu0 %v4070
    %5436 = vmatpush.bf16.msra.mxu0 %v4069
    %5437 = vmatpush.bf16.msra.mxu0 %v4068
    %5438 = vmatpush.bf16.msra.mxu0 %v4067
    %5439 = vmatpush.bf16.msra.mxu0 %v4066
    %5440 = vmatpush.bf16.msra.mxu0 %v4065
    %5441 = vmatpush.bf16.msra.mxu0 %v4064
    %5442 = vmatpush.bf16.msra.mxu0 %v4063
    %5443 = vmatmul.bf16.gmra.mxu0 %v1301
    %v5444 = vpop.f32.mrf.mxu0
    %v5445 = vadd.f32 %v5432, %v5444
    %v5446 = vpop.f32.mrf.mxu0
    %5447 = vdwg.mxu0
    %5448 = vmatpush.bf16.msra.mxu0 %v4078
    %5449 = vmatpush.bf16.msra.mxu0 %v4077
    %5450 = vmatpush.bf16.msra.mxu0 %v4076
    %5451 = vmatpush.bf16.msra.mxu0 %v4075
    %5452 = vmatpush.bf16.msra.mxu0 %v4074
    %5453 = vmatpush.bf16.msra.mxu0 %v4073
    %5454 = vmatpush.bf16.msra.mxu0 %v4072
    %5455 = vmatpush.bf16.msra.mxu0 %v4071
    %5456 = vmatmul.bf16.gmra.mxu0 %v1302
    %v5457 = vpop.f32.mrf.mxu0
    %v5458 = vadd.f32 %v5445, %v5457
    %v5459 = vpop.f32.mrf.mxu0
    %5460 = vdwg.mxu0
    %5461 = vmatpush.bf16.msra.mxu0 %v4086
    %5462 = vmatpush.bf16.msra.mxu0 %v4085
    %5463 = vmatpush.bf16.msra.mxu0 %v4084
    %5464 = vmatpush.bf16.msra.mxu0 %v4083
    %5465 = vmatpush.bf16.msra.mxu0 %v4082
    %5466 = vmatpush.bf16.msra.mxu0 %v4081
    %5467 = vmatpush.bf16.msra.mxu0 %v4080
    %5468 = vmatpush.bf16.msra.mxu0 %v4079
    %5469 = vmatmul.bf16.gmra.mxu0 %v1303
    %v5470 = vpop.f32.mrf.mxu0
    %v5471 = vadd.f32 %v5458, %v5470
    %v5472 = vpop.f32.mrf.mxu0
    %5473 = vdwg.mxu0
    %5474 = vmatpush.bf16.msra.mxu0 %v4094
    %5475 = vmatpush.bf16.msra.mxu0 %v4093
    %5476 = vmatpush.bf16.msra.mxu0 %v4092
    %5477 = vmatpush.bf16.msra.mxu0 %v4091
    %5478 = vmatpush.bf16.msra.mxu0 %v4090
    %5479 = vmatpush.bf16.msra.mxu0 %v4089
    %5480 = vmatpush.bf16.msra.mxu0 %v4088
    %5481 = vmatpush.bf16.msra.mxu0 %v4087
    %5482 = vmatmul.bf16.gmra.mxu0 %v1304
    %v5483 = vpop.f32.mrf.mxu0
    %v5484 = vadd.f32 %v5471, %v5483
    %v5485 = vpop.f32.mrf.mxu0
    %5486 = vdwg.mxu0
    %5487 = vmatpush.bf16.msra.mxu0 %v4102
    %5488 = vmatpush.bf16.msra.mxu0 %v4101
    %5489 = vmatpush.bf16.msra.mxu0 %v4100
    %5490 = vmatpush.bf16.msra.mxu0 %v4099
    %5491 = vmatpush.bf16.msra.mxu0 %v4098
    %5492 = vmatpush.bf16.msra.mxu0 %v4097
    %5493 = vmatpush.bf16.msra.mxu0 %v4096
    %5494 = vmatpush.bf16.msra.mxu0 %v4095
    %5495 = vmatmul.bf16.gmra.mxu0 %v1307
    %v5496 = vpop.f32.mrf.mxu0
    %v5497 = vadd.f32 %v5484, %v5496
    %v5498 = vpop.f32.mrf.mxu0
    %5499 = vdwg.mxu0
    %5500 = vmatpush.bf16.msra.mxu0 %v4110
    %5501 = vmatpush.bf16.msra.mxu0 %v4109
    %5502 = vmatpush.bf16.msra.mxu0 %v4108
    %5503 = vmatpush.bf16.msra.mxu0 %v4107
    %5504 = vmatpush.bf16.msra.mxu0 %v4106
    %5505 = vmatpush.bf16.msra.mxu0 %v4105
    %5506 = vmatpush.bf16.msra.mxu0 %v4104
    %5507 = vmatpush.bf16.msra.mxu0 %v4103
    %5508 = vmatmul.bf16.gmra.mxu0 %v1308
    %v5509 = vpop.f32.mrf.mxu0
    %v5510 = vadd.f32 %v5497, %v5509
    %v5511 = vpop.f32.mrf.mxu0
    %5512 = vdwg.mxu0
    %5513 = vmatpush.bf16.msra.mxu0 %v4118
    %5514 = vmatpush.bf16.msra.mxu0 %v4117
    %5515 = vmatpush.bf16.msra.mxu0 %v4116
    %5516 = vmatpush.bf16.msra.mxu0 %v4115
    %5517 = vmatpush.bf16.msra.mxu0 %v4114
    %5518 = vmatpush.bf16.msra.mxu0 %v4113
    %5519 = vmatpush.bf16.msra.mxu0 %v4112
    %5520 = vmatpush.bf16.msra.mxu0 %v4111
    %5521 = vmatmul.bf16.gmra.mxu0 %v1309
    %v5522 = vpop.f32.mrf.mxu0
    %v5523 = vadd.f32 %v5510, %v5522
    %v5524 = vpop.f32.mrf.mxu0
    %5525 = vdwg.mxu0
    %5526 = vmatpush.bf16.msra.mxu0 %v4126
    %5527 = vmatpush.bf16.msra.mxu0 %v4125
    %5528 = vmatpush.bf16.msra.mxu0 %v4124
    %5529 = vmatpush.bf16.msra.mxu0 %v4123
    %5530 = vmatpush.bf16.msra.mxu0 %v4122
    %5531 = vmatpush.bf16.msra.mxu0 %v4121
    %5532 = vmatpush.bf16.msra.mxu0 %v4120
    %5533 = vmatpush.bf16.msra.mxu0 %v4119
    %5534 = vmatmul.bf16.gmra.mxu0 %v1310
    %v5535 = vpop.f32.mrf.mxu0
    %v5536 = vadd.f32 %v5523, %v5535
    %v5537 = vpop.f32.mrf.mxu0
    %5538 = vdwg.mxu0
    %5539 = vmatpush.bf16.msra.mxu0 %v4134
    %5540 = vmatpush.bf16.msra.mxu0 %v4133
    %5541 = vmatpush.bf16.msra.mxu0 %v4132
    %5542 = vmatpush.bf16.msra.mxu0 %v4131
    %5543 = vmatpush.bf16.msra.mxu0 %v4130
    %5544 = vmatpush.bf16.msra.mxu0 %v4129
    %5545 = vmatpush.bf16.msra.mxu0 %v4128
    %5546 = vmatpush.bf16.msra.mxu0 %v4127
    %5547 = vmatmul.bf16.gmra.mxu0 %v1311
    %v5548 = vpop.f32.mrf.mxu0
    %v5549 = vadd.f32 %v5536, %v5548
    %v5550 = vpop.f32.mrf.mxu0
    %5551 = vdwg.mxu0
    %5552 = vmatpush.bf16.msra.mxu0 %v4142
    %5553 = vmatpush.bf16.msra.mxu0 %v4141
    %5554 = vmatpush.bf16.msra.mxu0 %v4140
    %5555 = vmatpush.bf16.msra.mxu0 %v4139
    %5556 = vmatpush.bf16.msra.mxu0 %v4138
    %5557 = vmatpush.bf16.msra.mxu0 %v4137
    %5558 = vmatpush.bf16.msra.mxu0 %v4136
    %5559 = vmatpush.bf16.msra.mxu0 %v4135
    %5560 = vmatmul.bf16.gmra.mxu0 %v1312
    %v5561 = vpop.f32.mrf.mxu0
    %v5562 = vadd.f32 %v5549, %v5561
    %v5563 = vpop.f32.mrf.mxu0
    %5564 = vdwg.mxu0
    %5565 = vmatpush.bf16.msra.mxu0 %v4150
    %5566 = vmatpush.bf16.msra.mxu0 %v4149
    %5567 = vmatpush.bf16.msra.mxu0 %v4148
    %5568 = vmatpush.bf16.msra.mxu0 %v4147
    %5569 = vmatpush.bf16.msra.mxu0 %v4146
    %5570 = vmatpush.bf16.msra.mxu0 %v4145
    %5571 = vmatpush.bf16.msra.mxu0 %v4144
    %5572 = vmatpush.bf16.msra.mxu0 %v4143
    %5573 = vmatmul.bf16.gmra.mxu0 %v1313
    %v5574 = vpop.f32.mrf.mxu0
    %v5575 = vadd.f32 %v5562, %v5574
    %v5576 = vpop.f32.mrf.mxu0
    %5577 = vdwg.mxu0
    %5578 = vmatpush.bf16.msra.mxu0 %v4158
    %5579 = vmatpush.bf16.msra.mxu0 %v4157
    %5580 = vmatpush.bf16.msra.mxu0 %v4156
    %5581 = vmatpush.bf16.msra.mxu0 %v4155
    %5582 = vmatpush.bf16.msra.mxu0 %v4154
    %5583 = vmatpush.bf16.msra.mxu0 %v4153
    %5584 = vmatpush.bf16.msra.mxu0 %v4152
    %5585 = vmatpush.bf16.msra.mxu0 %v4151
    %5586 = vmatmul.bf16.gmra.mxu0 %v1314
    %v5587 = vpop.f32.mrf.mxu0
    %v5588 = vadd.f32 %v5575, %v5587
    %v5589 = vpop.f32.mrf.mxu0
    %5590 = vdwg.mxu0
    %5591 = vmatpush.bf16.msra.mxu0 %v4166
    %5592 = vmatpush.bf16.msra.mxu0 %v4165
    %5593 = vmatpush.bf16.msra.mxu0 %v4164
    %5594 = vmatpush.bf16.msra.mxu0 %v4163
    %5595 = vmatpush.bf16.msra.mxu0 %v4162
    %5596 = vmatpush.bf16.msra.mxu0 %v4161
    %5597 = vmatpush.bf16.msra.mxu0 %v4160
    %5598 = vmatpush.bf16.msra.mxu0 %v4159
    %5599 = vmatmul.bf16.gmra.mxu0 %v1317
    %v5600 = vpop.f32.mrf.mxu0
    %v5601 = vadd.f32 %v5588, %v5600
    %v5602 = vpop.f32.mrf.mxu0
    %5603 = vdwg.mxu0
    %5604 = vmatpush.bf16.msra.mxu0 %v4174
    %5605 = vmatpush.bf16.msra.mxu0 %v4173
    %5606 = vmatpush.bf16.msra.mxu0 %v4172
    %5607 = vmatpush.bf16.msra.mxu0 %v4171
    %5608 = vmatpush.bf16.msra.mxu0 %v4170
    %5609 = vmatpush.bf16.msra.mxu0 %v4169
    %5610 = vmatpush.bf16.msra.mxu0 %v4168
    %5611 = vmatpush.bf16.msra.mxu0 %v4167
    %5612 = vmatmul.bf16.gmra.mxu0 %v1318
    %v5613 = vpop.f32.mrf.mxu0
    %v5614 = vadd.f32 %v5601, %v5613
    %v5615 = vpop.f32.mrf.mxu0
    %5616 = vdwg.mxu0
    %5617 = vmatpush.bf16.msra.mxu0 %v4182
    %5618 = vmatpush.bf16.msra.mxu0 %v4181
    %5619 = vmatpush.bf16.msra.mxu0 %v4180
    %5620 = vmatpush.bf16.msra.mxu0 %v4179
    %5621 = vmatpush.bf16.msra.mxu0 %v4178
    %5622 = vmatpush.bf16.msra.mxu0 %v4177
    %5623 = vmatpush.bf16.msra.mxu0 %v4176
    %5624 = vmatpush.bf16.msra.mxu0 %v4175
    %5625 = vmatmul.bf16.gmra.mxu0 %v1319
    %v5626 = vpop.f32.mrf.mxu0
    %v5627 = vadd.f32 %v5614, %v5626
    %v5628 = vpop.f32.mrf.mxu0
    %5629 = vdwg.mxu0
    %5630 = vmatpush.bf16.msra.mxu0 %v4190
    %5631 = vmatpush.bf16.msra.mxu0 %v4189
    %5632 = vmatpush.bf16.msra.mxu0 %v4188
    %5633 = vmatpush.bf16.msra.mxu0 %v4187
    %5634 = vmatpush.bf16.msra.mxu0 %v4186
    %5635 = vmatpush.bf16.msra.mxu0 %v4185
    %5636 = vmatpush.bf16.msra.mxu0 %v4184
    %5637 = vmatpush.bf16.msra.mxu0 %v4183
    %5638 = vmatmul.bf16.gmra.mxu0 %v1320
    %v5639 = vpop.f32.mrf.mxu0
    %v5640 = vadd.f32 %v5627, %v5639
    %v5641 = vpop.f32.mrf.mxu0
    %5642 = vdwg.mxu0
    %5643 = vmatpush.bf16.msra.mxu0 %v4198
    %5644 = vmatpush.bf16.msra.mxu0 %v4197
    %5645 = vmatpush.bf16.msra.mxu0 %v4196
    %5646 = vmatpush.bf16.msra.mxu0 %v4195
    %5647 = vmatpush.bf16.msra.mxu0 %v4194
    %5648 = vmatpush.bf16.msra.mxu0 %v4193
    %5649 = vmatpush.bf16.msra.mxu0 %v4192
    %5650 = vmatpush.bf16.msra.mxu0 %v4191
    %5651 = vmatmul.bf16.gmra.mxu0 %v1321
    %v5652 = vpop.f32.mrf.mxu0
    %v5653 = vadd.f32 %v5640, %v5652
    %v5654 = vpop.f32.mrf.mxu0
    %5655 = vdwg.mxu0
    %5656 = vmatpush.bf16.msra.mxu0 %v4206
    %5657 = vmatpush.bf16.msra.mxu0 %v4205
    %5658 = vmatpush.bf16.msra.mxu0 %v4204
    %5659 = vmatpush.bf16.msra.mxu0 %v4203
    %5660 = vmatpush.bf16.msra.mxu0 %v4202
    %5661 = vmatpush.bf16.msra.mxu0 %v4201
    %5662 = vmatpush.bf16.msra.mxu0 %v4200
    %5663 = vmatpush.bf16.msra.mxu0 %v4199
    %5664 = vmatmul.bf16.gmra.mxu0 %v1322
    %v5665 = vpop.f32.mrf.mxu0
    %v5666 = vadd.f32 %v5653, %v5665
    %v5667 = vpop.f32.mrf.mxu0
    %5668 = vdwg.mxu0
    %5669 = vmatpush.bf16.msra.mxu0 %v4214
    %5670 = vmatpush.bf16.msra.mxu0 %v4213
    %5671 = vmatpush.bf16.msra.mxu0 %v4212
    %5672 = vmatpush.bf16.msra.mxu0 %v4211
    %5673 = vmatpush.bf16.msra.mxu0 %v4210
    %5674 = vmatpush.bf16.msra.mxu0 %v4209
    %5675 = vmatpush.bf16.msra.mxu0 %v4208
    %5676 = vmatpush.bf16.msra.mxu0 %v4207
    %5677 = vmatmul.bf16.gmra.mxu0 %v1323
    %v5678 = vpop.f32.mrf.mxu0
    %v5679 = vadd.f32 %v5666, %v5678
    %v5680 = vpop.f32.mrf.mxu0
    %5681 = vdwg.mxu0
    %5682 = vmatpush.bf16.msra.mxu0 %v4222
    %5683 = vmatpush.bf16.msra.mxu0 %v4221
    %5684 = vmatpush.bf16.msra.mxu0 %v4220
    %5685 = vmatpush.bf16.msra.mxu0 %v4219
    %5686 = vmatpush.bf16.msra.mxu0 %v4218
    %5687 = vmatpush.bf16.msra.mxu0 %v4217
    %5688 = vmatpush.bf16.msra.mxu0 %v4216
    %5689 = vmatpush.bf16.msra.mxu0 %v4215
    %5690 = vmatmul.bf16.gmra.mxu0 %v1324
    %v5691 = vpop.f32.mrf.mxu0
    %v5692 = vadd.f32 %v5679, %v5691
    %v5693 = vpop.f32.mrf.mxu0
    %5694 = vdwg.mxu0
    %5695 = vmatpush.bf16.msra.mxu0 %v4230
    %5696 = vmatpush.bf16.msra.mxu0 %v4229
    %5697 = vmatpush.bf16.msra.mxu0 %v4228
    %5698 = vmatpush.bf16.msra.mxu0 %v4227
    %5699 = vmatpush.bf16.msra.mxu0 %v4226
    %5700 = vmatpush.bf16.msra.mxu0 %v4225
    %5701 = vmatpush.bf16.msra.mxu0 %v4224
    %5702 = vmatpush.bf16.msra.mxu0 %v4223
    %5703 = vmatmul.bf16.gmra.mxu0 %v1327
    %v5704 = vpop.f32.mrf.mxu0
    %v5705 = vadd.f32 %v5692, %v5704
    %v5706 = vpop.f32.mrf.mxu0
    %5707 = vdwg.mxu0
    %5708 = vmatpush.bf16.msra.mxu0 %v4238
    %5709 = vmatpush.bf16.msra.mxu0 %v4237
    %5710 = vmatpush.bf16.msra.mxu0 %v4236
    %5711 = vmatpush.bf16.msra.mxu0 %v4235
    %5712 = vmatpush.bf16.msra.mxu0 %v4234
    %5713 = vmatpush.bf16.msra.mxu0 %v4233
    %5714 = vmatpush.bf16.msra.mxu0 %v4232
    %5715 = vmatpush.bf16.msra.mxu0 %v4231
    %5716 = vmatmul.bf16.gmra.mxu0 %v1328
    %v5717 = vpop.f32.mrf.mxu0
    %v5718 = vadd.f32 %v5705, %v5717
    %v5719 = vpop.f32.mrf.mxu0
    %5720 = vdwg.mxu0
    %5721 = vmatpush.bf16.msra.mxu0 %v4246
    %5722 = vmatpush.bf16.msra.mxu0 %v4245
    %5723 = vmatpush.bf16.msra.mxu0 %v4244
    %5724 = vmatpush.bf16.msra.mxu0 %v4243
    %5725 = vmatpush.bf16.msra.mxu0 %v4242
    %5726 = vmatpush.bf16.msra.mxu0 %v4241
    %5727 = vmatpush.bf16.msra.mxu0 %v4240
    %5728 = vmatpush.bf16.msra.mxu0 %v4239
    %5729 = vmatmul.bf16.gmra.mxu0 %v1329
    %v5730 = vpop.f32.mrf.mxu0
    %v5731 = vadd.f32 %v5718, %v5730
    %v5732 = vpop.f32.mrf.mxu0
    %5733 = vdwg.mxu0
    %5734 = vmatpush.bf16.msra.mxu0 %v4254
    %5735 = vmatpush.bf16.msra.mxu0 %v4253
    %5736 = vmatpush.bf16.msra.mxu0 %v4252
    %5737 = vmatpush.bf16.msra.mxu0 %v4251
    %5738 = vmatpush.bf16.msra.mxu0 %v4250
    %5739 = vmatpush.bf16.msra.mxu0 %v4249
    %5740 = vmatpush.bf16.msra.mxu0 %v4248
    %5741 = vmatpush.bf16.msra.mxu0 %v4247
    %5742 = vmatmul.bf16.gmra.mxu0 %v1330
    %v5743 = vpop.f32.mrf.mxu0
    %v5744 = vadd.f32 %v5731, %v5743
    %v5745 = vpop.f32.mrf.mxu0
    %5746 = vdwg.mxu0
    %5747 = vmatpush.bf16.msra.mxu0 %v4262
    %5748 = vmatpush.bf16.msra.mxu0 %v4261
    %5749 = vmatpush.bf16.msra.mxu0 %v4260
    %5750 = vmatpush.bf16.msra.mxu0 %v4259
    %5751 = vmatpush.bf16.msra.mxu0 %v4258
    %5752 = vmatpush.bf16.msra.mxu0 %v4257
    %5753 = vmatpush.bf16.msra.mxu0 %v4256
    %5754 = vmatpush.bf16.msra.mxu0 %v4255
    %5755 = vmatmul.bf16.gmra.mxu0 %v1331
    %v5756 = vpop.f32.mrf.mxu0
    %v5757 = vadd.f32 %v5744, %v5756
    %v5758 = vpop.f32.mrf.mxu0
    %5759 = vdwg.mxu0
    %5760 = vmatpush.bf16.msra.mxu0 %v4270
    %5761 = vmatpush.bf16.msra.mxu0 %v4269
    %5762 = vmatpush.bf16.msra.mxu0 %v4268
    %5763 = vmatpush.bf16.msra.mxu0 %v4267
    %5764 = vmatpush.bf16.msra.mxu0 %v4266
    %5765 = vmatpush.bf16.msra.mxu0 %v4265
    %5766 = vmatpush.bf16.msra.mxu0 %v4264
    %5767 = vmatpush.bf16.msra.mxu0 %v4263
    %5768 = vmatmul.bf16.gmra.mxu0 %v1332
    %v5769 = vpop.f32.mrf.mxu0
    %v5770 = vadd.f32 %v5757, %v5769
    %v5771 = vpop.f32.mrf.mxu0
    %5772 = vdwg.mxu0
    %5773 = vmatpush.bf16.msra.mxu0 %v4278
    %5774 = vmatpush.bf16.msra.mxu0 %v4277
    %5775 = vmatpush.bf16.msra.mxu0 %v4276
    %5776 = vmatpush.bf16.msra.mxu0 %v4275
    %5777 = vmatpush.bf16.msra.mxu0 %v4274
    %5778 = vmatpush.bf16.msra.mxu0 %v4273
    %5779 = vmatpush.bf16.msra.mxu0 %v4272
    %5780 = vmatpush.bf16.msra.mxu0 %v4271
    %5781 = vmatmul.bf16.gmra.mxu0 %v1333
    %v5782 = vpop.f32.mrf.mxu0
    %v5783 = vadd.f32 %v5770, %v5782
    %v5784 = vpop.f32.mrf.mxu0
    %5785 = vdwg.mxu0
    %5786 = vmatpush.bf16.msra.mxu0 %v4286
    %5787 = vmatpush.bf16.msra.mxu0 %v4285
    %5788 = vmatpush.bf16.msra.mxu0 %v4284
    %5789 = vmatpush.bf16.msra.mxu0 %v4283
    %5790 = vmatpush.bf16.msra.mxu0 %v4282
    %5791 = vmatpush.bf16.msra.mxu0 %v4281
    %5792 = vmatpush.bf16.msra.mxu0 %v4280
    %5793 = vmatpush.bf16.msra.mxu0 %v4279
    %5794 = vmatmul.bf16.gmra.mxu0 %v1334
    %v5795 = vpop.f32.mrf.mxu0
    %v5796 = vadd.f32 %v5783, %v5795
    %v5797 = vpop.f32.mrf.mxu0
    %5798 = vdwg.mxu0
    %v5799 = vmax.f32 %v5796, 0.0
    %v5800 = vpack.c.bf16 %v5799, %v5799
    %v5801 = vld [vmem:[#allocation7] sm:$0xf]
    %v5802 = vld [vmem:[#allocation7 + $0x4] sm:$0xf]
    %v5803 = vld [vmem:[#allocation7 + $0x8] sm:$0xf]
    %v5804 = vld [vmem:[#allocation7 + $0xc] sm:$0xf]
    %v5805 = vld [vmem:[#allocation7 + $0x10] sm:$0xf]
    %v5806 = vld [vmem:[#allocation7 + $0x14] sm:$0xf]
    %v5807 = vld [vmem:[#allocation7 + $0x18] sm:$0xf]
    %v5808 = vld [vmem:[#allocation7 + $0x1c] sm:$0xf]
    %v5809 = vld [vmem:[#allocation7 + $0x20] sm:$0xf]
    %v5810 = vld [vmem:[#allocation7 + $0x24] sm:$0xf]
    %v5811 = vld [vmem:[#allocation7 + $0x28] sm:$0xf]
    %v5812 = vld [vmem:[#allocation7 + $0x2c] sm:$0xf]
    %v5813 = vld [vmem:[#allocation7 + $0x30] sm:$0xf]
    %v5814 = vld [vmem:[#allocation7 + $0x34] sm:$0xf]
    %v5815 = vld [vmem:[#allocation7 + $0x38] sm:$0xf]
    %v5816 = vld [vmem:[#allocation7 + $0x3c] sm:$0xf]
    %v5817 = vld [vmem:[#allocation8] sm:$0x1]
    %v5819 = vperm.slane %v5817, 0
    %v5837 = vunpack.c.l.b16 %v5801
    %v5838 = vunpack.c.l.b16 %v5802
    %v5839 = vunpack.c.l.b16 %v5803
    %v5840 = vunpack.c.l.b16 %v5804
    %v5841 = vunpack.c.l.b16 %v5805
    %v5842 = vunpack.c.l.b16 %v5806
    %v5843 = vunpack.c.l.b16 %v5807
    %v5844 = vunpack.c.l.b16 %v5808
    %v5845 = vunpack.c.l.b16 %v5809
    %v5846 = vunpack.c.l.b16 %v5810
    %v5847 = vunpack.c.l.b16 %v5811
    %v5848 = vunpack.c.l.b16 %v5812
    %v5849 = vunpack.c.l.b16 %v5813
    %v5850 = vunpack.c.l.b16 %v5814
    %v5851 = vunpack.c.l.b16 %v5815
    %v5852 = vunpack.c.l.b16 %v5816
    %v5853 = vpack.c.b16 %v5838, %v5837
    %v5854 = vpack.c.b16 %v5840, %v5839
    %v5855 = vpack.c.b16 %v5842, %v5841
    %v5856 = vpack.c.b16 %v5844, %v5843
    %v5857 = vpack.c.b16 %v5846, %v5845
    %v5858 = vpack.c.b16 %v5848, %v5847
    %v5859 = vpack.c.b16 %v5850, %v5849
    %v5860 = vpack.c.b16 %v5852, %v5851
    %5869 = vmatpush.bf16.msra.mxu0 %v5860
    %5870 = vmatpush.bf16.msra.mxu0 %v5859
    %5871 = vmatpush.bf16.msra.mxu0 %v5858
    %5872 = vmatpush.bf16.msra.mxu0 %v5857
    %5873 = vmatpush.bf16.msra.mxu0 %v5856
    %5874 = vmatpush.bf16.msra.mxu0 %v5855
    %5875 = vmatpush.bf16.msra.mxu0 %v5854
    %5876 = vmatpush.bf16.msra.mxu0 %v5853
    %5877 = vmatmul.bf16.gmra.mxu0 %v5800
    %v5878 = vpop.f32.mrf.mxu0
    %v5879 = vadd.f32 %v5819, %v5878
    %v5880 = vpop.f32.mrf.mxu0
    %5881 = vdwg.mxu0
    %v5882 = vlaneseq
    %v5883 = vand.u32 %v5882, 127
    %vm5884 = vcmp.lt.s32.totalorder %v5883, 10
    %v5885 = vsel %vm5884, %v5879, -1e+30
    %vm5886 = vcmask 1041408
    %v5887 = vsel %vm5886, %v5885, -inf
    %5888 = vmax.xlane.f32.xlu0 %v5887
    %v5889 = vpop.xlane.xlu0 %5888
    %v5890 = vsub.f32 %v5885, %v5889
    %v5891 = vmul.f32 %v5890, 1.442695
    %v5892 = vpow.pop %v5891
    %v5893 = vsel %vm5886, %v5892, 0.0
    %5894 = vadd.xlane.f32.xlu0 %v5893
    %v5895 = vpop.xlane.xlu0 %5894
    %v5896 = vlog2.pop %v5895
    %v5897 = vmul.f32 %v5896, 0.6931472
    %v5898 = vsub.f32 %v5890, %v5897
    %5899 = vst [vmem:[#allocation10] sm:$0x3] %v5898
    // Predicated region
    $region38: #{trainer_net_forward.3} parent=1 // pred_check
      _
    $region39: #{trainer_net_forward.3} parent=1 // pred_check_branch
      %5901 = sbr.rel (0) target = $region41
    $region40: #{trainer_net_forward.3} parent=1 // pred_region
      %5903 = vsyncadd [#allocation4], 0
      %s5905 = sshll.u32 [#allocation10], 4
      %s5906 = int_to_ptr.vmem [resolvable:$true] %s5905
      %s5907 = sshll.u32 %s5, 4
      %s5908 = int_to_ptr.hbm [resolvable:$true] %s5907
      %5910 = dma.vmem_to_hbm [thread:$0]  %s5906, 32, %s5908, [#allocation4]
    $region41: #{trainer_net_forward.3} parent=1 // pred_fallthru
      _
    // Predicated region
    $region42: #{trainer_net_forward.3} parent=1 // pred_check
      _
    $region43: #{trainer_net_forward.3} parent=1 // pred_check_branch
      %5912 = sbr.rel (0) target = $region45
    $region44: #{trainer_net_forward.3} parent=1 // pred_region
      %5914 = dma.done [#allocation4], 32
    $region45: #{trainer_net_forward.3} parent=1 // pred_fallthru
      _
    %5915 = vsyncpa [#allocation3], 1
    %5916 = vsyncpa [#allocation6], 1
    %5917 = vsyncpa [#allocation9], 1
    %5918 = vsyncpa [#allocation4], 1

// kernel: trainer_net_forward.2
$region0: #{trainer_net_forward.2}
  #allocation0 [shape = 'u32[]', space=smem, size = 0x4, offset = 0x4, fixed_abs, tag = 'smem constant byte address 0x4 - core index']
  #allocation1 [shape = 'u32[72,128]{1,0:T(1,128)}', space=vmem, size = 0x9000, scoped, tag = 'internal scratch']
  #allocation2 [shape = 'f32[624,64]{1,0:T(8,128)}', space=vmem, size = 0x4e000, scoped, tag = 'scratch operand']
  %s0 = inlined_call_operand.vmem [shape: bf16[1360,9], index: 0, kind: input, shape index: {}]
  %s1 = inlined_call_operand.hbm [shape: bf16[9,32], index: 1, kind: input, shape index: {}]
  %s2 = inlined_call_operand.hbm [shape: f32[1,32], index: 2, kind: input, shape index: {}]
  %s3 = inlined_call_operand.hbm [shape: bf16[9,32,64], index: 3, kind: input, shape index: {}]
  %s4 = inlined_call_operand.hbm [shape: f32[1,64], index: 4, kind: input, shape index: {}]
  %s5 = inlined_call_operand.vmem [shape: bf16[288,64], index: 5, kind: output, shape index: {}]
  %s6 = sld [smem:[#allocation0]]
  $region69: #{trainer_net_forward.2} parent=0
    _
  %s8 = ssub.s32 1, %s6
  %s9 = scalar_select 0, %s8, %s6
  $region1: #{trainer_net_forward.2} parent=0
    #allocation3 [shape = 'u8[4096]{0}', space=vmem, size = 0x1000, scoped, tag = 'input window, operand 1, single buffered']
    #allocation4 [shape = 's32[2]{0}', space=sflag, size = 0x8, scoped, tag = 'scoped memory for trainer_net_forward.2']
    #allocation5 [shape = 'u8[512]{0}', space=vmem, size = 0x400, scoped, tag = 'input window, operand 2, single buffered']
    #allocation6 [shape = 's32[1]{0}', space=sflag, size = 0x4, scoped, tag = 'scoped memory for trainer_net_forward.2']
    #allocation7 [shape = 'u8[73728]{0}', space=vmem, size = 0x12000, scoped, tag = 'input window, operand 3, single buffered']
    #allocation8 [shape = 'u8[512]{0}', space=vmem, size = 0x400, scoped, tag = 'input window, operand 4, single buffered']
    #allocation9 [shape = 's32[1]{0}', space=sflag, size = 0x4, scoped, tag = 'scoped memory for trainer_net_forward.2']
    %10 = vsyncpa [#allocation4], 0
    %11 = vsyncpa [#allocation6], 0
    %12 = vsyncpa [#allocation9], 0
    loop: start=0, step=1, limit=4
    $region2: #{trainer_net_forward.2} parent=1 // loop_pre_header
      _
    $region3: #{trainer_net_forward.2} parent=1 // loop_header
      %s14 = sphi 0, %s18
      %p15 = scmp.ge.s32.totalorder %s14, 4
      %s24 = sphi 0, %s26
      %s27 = sphi 0, %s24
      %s28 = sphi 0, %s27
      %s44 = sphi 0, %s28
      %s48 = sphi 0, %s48
      %s50 = sphi 0, %s48
      %s51 = sphi 0, %s50
      %s65 = sphi 0, %s51
      %s69 = sphi 0, %s69
      %s71 = sphi 0, %s69
      %s72 = sphi 0, %s71
      %s86 = sphi 0, %s72
      %s90 = sphi 0, %s90
      %s92 = sphi 0, %s90
      %s93 = sphi 0, %s92
      %s107 = sphi 0, %s93
      %s111 = sphi 0, %s111
      %s113 = sphi 0, %s111
      %s114 = sphi 0, %s113
      %s128 = sphi 0, %s114
      %s134 = sphi 0, %s136
      %s137 = sphi 0, %s134
      %s138 = sphi 0, %s137
      %s154 = sphi 0, %s138
    $region4: #{trainer_net_forward.2} parent=1 // loop_header_branch
      %17 = sbr.rel (%p15) target = $region8
    $region5: #{trainer_net_forward.2} parent=1 // loop_body
      %s19 = ssub.s32 %s14, 1
      %s20 = ssub.s32 %s14, 2
      %s21 = sadd.s32 %s14, 1
      %s22 = ssub.s32 %s14, %s21
      %p23 = scmp.eq.s32.totalorder %s22, 0
      %s25 = sadd.s32 %s24, 1
      %s26 = scalar_select %p23, %s24, %s25
      %p29 = pneg %p23
      %p30 = scmp.eq.s32.totalorder %s14, 1
      %p31 = por %p29, %p30
      %p32 = scmp.ne.s32.totalorder %s24, %s27
      %p33 = scmp.eq.s32.totalorder %s14, 0
      %p34 = por %p32, %p33
      %p35 = scmp.ne.s32.totalorder %s24, %s27
      %p36 = scmp.eq.s32.totalorder %s19, 1
      %p37 = por %p35, %p36
      %p38 = scmp.ne.s32.totalorder %s27, %s28
      %p39 = scmp.eq.s32.totalorder %s19, 0
      %p40 = por %p38, %p39
      %p41 = scmp.ne.s32.totalorder %s27, %s28
      %p42 = scmp.eq.s32.totalorder %s20, 1
      %p43 = por %p41, %p42
      %p45 = scmp.ne.s32.totalorder %s28, %s44
      %p46 = scmp.eq.s32.totalorder %s20, 0
      %p47 = por %p45, %p46
      %s49 = sadd.s32 %s48, 1
      %p52 = scmp.eq.s32.totalorder %s14, 1
      %p53 = scmp.ne.s32.totalorder %s48, %s50
      %p54 = scmp.eq.s32.totalorder %s14, 0
      %p55 = por %p53, %p54
      %p56 = scmp.ne.s32.totalorder %s48, %s50
      %p57 = scmp.eq.s32.totalorder %s19, 1
      %p58 = por %p56, %p57
      %p59 = scmp.ne.s32.totalorder %s50, %s51
      %p60 = scmp.eq.s32.totalorder %s19, 0
      %p61 = por %p59, %p60
      %p62 = scmp.ne.s32.totalorder %s50, %s51
      %p63 = scmp.eq.s32.totalorder %s20, 1
      %p64 = por %p62, %p63
      %p66 = scmp.ne.s32.totalorder %s51, %s65
      %p67 = scmp.eq.s32.totalorder %s20, 0
      %p68 = por %p66, %p67
      %s70 = sadd.s32 %s69, 1
      %p73 = scmp.eq.s32.totalorder %s14, 1
      %p74 = scmp.ne.s32.totalorder %s69, %s71
      %p75 = scmp.eq.s32.totalorder %s14, 0
      %p76 = por %p74, %p75
      %p77 = scmp.ne.s32.totalorder %s69, %s71
      %p78 = scmp.eq.s32.totalorder %s19, 1
      %p79 = por %p77, %p78
      %p80 = scmp.ne.s32.totalorder %s71, %s72
      %p81 = scmp.eq.s32.totalorder %s19, 0
      %p82 = por %p80, %p81
      %p83 = scmp.ne.s32.totalorder %s71, %s72
      %p84 = scmp.eq.s32.totalorder %s20, 1
      %p85 = por %p83, %p84
      %p87 = scmp.ne.s32.totalorder %s72, %s86
      %p88 = scmp.eq.s32.totalorder %s20, 0
      %p89 = por %p87, %p88
      %s91 = sadd.s32 %s90, 1
      %p94 = scmp.eq.s32.totalorder %s14, 1
      %p95 = scmp.ne.s32.totalorder %s90, %s92
      %p96 = scmp.eq.s32.totalorder %s14, 0
      %p97 = por %p95, %p96
      %p98 = scmp.ne.s32.totalorder %s90, %s92
      %p99 = scmp.eq.s32.totalorder %s19, 1
      %p100 = por %p98, %p99
      %p101 = scmp.ne.s32.totalorder %s92, %s93
      %p102 = scmp.eq.s32.totalorder %s19, 0
      %p103 = por %p101, %p102
      %p104 = scmp.ne.s32.totalorder %s92, %s93
      %p105 = scmp.eq.s32.totalorder %s20, 1
      %p106 = por %p104, %p105
      %p108 = scmp.ne.s32.totalorder %s93, %s107
      %p109 = scmp.eq.s32.totalorder %s20, 0
      %p110 = por %p108, %p109
      %s112 = sadd.s32 %s111, 1
      %p115 = scmp.eq.s32.totalorder %s14, 1
      %p116 = scmp.ne.s32.totalorder %s111, %s113
      %p117 = scmp.eq.s32.totalorder %s14, 0
      %p118 = por %p116, %p117
      %p119 = scmp.ne.s32.totalorder %s111, %s113
      %p120 = scmp.eq.s32.totalorder %s19, 1
      %p121 = por %p119, %p120
      %p122 = scmp.ne.s32.totalorder %s113, %s114
      %p123 = scmp.eq.s32.totalorder %s19, 0
      %p124 = por %p122, %p123
      %p125 = scmp.ne.s32.totalorder %s113, %s114
      %p126 = scmp.eq.s32.totalorder %s20, 1
      %p127 = por %p125, %p126
      %p129 = scmp.ne.s32.totalorder %s114, %s128
      %p130 = scmp.eq.s32.totalorder %s20, 0
      %p131 = por %p129, %p130
      %s132 = ssub.s32 %s14, %s21
      %p133 = scmp.eq.s32.totalorder %s132, 0
      %s135 = sadd.s32 %s134, 1
      %s136 = scalar_select %p133, %s134, %s135
      %p139 = pneg %p133
      %p140 = scmp.eq.s32.totalorder %s14, 1
      %p141 = por %p139, %p140
      %p142 = scmp.ne.s32.totalorder %s134, %s137
      %p143 = scmp.eq.s32.totalorder %s14, 0
      %p144 = por %p142, %p143
      %p145 = scmp.ne.s32.totalorder %s134, %s137
      %p146 = scmp.eq.s32.totalorder %s19, 1
      %p147 = por %p145, %p146
      %p148 = scmp.ne.s32.totalorder %s137, %s138
      %p149 = scmp.eq.s32.totalorder %s19, 0
      %p150 = por %p148, %p149
      %p151 = scmp.ne.s32.totalorder %s137, %s138
      %p152 = scmp.eq.s32.totalorder %s20, 1
      %p153 = por %p151, %p152
      %p155 = scmp.ne.s32.totalorder %s138, %s154
      %p156 = scmp.eq.s32.totalorder %s20, 0
      %p157 = por %p155, %p156
      %p158 = scmp.le.s32.totalorder 1, %s14
      %p159 = scmp.lt.s32.totalorder %s14, 3
      %p160 = pnand %p158, %p159
      %p161 = pneg %p160
      // Predicated region
      $region9: #{trainer_net_forward.2} parent=5 // pred_check
        _
      $region10: #{trainer_net_forward.2} parent=5 // pred_check_branch
        %163 = sbr.rel (%p160) target = $region12
      $region11: #{trainer_net_forward.2} parent=5 // pred_region
        %s164 = ssub.s32 %s14, 1
        // Predicated region
        $region13: #{trainer_net_forward.2} parent=11 // pred_check
          %p165 = pneg %p61
        $region14: #{trainer_net_forward.2} parent=11 // pred_check_branch
          %167 = sbr.rel (%p165) target = $region16
        $region15: #{trainer_net_forward.2} parent=11 // pred_region
          %169 = vsyncadd [#allocation4], 0
          %s170 = sshll.u32 %s1, 4
          %s171 = int_to_ptr.hbm [resolvable:$true] %s170
          %s172 = sshll.u32 [#allocation3], 4
          %s173 = int_to_ptr.vmem [resolvable:$true] %s172
          %178 = dma.hbm_to_vmem [thread:$0]  %s171, 128, %s173, [#allocation4], 64, 64, 4
        $region16: #{trainer_net_forward.2} parent=11 // pred_fallthru
          _
        // Predicated region
        $region17: #{trainer_net_forward.2} parent=11 // pred_check
          %p179 = pneg %p82
        $region18: #{trainer_net_forward.2} parent=11 // pred_check_branch
          %181 = sbr.rel (%p179) target = $region20
        $region19: #{trainer_net_forward.2} parent=11 // pred_region
          %183 = vsyncadd [#allocation6], 0
          %s185 = sshll.u32 %s2, 4
          %s186 = int_to_ptr.hbm [resolvable:$true] %s185
          %s187 = sshll.u32 [#allocation5], 4
          %s188 = int_to_ptr.vmem [resolvable:$true] %s187
          %190 = dma.hbm_to_vmem [thread:$0]  %s186, 16, %s188, [#allocation6]
        $region20: #{trainer_net_forward.2} parent=11 // pred_fallthru
          _
        // Predicated region
        $region21: #{trainer_net_forward.2} parent=11 // pred_check
          %p191 = pneg %p103
        $region22: #{trainer_net_forward.2} parent=11 // pred_check_branch
          %193 = sbr.rel (%p191) target = $region24
        $region23: #{trainer_net_forward.2} parent=11 // pred_region
          %195 = vsyncadd [#allocation6], 0
          %s196 = sshll.u32 %s3, 4
          %s197 = int_to_ptr.hbm [resolvable:$true] %s196
          %s198 = sshll.u32 [#allocation7], 4
          %s199 = int_to_ptr.vmem [resolvable:$true] %s198
          %204 = dma.hbm_to_vmem [thread:$0]  %s197, 2304, %s199, [#allocation6], 64, 64, 4
        $region24: #{trainer_net_forward.2} parent=11 // pred_fallthru
          _
        // Predicated region
        $region25: #{trainer_net_forward.2} parent=11 // pred_check
          %p205 = pneg %p124
        $region26: #{trainer_net_forward.2} parent=11 // pred_check_branch
          %207 = sbr.rel (%p205) target = $region28
        $region27: #{trainer_net_forward.2} parent=11 // pred_region
          %209 = vsyncadd [#allocation9], 0
          %s211 = sshll.u32 %s4, 4
          %s212 = int_to_ptr.hbm [resolvable:$true] %s211
          %s213 = sshll.u32 [#allocation8], 4
          %s214 = int_to_ptr.vmem [resolvable:$true] %s213
          %216 = dma.hbm_to_vmem [thread:$0]  %s212, 16, %s214, [#allocation9]
        $region28: #{trainer_net_forward.2} parent=11 // pred_fallthru
          _
      $region12: #{trainer_net_forward.2} parent=5 // pred_fallthru
        _
      %p217 = scmp.lt.s32.totalorder %s14, 2
      // Predicated region
      $region29: #{trainer_net_forward.2} parent=5 // pred_check
        %p218 = pneg %p217
      $region30: #{trainer_net_forward.2} parent=5 // pred_check_branch
        %220 = sbr.rel (%p218) target = $region32
      $region31: #{trainer_net_forward.2} parent=5 // pred_region
        // Predicated region
        $region33: #{trainer_net_forward.2} parent=31 // pred_check
          %p221 = pneg %p34
        $region34: #{trainer_net_forward.2} parent=31 // pred_check_branch
          %223 = sbr.rel (%p221) target = $region36
        $region35: #{trainer_net_forward.2} parent=31 // pred_region
          %s224 = smul.u32 85, %s14
          %p225 = scmp.lt.s32.totalorder %s224, 169
          %s226 = scalar_select %p225, %s224, 169
          %s227 = smul.addr %s226, 4
          %s228 = scalar_lea.vmem %s0, %s227
          %s229 = smul.u32 85, %s14
        $region36: #{trainer_net_forward.2} parent=31 // pred_fallthru
          _
      $region32: #{trainer_net_forward.2} parent=5 // pred_fallthru
        _
      %p230 = scmp.le.s32.totalorder 1, %s14
      %p231 = scmp.lt.s32.totalorder %s14, 3
      %p232 = pnand %p230, %p231
      %p233 = pneg %p232
      // Predicated region
      $region37: #{trainer_net_forward.2} parent=5 // pred_check
        _
      $region38: #{trainer_net_forward.2} parent=5 // pred_check_branch
        %235 = sbr.rel (%p232) target = $region40
      $region39: #{trainer_net_forward.2} parent=5 // pred_region
        %s236 = ssub.s32 %s14, 1
        // Predicated region
        $region41: #{trainer_net_forward.2} parent=39 // pred_check
          %p237 = pneg %p61
        $region42: #{trainer_net_forward.2} parent=39 // pred_check_branch
          %239 = sbr.rel (%p237) target = $region44
        $region43: #{trainer_net_forward.2} parent=39 // pred_region
          %241 = dma.done [#allocation4], 128
        $region44: #{trainer_net_forward.2} parent=39 // pred_fallthru
          _
        // Predicated region
        $region45: #{trainer_net_forward.2} parent=39 // pred_check
          %p242 = pneg %p82
        $region46: #{trainer_net_forward.2} parent=39 // pred_check_branch
          %244 = sbr.rel (%p242) target = $region48
        $region47: #{trainer_net_forward.2} parent=39 // pred_region
          %246 = dma.done [#allocation6], 16
        $region48: #{trainer_net_forward.2} parent=39 // pred_fallthru
          _
        // Predicated region
        $region49: #{trainer_net_forward.2} parent=39 // pred_check
          %p247 = pneg %p103
        $region50: #{trainer_net_forward.2} parent=39 // pred_check_branch
          %249 = sbr.rel (%p247) target = $region52
        $region51: #{trainer_net_forward.2} parent=39 // pred_region
          %251 = dma.done [#allocation6], 2304
        $region52: #{trainer_net_forward.2} parent=39 // pred_fallthru
          _
        // Predicated region
        $region53: #{trainer_net_forward.2} parent=39 // pred_check
          %p252 = pneg %p124
        $region54: #{trainer_net_forward.2} parent=39 // pred_check_branch
          %254 = sbr.rel (%p252) target = $region56
        $region55: #{trainer_net_forward.2} parent=39 // pred_region
          %256 = dma.done [#allocation9], 16
        $region56: #{trainer_net_forward.2} parent=39 // pred_fallthru
          _
        %s257 = smul.u32 85, %s19
        %p258 = scmp.lt.s32.totalorder %s257, 169
        %s259 = scalar_select %p258, %s257, 169
        %s260 = smul.addr %s259, 4
        %s261 = scalar_lea.vmem %s0, %s260
        %p262 = pneg %p40
        %p263 = pneg %p37
        %p264 = pneg %p61
        %p265 = pneg %p58
        %p266 = pneg %p82
        %p267 = pneg %p79
        %p268 = pneg %p103
        %p269 = pneg %p100
        %p270 = pneg %p124
        %p271 = pneg %p121
        %p272 = pneg %p150
        %p273 = pneg %p147
        %s274 = smul.u32 18, %s19
        %p275 = scmp.lt.s32.totalorder %s274, 35
        %s276 = scalar_select %p275, %s274, 35
        %s277 = smul.addr %s276, 4
        %s278 = scalar_lea.vmem %s5, %s277
        %s279 = smul.u32 85, %s19
        %p280 = scmp.lt.s32.totalorder %s279, 169
        %s281 = scalar_select %p280, %s279, 169
        %s282 = smul.addr %s281, 4
        %s283 = scalar_lea.vmem %s0, %s282
        %s284 = smul.u32 85, %s19
        %s285 = smul.u32 18, %s19
        %p286 = scmp.lt.s32.totalorder %s285, 35
        %s287 = scalar_select %p286, %s285, 35
        %s288 = smul.addr %s287, 4
        %s289 = scalar_lea.vmem %s5, %s288
        %s290 = smul.u32 18, %s19
        %v292 = vld [vmem:[%s283] sm:$0xf]
        %v293 = vld [vmem:[%s283 + $0x4] sm:$0xf]
        %v294 = vld [vmem:[%s283 + $0x8] sm:$0xf]
        %v295 = vld [vmem:[%s283 + $0xc] sm:$0xf]
        %v296 = vld [vmem:[%s283 + $0x10] sm:$0xf]
        %v297 = vld [vmem:[%s283 + $0x14] sm:$0xf]
        %v298 = vld [vmem:[%s283 + $0x18] sm:$0xf]
        %v299 = vld [vmem:[%s283 + $0x1c] sm:$0xf]
        %v300 = vld [vmem:[%s283 + $0x20] sm:$0xf]
        %v301 = vld [vmem:[%s283 + $0x24] sm:$0xf]
        %v302 = vld [vmem:[%s283 + $0x28] sm:$0xf]
        %v303 = vld [vmem:[%s283 + $0x2c] sm:$0xf]
        %v304 = vld [vmem:[%s283 + $0x30] sm:$0xf]
        %v305 = vld [vmem:[%s283 + $0x34] sm:$0xf]
        %v306 = vld [vmem:[%s283 + $0x38] sm:$0xf]
        %v307 = vld [vmem:[%s283 + $0x3c] sm:$0xf]
        %v308 = vld [vmem:[%s283 + $0x40] sm:$0xf]
        %v309 = vld [vmem:[%s283 + $0x44] sm:$0xf]
        %v310 = vld [vmem:[%s283 + $0x48] sm:$0xf]
        %v311 = vld [vmem:[%s283 + $0x4c] sm:$0xf]
        %v312 = vld [vmem:[%s283 + $0x50] sm:$0xf]
        %v313 = vld [vmem:[%s283 + $0x54] sm:$0xf]
        %v314 = vld [vmem:[%s283 + $0x58] sm:$0xf]
        %v315 = vld [vmem:[%s283 + $0x5c] sm:$0xf]
        %v316 = vld [vmem:[%s283 + $0x60] sm:$0xf]
        %v317 = vld [vmem:[%s283 + $0x64] sm:$0xf]
        %v318 = vld [vmem:[%s283 + $0x68] sm:$0xf]
        %v319 = vld [vmem:[%s283 + $0x6c] sm:$0xf]
        %v320 = vld [vmem:[%s283 + $0x70] sm:$0xf]
        %v321 = vld [vmem:[%s283 + $0x74] sm:$0xf]
        %v322 = vld [vmem:[%s283 + $0x78] sm:$0xf]
        %v323 = vld [vmem:[%s283 + $0x7c] sm:$0xf]
        %v324 = vld [vmem:[%s283 + $0x80] sm:$0xf]
        %v325 = vld [vmem:[%s283 + $0x84] sm:$0xf]
        %v326 = vld [vmem:[%s283 + $0x88] sm:$0xf]
        %v327 = vld [vmem:[%s283 + $0x8c] sm:$0xf]
        %v328 = vld [vmem:[%s283 + $0x90] sm:$0xf]
        %v329 = vld [vmem:[%s283 + $0x94] sm:$0xf]
        %v330 = vld [vmem:[%s283 + $0x98] sm:$0xf]
        %v331 = vld [vmem:[%s283 + $0x9c] sm:$0xf]
        %v332 = vld [vmem:[%s283 + $0xa0] sm:$0xf]
        %v333 = vld [vmem:[%s283 + $0xa4] sm:$0xf]
        %v334 = vld [vmem:[%s283 + $0xa8] sm:$0xf]
        %v335 = vld [vmem:[%s283 + $0xac] sm:$0xf]
        %v336 = vld [vmem:[%s283 + $0xb0] sm:$0xf]
        %v337 = vld [vmem:[%s283 + $0xb4] sm:$0xf]
        %v338 = vld [vmem:[%s283 + $0xb8] sm:$0xf]
        %v339 = vld [vmem:[%s283 + $0xbc] sm:$0xf]
        %v340 = vld [vmem:[%s283 + $0xc0] sm:$0xf]
        %v341 = vld [vmem:[%s283 + $0xc4] sm:$0xf]
        %v342 = vld [vmem:[%s283 + $0xc8] sm:$0xf]
        %v343 = vld [vmem:[%s283 + $0xcc] sm:$0xf]
        %v344 = vld [vmem:[%s283 + $0xd0] sm:$0xf]
        %v345 = vld [vmem:[%s283 + $0xd4] sm:$0xf]
        %v346 = vld [vmem:[%s283 + $0xd8] sm:$0xf]
        %v347 = vld [vmem:[%s283 + $0xdc] sm:$0xf]
        %v348 = vld [vmem:[%s283 + $0xe0] sm:$0xf]
        %v349 = vld [vmem:[%s283 + $0xe4] sm:$0xf]
        %v350 = vld [vmem:[%s283 + $0xe8] sm:$0xf]
        %v351 = vld [vmem:[%s283 + $0xec] sm:$0xf]
        %v352 = vld [vmem:[%s283 + $0xf0] sm:$0xf]
        %v353 = vld [vmem:[%s283 + $0xf4] sm:$0xf]
        %v354 = vld [vmem:[%s283 + $0xf8] sm:$0xf]
        %v355 = vld [vmem:[%s283 + $0xfc] sm:$0xf]
        %v356 = vld [vmem:[%s283 + $0x100] sm:$0xf]
        %v357 = vld [vmem:[%s283 + $0x104] sm:$0xf]
        %v358 = vld [vmem:[%s283 + $0x108] sm:$0xf]
        %v359 = vld [vmem:[%s283 + $0x10c] sm:$0xf]
        %v360 = vld [vmem:[%s283 + $0x110] sm:$0xf]
        %v361 = vld [vmem:[%s283 + $0x114] sm:$0xf]
        %v362 = vld [vmem:[%s283 + $0x118] sm:$0xf]
        %v363 = vld [vmem:[%s283 + $0x11c] sm:$0xf]
        %v364 = vld [vmem:[%s283 + $0x120] sm:$0xf]
        %v365 = vld [vmem:[%s283 + $0x124] sm:$0xf]
        %v366 = vld [vmem:[%s283 + $0x128] sm:$0xf]
        %v367 = vld [vmem:[%s283 + $0x12c] sm:$0xf]
        %v368 = vld [vmem:[%s283 + $0x130] sm:$0xf]
        %v369 = vld [vmem:[%s283 + $0x134] sm:$0xf]
        %v370 = vld [vmem:[%s283 + $0x138] sm:$0xf]
        %v371 = vld [vmem:[%s283 + $0x13c] sm:$0xf]
        %v372 = vld [vmem:[%s283 + $0x140] sm:$0xf]
        %v373 = vld [vmem:[%s283 + $0x144] sm:$0xf]
        %v374 = vld [vmem:[%s283 + $0x148] sm:$0xf]
        %v375 = vld [vmem:[%s283 + $0x14c] sm:$0xf]
        %v376 = vld [vmem:[%s283 + $0x150] sm:$0xf]
        %v377 = vld [vmem:[#allocation3] sm:$0xf]
        %v378 = vld [vmem:[#allocation3 + $0x4] sm:$0x1]
        %v379 = vld [vmem:[#allocation5] sm:$0x1]
        %v381 = vperm.slane %v379, 0
        %v468 = vunpack.c.l.b16 %v292
        %v469 = vunpack.c.l.b16 %v293
        %v470 = vunpack.c.l.b16 %v294
        %v471 = vunpack.c.l.b16 %v295
        %v472 = vunpack.c.l.b16 %v296
        %v473 = vunpack.c.l.b16 %v297
        %v474 = vunpack.c.l.b16 %v298
        %v475 = vunpack.c.l.b16 %v299
        %v476 = vunpack.c.l.b16 %v300
        %v477 = vunpack.c.l.b16 %v301
        %v478 = vunpack.c.l.b16 %v302
        %v479 = vunpack.c.l.b16 %v303
        %v480 = vunpack.c.l.b16 %v304
        %v481 = vunpack.c.l.b16 %v305
        %v482 = vunpack.c.l.b16 %v306
        %v483 = vunpack.c.l.b16 %v307
        %v484 = vunpack.c.l.b16 %v308
        %v485 = vunpack.c.l.b16 %v309
        %v486 = vunpack.c.l.b16 %v310
        %v487 = vunpack.c.l.b16 %v311
        %v488 = vunpack.c.l.b16 %v312
        %v489 = vunpack.c.l.b16 %v313
        %v490 = vunpack.c.l.b16 %v314
        %v491 = vunpack.c.l.b16 %v315
        %v492 = vunpack.c.l.b16 %v316
        %v493 = vunpack.c.l.b16 %v317
        %v494 = vunpack.c.l.b16 %v318
        %v495 = vunpack.c.l.b16 %v319
        %v496 = vunpack.c.l.b16 %v320
        %v497 = vunpack.c.l.b16 %v321
        %v498 = vunpack.c.l.b16 %v322
        %v499 = vunpack.c.l.b16 %v323
        %v500 = vunpack.c.l.b16 %v324
        %v501 = vunpack.c.l.b16 %v325
        %v502 = vunpack.c.l.b16 %v326
        %v503 = vunpack.c.l.b16 %v327
        %v504 = vunpack.c.l.b16 %v328
        %v505 = vunpack.c.l.b16 %v329
        %v506 = vunpack.c.l.b16 %v330
        %v507 = vunpack.c.l.b16 %v331
        %v508 = vunpack.c.l.b16 %v332
        %v509 = vunpack.c.l.b16 %v333
        %v510 = vunpack.c.l.b16 %v334
        %v511 = vunpack.c.l.b16 %v335
        %v512 = vunpack.c.l.b16 %v336
        %v513 = vunpack.c.l.b16 %v337
        %v514 = vunpack.c.l.b16 %v338
        %v515 = vunpack.c.l.b16 %v339
        %v516 = vunpack.c.l.b16 %v340
        %v517 = vunpack.c.l.b16 %v341
        %v518 = vunpack.c.l.b16 %v342
        %v519 = vunpack.c.l.b16 %v343
        %v520 = vunpack.c.l.b16 %v344
        %v521 = vunpack.c.l.b16 %v345
        %v522 = vunpack.c.l.b16 %v346
        %v523 = vunpack.c.l.b16 %v347
        %v524 = vunpack.c.l.b16 %v348
        %v525 = vunpack.c.l.b16 %v349
        %v526 = vunpack.c.l.b16 %v350
        %v527 = vunpack.c.l.b16 %v351
        %v528 = vunpack.c.l.b16 %v352
        %v529 = vunpack.c.l.b16 %v353
        %v530 = vunpack.c.l.b16 %v354
        %v531 = vunpack.c.l.b16 %v355
        %v532 = vunpack.c.l.b16 %v356
        %v533 = vunpack.c.l.b16 %v357
        %v534 = vunpack.c.l.b16 %v358
        %v535 = vunpack.c.l.b16 %v359
        %v536 = vunpack.c.l.b16 %v360
        %v537 = vunpack.c.l.b16 %v361
        %v538 = vunpack.c.l.b16 %v362
        %v539 = vunpack.c.l.b16 %v363
        %v540 = vunpack.c.l.b16 %v364
        %v541 = vunpack.c.l.b16 %v365
        %v542 = vunpack.c.l.b16 %v366
        %v543 = vunpack.c.l.b16 %v367
        %v544 = vunpack.c.l.b16 %v368
        %v545 = vunpack.c.l.b16 %v369
        %v546 = vunpack.c.l.b16 %v370
        %v547 = vunpack.c.l.b16 %v371
        %v548 = vunpack.c.l.b16 %v372
        %v549 = vunpack.c.l.b16 %v373
        %v550 = vunpack.c.l.b16 %v374
        %v551 = vunpack.c.l.b16 %v375
        %v552 = vunpack.c.l.b16 %v376
        %v553 = vpack.c.b16 %v469, %v468
        %v554 = vpack.c.b16 %v471, %v470
        %v555 = vpack.c.b16 %v473, %v472
        %v556 = vpack.c.b16 %v475, %v474
        %v557 = vpack.c.b16 %v477, %v476
        %v558 = vpack.c.b16 %v479, %v478
        %v559 = vpack.c.b16 %v481, %v480
        %v560 = vpack.c.b16 %v483, %v482
        %v561 = vpack.c.b16 %v485, %v484
        %v562 = vpack.c.b16 %v487, %v486
        %v563 = vpack.c.b16 %v489, %v488
        %v564 = vpack.c.b16 %v491, %v490
        %v565 = vpack.c.b16 %v493, %v492
        %v566 = vpack.c.b16 %v495, %v494
        %v567 = vpack.c.b16 %v497, %v496
        %v568 = vpack.c.b16 %v499, %v498
        %v569 = vpack.c.b16 %v501, %v500
        %v570 = vpack.c.b16 %v503, %v502
        %v571 = vpack.c.b16 %v505, %v504
        %v572 = vpack.c.b16 %v507, %v506
        %v573 = vpack.c.b16 %v509, %v508
        %v574 = vpack.c.b16 %v511, %v510
        %v575 = vpack.c.b16 %v513, %v512
        %v576 = vpack.c.b16 %v515, %v514
        %v577 = vpack.c.b16 %v517, %v516
        %v578 = vpack.c.b16 %v519, %v518
        %v579 = vpack.c.b16 %v521, %v520
        %v580 = vpack.c.b16 %v523, %v522
        %v581 = vpack.c.b16 %v525, %v524
        %v582 = vpack.c.b16 %v527, %v526
        %v583 = vpack.c.b16 %v529, %v528
        %v584 = vpack.c.b16 %v531, %v530
        %v585 = vpack.c.b16 %v533, %v532
        %v586 = vpack.c.b16 %v535, %v534
        %v587 = vpack.c.b16 %v537, %v536
        %v588 = vpack.c.b16 %v539, %v538
        %v589 = vpack.c.b16 %v541, %v540
        %v590 = vpack.c.b16 %v543, %v542
        %v591 = vpack.c.b16 %v545, %v544
        %v592 = vpack.c.b16 %v547, %v546
        %v593 = vpack.c.b16 %v549, %v548
        %v594 = vpack.c.b16 %v551, %v550
        %v595 = vpack.c.b16 %v552, %v552
        %v598 = vunpack.c.l.b16 %v377
        %v599 = vunpack.c.l.b16 %v378
        %v600 = vpack.c.b16 %v599, %v598
        %vm601 = vcmask 72704
        %v603 = vsel %vm601, %v553, 0
        %v606 = vsel %vm601, %v554, 0
        %v609 = vsel %vm601, %v555, 0
        %v612 = vsel %vm601, %v556, 0
        %v615 = vsel %vm601, %v557, 0
        %v618 = vsel %vm601, %v558, 0
        %v621 = vsel %vm601, %v559, 0
        %v624 = vsel %vm601, %v560, 0
        %v627 = vsel %vm601, %v561, 0
        %v630 = vsel %vm601, %v562, 0
        %v633 = vsel %vm601, %v563, 0
        %v636 = vsel %vm601, %v564, 0
        %v639 = vsel %vm601, %v565, 0
        %v642 = vsel %vm601, %v566, 0
        %v645 = vsel %vm601, %v567, 0
        %v648 = vsel %vm601, %v568, 0
        %v651 = vsel %vm601, %v569, 0
        %v654 = vsel %vm601, %v570, 0
        %v657 = vsel %vm601, %v571, 0
        %v660 = vsel %vm601, %v572, 0
        %v663 = vsel %vm601, %v573, 0
        %v666 = vsel %vm601, %v574, 0
        %v669 = vsel %vm601, %v575, 0
        %v672 = vsel %vm601, %v576, 0
        %v675 = vsel %vm601, %v577, 0
        %v678 = vsel %vm601, %v578, 0
        %v681 = vsel %vm601, %v579, 0
        %v684 = vsel %vm601, %v580, 0
        %v687 = vsel %vm601, %v581, 0
        %v690 = vsel %vm601, %v582, 0
        %v693 = vsel %vm601, %v583, 0
        %v696 = vsel %vm601, %v584, 0
        %v699 = vsel %vm601, %v585, 0
        %v702 = vsel %vm601, %v586, 0
        %v705 = vsel %vm601, %v587, 0
        %v708 = vsel %vm601, %v588, 0
        %v711 = vsel %vm601, %v589, 0
        %v714 = vsel %vm601, %v590, 0
        %v717 = vsel %vm601, %v591, 0
        %v720 = vsel %vm601, %v592, 0
        %v723 = vsel %vm601, %v593, 0
        %v726 = vsel %vm601, %v594, 0
        %v729 = vsel %vm601, %v595, 0
        %vm731 = vcmask 1043456
        %vm732 = vcmask 1044480
        %v733 = vsel %vm731, 4294967295, 65535
        %v734 = vsel %vm732, %v733, 0
        %v736 = vand.u32 %v600, %v734
        %738 = vmatpush.bf16.msra.mxu0 0
        %739 = vmatpush.bf16.msra.mxu0 0
        %740 = vmatpush.bf16.msra.mxu0 0
        %741 = vmatpush.bf16.msra.mxu0 0
        %742 = vmatpush.bf16.msra.mxu0 0
        %743 = vmatpush.bf16.msra.mxu0 0
        %744 = vmatpush.bf16.msra.mxu0 0
        %745 = vmatpush.bf16.msra.mxu0 %v736
        %746 = vmatmul.bf16.gmra.mxu0 %v603
        %v747 = vpop.f32.mrf.mxu0
        %v748 = vadd.f32 %v381, %v747
        %v749 = vpop.f32.mrf.mxu0
        %v750 = vadd.f32 %v381, %v749
        %751 = vmatmul.bf16.gmra.mxu0 %v606
        %v752 = vpop.f32.mrf.mxu0
        %v753 = vadd.f32 %v381, %v752
        %v754 = vpop.f32.mrf.mxu0
        %v755 = vadd.f32 %v381, %v754
        %756 = vmatmul.bf16.gmra.mxu0 %v609
        %v757 = vpop.f32.mrf.mxu0
        %v758 = vadd.f32 %v381, %v757
        %v759 = vpop.f32.mrf.mxu0
        %v760 = vadd.f32 %v381, %v759
        %761 = vmatmul.bf16.gmra.mxu0 %v612
        %v762 = vpop.f32.mrf.mxu0
        %v763 = vadd.f32 %v381, %v762
        %v764 = vpop.f32.mrf.mxu0
        %v765 = vadd.f32 %v381, %v764
        %766 = vmatmul.bf16.gmra.mxu0 %v615
        %v767 = vpop.f32.mrf.mxu0
        %v768 = vadd.f32 %v381, %v767
        %v769 = vpop.f32.mrf.mxu0
        %v770 = vadd.f32 %v381, %v769
        %771 = vmatmul.bf16.gmra.mxu0 %v618
        %v772 = vpop.f32.mrf.mxu0
        %v773 = vadd.f32 %v381, %v772
        %v774 = vpop.f32.mrf.mxu0
        %v775 = vadd.f32 %v381, %v774
        %776 = vmatmul.bf16.gmra.mxu0 %v621
        %v777 = vpop.f32.mrf.mxu0
        %v778 = vadd.f32 %v381, %v777
        %v779 = vpop.f32.mrf.mxu0
        %v780 = vadd.f32 %v381, %v779
        %781 = vmatmul.bf16.gmra.mxu0 %v624
        %v782 = vpop.f32.mrf.mxu0
        %v783 = vadd.f32 %v381, %v782
        %v784 = vpop.f32.mrf.mxu0
        %v785 = vadd.f32 %v381, %v784
        %786 = vmatmul.bf16.gmra.mxu0 %v627
        %v787 = vpop.f32.mrf.mxu0
        %v788 = vadd.f32 %v381, %v787
        %v789 = vpop.f32.mrf.mxu0
        %v790 = vadd.f32 %v381, %v789
        %791 = vmatmul.bf16.gmra.mxu0 %v630
        %v792 = vpop.f32.mrf.mxu0
        %v793 = vadd.f32 %v381, %v792
        %v794 = vpop.f32.mrf.mxu0
        %v795 = vadd.f32 %v381, %v794
        %796 = vmatmul.bf16.gmra.mxu0 %v633
        %v797 = vpop.f32.mrf.mxu0
        %v798 = vadd.f32 %v381, %v797
        %v799 = vpop.f32.mrf.mxu0
        %v800 = vadd.f32 %v381, %v799
        %801 = vmatmul.bf16.gmra.mxu0 %v636
        %v802 = vpop.f32.mrf.mxu0
        %v803 = vadd.f32 %v381, %v802
        %v804 = vpop.f32.mrf.mxu0
        %v805 = vadd.f32 %v381, %v804
        %806 = vmatmul.bf16.gmra.mxu0 %v639
        %v807 = vpop.f32.mrf.mxu0
        %v808 = vadd.f32 %v381, %v807
        %v809 = vpop.f32.mrf.mxu0
        %v810 = vadd.f32 %v381, %v809
        %811 = vmatmul.bf16.gmra.mxu0 %v642
        %v812 = vpop.f32.mrf.mxu0
        %v813 = vadd.f32 %v381, %v812
        %v814 = vpop.f32.mrf.mxu0
        %v815 = vadd.f32 %v381, %v814
        %816 = vmatmul.bf16.gmra.mxu0 %v645
        %v817 = vpop.f32.mrf.mxu0
        %v818 = vadd.f32 %v381, %v817
        %v819 = vpop.f32.mrf.mxu0
        %v820 = vadd.f32 %v381, %v819
        %821 = vmatmul.bf16.gmra.mxu0 %v648
        %v822 = vpop.f32.mrf.mxu0
        %v823 = vadd.f32 %v381, %v822
        %v824 = vpop.f32.mrf.mxu0
        %v825 = vadd.f32 %v381, %v824
        %826 = vmatmul.bf16.gmra.mxu0 %v651
        %v827 = vpop.f32.mrf.mxu0
        %v828 = vadd.f32 %v381, %v827
        %v829 = vpop.f32.mrf.mxu0
        %v830 = vadd.f32 %v381, %v829
        %831 = vmatmul.bf16.gmra.mxu0 %v654
        %v832 = vpop.f32.mrf.mxu0
        %v833 = vadd.f32 %v381, %v832
        %v834 = vpop.f32.mrf.mxu0
        %v835 = vadd.f32 %v381, %v834
        %836 = vmatmul.bf16.gmra.mxu0 %v657
        %v837 = vpop.f32.mrf.mxu0
        %v838 = vadd.f32 %v381, %v837
        %v839 = vpop.f32.mrf.mxu0
        %v840 = vadd.f32 %v381, %v839
        %841 = vmatmul.bf16.gmra.mxu0 %v660
        %v842 = vpop.f32.mrf.mxu0
        %v843 = vadd.f32 %v381, %v842
        %v844 = vpop.f32.mrf.mxu0
        %v845 = vadd.f32 %v381, %v844
        %846 = vmatmul.bf16.gmra.mxu0 %v663
        %v847 = vpop.f32.mrf.mxu0
        %v848 = vadd.f32 %v381, %v847
        %v849 = vpop.f32.mrf.mxu0
        %v850 = vadd.f32 %v381, %v849
        %851 = vmatmul.bf16.gmra.mxu0 %v666
        %v852 = vpop.f32.mrf.mxu0
        %v853 = vadd.f32 %v381, %v852
        %v854 = vpop.f32.mrf.mxu0
        %v855 = vadd.f32 %v381, %v854
        %856 = vmatmul.bf16.gmra.mxu0 %v669
        %v857 = vpop.f32.mrf.mxu0
        %v858 = vadd.f32 %v381, %v857
        %v859 = vpop.f32.mrf.mxu0
        %v860 = vadd.f32 %v381, %v859
        %861 = vmatmul.bf16.gmra.mxu0 %v672
        %v862 = vpop.f32.mrf.mxu0
        %v863 = vadd.f32 %v381, %v862
        %v864 = vpop.f32.mrf.mxu0
        %v865 = vadd.f32 %v381, %v864
        %866 = vmatmul.bf16.gmra.mxu0 %v675
        %v867 = vpop.f32.mrf.mxu0
        %v868 = vadd.f32 %v381, %v867
        %v869 = vpop.f32.mrf.mxu0
        %v870 = vadd.f32 %v381, %v869
        %871 = vmatmul.bf16.gmra.mxu0 %v678
        %v872 = vpop.f32.mrf.mxu0
        %v873 = vadd.f32 %v381, %v872
        %v874 = vpop.f32.mrf.mxu0
        %v875 = vadd.f32 %v381, %v874
        %876 = vmatmul.bf16.gmra.mxu0 %v681
        %v877 = vpop.f32.mrf.mxu0
        %v878 = vadd.f32 %v381, %v877
        %v879 = vpop.f32.mrf.mxu0
        %v880 = vadd.f32 %v381, %v879
        %881 = vmatmul.bf16.gmra.mxu0 %v684
        %v882 = vpop.f32.mrf.mxu0
        %v883 = vadd.f32 %v381, %v882
        %v884 = vpop.f32.mrf.mxu0
        %v885 = vadd.f32 %v381, %v884
        %886 = vmatmul.bf16.gmra.mxu0 %v687
        %v887 = vpop.f32.mrf.mxu0
        %v888 = vadd.f32 %v381, %v887
        %v889 = vpop.f32.mrf.mxu0
        %v890 = vadd.f32 %v381, %v889
        %891 = vmatmul.bf16.gmra.mxu0 %v690
        %v892 = vpop.f32.mrf.mxu0
        %v893 = vadd.f32 %v381, %v892
        %v894 = vpop.f32.mrf.mxu0
        %v895 = vadd.f32 %v381, %v894
        %896 = vmatmul.bf16.gmra.mxu0 %v693
        %v897 = vpop.f32.mrf.mxu0
        %v898 = vadd.f32 %v381, %v897
        %v899 = vpop.f32.mrf.mxu0
        %v900 = vadd.f32 %v381, %v899
        %901 = vmatmul.bf16.gmra.mxu0 %v696
        %v902 = vpop.f32.mrf.mxu0
        %v903 = vadd.f32 %v381, %v902
        %v904 = vpop.f32.mrf.mxu0
        %v905 = vadd.f32 %v381, %v904
        %906 = vmatmul.bf16.gmra.mxu0 %v699
        %v907 = vpop.f32.mrf.mxu0
        %v908 = vadd.f32 %v381, %v907
        %v909 = vpop.f32.mrf.mxu0
        %v910 = vadd.f32 %v381, %v909
        %911 = vmatmul.bf16.gmra.mxu0 %v702
        %v912 = vpop.f32.mrf.mxu0
        %v913 = vadd.f32 %v381, %v912
        %v914 = vpop.f32.mrf.mxu0
        %v915 = vadd.f32 %v381, %v914
        %916 = vmatmul.bf16.gmra.mxu0 %v705
        %v917 = vpop.f32.mrf.mxu0
        %v918 = vadd.f32 %v381, %v917
        %v919 = vpop.f32.mrf.mxu0
        %v920 = vadd.f32 %v381, %v919
        %921 = vmatmul.bf16.gmra.mxu0 %v708
        %v922 = vpop.f32.mrf.mxu0
        %v923 = vadd.f32 %v381, %v922
        %v924 = vpop.f32.mrf.mxu0
        %v925 = vadd.f32 %v381, %v924
        %926 = vmatmul.bf16.gmra.mxu0 %v711
        %v927 = vpop.f32.mrf.mxu0
        %v928 = vadd.f32 %v381, %v927
        %v929 = vpop.f32.mrf.mxu0
        %v930 = vadd.f32 %v381, %v929
        %931 = vmatmul.bf16.gmra.mxu0 %v714
        %v932 = vpop.f32.mrf.mxu0
        %v933 = vadd.f32 %v381, %v932
        %v934 = vpop.f32.mrf.mxu0
        %v935 = vadd.f32 %v381, %v934
        %936 = vmatmul.bf16.gmra.mxu0 %v717
        %v937 = vpop.f32.mrf.mxu0
        %v938 = vadd.f32 %v381, %v937
        %v939 = vpop.f32.mrf.mxu0
        %v940 = vadd.f32 %v381, %v939
        %941 = vmatmul.bf16.gmra.mxu0 %v720
        %v942 = vpop.f32.mrf.mxu0
        %v943 = vadd.f32 %v381, %v942
        %v944 = vpop.f32.mrf.mxu0
        %v945 = vadd.f32 %v381, %v944
        %946 = vmatmul.bf16.gmra.mxu0 %v723
        %v947 = vpop.f32.mrf.mxu0
        %v948 = vadd.f32 %v381, %v947
        %v949 = vpop.f32.mrf.mxu0
        %v950 = vadd.f32 %v381, %v949
        %951 = vmatmul.bf16.gmra.mxu0 %v726
        %v952 = vpop.f32.mrf.mxu0
        %v953 = vadd.f32 %v381, %v952
        %v954 = vpop.f32.mrf.mxu0
        %v955 = vadd.f32 %v381, %v954
        %956 = vmatmul.bf16.gmra.mxu0 %v729
        %v957 = vpop.f32.mrf.mxu0
        %v958 = vadd.f32 %v381, %v957
        %v959 = vpop.f32.mrf.mxu0
        %960 = vdwg.mxu0
        %v961 = vmax.f32 %v748, 0.0
        %v962 = vmax.f32 %v750, 0.0
        %v963 = vmax.f32 %v753, 0.0
        %v964 = vmax.f32 %v755, 0.0
        %v965 = vmax.f32 %v758, 0.0
        %v966 = vmax.f32 %v760, 0.0
        %v967 = vmax.f32 %v763, 0.0
        %v968 = vmax.f32 %v765, 0.0
        %v969 = vmax.f32 %v768, 0.0
        %v970 = vmax.f32 %v770, 0.0
        %v971 = vmax.f32 %v773, 0.0
        %v972 = vmax.f32 %v775, 0.0
        %v973 = vmax.f32 %v778, 0.0
        %v974 = vmax.f32 %v780, 0.0
        %v975 = vmax.f32 %v783, 0.0
        %v976 = vmax.f32 %v785, 0.0
        %v977 = vmax.f32 %v788, 0.0
        %v978 = vmax.f32 %v790, 0.0
        %v979 = vmax.f32 %v793, 0.0
        %v980 = vmax.f32 %v795, 0.0
        %v981 = vmax.f32 %v798, 0.0
        %v982 = vmax.f32 %v800, 0.0
        %v983 = vmax.f32 %v803, 0.0
        %v984 = vmax.f32 %v805, 0.0
        %v985 = vmax.f32 %v808, 0.0
        %v986 = vmax.f32 %v810, 0.0
        %v987 = vmax.f32 %v813, 0.0
        %v988 = vmax.f32 %v815, 0.0
        %v989 = vmax.f32 %v818, 0.0
        %v990 = vmax.f32 %v820, 0.0
        %v991 = vmax.f32 %v823, 0.0
        %v992 = vmax.f32 %v825, 0.0
        %v993 = vmax.f32 %v828, 0.0
        %v994 = vmax.f32 %v830, 0.0
        %v995 = vmax.f32 %v833, 0.0
        %v996 = vmax.f32 %v835, 0.0
        %v997 = vmax.f32 %v838, 0.0
        %v998 = vmax.f32 %v840, 0.0
        %v999 = vmax.f32 %v843, 0.0
        %v1000 = vmax.f32 %v845, 0.0
        %v1001 = vmax.f32 %v848, 0.0
        %v1002 = vmax.f32 %v850, 0.0
        %v1003 = vmax.f32 %v853, 0.0
        %v1004 = vmax.f32 %v855, 0.0
        %v1005 = vmax.f32 %v858, 0.0
        %v1006 = vmax.f32 %v860, 0.0
        %v1007 = vmax.f32 %v863, 0.0
        %v1008 = vmax.f32 %v865, 0.0
        %v1009 = vmax.f32 %v868, 0.0
        %v1010 = vmax.f32 %v870, 0.0
        %v1011 = vmax.f32 %v873, 0.0
        %v1012 = vmax.f32 %v875, 0.0
        %v1013 = vmax.f32 %v878, 0.0
        %v1014 = vmax.f32 %v880, 0.0
        %v1015 = vmax.f32 %v883, 0.0
        %v1016 = vmax.f32 %v885, 0.0
        %v1017 = vmax.f32 %v888, 0.0
        %v1018 = vmax.f32 %v890, 0.0
        %v1019 = vmax.f32 %v893, 0.0
        %v1020 = vmax.f32 %v895, 0.0
        %v1021 = vmax.f32 %v898, 0.0
        %v1022 = vmax.f32 %v900, 0.0
        %v1023 = vmax.f32 %v903, 0.0
        %v1024 = vmax.f32 %v905, 0.0
        %v1025 = vmax.f32 %v908, 0.0
        %v1026 = vmax.f32 %v910, 0.0
        %v1027 = vmax.f32 %v913, 0.0
        %v1028 = vmax.f32 %v915, 0.0
        %v1029 = vmax.f32 %v918, 0.0
        %v1030 = vmax.f32 %v920, 0.0
        %v1031 = vmax.f32 %v923, 0.0
        %v1032 = vmax.f32 %v925, 0.0
        %v1033 = vmax.f32 %v928, 0.0
        %v1034 = vmax.f32 %v930, 0.0
        %v1035 = vmax.f32 %v933, 0.0
        %v1036 = vmax.f32 %v935, 0.0
        %v1037 = vmax.f32 %v938, 0.0
        %v1038 = vmax.f32 %v940, 0.0
        %v1039 = vmax.f32 %v943, 0.0
        %v1040 = vmax.f32 %v945, 0.0
        %v1041 = vmax.f32 %v948, 0.0
        %v1042 = vmax.f32 %v950, 0.0
        %v1043 = vmax.f32 %v953, 0.0
        %v1044 = vmax.f32 %v955, 0.0
        %v1045 = vmax.f32 %v958, 0.0
        %v1046 = vpack.c.bf16 %v962, %v961
        %v1047 = vpack.c.bf16 %v964, %v963
        %v1048 = vpack.c.bf16 %v966, %v965
        %v1049 = vpack.c.bf16 %v968, %v967
        %v1050 = vpack.c.bf16 %v970, %v969
        %v1051 = vpack.c.bf16 %v972, %v971
        %v1052 = vpack.c.bf16 %v974, %v973
        %v1053 = vpack.c.bf16 %v976, %v975
        %v1054 = vpack.c.bf16 %v978, %v977
        %v1055 = vpack.c.bf16 %v980, %v979
        %v1056 = vpack.c.bf16 %v982, %v981
        %v1057 = vpack.c.bf16 %v984, %v983
        %v1058 = vpack.c.bf16 %v986, %v985
        %v1059 = vpack.c.bf16 %v988, %v987
        %v1060 = vpack.c.bf16 %v990, %v989
        %v1061 = vpack.c.bf16 %v992, %v991
        %v1062 = vpack.c.bf16 %v994, %v993
        %v1063 = vpack.c.bf16 %v996, %v995
        %v1064 = vpack.c.bf16 %v998, %v997
        %v1065 = vpack.c.bf16 %v1000, %v999
        %v1066 = vpack.c.bf16 %v1002, %v1001
        %v1067 = vpack.c.bf16 %v1004, %v1003
        %v1068 = vpack.c.bf16 %v1006, %v1005
        %v1069 = vpack.c.bf16 %v1008, %v1007
        %v1070 = vpack.c.bf16 %v1010, %v1009
        %v1071 = vpack.c.bf16 %v1012, %v1011
        %v1072 = vpack.c.bf16 %v1014, %v1013
        %v1073 = vpack.c.bf16 %v1016, %v1015
        %v1074 = vpack.c.bf16 %v1018, %v1017
        %v1075 = vpack.c.bf16 %v1020, %v1019
        %v1076 = vpack.c.bf16 %v1022, %v1021
        %v1077 = vpack.c.bf16 %v1024, %v1023
        %v1078 = vpack.c.bf16 %v1026, %v1025
        %v1079 = vpack.c.bf16 %v1028, %v1027
        %v1080 = vpack.c.bf16 %v1030, %v1029
        %v1081 = vpack.c.bf16 %v1032, %v1031
        %v1082 = vpack.c.bf16 %v1034, %v1033
        %v1083 = vpack.c.bf16 %v1036, %v1035
        %v1084 = vpack.c.bf16 %v1038, %v1037
        %v1085 = vld [vmem:[#allocation7] sm:$0xf]
        %v1086 = vld [vmem:[#allocation7 + $0x4] sm:$0xf]
        %v1087 = vld [vmem:[#allocation7 + $0x8] sm:$0xf]
        %v1088 = vld [vmem:[#allocation7 + $0xc] sm:$0xf]
        %v1089 = vpack.c.bf16 %v1039, %v1039
        %s1090 = scalar_lea.vmem [#allocation7], 16
        %v1091 = vld [vmem:[%s1090] sm:$0xf]
        %v1092 = vld [vmem:[%s1090 + $0x4] sm:$0xf]
        %v1093 = vld [vmem:[%s1090 + $0x8] sm:$0xf]
        %v1094 = vld [vmem:[%s1090 + $0xc] sm:$0xf]
        %vm1095 = vsmask.f32 7424
        %v1097 = vshrl.u32 %v1046, 16
        %v1099 = vshll.u32 %v1046, 16
        %v1101 = vrot.slane %v1099, 1
        %v1102 = vor.u32 %v1097, %v1101
        %v1104 = vshll.u32 %v1047, 16
        %v1106 = vrot.slane %v1104, 1
        %v1107 = vsel %vm1095, %v1102, %v1106
        %v1108 = vshrl.u32 %v1047, 16
        %v1110 = vor.u32 %v1108, %v1106
        %v1112 = vshll.u32 %v1048, 16
        %v1114 = vrot.slane %v1112, 1
        %v1115 = vsel %vm1095, %v1110, %v1114
        %v1116 = vshrl.u32 %v1048, 16
        %v1118 = vor.u32 %v1116, %v1114
        %v1120 = vshll.u32 %v1049, 16
        %v1122 = vrot.slane %v1120, 1
        %v1123 = vsel %vm1095, %v1118, %v1122
        %v1124 = vshrl.u32 %v1049, 16
        %v1126 = vor.u32 %v1124, %v1122
        %v1128 = vshll.u32 %v1050, 16
        %v1130 = vrot.slane %v1128, 1
        %v1131 = vsel %vm1095, %v1126, %v1130
        %v1132 = vshrl.u32 %v1050, 16
        %v1134 = vor.u32 %v1132, %v1130
        %v1136 = vshll.u32 %v1051, 16
        %v1138 = vrot.slane %v1136, 1
        %v1139 = vsel %vm1095, %v1134, %v1138
        %v1140 = vshrl.u32 %v1051, 16
        %v1142 = vor.u32 %v1140, %v1138
        %v1144 = vshll.u32 %v1052, 16
        %v1146 = vrot.slane %v1144, 1
        %v1147 = vsel %vm1095, %v1142, %v1146
        %v1148 = vshrl.u32 %v1052, 16
        %v1150 = vor.u32 %v1148, %v1146
        %v1152 = vshll.u32 %v1053, 16
        %v1154 = vrot.slane %v1152, 1
        %v1155 = vsel %vm1095, %v1150, %v1154
        %v1156 = vshrl.u32 %v1053, 16
        %v1158 = vor.u32 %v1156, %v1154
        %v1160 = vshll.u32 %v1054, 16
        %v1162 = vrot.slane %v1160, 1
        %v1163 = vsel %vm1095, %v1158, %v1162
        %v1164 = vshrl.u32 %v1054, 16
        %v1166 = vor.u32 %v1164, %v1162
        %v1168 = vshll.u32 %v1055, 16
        %v1170 = vrot.slane %v1168, 1
        %v1171 = vsel %vm1095, %v1166, %v1170
        %v1172 = vshrl.u32 %v1055, 16
        %v1174 = vor.u32 %v1172, %v1170
        %v1176 = vshll.u32 %v1056, 16
        %v1178 = vrot.slane %v1176, 1
        %v1179 = vsel %vm1095, %v1174, %v1178
        %v1180 = vshrl.u32 %v1056, 16
        %v1182 = vor.u32 %v1180, %v1178
        %v1184 = vshll.u32 %v1057, 16
        %v1186 = vrot.slane %v1184, 1
        %v1187 = vsel %vm1095, %v1182, %v1186
        %v1188 = vshrl.u32 %v1057, 16
        %v1190 = vor.u32 %v1188, %v1186
        %v1192 = vshll.u32 %v1058, 16
        %v1194 = vrot.slane %v1192, 1
        %v1195 = vsel %vm1095, %v1190, %v1194
        %v1196 = vshrl.u32 %v1058, 16
        %v1198 = vor.u32 %v1196, %v1194
        %v1200 = vshll.u32 %v1059, 16
        %v1202 = vrot.slane %v1200, 1
        %v1203 = vsel %vm1095, %v1198, %v1202
        %v1204 = vshrl.u32 %v1059, 16
        %v1206 = vor.u32 %v1204, %v1202
        %v1208 = vshll.u32 %v1060, 16
        %v1210 = vrot.slane %v1208, 1
        %v1211 = vsel %vm1095, %v1206, %v1210
        %v1212 = vshrl.u32 %v1060, 16
        %v1214 = vor.u32 %v1212, %v1210
        %v1216 = vshll.u32 %v1061, 16
        %v1218 = vrot.slane %v1216, 1
        %v1219 = vsel %vm1095, %v1214, %v1218
        %v1220 = vshrl.u32 %v1061, 16
        %v1222 = vor.u32 %v1220, %v1218
        %v1224 = vshll.u32 %v1062, 16
        %v1226 = vrot.slane %v1224, 1
        %v1227 = vsel %vm1095, %v1222, %v1226
        %v1228 = vshrl.u32 %v1062, 16
        %v1230 = vor.u32 %v1228, %v1226
        %v1232 = vshll.u32 %v1063, 16
        %v1234 = vrot.slane %v1232, 1
        %v1235 = vsel %vm1095, %v1230, %v1234
        %v1236 = vshrl.u32 %v1063, 16
        %v1238 = vor.u32 %v1236, %v1234
        %v1240 = vshll.u32 %v1064, 16
        %v1242 = vrot.slane %v1240, 1
        %v1243 = vsel %vm1095, %v1238, %v1242
        %v1244 = vshrl.u32 %v1064, 16
        %v1246 = vor.u32 %v1244, %v1242
        %v1248 = vshll.u32 %v1065, 16
        %v1250 = vrot.slane %v1248, 1
        %v1251 = vsel %vm1095, %v1246, %v1250
        %v1252 = vshrl.u32 %v1065, 16
        %v1254 = vor.u32 %v1252, %v1250
        %v1256 = vshll.u32 %v1066, 16
        %v1258 = vrot.slane %v1256, 1
        %v1259 = vsel %vm1095, %v1254, %v1258
        %v1260 = vshrl.u32 %v1066, 16
        %v1262 = vor.u32 %v1260, %v1258
        %v1264 = vshll.u32 %v1067, 16
        %v1266 = vrot.slane %v1264, 1
        %v1267 = vsel %vm1095, %v1262, %v1266
        %v1268 = vshrl.u32 %v1067, 16
        %v1270 = vor.u32 %v1268, %v1266
        %v1272 = vshll.u32 %v1068, 16
        %v1274 = vrot.slane %v1272, 1
        %v1275 = vsel %vm1095, %v1270, %v1274
        %v1276 = vshrl.u32 %v1068, 16
        %v1278 = vor.u32 %v1276, %v1274
        %v1280 = vshll.u32 %v1069, 16
        %v1282 = vrot.slane %v1280, 1
        %v1283 = vsel %vm1095, %v1278, %v1282
        %v1284 = vshrl.u32 %v1069, 16
        %v1286 = vor.u32 %v1284, %v1282
        %v1288 = vshll.u32 %v1070, 16
        %v1290 = vrot.slane %v1288, 1
        %v1291 = vsel %vm1095, %v1286, %v1290
        %v1292 = vshrl.u32 %v1070, 16
        %v1294 = vor.u32 %v1292, %v1290
        %v1296 = vshll.u32 %v1071, 16
        %v1298 = vrot.slane %v1296, 1
        %v1299 = vsel %vm1095, %v1294, %v1298
        %v1300 = vshrl.u32 %v1071, 16
        %v1302 = vor.u32 %v1300, %v1298
        %v1304 = vshll.u32 %v1072, 16
        %v1306 = vrot.slane %v1304, 1
        %v1307 = vsel %vm1095, %v1302, %v1306
        %v1308 = vshrl.u32 %v1072, 16
        %v1310 = vor.u32 %v1308, %v1306
        %v1312 = vshll.u32 %v1073, 16
        %v1314 = vrot.slane %v1312, 1
        %v1315 = vsel %vm1095, %v1310, %v1314
        %v1316 = vshrl.u32 %v1073, 16
        %v1318 = vor.u32 %v1316, %v1314
        %v1320 = vshll.u32 %v1074, 16
        %v1322 = vrot.slane %v1320, 1
        %v1323 = vsel %vm1095, %v1318, %v1322
        %v1324 = vshrl.u32 %v1074, 16
        %v1326 = vor.u32 %v1324, %v1322
        %v1328 = vshll.u32 %v1075, 16
        %v1330 = vrot.slane %v1328, 1
        %v1331 = vsel %vm1095, %v1326, %v1330
        %v1332 = vshrl.u32 %v1075, 16
        %v1334 = vor.u32 %v1332, %v1330
        %v1336 = vshll.u32 %v1076, 16
        %v1338 = vrot.slane %v1336, 1
        %v1339 = vsel %vm1095, %v1334, %v1338
        %v1340 = vshrl.u32 %v1076, 16
        %v1342 = vor.u32 %v1340, %v1338
        %v1344 = vshll.u32 %v1077, 16
        %v1346 = vrot.slane %v1344, 1
        %v1347 = vsel %vm1095, %v1342, %v1346
        %v1348 = vshrl.u32 %v1077, 16
        %v1350 = vor.u32 %v1348, %v1346
        %v1352 = vshll.u32 %v1078, 16
        %v1354 = vrot.slane %v1352, 1
        %v1355 = vsel %vm1095, %v1350, %v1354
        %v1356 = vshrl.u32 %v1078, 16
        %v1358 = vor.u32 %v1356, %v1354
        %v1360 = vshll.u32 %v1079, 16
        %v1362 = vrot.slane %v1360, 1
        %v1363 = vsel %vm1095, %v1358, %v1362
        %v1364 = vshrl.u32 %v1079, 16
        %v1366 = vor.u32 %v1364, %v1362
        %v1368 = vshll.u32 %v1080, 16
        %v1370 = vrot.slane %v1368, 1
        %v1371 = vsel %vm1095, %v1366, %v1370
        %v1372 = vshrl.u32 %v1080, 16
        %v1374 = vor.u32 %v1372, %v1370
        %v1376 = vshll.u32 %v1081, 16
        %v1378 = vrot.slane %v1376, 1
        %v1379 = vsel %vm1095, %v1374, %v1378
        %v1380 = vshrl.u32 %v1081, 16
        %v1382 = vor.u32 %v1380, %v1378
        %v1384 = vshll.u32 %v1082, 16
        %v1386 = vrot.slane %v1384, 1
        %v1387 = vsel %vm1095, %v1382, %v1386
        %v1388 = vshrl.u32 %v1082, 16
        %v1390 = vor.u32 %v1388, %v1386
        %v1392 = vshll.u32 %v1083, 16
        %v1394 = vrot.slane %v1392, 1
        %v1395 = vsel %vm1095, %v1390, %v1394
        %v1396 = vshrl.u32 %v1083, 16
        %v1398 = vor.u32 %v1396, %v1394
        %v1400 = vshll.u32 %v1084, 16
        %v1402 = vrot.slane %v1400, 1
        %v1403 = vsel %vm1095, %v1398, %v1402
        %v1404 = vshrl.u32 %v1084, 16
        %v1406 = vor.u32 %v1404, %v1402
        %v1408 = vshll.u32 %v1089, 16
        %v1410 = vrot.slane %v1408, 1
        %v1411 = vsel %vm1095, %v1406, %v1410
        %v1416 = vunpack.c.l.b16 %v1091
        %v1417 = vunpack.c.l.b16 %v1092
        %v1418 = vunpack.c.l.b16 %v1093
        %v1419 = vunpack.c.l.b16 %v1094
        %v1420 = vpack.c.b16 %v1417, %v1416
        %v1421 = vpack.c.b16 %v1419, %v1418
        %vm1424 = vcmask 261120
        %v1426 = vsel %vm1424, %v1107, 0
        %v1429 = vsel %vm1424, %v1115, 0
        %v1432 = vsel %vm1424, %v1123, 0
        %v1435 = vsel %vm1424, %v1131, 0
        %v1438 = vsel %vm1424, %v1139, 0
        %v1441 = vsel %vm1424, %v1147, 0
        %v1444 = vsel %vm1424, %v1155, 0
        %v1447 = vsel %vm1424, %v1163, 0
        %v1450 = vsel %vm1424, %v1171, 0
        %v1453 = vsel %vm1424, %v1179, 0
        %v1456 = vsel %vm1424, %v1187, 0
        %v1459 = vsel %vm1424, %v1195, 0
        %v1462 = vsel %vm1424, %v1203, 0
        %v1465 = vsel %vm1424, %v1211, 0
        %v1468 = vsel %vm1424, %v1219, 0
        %v1471 = vsel %vm1424, %v1227, 0
        %v1474 = vsel %vm1424, %v1235, 0
        %v1477 = vsel %vm1424, %v1243, 0
        %v1480 = vsel %vm1424, %v1251, 0
        %v1483 = vsel %vm1424, %v1259, 0
        %v1486 = vsel %vm1424, %v1267, 0
        %v1489 = vsel %vm1424, %v1275, 0
        %v1492 = vsel %vm1424, %v1283, 0
        %v1495 = vsel %vm1424, %v1291, 0
        %v1498 = vsel %vm1424, %v1299, 0
        %v1501 = vsel %vm1424, %v1307, 0
        %v1504 = vsel %vm1424, %v1315, 0
        %v1507 = vsel %vm1424, %v1323, 0
        %v1510 = vsel %vm1424, %v1331, 0
        %v1513 = vsel %vm1424, %v1339, 0
        %v1516 = vsel %vm1424, %v1347, 0
        %v1519 = vsel %vm1424, %v1355, 0
        %v1522 = vsel %vm1424, %v1363, 0
        %v1525 = vsel %vm1424, %v1371, 0
        %v1528 = vsel %vm1424, %v1379, 0
        %v1531 = vsel %vm1424, %v1387, 0
        %v1534 = vsel %vm1424, %v1395, 0
        %v1537 = vsel %vm1424, %v1403, 0
        %v1540 = vsel %vm1424, %v1411, 0
        %1542 = vmatpush.bf16.msra.mxu0 0
        %1543 = vmatpush.bf16.msra.mxu0 0
        %1544 = vmatpush.bf16.msra.mxu0 0
        %1545 = vmatpush.bf16.msra.mxu0 0
        %1546 = vmatpush.bf16.msra.mxu0 0
        %1547 = vmatpush.bf16.msra.mxu0 0
        %1548 = vmatpush.bf16.msra.mxu0 %v1421
        %1549 = vmatpush.bf16.msra.mxu0 %v1420
        %1550 = vmatmul.bf16.gmra.mxu0 %v1426
        %v1551 = vpop.f32.mrf.mxu0
        %v1552 = vadd.f32 0.0, %v1551
        %v1553 = vpop.f32.mrf.mxu0
        %v1554 = vadd.f32 0.0, %v1553
        %1555 = vmatmul.bf16.gmra.mxu0 %v1429
        %v1556 = vpop.f32.mrf.mxu0
        %v1557 = vadd.f32 0.0, %v1556
        %v1558 = vpop.f32.mrf.mxu0
        %v1559 = vadd.f32 0.0, %v1558
        %1560 = vmatmul.bf16.gmra.mxu0 %v1432
        %v1561 = vpop.f32.mrf.mxu0
        %v1562 = vadd.f32 0.0, %v1561
        %v1563 = vpop.f32.mrf.mxu0
        %v1564 = vadd.f32 0.0, %v1563
        %1565 = vmatmul.bf16.gmra.mxu0 %v1435
        %v1566 = vpop.f32.mrf.mxu0
        %v1567 = vadd.f32 0.0, %v1566
        %v1568 = vpop.f32.mrf.mxu0
        %v1569 = vadd.f32 0.0, %v1568
        %1570 = vmatmul.bf16.gmra.mxu0 %v1438
        %v1571 = vpop.f32.mrf.mxu0
        %v1572 = vadd.f32 0.0, %v1571
        %v1573 = vpop.f32.mrf.mxu0
        %v1574 = vadd.f32 0.0, %v1573
        %1575 = vmatmul.bf16.gmra.mxu0 %v1441
        %v1576 = vpop.f32.mrf.mxu0
        %v1577 = vadd.f32 0.0, %v1576
        %v1578 = vpop.f32.mrf.mxu0
        %v1579 = vadd.f32 0.0, %v1578
        %1580 = vmatmul.bf16.gmra.mxu0 %v1444
        %v1581 = vpop.f32.mrf.mxu0
        %v1582 = vadd.f32 0.0, %v1581
        %v1583 = vpop.f32.mrf.mxu0
        %v1584 = vadd.f32 0.0, %v1583
        %1585 = vmatmul.bf16.gmra.mxu0 %v1447
        %v1586 = vpop.f32.mrf.mxu0
        %v1587 = vadd.f32 0.0, %v1586
        %v1588 = vpop.f32.mrf.mxu0
        %v1589 = vadd.f32 0.0, %v1588
        %1590 = vmatmul.bf16.gmra.mxu0 %v1450
        %v1591 = vpop.f32.mrf.mxu0
        %v1592 = vadd.f32 0.0, %v1591
        %v1593 = vpop.f32.mrf.mxu0
        %v1594 = vadd.f32 0.0, %v1593
        %1595 = vmatmul.bf16.gmra.mxu0 %v1453
        %v1596 = vpop.f32.mrf.mxu0
        %v1597 = vadd.f32 0.0, %v1596
        %v1598 = vpop.f32.mrf.mxu0
        %v1599 = vadd.f32 0.0, %v1598
        %1600 = vmatmul.bf16.gmra.mxu0 %v1456
        %v1601 = vpop.f32.mrf.mxu0
        %v1602 = vadd.f32 0.0, %v1601
        %v1603 = vpop.f32.mrf.mxu0
        %v1604 = vadd.f32 0.0, %v1603
        %1605 = vmatmul.bf16.gmra.mxu0 %v1459
        %v1606 = vpop.f32.mrf.mxu0
        %v1607 = vadd.f32 0.0, %v1606
        %v1608 = vpop.f32.mrf.mxu0
        %v1609 = vadd.f32 0.0, %v1608
        %1610 = vmatmul.bf16.gmra.mxu0 %v1462
        %v1611 = vpop.f32.mrf.mxu0
        %v1612 = vadd.f32 0.0, %v1611
        %v1613 = vpop.f32.mrf.mxu0
        %v1614 = vadd.f32 0.0, %v1613
        %1615 = vmatmul.bf16.gmra.mxu0 %v1465
        %v1616 = vpop.f32.mrf.mxu0
        %v1617 = vadd.f32 0.0, %v1616
        %v1618 = vpop.f32.mrf.mxu0
        %v1619 = vadd.f32 0.0, %v1618
        %1620 = vmatmul.bf16.gmra.mxu0 %v1468
        %v1621 = vpop.f32.mrf.mxu0
        %v1622 = vadd.f32 0.0, %v1621
        %v1623 = vpop.f32.mrf.mxu0
        %v1624 = vadd.f32 0.0, %v1623
        %1625 = vmatmul.bf16.gmra.mxu0 %v1471
        %v1626 = vpop.f32.mrf.mxu0
        %v1627 = vadd.f32 0.0, %v1626
        %v1628 = vpop.f32.mrf.mxu0
        %v1629 = vadd.f32 0.0, %v1628
        %1630 = vmatmul.bf16.gmra.mxu0 %v1474
        %v1631 = vpop.f32.mrf.mxu0
        %v1632 = vadd.f32 0.0, %v1631
        %v1633 = vpop.f32.mrf.mxu0
        %v1634 = vadd.f32 0.0, %v1633
        %1635 = vmatmul.bf16.gmra.mxu0 %v1477
        %v1636 = vpop.f32.mrf.mxu0
        %v1637 = vadd.f32 0.0, %v1636
        %v1638 = vpop.f32.mrf.mxu0
        %v1639 = vadd.f32 0.0, %v1638
        %1640 = vmatmul.bf16.gmra.mxu0 %v1480
        %v1641 = vpop.f32.mrf.mxu0
        %v1642 = vadd.f32 0.0, %v1641
        %v1643 = vpop.f32.mrf.mxu0
        %v1644 = vadd.f32 0.0, %v1643
        %1645 = vmatmul.bf16.gmra.mxu0 %v1483
        %v1646 = vpop.f32.mrf.mxu0
        %v1647 = vadd.f32 0.0, %v1646
        %v1648 = vpop.f32.mrf.mxu0
        %v1649 = vadd.f32 0.0, %v1648
        %1650 = vmatmul.bf16.gmra.mxu0 %v1486
        %v1651 = vpop.f32.mrf.mxu0
        %v1652 = vadd.f32 0.0, %v1651
        %v1653 = vpop.f32.mrf.mxu0
        %v1654 = vadd.f32 0.0, %v1653
        %1655 = vmatmul.bf16.gmra.mxu0 %v1489
        %v1656 = vpop.f32.mrf.mxu0
        %v1657 = vadd.f32 0.0, %v1656
        %v1658 = vpop.f32.mrf.mxu0
        %v1659 = vadd.f32 0.0, %v1658
        %1660 = vmatmul.bf16.gmra.mxu0 %v1492
        %v1661 = vpop.f32.mrf.mxu0
        %v1662 = vadd.f32 0.0, %v1661
        %v1663 = vpop.f32.mrf.mxu0
        %v1664 = vadd.f32 0.0, %v1663
        %1665 = vmatmul.bf16.gmra.mxu0 %v1495
        %v1666 = vpop.f32.mrf.mxu0
        %v1667 = vadd.f32 0.0, %v1666
        %v1668 = vpop.f32.mrf.mxu0
        %v1669 = vadd.f32 0.0, %v1668
        %1670 = vmatmul.bf16.gmra.mxu0 %v1498
        %v1671 = vpop.f32.mrf.mxu0
        %v1672 = vadd.f32 0.0, %v1671
        %v1673 = vpop.f32.mrf.mxu0
        %v1674 = vadd.f32 0.0, %v1673
        %1675 = vmatmul.bf16.gmra.mxu0 %v1501
        %v1676 = vpop.f32.mrf.mxu0
        %v1677 = vadd.f32 0.0, %v1676
        %v1678 = vpop.f32.mrf.mxu0
        %v1679 = vadd.f32 0.0, %v1678
        %1680 = vmatmul.bf16.gmra.mxu0 %v1504
        %v1681 = vpop.f32.mrf.mxu0
        %v1682 = vadd.f32 0.0, %v1681
        %v1683 = vpop.f32.mrf.mxu0
        %v1684 = vadd.f32 0.0, %v1683
        %1685 = vmatmul.bf16.gmra.mxu0 %v1507
        %v1686 = vpop.f32.mrf.mxu0
        %v1687 = vadd.f32 0.0, %v1686
        %v1688 = vpop.f32.mrf.mxu0
        %v1689 = vadd.f32 0.0, %v1688
        %1690 = vmatmul.bf16.gmra.mxu0 %v1510
        %v1691 = vpop.f32.mrf.mxu0
        %v1692 = vadd.f32 0.0, %v1691
        %v1693 = vpop.f32.mrf.mxu0
        %v1694 = vadd.f32 0.0, %v1693
        %1695 = vmatmul.bf16.gmra.mxu0 %v1513
        %v1696 = vpop.f32.mrf.mxu0
        %v1697 = vadd.f32 0.0, %v1696
        %v1698 = vpop.f32.mrf.mxu0
        %v1699 = vadd.f32 0.0, %v1698
        %1700 = vmatmul.bf16.gmra.mxu0 %v1516
        %v1701 = vpop.f32.mrf.mxu0
        %v1702 = vadd.f32 0.0, %v1701
        %v1703 = vpop.f32.mrf.mxu0
        %v1704 = vadd.f32 0.0, %v1703
        %1705 = vmatmul.bf16.gmra.mxu0 %v1519
        %v1706 = vpop.f32.mrf.mxu0
        %v1707 = vadd.f32 0.0, %v1706
        %v1708 = vpop.f32.mrf.mxu0
        %v1709 = vadd.f32 0.0, %v1708
        %1710 = vmatmul.bf16.gmra.mxu0 %v1522
        %v1711 = vpop.f32.mrf.mxu0
        %v1712 = vadd.f32 0.0, %v1711
        %v1713 = vpop.f32.mrf.mxu0
        %v1714 = vadd.f32 0.0, %v1713
        %1715 = vmatmul.bf16.gmra.mxu0 %v1525
        %v1716 = vpop.f32.mrf.mxu0
        %v1717 = vadd.f32 0.0, %v1716
        %v1718 = vpop.f32.mrf.mxu0
        %v1719 = vadd.f32 0.0, %v1718
        %1720 = vmatmul.bf16.gmra.mxu0 %v1528
        %v1721 = vpop.f32.mrf.mxu0
        %v1722 = vadd.f32 0.0, %v1721
        %v1723 = vpop.f32.mrf.mxu0
        %v1724 = vadd.f32 0.0, %v1723
        %1725 = vmatmul.bf16.gmra.mxu0 %v1531
        %v1726 = vpop.f32.mrf.mxu0
        %v1727 = vadd.f32 0.0, %v1726
        %v1728 = vpop.f32.mrf.mxu0
        %v1729 = vadd.f32 0.0, %v1728
        %1730 = vmatmul.bf16.gmra.mxu0 %v1534
        %v1731 = vpop.f32.mrf.mxu0
        %v1732 = vadd.f32 0.0, %v1731
        %v1733 = vpop.f32.mrf.mxu0
        %v1734 = vadd.f32 0.0, %v1733
        %1735 = vmatmul.bf16.gmra.mxu0 %v1537
        %v1736 = vpop.f32.mrf.mxu0
        %v1737 = vadd.f32 0.0, %v1736
        %v1738 = vpop.f32.mrf.mxu0
        %v1739 = vadd.f32 0.0, %v1738
        %1740 = vmatmul.bf16.gmra.mxu0 %v1540
        %v1741 = vpop.f32.mrf.mxu0
        %v1742 = vadd.f32 0.0, %v1741
        %v1743 = vpop.f32.mrf.mxu0
        %v1744 = vadd.f32 0.0, %v1743
        %1745 = vdwg.mxu0
        %v1750 = vunpack.c.l.b16 %v1085
        %v1751 = vunpack.c.l.b16 %v1086
        %v1752 = vunpack.c.l.b16 %v1087
        %v1753 = vunpack.c.l.b16 %v1088
        %v1754 = vpack.c.b16 %v1751, %v1750
        %v1755 = vpack.c.b16 %v1753, %v1752
        %v1758 = vsel %vm1424, %v1046, 0
        %v1760 = vsel %vm1424, %v1047, 0
        %v1762 = vsel %vm1424, %v1048, 0
        %v1764 = vsel %vm1424, %v1049, 0
        %v1766 = vsel %vm1424, %v1050, 0
        %v1768 = vsel %vm1424, %v1051, 0
        %v1770 = vsel %vm1424, %v1052, 0
        %v1772 = vsel %vm1424, %v1053, 0
        %v1774 = vsel %vm1424, %v1054, 0
        %v1776 = vsel %vm1424, %v1055, 0
        %v1778 = vsel %vm1424, %v1056, 0
        %v1780 = vsel %vm1424, %v1057, 0
        %v1782 = vsel %vm1424, %v1058, 0
        %v1784 = vsel %vm1424, %v1059, 0
        %v1786 = vsel %vm1424, %v1060, 0
        %v1788 = vsel %vm1424, %v1061, 0
        %v1790 = vsel %vm1424, %v1062, 0
        %v1792 = vsel %vm1424, %v1063, 0
        %v1794 = vsel %vm1424, %v1064, 0
        %v1796 = vsel %vm1424, %v1065, 0
        %v1798 = vsel %vm1424, %v1066, 0
        %v1800 = vsel %vm1424, %v1067, 0
        %v1802 = vsel %vm1424, %v1068, 0
        %v1804 = vsel %vm1424, %v1069, 0
        %v1806 = vsel %vm1424, %v1070, 0
        %v1808 = vsel %vm1424, %v1071, 0
        %v1810 = vsel %vm1424, %v1072, 0
        %v1812 = vsel %vm1424, %v1073, 0
        %v1814 = vsel %vm1424, %v1074, 0
        %v1816 = vsel %vm1424, %v1075, 0
        %v1818 = vsel %vm1424, %v1076, 0
        %v1820 = vsel %vm1424, %v1077, 0
        %v1822 = vsel %vm1424, %v1078, 0
        %v1824 = vsel %vm1424, %v1079, 0
        %v1826 = vsel %vm1424, %v1080, 0
        %v1828 = vsel %vm1424, %v1081, 0
        %v1830 = vsel %vm1424, %v1082, 0
        %v1832 = vsel %vm1424, %v1083, 0
        %v1834 = vsel %vm1424, %v1084, 0
        %1836 = vmatpush.bf16.msra.mxu0 0
        %1837 = vmatpush.bf16.msra.mxu0 0
        %1838 = vmatpush.bf16.msra.mxu0 0
        %1839 = vmatpush.bf16.msra.mxu0 0
        %1840 = vmatpush.bf16.msra.mxu0 0
        %1841 = vmatpush.bf16.msra.mxu0 0
        %1842 = vmatpush.bf16.msra.mxu0 %v1755
        %1843 = vmatpush.bf16.msra.mxu0 %v1754
        %1844 = vmatmul.bf16.gmra.mxu0 %v1758
        %v1845 = vpop.f32.mrf.mxu0
        %v1846 = vadd.f32 %v1552, %v1845
        %v1847 = vpop.f32.mrf.mxu0
        %v1848 = vadd.f32 %v1554, %v1847
        %1849 = vmatmul.bf16.gmra.mxu0 %v1760
        %v1850 = vpop.f32.mrf.mxu0
        %v1851 = vadd.f32 %v1557, %v1850
        %v1852 = vpop.f32.mrf.mxu0
        %v1853 = vadd.f32 %v1559, %v1852
        %1854 = vmatmul.bf16.gmra.mxu0 %v1762
        %v1855 = vpop.f32.mrf.mxu0
        %v1856 = vadd.f32 %v1562, %v1855
        %v1857 = vpop.f32.mrf.mxu0
        %v1858 = vadd.f32 %v1564, %v1857
        %1859 = vmatmul.bf16.gmra.mxu0 %v1764
        %v1860 = vpop.f32.mrf.mxu0
        %v1861 = vadd.f32 %v1567, %v1860
        %v1862 = vpop.f32.mrf.mxu0
        %v1863 = vadd.f32 %v1569, %v1862
        %1864 = vmatmul.bf16.gmra.mxu0 %v1766
        %v1865 = vpop.f32.mrf.mxu0
        %v1866 = vadd.f32 %v1572, %v1865
        %v1867 = vpop.f32.mrf.mxu0
        %v1868 = vadd.f32 %v1574, %v1867
        %1869 = vmatmul.bf16.gmra.mxu0 %v1768
        %v1870 = vpop.f32.mrf.mxu0
        %v1871 = vadd.f32 %v1577, %v1870
        %v1872 = vpop.f32.mrf.mxu0
        %v1873 = vadd.f32 %v1579, %v1872
        %1874 = vmatmul.bf16.gmra.mxu0 %v1770
        %v1875 = vpop.f32.mrf.mxu0
        %v1876 = vadd.f32 %v1582, %v1875
        %v1877 = vpop.f32.mrf.mxu0
        %v1878 = vadd.f32 %v1584, %v1877
        %1879 = vmatmul.bf16.gmra.mxu0 %v1772
        %v1880 = vpop.f32.mrf.mxu0
        %v1881 = vadd.f32 %v1587, %v1880
        %v1882 = vpop.f32.mrf.mxu0
        %v1883 = vadd.f32 %v1589, %v1882
        %1884 = vmatmul.bf16.gmra.mxu0 %v1774
        %v1885 = vpop.f32.mrf.mxu0
        %v1886 = vadd.f32 %v1592, %v1885
        %v1887 = vpop.f32.mrf.mxu0
        %v1888 = vadd.f32 %v1594, %v1887
        %1889 = vmatmul.bf16.gmra.mxu0 %v1776
        %v1890 = vpop.f32.mrf.mxu0
        %v1891 = vadd.f32 %v1597, %v1890
        %v1892 = vpop.f32.mrf.mxu0
        %v1893 = vadd.f32 %v1599, %v1892
        %1894 = vmatmul.bf16.gmra.mxu0 %v1778
        %v1895 = vpop.f32.mrf.mxu0
        %v1896 = vadd.f32 %v1602, %v1895
        %v1897 = vpop.f32.mrf.mxu0
        %v1898 = vadd.f32 %v1604, %v1897
        %1899 = vmatmul.bf16.gmra.mxu0 %v1780
        %v1900 = vpop.f32.mrf.mxu0
        %v1901 = vadd.f32 %v1607, %v1900
        %v1902 = vpop.f32.mrf.mxu0
        %v1903 = vadd.f32 %v1609, %v1902
        %1904 = vmatmul.bf16.gmra.mxu0 %v1782
        %v1905 = vpop.f32.mrf.mxu0
        %v1906 = vadd.f32 %v1612, %v1905
        %v1907 = vpop.f32.mrf.mxu0
        %v1908 = vadd.f32 %v1614, %v1907
        %1909 = vmatmul.bf16.gmra.mxu0 %v1784
        %v1910 = vpop.f32.mrf.mxu0
        %v1911 = vadd.f32 %v1617, %v1910
        %v1912 = vpop.f32.mrf.mxu0
        %v1913 = vadd.f32 %v1619, %v1912
        %1914 = vmatmul.bf16.gmra.mxu0 %v1786
        %v1915 = vpop.f32.mrf.mxu0
        %v1916 = vadd.f32 %v1622, %v1915
        %v1917 = vpop.f32.mrf.mxu0
        %v1918 = vadd.f32 %v1624, %v1917
        %1919 = vmatmul.bf16.gmra.mxu0 %v1788
        %v1920 = vpop.f32.mrf.mxu0
        %v1921 = vadd.f32 %v1627, %v1920
        %v1922 = vpop.f32.mrf.mxu0
        %v1923 = vadd.f32 %v1629, %v1922
        %1924 = vmatmul.bf16.gmra.mxu0 %v1790
        %v1925 = vpop.f32.mrf.mxu0
        %v1926 = vadd.f32 %v1632, %v1925
        %v1927 = vpop.f32.mrf.mxu0
        %v1928 = vadd.f32 %v1634, %v1927
        %1929 = vmatmul.bf16.gmra.mxu0 %v1792
        %v1930 = vpop.f32.mrf.mxu0
        %v1931 = vadd.f32 %v1637, %v1930
        %v1932 = vpop.f32.mrf.mxu0
        %v1933 = vadd.f32 %v1639, %v1932
        %1934 = vmatmul.bf16.gmra.mxu0 %v1794
        %v1935 = vpop.f32.mrf.mxu0
        %v1936 = vadd.f32 %v1642, %v1935
        %v1937 = vpop.f32.mrf.mxu0
        %v1938 = vadd.f32 %v1644, %v1937
        %1939 = vmatmul.bf16.gmra.mxu0 %v1796
        %v1940 = vpop.f32.mrf.mxu0
        %v1941 = vadd.f32 %v1647, %v1940
        %v1942 = vpop.f32.mrf.mxu0
        %v1943 = vadd.f32 %v1649, %v1942
        %1944 = vmatmul.bf16.gmra.mxu0 %v1798
        %v1945 = vpop.f32.mrf.mxu0
        %v1946 = vadd.f32 %v1652, %v1945
        %v1947 = vpop.f32.mrf.mxu0
        %v1948 = vadd.f32 %v1654, %v1947
        %1949 = vmatmul.bf16.gmra.mxu0 %v1800
        %v1950 = vpop.f32.mrf.mxu0
        %v1951 = vadd.f32 %v1657, %v1950
        %v1952 = vpop.f32.mrf.mxu0
        %v1953 = vadd.f32 %v1659, %v1952
        %1954 = vmatmul.bf16.gmra.mxu0 %v1802
        %v1955 = vpop.f32.mrf.mxu0
        %v1956 = vadd.f32 %v1662, %v1955
        %v1957 = vpop.f32.mrf.mxu0
        %v1958 = vadd.f32 %v1664, %v1957
        %1959 = vmatmul.bf16.gmra.mxu0 %v1804
        %v1960 = vpop.f32.mrf.mxu0
        %v1961 = vadd.f32 %v1667, %v1960
        %v1962 = vpop.f32.mrf.mxu0
        %v1963 = vadd.f32 %v1669, %v1962
        %1964 = vmatmul.bf16.gmra.mxu0 %v1806
        %v1965 = vpop.f32.mrf.mxu0
        %v1966 = vadd.f32 %v1672, %v1965
        %v1967 = vpop.f32.mrf.mxu0
        %v1968 = vadd.f32 %v1674, %v1967
        %1969 = vmatmul.bf16.gmra.mxu0 %v1808
        %v1970 = vpop.f32.mrf.mxu0
        %v1971 = vadd.f32 %v1677, %v1970
        %v1972 = vpop.f32.mrf.mxu0
        %v1973 = vadd.f32 %v1679, %v1972
        %1974 = vmatmul.bf16.gmra.mxu0 %v1810
        %v1975 = vpop.f32.mrf.mxu0
        %v1976 = vadd.f32 %v1682, %v1975
        %v1977 = vpop.f32.mrf.mxu0
        %v1978 = vadd.f32 %v1684, %v1977
        %1979 = vmatmul.bf16.gmra.mxu0 %v1812
        %v1980 = vpop.f32.mrf.mxu0
        %v1981 = vadd.f32 %v1687, %v1980
        %v1982 = vpop.f32.mrf.mxu0
        %v1983 = vadd.f32 %v1689, %v1982
        %1984 = vmatmul.bf16.gmra.mxu0 %v1814
        %v1985 = vpop.f32.mrf.mxu0
        %v1986 = vadd.f32 %v1692, %v1985
        %v1987 = vpop.f32.mrf.mxu0
        %v1988 = vadd.f32 %v1694, %v1987
        %1989 = vmatmul.bf16.gmra.mxu0 %v1816
        %v1990 = vpop.f32.mrf.mxu0
        %v1991 = vadd.f32 %v1697, %v1990
        %v1992 = vpop.f32.mrf.mxu0
        %v1993 = vadd.f32 %v1699, %v1992
        %1994 = vmatmul.bf16.gmra.mxu0 %v1818
        %v1995 = vpop.f32.mrf.mxu0
        %v1996 = vadd.f32 %v1702, %v1995
        %v1997 = vpop.f32.mrf.mxu0
        %v1998 = vadd.f32 %v1704, %v1997
        %1999 = vmatmul.bf16.gmra.mxu0 %v1820
        %v2000 = vpop.f32.mrf.mxu0
        %v2001 = vadd.f32 %v1707, %v2000
        %v2002 = vpop.f32.mrf.mxu0
        %v2003 = vadd.f32 %v1709, %v2002
        %2004 = vmatmul.bf16.gmra.mxu0 %v1822
        %v2005 = vpop.f32.mrf.mxu0
        %v2006 = vadd.f32 %v1712, %v2005
        %v2007 = vpop.f32.mrf.mxu0
        %v2008 = vadd.f32 %v1714, %v2007
        %2009 = vmatmul.bf16.gmra.mxu0 %v1824
        %v2010 = vpop.f32.mrf.mxu0
        %v2011 = vadd.f32 %v1717, %v2010
        %v2012 = vpop.f32.mrf.mxu0
        %v2013 = vadd.f32 %v1719, %v2012
        %2014 = vmatmul.bf16.gmra.mxu0 %v1826
        %v2015 = vpop.f32.mrf.mxu0
        %v2016 = vadd.f32 %v1722, %v2015
        %v2017 = vpop.f32.mrf.mxu0
        %v2018 = vadd.f32 %v1724, %v2017
        %2019 = vmatmul.bf16.gmra.mxu0 %v1828
        %v2020 = vpop.f32.mrf.mxu0
        %v2021 = vadd.f32 %v1727, %v2020
        %v2022 = vpop.f32.mrf.mxu0
        %v2023 = vadd.f32 %v1729, %v2022
        %2024 = vmatmul.bf16.gmra.mxu0 %v1830
        %v2025 = vpop.f32.mrf.mxu0
        %v2026 = vadd.f32 %v1732, %v2025
        %v2027 = vpop.f32.mrf.mxu0
        %v2028 = vadd.f32 %v1734, %v2027
        %2029 = vmatmul.bf16.gmra.mxu0 %v1832
        %v2030 = vpop.f32.mrf.mxu0
        %v2031 = vadd.f32 %v1737, %v2030
        %v2032 = vpop.f32.mrf.mxu0
        %v2033 = vadd.f32 %v1739, %v2032
        %2034 = vmatmul.bf16.gmra.mxu0 %v1834
        %v2035 = vpop.f32.mrf.mxu0
        %v2036 = vadd.f32 %v1742, %v2035
        %v2037 = vpop.f32.mrf.mxu0
        %v2038 = vadd.f32 %v1744, %v2037
        %2039 = vdwg.mxu0
        %s2040 = scalar_lea.vmem [#allocation7], 32
        %v2041 = vld [vmem:[%s2040] sm:$0xf]
        %v2042 = vld [vmem:[%s2040 + $0x4] sm:$0xf]
        %v2043 = vld [vmem:[%s2040 + $0x8] sm:$0xf]
        %v2044 = vld [vmem:[%s2040 + $0xc] sm:$0xf]
        %vm2085 = vcmask 1046528
        %v2086 = vrot.slane %v1046, 1
        %v2087 = vrot.slane %v1047, 1
        %v2088 = vsel %vm2085, %v2086, %v2087
        %v2089 = vrot.slane %v1048, 1
        %v2090 = vsel %vm2085, %v2087, %v2089
        %v2091 = vrot.slane %v1049, 1
        %v2092 = vsel %vm2085, %v2089, %v2091
        %v2093 = vrot.slane %v1050, 1
        %v2094 = vsel %vm2085, %v2091, %v2093
        %v2095 = vrot.slane %v1051, 1
        %v2096 = vsel %vm2085, %v2093, %v2095
        %v2097 = vrot.slane %v1052, 1
        %v2098 = vsel %vm2085, %v2095, %v2097
        %v2099 = vrot.slane %v1053, 1
        %v2100 = vsel %vm2085, %v2097, %v2099
        %v2101 = vrot.slane %v1054, 1
        %v2102 = vsel %vm2085, %v2099, %v2101
        %v2103 = vrot.slane %v1055, 1
        %v2104 = vsel %vm2085, %v2101, %v2103
        %v2105 = vrot.slane %v1056, 1
        %v2106 = vsel %vm2085, %v2103, %v2105
        %v2107 = vrot.slane %v1057, 1
        %v2108 = vsel %vm2085, %v2105, %v2107
        %v2109 = vrot.slane %v1058, 1
        %v2110 = vsel %vm2085, %v2107, %v2109
        %v2111 = vrot.slane %v1059, 1
        %v2112 = vsel %vm2085, %v2109, %v2111
        %v2113 = vrot.slane %v1060, 1
        %v2114 = vsel %vm2085, %v2111, %v2113
        %v2115 = vrot.slane %v1061, 1
        %v2116 = vsel %vm2085, %v2113, %v2115
        %v2117 = vrot.slane %v1062, 1
        %v2118 = vsel %vm2085, %v2115, %v2117
        %v2119 = vrot.slane %v1063, 1
        %v2120 = vsel %vm2085, %v2117, %v2119
        %v2121 = vrot.slane %v1064, 1
        %v2122 = vsel %vm2085, %v2119, %v2121
        %v2123 = vrot.slane %v1065, 1
        %v2124 = vsel %vm2085, %v2121, %v2123
        %v2125 = vrot.slane %v1066, 1
        %v2126 = vsel %vm2085, %v2123, %v2125
        %v2127 = vrot.slane %v1067, 1
        %v2128 = vsel %vm2085, %v2125, %v2127
        %v2129 = vrot.slane %v1068, 1
        %v2130 = vsel %vm2085, %v2127, %v2129
        %v2131 = vrot.slane %v1069, 1
        %v2132 = vsel %vm2085, %v2129, %v2131
        %v2133 = vrot.slane %v1070, 1
        %v2134 = vsel %vm2085, %v2131, %v2133
        %v2135 = vrot.slane %v1071, 1
        %v2136 = vsel %vm2085, %v2133, %v2135
        %v2137 = vrot.slane %v1072, 1
        %v2138 = vsel %vm2085, %v2135, %v2137
        %v2139 = vrot.slane %v1073, 1
        %v2140 = vsel %vm2085, %v2137, %v2139
        %v2141 = vrot.slane %v1074, 1
        %v2142 = vsel %vm2085, %v2139, %v2141
        %v2143 = vrot.slane %v1075, 1
        %v2144 = vsel %vm2085, %v2141, %v2143
        %v2145 = vrot.slane %v1076, 1
        %v2146 = vsel %vm2085, %v2143, %v2145
        %v2147 = vrot.slane %v1077, 1
        %v2148 = vsel %vm2085, %v2145, %v2147
        %v2149 = vrot.slane %v1078, 1
        %v2150 = vsel %vm2085, %v2147, %v2149
        %v2151 = vrot.slane %v1079, 1
        %v2152 = vsel %vm2085, %v2149, %v2151
        %v2153 = vrot.slane %v1080, 1
        %v2154 = vsel %vm2085, %v2151, %v2153
        %v2155 = vrot.slane %v1081, 1
        %v2156 = vsel %vm2085, %v2153, %v2155
        %v2157 = vrot.slane %v1082, 1
        %v2158 = vsel %vm2085, %v2155, %v2157
        %v2159 = vrot.slane %v1083, 1
        %v2160 = vsel %vm2085, %v2157, %v2159
        %v2161 = vrot.slane %v1084, 1
        %v2162 = vsel %vm2085, %v2159, %v2161
        %v2163 = vrot.slane %v1089, 1
        %v2164 = vsel %vm2085, %v2161, %v2163
        %v2169 = vunpack.c.l.b16 %v2041
        %v2170 = vunpack.c.l.b16 %v2042
        %v2171 = vunpack.c.l.b16 %v2043
        %v2172 = vunpack.c.l.b16 %v2044
        %v2173 = vpack.c.b16 %v2170, %v2169
        %v2174 = vpack.c.b16 %v2172, %v2171
        %v2178 = vsel %vm1424, %v2088, 0
        %v2181 = vsel %vm1424, %v2090, 0
        %v2184 = vsel %vm1424, %v2092, 0
        %v2187 = vsel %vm1424, %v2094, 0
        %v2190 = vsel %vm1424, %v2096, 0
        %v2193 = vsel %vm1424, %v2098, 0
        %v2196 = vsel %vm1424, %v2100, 0
        %v2199 = vsel %vm1424, %v2102, 0
        %v2202 = vsel %vm1424, %v2104, 0
        %v2205 = vsel %vm1424, %v2106, 0
        %v2208 = vsel %vm1424, %v2108, 0
        %v2211 = vsel %vm1424, %v2110, 0
        %v2214 = vsel %vm1424, %v2112, 0
        %v2217 = vsel %vm1424, %v2114, 0
        %v2220 = vsel %vm1424, %v2116, 0
        %v2223 = vsel %vm1424, %v2118, 0
        %v2226 = vsel %vm1424, %v2120, 0
        %v2229 = vsel %vm1424, %v2122, 0
        %v2232 = vsel %vm1424, %v2124, 0
        %v2235 = vsel %vm1424, %v2126, 0
        %v2238 = vsel %vm1424, %v2128, 0
        %v2241 = vsel %vm1424, %v2130, 0
        %v2244 = vsel %vm1424, %v2132, 0
        %v2247 = vsel %vm1424, %v2134, 0
        %v2250 = vsel %vm1424, %v2136, 0
        %v2253 = vsel %vm1424, %v2138, 0
        %v2256 = vsel %vm1424, %v2140, 0
        %v2259 = vsel %vm1424, %v2142, 0
        %v2262 = vsel %vm1424, %v2144, 0
        %v2265 = vsel %vm1424, %v2146, 0
        %v2268 = vsel %vm1424, %v2148, 0
        %v2271 = vsel %vm1424, %v2150, 0
        %v2274 = vsel %vm1424, %v2152, 0
        %v2277 = vsel %vm1424, %v2154, 0
        %v2280 = vsel %vm1424, %v2156, 0
        %v2283 = vsel %vm1424, %v2158, 0
        %v2286 = vsel %vm1424, %v2160, 0
        %v2289 = vsel %vm1424, %v2162, 0
        %v2292 = vsel %vm1424, %v2164, 0
        %2294 = vmatpush.bf16.msra.mxu0 0
        %2295 = vmatpush.bf16.msra.mxu0 0
        %2296 = vmatpush.bf16.msra.mxu0 0
        %2297 = vmatpush.bf16.msra.mxu0 0
        %2298 = vmatpush.bf16.msra.mxu0 0
        %2299 = vmatpush.bf16.msra.mxu0 0
        %2300 = vmatpush.bf16.msra.mxu0 %v2174
        %2301 = vmatpush.bf16.msra.mxu0 %v2173
        %2302 = vmatmul.bf16.gmra.mxu0 %v2178
        %v2303 = vpop.f32.mrf.mxu0
        %v2304 = vadd.f32 0.0, %v2303
        %v2305 = vpop.f32.mrf.mxu0
        %v2306 = vadd.f32 0.0, %v2305
        %2307 = vmatmul.bf16.gmra.mxu0 %v2181
        %v2308 = vpop.f32.mrf.mxu0
        %v2309 = vadd.f32 0.0, %v2308
        %v2310 = vpop.f32.mrf.mxu0
        %v2311 = vadd.f32 0.0, %v2310
        %2312 = vmatmul.bf16.gmra.mxu0 %v2184
        %v2313 = vpop.f32.mrf.mxu0
        %v2314 = vadd.f32 0.0, %v2313
        %v2315 = vpop.f32.mrf.mxu0
        %v2316 = vadd.f32 0.0, %v2315
        %2317 = vmatmul.bf16.gmra.mxu0 %v2187
        %v2318 = vpop.f32.mrf.mxu0
        %v2319 = vadd.f32 0.0, %v2318
        %v2320 = vpop.f32.mrf.mxu0
        %v2321 = vadd.f32 0.0, %v2320
        %2322 = vmatmul.bf16.gmra.mxu0 %v2190
        %v2323 = vpop.f32.mrf.mxu0
        %v2324 = vadd.f32 0.0, %v2323
        %v2325 = vpop.f32.mrf.mxu0
        %v2326 = vadd.f32 0.0, %v2325
        %2327 = vmatmul.bf16.gmra.mxu0 %v2193
        %v2328 = vpop.f32.mrf.mxu0
        %v2329 = vadd.f32 0.0, %v2328
        %v2330 = vpop.f32.mrf.mxu0
        %v2331 = vadd.f32 0.0, %v2330
        %2332 = vmatmul.bf16.gmra.mxu0 %v2196
        %v2333 = vpop.f32.mrf.mxu0
        %v2334 = vadd.f32 0.0, %v2333
        %v2335 = vpop.f32.mrf.mxu0
        %v2336 = vadd.f32 0.0, %v2335
        %2337 = vmatmul.bf16.gmra.mxu0 %v2199
        %v2338 = vpop.f32.mrf.mxu0
        %v2339 = vadd.f32 0.0, %v2338
        %v2340 = vpop.f32.mrf.mxu0
        %v2341 = vadd.f32 0.0, %v2340
        %2342 = vmatmul.bf16.gmra.mxu0 %v2202
        %v2343 = vpop.f32.mrf.mxu0
        %v2344 = vadd.f32 0.0, %v2343
        %v2345 = vpop.f32.mrf.mxu0
        %v2346 = vadd.f32 0.0, %v2345
        %2347 = vmatmul.bf16.gmra.mxu0 %v2205
        %v2348 = vpop.f32.mrf.mxu0
        %v2349 = vadd.f32 0.0, %v2348
        %v2350 = vpop.f32.mrf.mxu0
        %v2351 = vadd.f32 0.0, %v2350
        %2352 = vmatmul.bf16.gmra.mxu0 %v2208
        %v2353 = vpop.f32.mrf.mxu0
        %v2354 = vadd.f32 0.0, %v2353
        %v2355 = vpop.f32.mrf.mxu0
        %v2356 = vadd.f32 0.0, %v2355
        %2357 = vmatmul.bf16.gmra.mxu0 %v2211
        %v2358 = vpop.f32.mrf.mxu0
        %v2359 = vadd.f32 0.0, %v2358
        %v2360 = vpop.f32.mrf.mxu0
        %v2361 = vadd.f32 0.0, %v2360
        %2362 = vmatmul.bf16.gmra.mxu0 %v2214
        %v2363 = vpop.f32.mrf.mxu0
        %v2364 = vadd.f32 0.0, %v2363
        %v2365 = vpop.f32.mrf.mxu0
        %v2366 = vadd.f32 0.0, %v2365
        %2367 = vmatmul.bf16.gmra.mxu0 %v2217
        %v2368 = vpop.f32.mrf.mxu0
        %v2369 = vadd.f32 0.0, %v2368
        %v2370 = vpop.f32.mrf.mxu0
        %v2371 = vadd.f32 0.0, %v2370
        %2372 = vmatmul.bf16.gmra.mxu0 %v2220
        %v2373 = vpop.f32.mrf.mxu0
        %v2374 = vadd.f32 0.0, %v2373
        %v2375 = vpop.f32.mrf.mxu0
        %v2376 = vadd.f32 0.0, %v2375
        %2377 = vmatmul.bf16.gmra.mxu0 %v2223
        %v2378 = vpop.f32.mrf.mxu0
        %v2379 = vadd.f32 0.0, %v2378
        %v2380 = vpop.f32.mrf.mxu0
        %v2381 = vadd.f32 0.0, %v2380
        %2382 = vmatmul.bf16.gmra.mxu0 %v2226
        %v2383 = vpop.f32.mrf.mxu0
        %v2384 = vadd.f32 0.0, %v2383
        %v2385 = vpop.f32.mrf.mxu0
        %v2386 = vadd.f32 0.0, %v2385
        %2387 = vmatmul.bf16.gmra.mxu0 %v2229
        %v2388 = vpop.f32.mrf.mxu0
        %v2389 = vadd.f32 0.0, %v2388
        %v2390 = vpop.f32.mrf.mxu0
        %v2391 = vadd.f32 0.0, %v2390
        %2392 = vmatmul.bf16.gmra.mxu0 %v2232
        %v2393 = vpop.f32.mrf.mxu0
        %v2394 = vadd.f32 0.0, %v2393
        %v2395 = vpop.f32.mrf.mxu0
        %v2396 = vadd.f32 0.0, %v2395
        %2397 = vmatmul.bf16.gmra.mxu0 %v2235
        %v2398 = vpop.f32.mrf.mxu0
        %v2399 = vadd.f32 0.0, %v2398
        %v2400 = vpop.f32.mrf.mxu0
        %v2401 = vadd.f32 0.0, %v2400
        %2402 = vmatmul.bf16.gmra.mxu0 %v2238
        %v2403 = vpop.f32.mrf.mxu0
        %v2404 = vadd.f32 0.0, %v2403
        %v2405 = vpop.f32.mrf.mxu0
        %v2406 = vadd.f32 0.0, %v2405
        %2407 = vmatmul.bf16.gmra.mxu0 %v2241
        %v2408 = vpop.f32.mrf.mxu0
        %v2409 = vadd.f32 0.0, %v2408
        %v2410 = vpop.f32.mrf.mxu0
        %v2411 = vadd.f32 0.0, %v2410
        %2412 = vmatmul.bf16.gmra.mxu0 %v2244
        %v2413 = vpop.f32.mrf.mxu0
        %v2414 = vadd.f32 0.0, %v2413
        %v2415 = vpop.f32.mrf.mxu0
        %v2416 = vadd.f32 0.0, %v2415
        %2417 = vmatmul.bf16.gmra.mxu0 %v2247
        %v2418 = vpop.f32.mrf.mxu0
        %v2419 = vadd.f32 0.0, %v2418
        %v2420 = vpop.f32.mrf.mxu0
        %v2421 = vadd.f32 0.0, %v2420
        %2422 = vmatmul.bf16.gmra.mxu0 %v2250
        %v2423 = vpop.f32.mrf.mxu0
        %v2424 = vadd.f32 0.0, %v2423
        %v2425 = vpop.f32.mrf.mxu0
        %v2426 = vadd.f32 0.0, %v2425
        %2427 = vmatmul.bf16.gmra.mxu0 %v2253
        %v2428 = vpop.f32.mrf.mxu0
        %v2429 = vadd.f32 0.0, %v2428
        %v2430 = vpop.f32.mrf.mxu0
        %v2431 = vadd.f32 0.0, %v2430
        %2432 = vmatmul.bf16.gmra.mxu0 %v2256
        %v2433 = vpop.f32.mrf.mxu0
        %v2434 = vadd.f32 0.0, %v2433
        %v2435 = vpop.f32.mrf.mxu0
        %v2436 = vadd.f32 0.0, %v2435
        %2437 = vmatmul.bf16.gmra.mxu0 %v2259
        %v2438 = vpop.f32.mrf.mxu0
        %v2439 = vadd.f32 0.0, %v2438
        %v2440 = vpop.f32.mrf.mxu0
        %v2441 = vadd.f32 0.0, %v2440
        %2442 = vmatmul.bf16.gmra.mxu0 %v2262
        %v2443 = vpop.f32.mrf.mxu0
        %v2444 = vadd.f32 0.0, %v2443
        %v2445 = vpop.f32.mrf.mxu0
        %v2446 = vadd.f32 0.0, %v2445
        %2447 = vmatmul.bf16.gmra.mxu0 %v2265
        %v2448 = vpop.f32.mrf.mxu0
        %v2449 = vadd.f32 0.0, %v2448
        %v2450 = vpop.f32.mrf.mxu0
        %v2451 = vadd.f32 0.0, %v2450
        %2452 = vmatmul.bf16.gmra.mxu0 %v2268
        %v2453 = vpop.f32.mrf.mxu0
        %v2454 = vadd.f32 0.0, %v2453
        %v2455 = vpop.f32.mrf.mxu0
        %v2456 = vadd.f32 0.0, %v2455
        %2457 = vmatmul.bf16.gmra.mxu0 %v2271
        %v2458 = vpop.f32.mrf.mxu0
        %v2459 = vadd.f32 0.0, %v2458
        %v2460 = vpop.f32.mrf.mxu0
        %v2461 = vadd.f32 0.0, %v2460
        %2462 = vmatmul.bf16.gmra.mxu0 %v2274
        %v2463 = vpop.f32.mrf.mxu0
        %v2464 = vadd.f32 0.0, %v2463
        %v2465 = vpop.f32.mrf.mxu0
        %v2466 = vadd.f32 0.0, %v2465
        %2467 = vmatmul.bf16.gmra.mxu0 %v2277
        %v2468 = vpop.f32.mrf.mxu0
        %v2469 = vadd.f32 0.0, %v2468
        %v2470 = vpop.f32.mrf.mxu0
        %v2471 = vadd.f32 0.0, %v2470
        %2472 = vmatmul.bf16.gmra.mxu0 %v2280
        %v2473 = vpop.f32.mrf.mxu0
        %v2474 = vadd.f32 0.0, %v2473
        %v2475 = vpop.f32.mrf.mxu0
        %v2476 = vadd.f32 0.0, %v2475
        %2477 = vmatmul.bf16.gmra.mxu0 %v2283
        %v2478 = vpop.f32.mrf.mxu0
        %v2479 = vadd.f32 0.0, %v2478
        %v2480 = vpop.f32.mrf.mxu0
        %v2481 = vadd.f32 0.0, %v2480
        %2482 = vmatmul.bf16.gmra.mxu0 %v2286
        %v2483 = vpop.f32.mrf.mxu0
        %v2484 = vadd.f32 0.0, %v2483
        %v2485 = vpop.f32.mrf.mxu0
        %v2486 = vadd.f32 0.0, %v2485
        %2487 = vmatmul.bf16.gmra.mxu0 %v2289
        %v2488 = vpop.f32.mrf.mxu0
        %v2489 = vadd.f32 0.0, %v2488
        %v2490 = vpop.f32.mrf.mxu0
        %v2491 = vadd.f32 0.0, %v2490
        %2492 = vmatmul.bf16.gmra.mxu0 %v2292
        %v2493 = vpop.f32.mrf.mxu0
        %v2494 = vadd.f32 0.0, %v2493
        %v2495 = vpop.f32.mrf.mxu0
        %v2496 = vadd.f32 0.0, %v2495
        %2497 = vdwg.mxu0
        %v2498 = vadd.f32 %v1846, %v2304
        %v2499 = vadd.f32 %v1848, %v2306
        %v2500 = vadd.f32 %v1851, %v2309
        %v2501 = vadd.f32 %v1853, %v2311
        %v2502 = vadd.f32 %v1856, %v2314
        %v2503 = vadd.f32 %v1858, %v2316
        %v2504 = vadd.f32 %v1861, %v2319
        %v2505 = vadd.f32 %v1863, %v2321
        %v2506 = vadd.f32 %v1866, %v2324
        %v2507 = vadd.f32 %v1868, %v2326
        %v2508 = vadd.f32 %v1871, %v2329
        %v2509 = vadd.f32 %v1873, %v2331
        %v2510 = vadd.f32 %v1876, %v2334
        %v2511 = vadd.f32 %v1878, %v2336
        %v2512 = vadd.f32 %v1881, %v2339
        %v2513 = vadd.f32 %v1883, %v2341
        %v2514 = vadd.f32 %v1886, %v2344
        %v2515 = vadd.f32 %v1888, %v2346
        %v2516 = vadd.f32 %v1891, %v2349
        %v2517 = vadd.f32 %v1893, %v2351
        %v2518 = vadd.f32 %v1896, %v2354
        %v2519 = vadd.f32 %v1898, %v2356
        %v2520 = vadd.f32 %v1901, %v2359
        %v2521 = vadd.f32 %v1903, %v2361
        %v2522 = vadd.f32 %v1906, %v2364
        %v2523 = vadd.f32 %v1908, %v2366
        %v2524 = vadd.f32 %v1911, %v2369
        %v2525 = vadd.f32 %v1913, %v2371
        %v2526 = vadd.f32 %v1916, %v2374
        %v2527 = vadd.f32 %v1918, %v2376
        %v2528 = vadd.f32 %v1921, %v2379
        %v2529 = vadd.f32 %v1923, %v2381
        %v2530 = vadd.f32 %v1926, %v2384
        %v2531 = vadd.f32 %v1928, %v2386
        %v2532 = vadd.f32 %v1931, %v2389
        %v2533 = vadd.f32 %v1933, %v2391
        %v2534 = vadd.f32 %v1936, %v2394
        %v2535 = vadd.f32 %v1938, %v2396
        %v2536 = vadd.f32 %v1941, %v2399
        %v2537 = vadd.f32 %v1943, %v2401
        %v2538 = vadd.f32 %v1946, %v2404
        %v2539 = vadd.f32 %v1948, %v2406
        %v2540 = vadd.f32 %v1951, %v2409
        %v2541 = vadd.f32 %v1953, %v2411
        %v2542 = vadd.f32 %v1956, %v2414
        %v2543 = vadd.f32 %v1958, %v2416
        %v2544 = vadd.f32 %v1961, %v2419
        %v2545 = vadd.f32 %v1963, %v2421
        %v2546 = vadd.f32 %v1966, %v2424
        %v2547 = vadd.f32 %v1968, %v2426
        %v2548 = vadd.f32 %v1971, %v2429
        %v2549 = vadd.f32 %v1973, %v2431
        %v2550 = vadd.f32 %v1976, %v2434
        %v2551 = vadd.f32 %v1978, %v2436
        %v2552 = vadd.f32 %v1981, %v2439
        %v2553 = vadd.f32 %v1983, %v2441
        %v2554 = vadd.f32 %v1986, %v2444
        %v2555 = vadd.f32 %v1988, %v2446
        %v2556 = vadd.f32 %v1991, %v2449
        %v2557 = vadd.f32 %v1993, %v2451
        %v2558 = vadd.f32 %v1996, %v2454
        %v2559 = vadd.f32 %v1998, %v2456
        %v2560 = vadd.f32 %v2001, %v2459
        %v2561 = vadd.f32 %v2003, %v2461
        %v2562 = vadd.f32 %v2006, %v2464
        %v2563 = vadd.f32 %v2008, %v2466
        %v2564 = vadd.f32 %v2011, %v2469
        %v2565 = vadd.f32 %v2013, %v2471
        %v2566 = vadd.f32 %v2016, %v2474
        %v2567 = vadd.f32 %v2018, %v2476
        %v2568 = vadd.f32 %v2021, %v2479
        %v2569 = vadd.f32 %v2023, %v2481
        %v2570 = vadd.f32 %v2026, %v2484
        %v2571 = vadd.f32 %v2028, %v2486
        %v2572 = vadd.f32 %v2031, %v2489
        %v2573 = vadd.f32 %v2033, %v2491
        %v2574 = vadd.f32 %v2036, %v2494
        %v2575 = vadd.f32 %v2038, %v2496
        %v2576 = vpack.c.bf16 %v965, %v964
        %v2577 = vpack.c.bf16 %v967, %v966
        %v2578 = vpack.c.bf16 %v969, %v968
        %v2579 = vpack.c.bf16 %v971, %v970
        %v2580 = vpack.c.bf16 %v973, %v972
        %v2581 = vpack.c.bf16 %v975, %v974
        %v2582 = vpack.c.bf16 %v977, %v976
        %v2583 = vpack.c.bf16 %v979, %v978
        %v2584 = vpack.c.bf16 %v981, %v980
        %v2585 = vpack.c.bf16 %v983, %v982
        %v2586 = vpack.c.bf16 %v985, %v984
        %v2587 = vpack.c.bf16 %v987, %v986
        %v2588 = vpack.c.bf16 %v989, %v988
        %v2589 = vpack.c.bf16 %v991, %v990
        %v2590 = vpack.c.bf16 %v993, %v992
        %v2591 = vpack.c.bf16 %v995, %v994
        %v2592 = vpack.c.bf16 %v997, %v996
        %v2593 = vpack.c.bf16 %v999, %v998
        %v2594 = vpack.c.bf16 %v1001, %v1000
        %v2595 = vpack.c.bf16 %v1003, %v1002
        %v2596 = vpack.c.bf16 %v1005, %v1004
        %v2597 = vpack.c.bf16 %v1007, %v1006
        %v2598 = vpack.c.bf16 %v1009, %v1008
        %v2599 = vpack.c.bf16 %v1011, %v1010
        %v2600 = vpack.c.bf16 %v1013, %v1012
        %v2601 = vpack.c.bf16 %v1015, %v1014
        %v2602 = vpack.c.bf16 %v1017, %v1016
        %v2603 = vpack.c.bf16 %v1019, %v1018
        %v2604 = vpack.c.bf16 %v1021, %v1020
        %v2605 = vpack.c.bf16 %v1023, %v1022
        %v2606 = vpack.c.bf16 %v1025, %v1024
        %v2607 = vpack.c.bf16 %v1027, %v1026
        %v2608 = vpack.c.bf16 %v1029, %v1028
        %v2609 = vpack.c.bf16 %v1031, %v1030
        %v2610 = vpack.c.bf16 %v1033, %v1032
        %v2611 = vpack.c.bf16 %v1035, %v1034
        %v2612 = vpack.c.bf16 %v1037, %v1036
        %v2613 = vpack.c.bf16 %v1039, %v1038
        %v2614 = vpack.c.bf16 %v1041, %v1040
        %v2615 = vpack.c.bf16 %v1042, %v1042
        %s2616 = scalar_lea.vmem [#allocation7], 48
        %v2617 = vld [vmem:[%s2616] sm:$0xf]
        %v2618 = vld [vmem:[%s2616 + $0x4] sm:$0xf]
        %v2619 = vld [vmem:[%s2616 + $0x8] sm:$0xf]
        %v2620 = vld [vmem:[%s2616 + $0xc] sm:$0xf]
        %v2661 = vrot.slane %v2576, 1
        %v2662 = vrot.slane %v2577, 1
        %v2663 = vsel %vm2085, %v2661, %v2662
        %v2664 = vrot.slane %v2578, 1
        %v2665 = vsel %vm2085, %v2662, %v2664
        %v2666 = vrot.slane %v2579, 1
        %v2667 = vsel %vm2085, %v2664, %v2666
        %v2668 = vrot.slane %v2580, 1
        %v2669 = vsel %vm2085, %v2666, %v2668
        %v2670 = vrot.slane %v2581, 1
        %v2671 = vsel %vm2085, %v2668, %v2670
        %v2672 = vrot.slane %v2582, 1
        %v2673 = vsel %vm2085, %v2670, %v2672
        %v2674 = vrot.slane %v2583, 1
        %v2675 = vsel %vm2085, %v2672, %v2674
        %v2676 = vrot.slane %v2584, 1
        %v2677 = vsel %vm2085, %v2674, %v2676
        %v2678 = vrot.slane %v2585, 1
        %v2679 = vsel %vm2085, %v2676, %v2678
        %v2680 = vrot.slane %v2586, 1
        %v2681 = vsel %vm2085, %v2678, %v2680
        %v2682 = vrot.slane %v2587, 1
        %v2683 = vsel %vm2085, %v2680, %v2682
        %v2684 = vrot.slane %v2588, 1
        %v2685 = vsel %vm2085, %v2682, %v2684
        %v2686 = vrot.slane %v2589, 1
        %v2687 = vsel %vm2085, %v2684, %v2686
        %v2688 = vrot.slane %v2590, 1
        %v2689 = vsel %vm2085, %v2686, %v2688
        %v2690 = vrot.slane %v2591, 1
        %v2691 = vsel %vm2085, %v2688, %v2690
        %v2692 = vrot.slane %v2592, 1
        %v2693 = vsel %vm2085, %v2690, %v2692
        %v2694 = vrot.slane %v2593, 1
        %v2695 = vsel %vm2085, %v2692, %v2694
        %v2696 = vrot.slane %v2594, 1
        %v2697 = vsel %vm2085, %v2694, %v2696
        %v2698 = vrot.slane %v2595, 1
        %v2699 = vsel %vm2085, %v2696, %v2698
        %v2700 = vrot.slane %v2596, 1
        %v2701 = vsel %vm2085, %v2698, %v2700
        %v2702 = vrot.slane %v2597, 1
        %v2703 = vsel %vm2085, %v2700, %v2702
        %v2704 = vrot.slane %v2598, 1
        %v2705 = vsel %vm2085, %v2702, %v2704
        %v2706 = vrot.slane %v2599, 1
        %v2707 = vsel %vm2085, %v2704, %v2706
        %v2708 = vrot.slane %v2600, 1
        %v2709 = vsel %vm2085, %v2706, %v2708
        %v2710 = vrot.slane %v2601, 1
        %v2711 = vsel %vm2085, %v2708, %v2710
        %v2712 = vrot.slane %v2602, 1
        %v2713 = vsel %vm2085, %v2710, %v2712
        %v2714 = vrot.slane %v2603, 1
        %v2715 = vsel %vm2085, %v2712, %v2714
        %v2716 = vrot.slane %v2604, 1
        %v2717 = vsel %vm2085, %v2714, %v2716
        %v2718 = vrot.slane %v2605, 1
        %v2719 = vsel %vm2085, %v2716, %v2718
        %v2720 = vrot.slane %v2606, 1
        %v2721 = vsel %vm2085, %v2718, %v2720
        %v2722 = vrot.slane %v2607, 1
        %v2723 = vsel %vm2085, %v2720, %v2722
        %v2724 = vrot.slane %v2608, 1
        %v2725 = vsel %vm2085, %v2722, %v2724
        %v2726 = vrot.slane %v2609, 1
        %v2727 = vsel %vm2085, %v2724, %v2726
        %v2728 = vrot.slane %v2610, 1
        %v2729 = vsel %vm2085, %v2726, %v2728
        %v2730 = vrot.slane %v2611, 1
        %v2731 = vsel %vm2085, %v2728, %v2730
        %v2732 = vrot.slane %v2612, 1
        %v2733 = vsel %vm2085, %v2730, %v2732
        %v2734 = vrot.slane %v2613, 1
        %v2735 = vsel %vm2085, %v2732, %v2734
        %v2736 = vrot.slane %v2614, 1
        %v2737 = vsel %vm2085, %v2734, %v2736
        %v2738 = vrot.slane %v2615, 1
        %v2739 = vsel %vm2085, %v2736, %v2738
        %v2744 = vunpack.c.l.b16 %v2617
        %v2745 = vunpack.c.l.b16 %v2618
        %v2746 = vunpack.c.l.b16 %v2619
        %v2747 = vunpack.c.l.b16 %v2620
        %v2748 = vpack.c.b16 %v2745, %v2744
        %v2749 = vpack.c.b16 %v2747, %v2746
        %v2753 = vsel %vm1424, %v2663, 0
        %v2756 = vsel %vm1424, %v2665, 0
        %v2759 = vsel %vm1424, %v2667, 0
        %v2762 = vsel %vm1424, %v2669, 0
        %v2765 = vsel %vm1424, %v2671, 0
        %v2768 = vsel %vm1424, %v2673, 0
        %v2771 = vsel %vm1424, %v2675, 0
        %v2774 = vsel %vm1424, %v2677, 0
        %v2777 = vsel %vm1424, %v2679, 0
        %v2780 = vsel %vm1424, %v2681, 0
        %v2783 = vsel %vm1424, %v2683, 0
        %v2786 = vsel %vm1424, %v2685, 0
        %v2789 = vsel %vm1424, %v2687, 0
        %v2792 = vsel %vm1424, %v2689, 0
        %v2795 = vsel %vm1424, %v2691, 0
        %v2798 = vsel %vm1424, %v2693, 0
        %v2801 = vsel %vm1424, %v2695, 0
        %v2804 = vsel %vm1424, %v2697, 0
        %v2807 = vsel %vm1424, %v2699, 0
        %v2810 = vsel %vm1424, %v2701, 0
        %v2813 = vsel %vm1424, %v2703, 0
        %v2816 = vsel %vm1424, %v2705, 0
        %v2819 = vsel %vm1424, %v2707, 0
        %v2822 = vsel %vm1424, %v2709, 0
        %v2825 = vsel %vm1424, %v2711, 0
        %v2828 = vsel %vm1424, %v2713, 0
        %v2831 = vsel %vm1424, %v2715, 0
        %v2834 = vsel %vm1424, %v2717, 0
        %v2837 = vsel %vm1424, %v2719, 0
        %v2840 = vsel %vm1424, %v2721, 0
        %v2843 = vsel %vm1424, %v2723, 0
        %v2846 = vsel %vm1424, %v2725, 0
        %v2849 = vsel %vm1424, %v2727, 0
        %v2852 = vsel %vm1424, %v2729, 0
        %v2855 = vsel %vm1424, %v2731, 0
        %v2858 = vsel %vm1424, %v2733, 0
        %v2861 = vsel %vm1424, %v2735, 0
        %v2864 = vsel %vm1424, %v2737, 0
        %v2867 = vsel %vm1424, %v2739, 0
        %2869 = vmatpush.bf16.msra.mxu0 0
        %2870 = vmatpush.bf16.msra.mxu0 0
        %2871 = vmatpush.bf16.msra.mxu0 0
        %2872 = vmatpush.bf16.msra.mxu0 0
        %2873 = vmatpush.bf16.msra.mxu0 0
        %2874 = vmatpush.bf16.msra.mxu0 0
        %2875 = vmatpush.bf16.msra.mxu0 %v2749
        %2876 = vmatpush.bf16.msra.mxu0 %v2748
        %2877 = vmatmul.bf16.gmra.mxu0 %v2753
        %v2878 = vpop.f32.mrf.mxu0
        %v2879 = vadd.f32 0.0, %v2878
        %v2880 = vpop.f32.mrf.mxu0
        %v2881 = vadd.f32 0.0, %v2880
        %2882 = vmatmul.bf16.gmra.mxu0 %v2756
        %v2883 = vpop.f32.mrf.mxu0
        %v2884 = vadd.f32 0.0, %v2883
        %v2885 = vpop.f32.mrf.mxu0
        %v2886 = vadd.f32 0.0, %v2885
        %2887 = vmatmul.bf16.gmra.mxu0 %v2759
        %v2888 = vpop.f32.mrf.mxu0
        %v2889 = vadd.f32 0.0, %v2888
        %v2890 = vpop.f32.mrf.mxu0
        %v2891 = vadd.f32 0.0, %v2890
        %2892 = vmatmul.bf16.gmra.mxu0 %v2762
        %v2893 = vpop.f32.mrf.mxu0
        %v2894 = vadd.f32 0.0, %v2893
        %v2895 = vpop.f32.mrf.mxu0
        %v2896 = vadd.f32 0.0, %v2895
        %2897 = vmatmul.bf16.gmra.mxu0 %v2765
        %v2898 = vpop.f32.mrf.mxu0
        %v2899 = vadd.f32 0.0, %v2898
        %v2900 = vpop.f32.mrf.mxu0
        %v2901 = vadd.f32 0.0, %v2900
        %2902 = vmatmul.bf16.gmra.mxu0 %v2768
        %v2903 = vpop.f32.mrf.mxu0
        %v2904 = vadd.f32 0.0, %v2903
        %v2905 = vpop.f32.mrf.mxu0
        %v2906 = vadd.f32 0.0, %v2905
        %2907 = vmatmul.bf16.gmra.mxu0 %v2771
        %v2908 = vpop.f32.mrf.mxu0
        %v2909 = vadd.f32 0.0, %v2908
        %v2910 = vpop.f32.mrf.mxu0
        %v2911 = vadd.f32 0.0, %v2910
        %2912 = vmatmul.bf16.gmra.mxu0 %v2774
        %v2913 = vpop.f32.mrf.mxu0
        %v2914 = vadd.f32 0.0, %v2913
        %v2915 = vpop.f32.mrf.mxu0
        %v2916 = vadd.f32 0.0, %v2915
        %2917 = vmatmul.bf16.gmra.mxu0 %v2777
        %v2918 = vpop.f32.mrf.mxu0
        %v2919 = vadd.f32 0.0, %v2918
        %v2920 = vpop.f32.mrf.mxu0
        %v2921 = vadd.f32 0.0, %v2920
        %2922 = vmatmul.bf16.gmra.mxu0 %v2780
        %v2923 = vpop.f32.mrf.mxu0
        %v2924 = vadd.f32 0.0, %v2923
        %v2925 = vpop.f32.mrf.mxu0
        %v2926 = vadd.f32 0.0, %v2925
        %2927 = vmatmul.bf16.gmra.mxu0 %v2783
        %v2928 = vpop.f32.mrf.mxu0
        %v2929 = vadd.f32 0.0, %v2928
        %v2930 = vpop.f32.mrf.mxu0
        %v2931 = vadd.f32 0.0, %v2930
        %2932 = vmatmul.bf16.gmra.mxu0 %v2786
        %v2933 = vpop.f32.mrf.mxu0
        %v2934 = vadd.f32 0.0, %v2933
        %v2935 = vpop.f32.mrf.mxu0
        %v2936 = vadd.f32 0.0, %v2935
        %2937 = vmatmul.bf16.gmra.mxu0 %v2789
        %v2938 = vpop.f32.mrf.mxu0
        %v2939 = vadd.f32 0.0, %v2938
        %v2940 = vpop.f32.mrf.mxu0
        %v2941 = vadd.f32 0.0, %v2940
        %2942 = vmatmul.bf16.gmra.mxu0 %v2792
        %v2943 = vpop.f32.mrf.mxu0
        %v2944 = vadd.f32 0.0, %v2943
        %v2945 = vpop.f32.mrf.mxu0
        %v2946 = vadd.f32 0.0, %v2945
        %2947 = vmatmul.bf16.gmra.mxu0 %v2795
        %v2948 = vpop.f32.mrf.mxu0
        %v2949 = vadd.f32 0.0, %v2948
        %v2950 = vpop.f32.mrf.mxu0
        %v2951 = vadd.f32 0.0, %v2950
        %2952 = vmatmul.bf16.gmra.mxu0 %v2798
        %v2953 = vpop.f32.mrf.mxu0
        %v2954 = vadd.f32 0.0, %v2953
        %v2955 = vpop.f32.mrf.mxu0
        %v2956 = vadd.f32 0.0, %v2955
        %2957 = vmatmul.bf16.gmra.mxu0 %v2801
        %v2958 = vpop.f32.mrf.mxu0
        %v2959 = vadd.f32 0.0, %v2958
        %v2960 = vpop.f32.mrf.mxu0
        %v2961 = vadd.f32 0.0, %v2960
        %2962 = vmatmul.bf16.gmra.mxu0 %v2804
        %v2963 = vpop.f32.mrf.mxu0
        %v2964 = vadd.f32 0.0, %v2963
        %v2965 = vpop.f32.mrf.mxu0
        %v2966 = vadd.f32 0.0, %v2965
        %2967 = vmatmul.bf16.gmra.mxu0 %v2807
        %v2968 = vpop.f32.mrf.mxu0
        %v2969 = vadd.f32 0.0, %v2968
        %v2970 = vpop.f32.mrf.mxu0
        %v2971 = vadd.f32 0.0, %v2970
        %2972 = vmatmul.bf16.gmra.mxu0 %v2810
        %v2973 = vpop.f32.mrf.mxu0
        %v2974 = vadd.f32 0.0, %v2973
        %v2975 = vpop.f32.mrf.mxu0
        %v2976 = vadd.f32 0.0, %v2975
        %2977 = vmatmul.bf16.gmra.mxu0 %v2813
        %v2978 = vpop.f32.mrf.mxu0
        %v2979 = vadd.f32 0.0, %v2978
        %v2980 = vpop.f32.mrf.mxu0
        %v2981 = vadd.f32 0.0, %v2980
        %2982 = vmatmul.bf16.gmra.mxu0 %v2816
        %v2983 = vpop.f32.mrf.mxu0
        %v2984 = vadd.f32 0.0, %v2983
        %v2985 = vpop.f32.mrf.mxu0
        %v2986 = vadd.f32 0.0, %v2985
        %2987 = vmatmul.bf16.gmra.mxu0 %v2819
        %v2988 = vpop.f32.mrf.mxu0
        %v2989 = vadd.f32 0.0, %v2988
        %v2990 = vpop.f32.mrf.mxu0
        %v2991 = vadd.f32 0.0, %v2990
        %2992 = vmatmul.bf16.gmra.mxu0 %v2822
        %v2993 = vpop.f32.mrf.mxu0
        %v2994 = vadd.f32 0.0, %v2993
        %v2995 = vpop.f32.mrf.mxu0
        %v2996 = vadd.f32 0.0, %v2995
        %2997 = vmatmul.bf16.gmra.mxu0 %v2825
        %v2998 = vpop.f32.mrf.mxu0
        %v2999 = vadd.f32 0.0, %v2998
        %v3000 = vpop.f32.mrf.mxu0
        %v3001 = vadd.f32 0.0, %v3000
        %3002 = vmatmul.bf16.gmra.mxu0 %v2828
        %v3003 = vpop.f32.mrf.mxu0
        %v3004 = vadd.f32 0.0, %v3003
        %v3005 = vpop.f32.mrf.mxu0
        %v3006 = vadd.f32 0.0, %v3005
        %3007 = vmatmul.bf16.gmra.mxu0 %v2831
        %v3008 = vpop.f32.mrf.mxu0
        %v3009 = vadd.f32 0.0, %v3008
        %v3010 = vpop.f32.mrf.mxu0
        %v3011 = vadd.f32 0.0, %v3010
        %3012 = vmatmul.bf16.gmra.mxu0 %v2834
        %v3013 = vpop.f32.mrf.mxu0
        %v3014 = vadd.f32 0.0, %v3013
        %v3015 = vpop.f32.mrf.mxu0
        %v3016 = vadd.f32 0.0, %v3015
        %3017 = vmatmul.bf16.gmra.mxu0 %v2837
        %v3018 = vpop.f32.mrf.mxu0
        %v3019 = vadd.f32 0.0, %v3018
        %v3020 = vpop.f32.mrf.mxu0
        %v3021 = vadd.f32 0.0, %v3020
        %3022 = vmatmul.bf16.gmra.mxu0 %v2840
        %v3023 = vpop.f32.mrf.mxu0
        %v3024 = vadd.f32 0.0, %v3023
        %v3025 = vpop.f32.mrf.mxu0
        %v3026 = vadd.f32 0.0, %v3025
        %3027 = vmatmul.bf16.gmra.mxu0 %v2843
        %v3028 = vpop.f32.mrf.mxu0
        %v3029 = vadd.f32 0.0, %v3028
        %v3030 = vpop.f32.mrf.mxu0
        %v3031 = vadd.f32 0.0, %v3030
        %3032 = vmatmul.bf16.gmra.mxu0 %v2846
        %v3033 = vpop.f32.mrf.mxu0
        %v3034 = vadd.f32 0.0, %v3033
        %v3035 = vpop.f32.mrf.mxu0
        %v3036 = vadd.f32 0.0, %v3035
        %3037 = vmatmul.bf16.gmra.mxu0 %v2849
        %v3038 = vpop.f32.mrf.mxu0
        %v3039 = vadd.f32 0.0, %v3038
        %v3040 = vpop.f32.mrf.mxu0
        %v3041 = vadd.f32 0.0, %v3040
        %3042 = vmatmul.bf16.gmra.mxu0 %v2852
        %v3043 = vpop.f32.mrf.mxu0
        %v3044 = vadd.f32 0.0, %v3043
        %v3045 = vpop.f32.mrf.mxu0
        %v3046 = vadd.f32 0.0, %v3045
        %3047 = vmatmul.bf16.gmra.mxu0 %v2855
        %v3048 = vpop.f32.mrf.mxu0
        %v3049 = vadd.f32 0.0, %v3048
        %v3050 = vpop.f32.mrf.mxu0
        %v3051 = vadd.f32 0.0, %v3050
        %3052 = vmatmul.bf16.gmra.mxu0 %v2858
        %v3053 = vpop.f32.mrf.mxu0
        %v3054 = vadd.f32 0.0, %v3053
        %v3055 = vpop.f32.mrf.mxu0
        %v3056 = vadd.f32 0.0, %v3055
        %3057 = vmatmul.bf16.gmra.mxu0 %v2861
        %v3058 = vpop.f32.mrf.mxu0
        %v3059 = vadd.f32 0.0, %v3058
        %v3060 = vpop.f32.mrf.mxu0
        %v3061 = vadd.f32 0.0, %v3060
        %3062 = vmatmul.bf16.gmra.mxu0 %v2864
        %v3063 = vpop.f32.mrf.mxu0
        %v3064 = vadd.f32 0.0, %v3063
        %v3065 = vpop.f32.mrf.mxu0
        %v3066 = vadd.f32 0.0, %v3065
        %3067 = vmatmul.bf16.gmra.mxu0 %v2867
        %v3068 = vpop.f32.mrf.mxu0
        %v3069 = vadd.f32 0.0, %v3068
        %v3070 = vpop.f32.mrf.mxu0
        %v3071 = vadd.f32 0.0, %v3070
        %3072 = vdwg.mxu0
        %v3073 = vadd.f32 %v2498, %v2879
        %v3074 = vadd.f32 %v2499, %v2881
        %v3075 = vadd.f32 %v2500, %v2884
        %v3076 = vadd.f32 %v2501, %v2886
        %v3077 = vadd.f32 %v2502, %v2889
        %v3078 = vadd.f32 %v2503, %v2891
        %v3079 = vadd.f32 %v2504, %v2894
        %v3080 = vadd.f32 %v2505, %v2896
        %v3081 = vadd.f32 %v2506, %v2899
        %v3082 = vadd.f32 %v2507, %v2901
        %v3083 = vadd.f32 %v2508, %v2904
        %v3084 = vadd.f32 %v2509, %v2906
        %v3085 = vadd.f32 %v2510, %v2909
        %v3086 = vadd.f32 %v2511, %v2911
        %v3087 = vadd.f32 %v2512, %v2914
        %v3088 = vadd.f32 %v2513, %v2916
        %v3089 = vadd.f32 %v2514, %v2919
        %v3090 = vadd.f32 %v2515, %v2921
        %v3091 = vadd.f32 %v2516, %v2924
        %v3092 = vadd.f32 %v2517, %v2926
        %v3093 = vadd.f32 %v2518, %v2929
        %v3094 = vadd.f32 %v2519, %v2931
        %v3095 = vadd.f32 %v2520, %v2934
        %v3096 = vadd.f32 %v2521, %v2936
        %v3097 = vadd.f32 %v2522, %v2939
        %v3098 = vadd.f32 %v2523, %v2941
        %v3099 = vadd.f32 %v2524, %v2944
        %v3100 = vadd.f32 %v2525, %v2946
        %v3101 = vadd.f32 %v2526, %v2949
        %v3102 = vadd.f32 %v2527, %v2951
        %v3103 = vadd.f32 %v2528, %v2954
        %v3104 = vadd.f32 %v2529, %v2956
        %v3105 = vadd.f32 %v2530, %v2959
        %v3106 = vadd.f32 %v2531, %v2961
        %v3107 = vadd.f32 %v2532, %v2964
        %v3108 = vadd.f32 %v2533, %v2966
        %v3109 = vadd.f32 %v2534, %v2969
        %v3110 = vadd.f32 %v2535, %v2971
        %v3111 = vadd.f32 %v2536, %v2974
        %v3112 = vadd.f32 %v2537, %v2976
        %v3113 = vadd.f32 %v2538, %v2979
        %v3114 = vadd.f32 %v2539, %v2981
        %v3115 = vadd.f32 %v2540, %v2984
        %v3116 = vadd.f32 %v2541, %v2986
        %v3117 = vadd.f32 %v2542, %v2989
        %v3118 = vadd.f32 %v2543, %v2991
        %v3119 = vadd.f32 %v2544, %v2994
        %v3120 = vadd.f32 %v2545, %v2996
        %v3121 = vadd.f32 %v2546, %v2999
        %v3122 = vadd.f32 %v2547, %v3001
        %v3123 = vadd.f32 %v2548, %v3004
        %v3124 = vadd.f32 %v2549, %v3006
        %v3125 = vadd.f32 %v2550, %v3009
        %v3126 = vadd.f32 %v2551, %v3011
        %v3127 = vadd.f32 %v2552, %v3014
        %v3128 = vadd.f32 %v2553, %v3016
        %v3129 = vadd.f32 %v2554, %v3019
        %v3130 = vadd.f32 %v2555, %v3021
        %v3131 = vadd.f32 %v2556, %v3024
        %v3132 = vadd.f32 %v2557, %v3026
        %v3133 = vadd.f32 %v2558, %v3029
        %v3134 = vadd.f32 %v2559, %v3031
        %v3135 = vadd.f32 %v2560, %v3034
        %v3136 = vadd.f32 %v2561, %v3036
        %v3137 = vadd.f32 %v2562, %v3039
        %v3138 = vadd.f32 %v2563, %v3041
        %v3139 = vadd.f32 %v2564, %v3044
        %v3140 = vadd.f32 %v2565, %v3046
        %v3141 = vadd.f32 %v2566, %v3049
        %v3142 = vadd.f32 %v2567, %v3051
        %v3143 = vadd.f32 %v2568, %v3054
        %v3144 = vadd.f32 %v2569, %v3056
        %v3145 = vadd.f32 %v2570, %v3059
        %v3146 = vadd.f32 %v2571, %v3061
        %v3147 = vadd.f32 %v2572, %v3064
        %v3148 = vadd.f32 %v2573, %v3066
        %v3149 = vadd.f32 %v2574, %v3069
        %v3150 = vadd.f32 %v2575, %v3071
        %s3151 = scalar_lea.vmem [#allocation7], 64
        %v3152 = vld [vmem:[%s3151] sm:$0xf]
        %v3153 = vld [vmem:[%s3151 + $0x4] sm:$0xf]
        %v3154 = vld [vmem:[%s3151 + $0x8] sm:$0xf]
        %v3155 = vld [vmem:[%s3151 + $0xc] sm:$0xf]
        %vm3156 = vsmask.f32 6400
        %v3158 = vshrl.u32 %v2576, 16
        %v3160 = vrot.slane %v3158, 1
        %v3161 = vshll.u32 %v2576, 16
        %v3163 = vrot.slane %v3161, 2
        %v3164 = vor.u32 %v3160, %v3163
        %v3166 = vshrl.u32 %v2577, 16
        %v3168 = vrot.slane %v3166, 1
        %v3169 = vshll.u32 %v2577, 16
        %v3171 = vrot.slane %v3169, 2
        %v3172 = vor.u32 %v3168, %v3171
        %v3173 = vsel %vm3156, %v3164, %v3172
        %v3175 = vshrl.u32 %v2578, 16
        %v3177 = vrot.slane %v3175, 1
        %v3178 = vshll.u32 %v2578, 16
        %v3180 = vrot.slane %v3178, 2
        %v3181 = vor.u32 %v3177, %v3180
        %v3182 = vsel %vm3156, %v3172, %v3181
        %v3184 = vshrl.u32 %v2579, 16
        %v3186 = vrot.slane %v3184, 1
        %v3187 = vshll.u32 %v2579, 16
        %v3189 = vrot.slane %v3187, 2
        %v3190 = vor.u32 %v3186, %v3189
        %v3191 = vsel %vm3156, %v3181, %v3190
        %v3193 = vshrl.u32 %v2580, 16
        %v3195 = vrot.slane %v3193, 1
        %v3196 = vshll.u32 %v2580, 16
        %v3198 = vrot.slane %v3196, 2
        %v3199 = vor.u32 %v3195, %v3198
        %v3200 = vsel %vm3156, %v3190, %v3199
        %v3202 = vshrl.u32 %v2581, 16
        %v3204 = vrot.slane %v3202, 1
        %v3205 = vshll.u32 %v2581, 16
        %v3207 = vrot.slane %v3205, 2
        %v3208 = vor.u32 %v3204, %v3207
        %v3209 = vsel %vm3156, %v3199, %v3208
        %v3211 = vshrl.u32 %v2582, 16
        %v3213 = vrot.slane %v3211, 1
        %v3214 = vshll.u32 %v2582, 16
        %v3216 = vrot.slane %v3214, 2
        %v3217 = vor.u32 %v3213, %v3216
        %v3218 = vsel %vm3156, %v3208, %v3217
        %v3220 = vshrl.u32 %v2583, 16
        %v3222 = vrot.slane %v3220, 1
        %v3223 = vshll.u32 %v2583, 16
        %v3225 = vrot.slane %v3223, 2
        %v3226 = vor.u32 %v3222, %v3225
        %v3227 = vsel %vm3156, %v3217, %v3226
        %v3229 = vshrl.u32 %v2584, 16
        %v3231 = vrot.slane %v3229, 1
        %v3232 = vshll.u32 %v2584, 16
        %v3234 = vrot.slane %v3232, 2
        %v3235 = vor.u32 %v3231, %v3234
        %v3236 = vsel %vm3156, %v3226, %v3235
        %v3238 = vshrl.u32 %v2585, 16
        %v3240 = vrot.slane %v3238, 1
        %v3241 = vshll.u32 %v2585, 16
        %v3243 = vrot.slane %v3241, 2
        %v3244 = vor.u32 %v3240, %v3243
        %v3245 = vsel %vm3156, %v3235, %v3244
        %v3247 = vshrl.u32 %v2586, 16
        %v3249 = vrot.slane %v3247, 1
        %v3250 = vshll.u32 %v2586, 16
        %v3252 = vrot.slane %v3250, 2
        %v3253 = vor.u32 %v3249, %v3252
        %v3254 = vsel %vm3156, %v3244, %v3253
        %v3256 = vshrl.u32 %v2587, 16
        %v3258 = vrot.slane %v3256, 1
        %v3259 = vshll.u32 %v2587, 16
        %v3261 = vrot.slane %v3259, 2
        %v3262 = vor.u32 %v3258, %v3261
        %v3263 = vsel %vm3156, %v3253, %v3262
        %v3265 = vshrl.u32 %v2588, 16
        %v3267 = vrot.slane %v3265, 1
        %v3268 = vshll.u32 %v2588, 16
        %v3270 = vrot.slane %v3268, 2
        %v3271 = vor.u32 %v3267, %v3270
        %v3272 = vsel %vm3156, %v3262, %v3271
        %v3274 = vshrl.u32 %v2589, 16
        %v3276 = vrot.slane %v3274, 1
        %v3277 = vshll.u32 %v2589, 16
        %v3279 = vrot.slane %v3277, 2
        %v3280 = vor.u32 %v3276, %v3279
        %v3281 = vsel %vm3156, %v3271, %v3280
        %v3283 = vshrl.u32 %v2590, 16
        %v3285 = vrot.slane %v3283, 1
        %v3286 = vshll.u32 %v2590, 16
        %v3288 = vrot.slane %v3286, 2
        %v3289 = vor.u32 %v3285, %v3288
        %v3290 = vsel %vm3156, %v3280, %v3289
        %v3292 = vshrl.u32 %v2591, 16
        %v3294 = vrot.slane %v3292, 1
        %v3295 = vshll.u32 %v2591, 16
        %v3297 = vrot.slane %v3295, 2
        %v3298 = vor.u32 %v3294, %v3297
        %v3299 = vsel %vm3156, %v3289, %v3298
        %v3301 = vshrl.u32 %v2592, 16
        %v3303 = vrot.slane %v3301, 1
        %v3304 = vshll.u32 %v2592, 16
        %v3306 = vrot.slane %v3304, 2
        %v3307 = vor.u32 %v3303, %v3306
        %v3308 = vsel %vm3156, %v3298, %v3307
        %v3310 = vshrl.u32 %v2593, 16
        %v3312 = vrot.slane %v3310, 1
        %v3313 = vshll.u32 %v2593, 16
        %v3315 = vrot.slane %v3313, 2
        %v3316 = vor.u32 %v3312, %v3315
        %v3317 = vsel %vm3156, %v3307, %v3316
        %v3319 = vshrl.u32 %v2594, 16
        %v3321 = vrot.slane %v3319, 1
        %v3322 = vshll.u32 %v2594, 16
        %v3324 = vrot.slane %v3322, 2
        %v3325 = vor.u32 %v3321, %v3324
        %v3326 = vsel %vm3156, %v3316, %v3325
        %v3328 = vshrl.u32 %v2595, 16
        %v3330 = vrot.slane %v3328, 1
        %v3331 = vshll.u32 %v2595, 16
        %v3333 = vrot.slane %v3331, 2
        %v3334 = vor.u32 %v3330, %v3333
        %v3335 = vsel %vm3156, %v3325, %v3334
        %v3337 = vshrl.u32 %v2596, 16
        %v3339 = vrot.slane %v3337, 1
        %v3340 = vshll.u32 %v2596, 16
        %v3342 = vrot.slane %v3340, 2
        %v3343 = vor.u32 %v3339, %v3342
        %v3344 = vsel %vm3156, %v3334, %v3343
        %v3346 = vshrl.u32 %v2597, 16
        %v3348 = vrot.slane %v3346, 1
        %v3349 = vshll.u32 %v2597, 16
        %v3351 = vrot.slane %v3349, 2
        %v3352 = vor.u32 %v3348, %v3351
        %v3353 = vsel %vm3156, %v3343, %v3352
        %v3355 = vshrl.u32 %v2598, 16
        %v3357 = vrot.slane %v3355, 1
        %v3358 = vshll.u32 %v2598, 16
        %v3360 = vrot.slane %v3358, 2
        %v3361 = vor.u32 %v3357, %v3360
        %v3362 = vsel %vm3156, %v3352, %v3361
        %v3364 = vshrl.u32 %v2599, 16
        %v3366 = vrot.slane %v3364, 1
        %v3367 = vshll.u32 %v2599, 16
        %v3369 = vrot.slane %v3367, 2
        %v3370 = vor.u32 %v3366, %v3369
        %v3371 = vsel %vm3156, %v3361, %v3370
        %v3373 = vshrl.u32 %v2600, 16
        %v3375 = vrot.slane %v3373, 1
        %v3376 = vshll.u32 %v2600, 16
        %v3378 = vrot.slane %v3376, 2
        %v3379 = vor.u32 %v3375, %v3378
        %v3380 = vsel %vm3156, %v3370, %v3379
        %v3382 = vshrl.u32 %v2601, 16
        %v3384 = vrot.slane %v3382, 1
        %v3385 = vshll.u32 %v2601, 16
        %v3387 = vrot.slane %v3385, 2
        %v3388 = vor.u32 %v3384, %v3387
        %v3389 = vsel %vm3156, %v3379, %v3388
        %v3391 = vshrl.u32 %v2602, 16
        %v3393 = vrot.slane %v3391, 1
        %v3394 = vshll.u32 %v2602, 16
        %v3396 = vrot.slane %v3394, 2
        %v3397 = vor.u32 %v3393, %v3396
        %v3398 = vsel %vm3156, %v3388, %v3397
        %v3400 = vshrl.u32 %v2603, 16
        %v3402 = vrot.slane %v3400, 1
        %v3403 = vshll.u32 %v2603, 16
        %v3405 = vrot.slane %v3403, 2
        %v3406 = vor.u32 %v3402, %v3405
        %v3407 = vsel %vm3156, %v3397, %v3406
        %v3409 = vshrl.u32 %v2604, 16
        %v3411 = vrot.slane %v3409, 1
        %v3412 = vshll.u32 %v2604, 16
        %v3414 = vrot.slane %v3412, 2
        %v3415 = vor.u32 %v3411, %v3414
        %v3416 = vsel %vm3156, %v3406, %v3415
        %v3418 = vshrl.u32 %v2605, 16
        %v3420 = vrot.slane %v3418, 1
        %v3421 = vshll.u32 %v2605, 16
        %v3423 = vrot.slane %v3421, 2
        %v3424 = vor.u32 %v3420, %v3423
        %v3425 = vsel %vm3156, %v3415, %v3424
        %v3427 = vshrl.u32 %v2606, 16
        %v3429 = vrot.slane %v3427, 1
        %v3430 = vshll.u32 %v2606, 16
        %v3432 = vrot.slane %v3430, 2
        %v3433 = vor.u32 %v3429, %v3432
        %v3434 = vsel %vm3156, %v3424, %v3433
        %v3436 = vshrl.u32 %v2607, 16
        %v3438 = vrot.slane %v3436, 1
        %v3439 = vshll.u32 %v2607, 16
        %v3441 = vrot.slane %v3439, 2
        %v3442 = vor.u32 %v3438, %v3441
        %v3443 = vsel %vm3156, %v3433, %v3442
        %v3445 = vshrl.u32 %v2608, 16
        %v3447 = vrot.slane %v3445, 1
        %v3448 = vshll.u32 %v2608, 16
        %v3450 = vrot.slane %v3448, 2
        %v3451 = vor.u32 %v3447, %v3450
        %v3452 = vsel %vm3156, %v3442, %v3451
        %v3454 = vshrl.u32 %v2609, 16
        %v3456 = vrot.slane %v3454, 1
        %v3457 = vshll.u32 %v2609, 16
        %v3459 = vrot.slane %v3457, 2
        %v3460 = vor.u32 %v3456, %v3459
        %v3461 = vsel %vm3156, %v3451, %v3460
        %v3463 = vshrl.u32 %v2610, 16
        %v3465 = vrot.slane %v3463, 1
        %v3466 = vshll.u32 %v2610, 16
        %v3468 = vrot.slane %v3466, 2
        %v3469 = vor.u32 %v3465, %v3468
        %v3470 = vsel %vm3156, %v3460, %v3469
        %v3472 = vshrl.u32 %v2611, 16
        %v3474 = vrot.slane %v3472, 1
        %v3475 = vshll.u32 %v2611, 16
        %v3477 = vrot.slane %v3475, 2
        %v3478 = vor.u32 %v3474, %v3477
        %v3479 = vsel %vm3156, %v3469, %v3478
        %v3481 = vshrl.u32 %v2612, 16
        %v3483 = vrot.slane %v3481, 1
        %v3484 = vshll.u32 %v2612, 16
        %v3486 = vrot.slane %v3484, 2
        %v3487 = vor.u32 %v3483, %v3486
        %v3488 = vsel %vm3156, %v3478, %v3487
        %v3490 = vshrl.u32 %v2613, 16
        %v3492 = vrot.slane %v3490, 1
        %v3493 = vshll.u32 %v2613, 16
        %v3495 = vrot.slane %v3493, 2
        %v3496 = vor.u32 %v3492, %v3495
        %v3497 = vsel %vm3156, %v3487, %v3496
        %v3499 = vshrl.u32 %v2614, 16
        %v3501 = vrot.slane %v3499, 1
        %v3502 = vshll.u32 %v2614, 16
        %v3504 = vrot.slane %v3502, 2
        %v3505 = vor.u32 %v3501, %v3504
        %v3506 = vsel %vm3156, %v3496, %v3505
        %v3508 = vshrl.u32 %v2615, 16
        %v3510 = vrot.slane %v3508, 1
        %v3511 = vshll.u32 %v2615, 16
        %v3513 = vrot.slane %v3511, 2
        %v3514 = vor.u32 %v3510, %v3513
        %v3515 = vsel %vm3156, %v3505, %v3514
        %v3520 = vunpack.c.l.b16 %v3152
        %v3521 = vunpack.c.l.b16 %v3153
        %v3522 = vunpack.c.l.b16 %v3154
        %v3523 = vunpack.c.l.b16 %v3155
        %v3524 = vpack.c.b16 %v3521, %v3520
        %v3525 = vpack.c.b16 %v3523, %v3522
        %v3529 = vsel %vm1424, %v3173, 0
        %v3532 = vsel %vm1424, %v3182, 0
        %v3535 = vsel %vm1424, %v3191, 0
        %v3538 = vsel %vm1424, %v3200, 0
        %v3541 = vsel %vm1424, %v3209, 0
        %v3544 = vsel %vm1424, %v3218, 0
        %v3547 = vsel %vm1424, %v3227, 0
        %v3550 = vsel %vm1424, %v3236, 0
        %v3553 = vsel %vm1424, %v3245, 0
        %v3556 = vsel %vm1424, %v3254, 0
        %v3559 = vsel %vm1424, %v3263, 0
        %v3562 = vsel %vm1424, %v3272, 0
        %v3565 = vsel %vm1424, %v3281, 0
        %v3568 = vsel %vm1424, %v3290, 0
        %v3571 = vsel %vm1424, %v3299, 0
        %v3574 = vsel %vm1424, %v3308, 0
        %v3577 = vsel %vm1424, %v3317, 0
        %v3580 = vsel %vm1424, %v3326, 0
        %v3583 = vsel %vm1424, %v3335, 0
        %v3586 = vsel %vm1424, %v3344, 0
        %v3589 = vsel %vm1424, %v3353, 0
        %v3592 = vsel %vm1424, %v3362, 0
        %v3595 = vsel %vm1424, %v3371, 0
        %v3598 = vsel %vm1424, %v3380, 0
        %v3601 = vsel %vm1424, %v3389, 0
        %v3604 = vsel %vm1424, %v3398, 0
        %v3607 = vsel %vm1424, %v3407, 0
        %v3610 = vsel %vm1424, %v3416, 0
        %v3613 = vsel %vm1424, %v3425, 0
        %v3616 = vsel %vm1424, %v3434, 0
        %v3619 = vsel %vm1424, %v3443, 0
        %v3622 = vsel %vm1424, %v3452, 0
        %v3625 = vsel %vm1424, %v3461, 0
        %v3628 = vsel %vm1424, %v3470, 0
        %v3631 = vsel %vm1424, %v3479, 0
        %v3634 = vsel %vm1424, %v3488, 0
        %v3637 = vsel %vm1424, %v3497, 0
        %v3640 = vsel %vm1424, %v3506, 0
        %v3643 = vsel %vm1424, %v3515, 0
        %3645 = vmatpush.bf16.msra.mxu0 0
        %3646 = vmatpush.bf16.msra.mxu0 0
        %3647 = vmatpush.bf16.msra.mxu0 0
        %3648 = vmatpush.bf16.msra.mxu0 0
        %3649 = vmatpush.bf16.msra.mxu0 0
        %3650 = vmatpush.bf16.msra.mxu0 0
        %3651 = vmatpush.bf16.msra.mxu0 %v3525
        %3652 = vmatpush.bf16.msra.mxu0 %v3524
        %3653 = vmatmul.bf16.gmra.mxu0 %v3529
        %v3654 = vpop.f32.mrf.mxu0
        %v3655 = vadd.f32 0.0, %v3654
        %v3656 = vpop.f32.mrf.mxu0
        %v3657 = vadd.f32 0.0, %v3656
        %3658 = vmatmul.bf16.gmra.mxu0 %v3532
        %v3659 = vpop.f32.mrf.mxu0
        %v3660 = vadd.f32 0.0, %v3659
        %v3661 = vpop.f32.mrf.mxu0
        %v3662 = vadd.f32 0.0, %v3661
        %3663 = vmatmul.bf16.gmra.mxu0 %v3535
        %v3664 = vpop.f32.mrf.mxu0
        %v3665 = vadd.f32 0.0, %v3664
        %v3666 = vpop.f32.mrf.mxu0
        %v3667 = vadd.f32 0.0, %v3666
        %3668 = vmatmul.bf16.gmra.mxu0 %v3538
        %v3669 = vpop.f32.mrf.mxu0
        %v3670 = vadd.f32 0.0, %v3669
        %v3671 = vpop.f32.mrf.mxu0
        %v3672 = vadd.f32 0.0, %v3671
        %3673 = vmatmul.bf16.gmra.mxu0 %v3541
        %v3674 = vpop.f32.mrf.mxu0
        %v3675 = vadd.f32 0.0, %v3674
        %v3676 = vpop.f32.mrf.mxu0
        %v3677 = vadd.f32 0.0, %v3676
        %3678 = vmatmul.bf16.gmra.mxu0 %v3544
        %v3679 = vpop.f32.mrf.mxu0
        %v3680 = vadd.f32 0.0, %v3679
        %v3681 = vpop.f32.mrf.mxu0
        %v3682 = vadd.f32 0.0, %v3681
        %3683 = vmatmul.bf16.gmra.mxu0 %v3547
        %v3684 = vpop.f32.mrf.mxu0
        %v3685 = vadd.f32 0.0, %v3684
        %v3686 = vpop.f32.mrf.mxu0
        %v3687 = vadd.f32 0.0, %v3686
        %3688 = vmatmul.bf16.gmra.mxu0 %v3550
        %v3689 = vpop.f32.mrf.mxu0
        %v3690 = vadd.f32 0.0, %v3689
        %v3691 = vpop.f32.mrf.mxu0
        %v3692 = vadd.f32 0.0, %v3691
        %3693 = vmatmul.bf16.gmra.mxu0 %v3553
        %v3694 = vpop.f32.mrf.mxu0
        %v3695 = vadd.f32 0.0, %v3694
        %v3696 = vpop.f32.mrf.mxu0
        %v3697 = vadd.f32 0.0, %v3696
        %3698 = vmatmul.bf16.gmra.mxu0 %v3556
        %v3699 = vpop.f32.mrf.mxu0
        %v3700 = vadd.f32 0.0, %v3699
        %v3701 = vpop.f32.mrf.mxu0
        %v3702 = vadd.f32 0.0, %v3701
        %3703 = vmatmul.bf16.gmra.mxu0 %v3559
        %v3704 = vpop.f32.mrf.mxu0
        %v3705 = vadd.f32 0.0, %v3704
        %v3706 = vpop.f32.mrf.mxu0
        %v3707 = vadd.f32 0.0, %v3706
        %3708 = vmatmul.bf16.gmra.mxu0 %v3562
        %v3709 = vpop.f32.mrf.mxu0
        %v3710 = vadd.f32 0.0, %v3709
        %v3711 = vpop.f32.mrf.mxu0
        %v3712 = vadd.f32 0.0, %v3711
        %3713 = vmatmul.bf16.gmra.mxu0 %v3565
        %v3714 = vpop.f32.mrf.mxu0
        %v3715 = vadd.f32 0.0, %v3714
        %v3716 = vpop.f32.mrf.mxu0
        %v3717 = vadd.f32 0.0, %v3716
        %3718 = vmatmul.bf16.gmra.mxu0 %v3568
        %v3719 = vpop.f32.mrf.mxu0
        %v3720 = vadd.f32 0.0, %v3719
        %v3721 = vpop.f32.mrf.mxu0
        %v3722 = vadd.f32 0.0, %v3721
        %3723 = vmatmul.bf16.gmra.mxu0 %v3571
        %v3724 = vpop.f32.mrf.mxu0
        %v3725 = vadd.f32 0.0, %v3724
        %v3726 = vpop.f32.mrf.mxu0
        %v3727 = vadd.f32 0.0, %v3726
        %3728 = vmatmul.bf16.gmra.mxu0 %v3574
        %v3729 = vpop.f32.mrf.mxu0
        %v3730 = vadd.f32 0.0, %v3729
        %v3731 = vpop.f32.mrf.mxu0
        %v3732 = vadd.f32 0.0, %v3731
        %3733 = vmatmul.bf16.gmra.mxu0 %v3577
        %v3734 = vpop.f32.mrf.mxu0
        %v3735 = vadd.f32 0.0, %v3734
        %v3736 = vpop.f32.mrf.mxu0
        %v3737 = vadd.f32 0.0, %v3736
        %3738 = vmatmul.bf16.gmra.mxu0 %v3580
        %v3739 = vpop.f32.mrf.mxu0
        %v3740 = vadd.f32 0.0, %v3739
        %v3741 = vpop.f32.mrf.mxu0
        %v3742 = vadd.f32 0.0, %v3741
        %3743 = vmatmul.bf16.gmra.mxu0 %v3583
        %v3744 = vpop.f32.mrf.mxu0
        %v3745 = vadd.f32 0.0, %v3744
        %v3746 = vpop.f32.mrf.mxu0
        %v3747 = vadd.f32 0.0, %v3746
        %3748 = vmatmul.bf16.gmra.mxu0 %v3586
        %v3749 = vpop.f32.mrf.mxu0
        %v3750 = vadd.f32 0.0, %v3749
        %v3751 = vpop.f32.mrf.mxu0
        %v3752 = vadd.f32 0.0, %v3751
        %3753 = vmatmul.bf16.gmra.mxu0 %v3589
        %v3754 = vpop.f32.mrf.mxu0
        %v3755 = vadd.f32 0.0, %v3754
        %v3756 = vpop.f32.mrf.mxu0
        %v3757 = vadd.f32 0.0, %v3756
        %3758 = vmatmul.bf16.gmra.mxu0 %v3592
        %v3759 = vpop.f32.mrf.mxu0
        %v3760 = vadd.f32 0.0, %v3759
        %v3761 = vpop.f32.mrf.mxu0
        %v3762 = vadd.f32 0.0, %v3761
        %3763 = vmatmul.bf16.gmra.mxu0 %v3595
        %v3764 = vpop.f32.mrf.mxu0
        %v3765 = vadd.f32 0.0, %v3764
        %v3766 = vpop.f32.mrf.mxu0
        %v3767 = vadd.f32 0.0, %v3766
        %3768 = vmatmul.bf16.gmra.mxu0 %v3598
        %v3769 = vpop.f32.mrf.mxu0
        %v3770 = vadd.f32 0.0, %v3769
        %v3771 = vpop.f32.mrf.mxu0
        %v3772 = vadd.f32 0.0, %v3771
        %3773 = vmatmul.bf16.gmra.mxu0 %v3601
        %v3774 = vpop.f32.mrf.mxu0
        %v3775 = vadd.f32 0.0, %v3774
        %v3776 = vpop.f32.mrf.mxu0
        %v3777 = vadd.f32 0.0, %v3776
        %3778 = vmatmul.bf16.gmra.mxu0 %v3604
        %v3779 = vpop.f32.mrf.mxu0
        %v3780 = vadd.f32 0.0, %v3779
        %v3781 = vpop.f32.mrf.mxu0
        %v3782 = vadd.f32 0.0, %v3781
        %3783 = vmatmul.bf16.gmra.mxu0 %v3607
        %v3784 = vpop.f32.mrf.mxu0
        %v3785 = vadd.f32 0.0, %v3784
        %v3786 = vpop.f32.mrf.mxu0
        %v3787 = vadd.f32 0.0, %v3786
        %3788 = vmatmul.bf16.gmra.mxu0 %v3610
        %v3789 = vpop.f32.mrf.mxu0
        %v3790 = vadd.f32 0.0, %v3789
        %v3791 = vpop.f32.mrf.mxu0
        %v3792 = vadd.f32 0.0, %v3791
        %3793 = vmatmul.bf16.gmra.mxu0 %v3613
        %v3794 = vpop.f32.mrf.mxu0
        %v3795 = vadd.f32 0.0, %v3794
        %v3796 = vpop.f32.mrf.mxu0
        %v3797 = vadd.f32 0.0, %v3796
        %3798 = vmatmul.bf16.gmra.mxu0 %v3616
        %v3799 = vpop.f32.mrf.mxu0
        %v3800 = vadd.f32 0.0, %v3799
        %v3801 = vpop.f32.mrf.mxu0
        %v3802 = vadd.f32 0.0, %v3801
        %3803 = vmatmul.bf16.gmra.mxu0 %v3619
        %v3804 = vpop.f32.mrf.mxu0
        %v3805 = vadd.f32 0.0, %v3804
        %v3806 = vpop.f32.mrf.mxu0
        %v3807 = vadd.f32 0.0, %v3806
        %3808 = vmatmul.bf16.gmra.mxu0 %v3622
        %v3809 = vpop.f32.mrf.mxu0
        %v3810 = vadd.f32 0.0, %v3809
        %v3811 = vpop.f32.mrf.mxu0
        %v3812 = vadd.f32 0.0, %v3811
        %3813 = vmatmul.bf16.gmra.mxu0 %v3625
        %v3814 = vpop.f32.mrf.mxu0
        %v3815 = vadd.f32 0.0, %v3814
        %v3816 = vpop.f32.mrf.mxu0
        %v3817 = vadd.f32 0.0, %v3816
        %3818 = vmatmul.bf16.gmra.mxu0 %v3628
        %v3819 = vpop.f32.mrf.mxu0
        %v3820 = vadd.f32 0.0, %v3819
        %v3821 = vpop.f32.mrf.mxu0
        %v3822 = vadd.f32 0.0, %v3821
        %3823 = vmatmul.bf16.gmra.mxu0 %v3631
        %v3824 = vpop.f32.mrf.mxu0
        %v3825 = vadd.f32 0.0, %v3824
        %v3826 = vpop.f32.mrf.mxu0
        %v3827 = vadd.f32 0.0, %v3826
        %3828 = vmatmul.bf16.gmra.mxu0 %v3634
        %v3829 = vpop.f32.mrf.mxu0
        %v3830 = vadd.f32 0.0, %v3829
        %v3831 = vpop.f32.mrf.mxu0
        %v3832 = vadd.f32 0.0, %v3831
        %3833 = vmatmul.bf16.gmra.mxu0 %v3637
        %v3834 = vpop.f32.mrf.mxu0
        %v3835 = vadd.f32 0.0, %v3834
        %v3836 = vpop.f32.mrf.mxu0
        %v3837 = vadd.f32 0.0, %v3836
        %3838 = vmatmul.bf16.gmra.mxu0 %v3640
        %v3839 = vpop.f32.mrf.mxu0
        %v3840 = vadd.f32 0.0, %v3839
        %v3841 = vpop.f32.mrf.mxu0
        %v3842 = vadd.f32 0.0, %v3841
        %3843 = vmatmul.bf16.gmra.mxu0 %v3643
        %v3844 = vpop.f32.mrf.mxu0
        %v3845 = vadd.f32 0.0, %v3844
        %v3846 = vpop.f32.mrf.mxu0
        %v3847 = vadd.f32 0.0, %v3846
        %3848 = vdwg.mxu0
        %v3849 = vadd.f32 %v3073, %v3655
        %v3850 = vadd.f32 %v3074, %v3657
        %v3851 = vadd.f32 %v3075, %v3660
        %v3852 = vadd.f32 %v3076, %v3662
        %v3853 = vadd.f32 %v3077, %v3665
        %v3854 = vadd.f32 %v3078, %v3667
        %v3855 = vadd.f32 %v3079, %v3670
        %v3856 = vadd.f32 %v3080, %v3672
        %v3857 = vadd.f32 %v3081, %v3675
        %v3858 = vadd.f32 %v3082, %v3677
        %v3859 = vadd.f32 %v3083, %v3680
        %v3860 = vadd.f32 %v3084, %v3682
        %v3861 = vadd.f32 %v3085, %v3685
        %v3862 = vadd.f32 %v3086, %v3687
        %v3863 = vadd.f32 %v3087, %v3690
        %v3864 = vadd.f32 %v3088, %v3692
        %v3865 = vadd.f32 %v3089, %v3695
        %v3866 = vadd.f32 %v3090, %v3697
        %v3867 = vadd.f32 %v3091, %v3700
        %v3868 = vadd.f32 %v3092, %v3702
        %v3869 = vadd.f32 %v3093, %v3705
        %v3870 = vadd.f32 %v3094, %v3707
        %v3871 = vadd.f32 %v3095, %v3710
        %v3872 = vadd.f32 %v3096, %v3712
        %v3873 = vadd.f32 %v3097, %v3715
        %v3874 = vadd.f32 %v3098, %v3717
        %v3875 = vadd.f32 %v3099, %v3720
        %v3876 = vadd.f32 %v3100, %v3722
        %v3877 = vadd.f32 %v3101, %v3725
        %v3878 = vadd.f32 %v3102, %v3727
        %v3879 = vadd.f32 %v3103, %v3730
        %v3880 = vadd.f32 %v3104, %v3732
        %v3881 = vadd.f32 %v3105, %v3735
        %v3882 = vadd.f32 %v3106, %v3737
        %v3883 = vadd.f32 %v3107, %v3740
        %v3884 = vadd.f32 %v3108, %v3742
        %v3885 = vadd.f32 %v3109, %v3745
        %v3886 = vadd.f32 %v3110, %v3747
        %v3887 = vadd.f32 %v3111, %v3750
        %v3888 = vadd.f32 %v3112, %v3752
        %v3889 = vadd.f32 %v3113, %v3755
        %v3890 = vadd.f32 %v3114, %v3757
        %v3891 = vadd.f32 %v3115, %v3760
        %v3892 = vadd.f32 %v3116, %v3762
        %v3893 = vadd.f32 %v3117, %v3765
        %v3894 = vadd.f32 %v3118, %v3767
        %v3895 = vadd.f32 %v3119, %v3770
        %v3896 = vadd.f32 %v3120, %v3772
        %v3897 = vadd.f32 %v3121, %v3775
        %v3898 = vadd.f32 %v3122, %v3777
        %v3899 = vadd.f32 %v3123, %v3780
        %v3900 = vadd.f32 %v3124, %v3782
        %v3901 = vadd.f32 %v3125, %v3785
        %v3902 = vadd.f32 %v3126, %v3787
        %v3903 = vadd.f32 %v3127, %v3790
        %v3904 = vadd.f32 %v3128, %v3792
        %v3905 = vadd.f32 %v3129, %v3795
        %v3906 = vadd.f32 %v3130, %v3797
        %v3907 = vadd.f32 %v3131, %v3800
        %v3908 = vadd.f32 %v3132, %v3802
        %v3909 = vadd.f32 %v3133, %v3805
        %v3910 = vadd.f32 %v3134, %v3807
        %v3911 = vadd.f32 %v3135, %v3810
        %v3912 = vadd.f32 %v3136, %v3812
        %v3913 = vadd.f32 %v3137, %v3815
        %v3914 = vadd.f32 %v3138, %v3817
        %v3915 = vadd.f32 %v3139, %v3820
        %v3916 = vadd.f32 %v3140, %v3822
        %v3917 = vadd.f32 %v3141, %v3825
        %v3918 = vadd.f32 %v3142, %v3827
        %v3919 = vadd.f32 %v3143, %v3830
        %v3920 = vadd.f32 %v3144, %v3832
        %v3921 = vadd.f32 %v3145, %v3835
        %v3922 = vadd.f32 %v3146, %v3837
        %v3923 = vadd.f32 %v3147, %v3840
        %v3924 = vadd.f32 %v3148, %v3842
        %v3925 = vadd.f32 %v3149, %v3845
        %v3926 = vadd.f32 %v3150, %v3847
        %s3927 = scalar_lea.vmem [#allocation7], 80
        %v3928 = vld [vmem:[%s3927] sm:$0xf]
        %v3929 = vld [vmem:[%s3927 + $0x4] sm:$0xf]
        %v3930 = vld [vmem:[%s3927 + $0x8] sm:$0xf]
        %v3931 = vld [vmem:[%s3927 + $0xc] sm:$0xf]
        %vm3932 = vcmask 1045504
        %v3933 = vrot.slane %v2576, 2
        %v3934 = vrot.slane %v2577, 2
        %v3935 = vsel %vm3932, %v3933, %v3934
        %v3936 = vrot.slane %v2578, 2
        %v3937 = vsel %vm3932, %v3934, %v3936
        %v3938 = vrot.slane %v2579, 2
        %v3939 = vsel %vm3932, %v3936, %v3938
        %v3940 = vrot.slane %v2580, 2
        %v3941 = vsel %vm3932, %v3938, %v3940
        %v3942 = vrot.slane %v2581, 2
        %v3943 = vsel %vm3932, %v3940, %v3942
        %v3944 = vrot.slane %v2582, 2
        %v3945 = vsel %vm3932, %v3942, %v3944
        %v3946 = vrot.slane %v2583, 2
        %v3947 = vsel %vm3932, %v3944, %v3946
        %v3948 = vrot.slane %v2584, 2
        %v3949 = vsel %vm3932, %v3946, %v3948
        %v3950 = vrot.slane %v2585, 2
        %v3951 = vsel %vm3932, %v3948, %v3950
        %v3952 = vrot.slane %v2586, 2
        %v3953 = vsel %vm3932, %v3950, %v3952
        %v3954 = vrot.slane %v2587, 2
        %v3955 = vsel %vm3932, %v3952, %v3954
        %v3956 = vrot.slane %v2588, 2
        %v3957 = vsel %vm3932, %v3954, %v3956
        %v3958 = vrot.slane %v2589, 2
        %v3959 = vsel %vm3932, %v3956, %v3958
        %v3960 = vrot.slane %v2590, 2
        %v3961 = vsel %vm3932, %v3958, %v3960
        %v3962 = vrot.slane %v2591, 2
        %v3963 = vsel %vm3932, %v3960, %v3962
        %v3964 = vrot.slane %v2592, 2
        %v3965 = vsel %vm3932, %v3962, %v3964
        %v3966 = vrot.slane %v2593, 2
        %v3967 = vsel %vm3932, %v3964, %v3966
        %v3968 = vrot.slane %v2594, 2
        %v3969 = vsel %vm3932, %v3966, %v3968
        %v3970 = vrot.slane %v2595, 2
        %v3971 = vsel %vm3932, %v3968, %v3970
        %v3972 = vrot.slane %v2596, 2
        %v3973 = vsel %vm3932, %v3970, %v3972
        %v3974 = vrot.slane %v2597, 2
        %v3975 = vsel %vm3932, %v3972, %v3974
        %v3976 = vrot.slane %v2598, 2
        %v3977 = vsel %vm3932, %v3974, %v3976
        %v3978 = vrot.slane %v2599, 2
        %v3979 = vsel %vm3932, %v3976, %v3978
        %v3980 = vrot.slane %v2600, 2
        %v3981 = vsel %vm3932, %v3978, %v3980
        %v3982 = vrot.slane %v2601, 2
        %v3983 = vsel %vm3932, %v3980, %v3982
        %v3984 = vrot.slane %v2602, 2
        %v3985 = vsel %vm3932, %v3982, %v3984
        %v3986 = vrot.slane %v2603, 2
        %v3987 = vsel %vm3932, %v3984, %v3986
        %v3988 = vrot.slane %v2604, 2
        %v3989 = vsel %vm3932, %v3986, %v3988
        %v3990 = vrot.slane %v2605, 2
        %v3991 = vsel %vm3932, %v3988, %v3990
        %v3992 = vrot.slane %v2606, 2
        %v3993 = vsel %vm3932, %v3990, %v3992
        %v3994 = vrot.slane %v2607, 2
        %v3995 = vsel %vm3932, %v3992, %v3994
        %v3996 = vrot.slane %v2608, 2
        %v3997 = vsel %vm3932, %v3994, %v3996
        %v3998 = vrot.slane %v2609, 2
        %v3999 = vsel %vm3932, %v3996, %v3998
        %v4000 = vrot.slane %v2610, 2
        %v4001 = vsel %vm3932, %v3998, %v4000
        %v4002 = vrot.slane %v2611, 2
        %v4003 = vsel %vm3932, %v4000, %v4002
        %v4004 = vrot.slane %v2612, 2
        %v4005 = vsel %vm3932, %v4002, %v4004
        %v4006 = vrot.slane %v2613, 2
        %v4007 = vsel %vm3932, %v4004, %v4006
        %v4008 = vrot.slane %v2614, 2
        %v4009 = vsel %vm3932, %v4006, %v4008
        %v4010 = vrot.slane %v2615, 2
        %v4011 = vsel %vm3932, %v4008, %v4010
        %v4016 = vunpack.c.l.b16 %v3928
        %v4017 = vunpack.c.l.b16 %v3929
        %v4018 = vunpack.c.l.b16 %v3930
        %v4019 = vunpack.c.l.b16 %v3931
        %v4020 = vpack.c.b16 %v4017, %v4016
        %v4021 = vpack.c.b16 %v4019, %v4018
        %v4025 = vsel %vm1424, %v3935, 0
        %v4028 = vsel %vm1424, %v3937, 0
        %v4031 = vsel %vm1424, %v3939, 0
        %v4034 = vsel %vm1424, %v3941, 0
        %v4037 = vsel %vm1424, %v3943, 0
        %v4040 = vsel %vm1424, %v3945, 0
        %v4043 = vsel %vm1424, %v3947, 0
        %v4046 = vsel %vm1424, %v3949, 0
        %v4049 = vsel %vm1424, %v3951, 0
        %v4052 = vsel %vm1424, %v3953, 0
        %v4055 = vsel %vm1424, %v3955, 0
        %v4058 = vsel %vm1424, %v3957, 0
        %v4061 = vsel %vm1424, %v3959, 0
        %v4064 = vsel %vm1424, %v3961, 0
        %v4067 = vsel %vm1424, %v3963, 0
        %v4070 = vsel %vm1424, %v3965, 0
        %v4073 = vsel %vm1424, %v3967, 0
        %v4076 = vsel %vm1424, %v3969, 0
        %v4079 = vsel %vm1424, %v3971, 0
        %v4082 = vsel %vm1424, %v3973, 0
        %v4085 = vsel %vm1424, %v3975, 0
        %v4088 = vsel %vm1424, %v3977, 0
        %v4091 = vsel %vm1424, %v3979, 0
        %v4094 = vsel %vm1424, %v3981, 0
        %v4097 = vsel %vm1424, %v3983, 0
        %v4100 = vsel %vm1424, %v3985, 0
        %v4103 = vsel %vm1424, %v3987, 0
        %v4106 = vsel %vm1424, %v3989, 0
        %v4109 = vsel %vm1424, %v3991, 0
        %v4112 = vsel %vm1424, %v3993, 0
        %v4115 = vsel %vm1424, %v3995, 0
        %v4118 = vsel %vm1424, %v3997, 0
        %v4121 = vsel %vm1424, %v3999, 0
        %v4124 = vsel %vm1424, %v4001, 0
        %v4127 = vsel %vm1424, %v4003, 0
        %v4130 = vsel %vm1424, %v4005, 0
        %v4133 = vsel %vm1424, %v4007, 0
        %v4136 = vsel %vm1424, %v4009, 0
        %v4139 = vsel %vm1424, %v4011, 0
        %4141 = vmatpush.bf16.msra.mxu0 0
        %4142 = vmatpush.bf16.msra.mxu0 0
        %4143 = vmatpush.bf16.msra.mxu0 0
        %4144 = vmatpush.bf16.msra.mxu0 0
        %4145 = vmatpush.bf16.msra.mxu0 0
        %4146 = vmatpush.bf16.msra.mxu0 0
        %4147 = vmatpush.bf16.msra.mxu0 %v4021
        %4148 = vmatpush.bf16.msra.mxu0 %v4020
        %4149 = vmatmul.bf16.gmra.mxu0 %v4025
        %v4150 = vpop.f32.mrf.mxu0
        %v4151 = vadd.f32 0.0, %v4150
        %v4152 = vpop.f32.mrf.mxu0
        %v4153 = vadd.f32 0.0, %v4152
        %4154 = vmatmul.bf16.gmra.mxu0 %v4028
        %v4155 = vpop.f32.mrf.mxu0
        %v4156 = vadd.f32 0.0, %v4155
        %v4157 = vpop.f32.mrf.mxu0
        %v4158 = vadd.f32 0.0, %v4157
        %4159 = vmatmul.bf16.gmra.mxu0 %v4031
        %v4160 = vpop.f32.mrf.mxu0
        %v4161 = vadd.f32 0.0, %v4160
        %v4162 = vpop.f32.mrf.mxu0
        %v4163 = vadd.f32 0.0, %v4162
        %4164 = vmatmul.bf16.gmra.mxu0 %v4034
        %v4165 = vpop.f32.mrf.mxu0
        %v4166 = vadd.f32 0.0, %v4165
        %v4167 = vpop.f32.mrf.mxu0
        %v4168 = vadd.f32 0.0, %v4167
        %4169 = vmatmul.bf16.gmra.mxu0 %v4037
        %v4170 = vpop.f32.mrf.mxu0
        %v4171 = vadd.f32 0.0, %v4170
        %v4172 = vpop.f32.mrf.mxu0
        %v4173 = vadd.f32 0.0, %v4172
        %4174 = vmatmul.bf16.gmra.mxu0 %v4040
        %v4175 = vpop.f32.mrf.mxu0
        %v4176 = vadd.f32 0.0, %v4175
        %v4177 = vpop.f32.mrf.mxu0
        %v4178 = vadd.f32 0.0, %v4177
        %4179 = vmatmul.bf16.gmra.mxu0 %v4043
        %v4180 = vpop.f32.mrf.mxu0
        %v4181 = vadd.f32 0.0, %v4180
        %v4182 = vpop.f32.mrf.mxu0
        %v4183 = vadd.f32 0.0, %v4182
        %4184 = vmatmul.bf16.gmra.mxu0 %v4046
        %v4185 = vpop.f32.mrf.mxu0
        %v4186 = vadd.f32 0.0, %v4185
        %v4187 = vpop.f32.mrf.mxu0
        %v4188 = vadd.f32 0.0, %v4187
        %4189 = vmatmul.bf16.gmra.mxu0 %v4049
        %v4190 = vpop.f32.mrf.mxu0
        %v4191 = vadd.f32 0.0, %v4190
        %v4192 = vpop.f32.mrf.mxu0
        %v4193 = vadd.f32 0.0, %v4192
        %4194 = vmatmul.bf16.gmra.mxu0 %v4052
        %v4195 = vpop.f32.mrf.mxu0
        %v4196 = vadd.f32 0.0, %v4195
        %v4197 = vpop.f32.mrf.mxu0
        %v4198 = vadd.f32 0.0, %v4197
        %4199 = vmatmul.bf16.gmra.mxu0 %v4055
        %v4200 = vpop.f32.mrf.mxu0
        %v4201 = vadd.f32 0.0, %v4200
        %v4202 = vpop.f32.mrf.mxu0
        %v4203 = vadd.f32 0.0, %v4202
        %4204 = vmatmul.bf16.gmra.mxu0 %v4058
        %v4205 = vpop.f32.mrf.mxu0
        %v4206 = vadd.f32 0.0, %v4205
        %v4207 = vpop.f32.mrf.mxu0
        %v4208 = vadd.f32 0.0, %v4207
        %4209 = vmatmul.bf16.gmra.mxu0 %v4061
        %v4210 = vpop.f32.mrf.mxu0
        %v4211 = vadd.f32 0.0, %v4210
        %v4212 = vpop.f32.mrf.mxu0
        %v4213 = vadd.f32 0.0, %v4212
        %4214 = vmatmul.bf16.gmra.mxu0 %v4064
        %v4215 = vpop.f32.mrf.mxu0
        %v4216 = vadd.f32 0.0, %v4215
        %v4217 = vpop.f32.mrf.mxu0
        %v4218 = vadd.f32 0.0, %v4217
        %4219 = vmatmul.bf16.gmra.mxu0 %v4067
        %v4220 = vpop.f32.mrf.mxu0
        %v4221 = vadd.f32 0.0, %v4220
        %v4222 = vpop.f32.mrf.mxu0
        %v4223 = vadd.f32 0.0, %v4222
        %4224 = vmatmul.bf16.gmra.mxu0 %v4070
        %v4225 = vpop.f32.mrf.mxu0
        %v4226 = vadd.f32 0.0, %v4225
        %v4227 = vpop.f32.mrf.mxu0
        %v4228 = vadd.f32 0.0, %v4227
        %4229 = vmatmul.bf16.gmra.mxu0 %v4073
        %v4230 = vpop.f32.mrf.mxu0
        %v4231 = vadd.f32 0.0, %v4230
        %v4232 = vpop.f32.mrf.mxu0
        %v4233 = vadd.f32 0.0, %v4232
        %4234 = vmatmul.bf16.gmra.mxu0 %v4076
        %v4235 = vpop.f32.mrf.mxu0
        %v4236 = vadd.f32 0.0, %v4235
        %v4237 = vpop.f32.mrf.mxu0
        %v4238 = vadd.f32 0.0, %v4237
        %4239 = vmatmul.bf16.gmra.mxu0 %v4079
        %v4240 = vpop.f32.mrf.mxu0
        %v4241 = vadd.f32 0.0, %v4240
        %v4242 = vpop.f32.mrf.mxu0
        %v4243 = vadd.f32 0.0, %v4242
        %4244 = vmatmul.bf16.gmra.mxu0 %v4082
        %v4245 = vpop.f32.mrf.mxu0
        %v4246 = vadd.f32 0.0, %v4245
        %v4247 = vpop.f32.mrf.mxu0
        %v4248 = vadd.f32 0.0, %v4247
        %4249 = vmatmul.bf16.gmra.mxu0 %v4085
        %v4250 = vpop.f32.mrf.mxu0
        %v4251 = vadd.f32 0.0, %v4250
        %v4252 = vpop.f32.mrf.mxu0
        %v4253 = vadd.f32 0.0, %v4252
        %4254 = vmatmul.bf16.gmra.mxu0 %v4088
        %v4255 = vpop.f32.mrf.mxu0
        %v4256 = vadd.f32 0.0, %v4255
        %v4257 = vpop.f32.mrf.mxu0
        %v4258 = vadd.f32 0.0, %v4257
        %4259 = vmatmul.bf16.gmra.mxu0 %v4091
        %v4260 = vpop.f32.mrf.mxu0
        %v4261 = vadd.f32 0.0, %v4260
        %v4262 = vpop.f32.mrf.mxu0
        %v4263 = vadd.f32 0.0, %v4262
        %4264 = vmatmul.bf16.gmra.mxu0 %v4094
        %v4265 = vpop.f32.mrf.mxu0
        %v4266 = vadd.f32 0.0, %v4265
        %v4267 = vpop.f32.mrf.mxu0
        %v4268 = vadd.f32 0.0, %v4267
        %4269 = vmatmul.bf16.gmra.mxu0 %v4097
        %v4270 = vpop.f32.mrf.mxu0
        %v4271 = vadd.f32 0.0, %v4270
        %v4272 = vpop.f32.mrf.mxu0
        %v4273 = vadd.f32 0.0, %v4272
        %4274 = vmatmul.bf16.gmra.mxu0 %v4100
        %v4275 = vpop.f32.mrf.mxu0
        %v4276 = vadd.f32 0.0, %v4275
        %v4277 = vpop.f32.mrf.mxu0
        %v4278 = vadd.f32 0.0, %v4277
        %4279 = vmatmul.bf16.gmra.mxu0 %v4103
        %v4280 = vpop.f32.mrf.mxu0
        %v4281 = vadd.f32 0.0, %v4280
        %v4282 = vpop.f32.mrf.mxu0
        %v4283 = vadd.f32 0.0, %v4282
        %4284 = vmatmul.bf16.gmra.mxu0 %v4106
        %v4285 = vpop.f32.mrf.mxu0
        %v4286 = vadd.f32 0.0, %v4285
        %v4287 = vpop.f32.mrf.mxu0
        %v4288 = vadd.f32 0.0, %v4287
        %4289 = vmatmul.bf16.gmra.mxu0 %v4109
        %v4290 = vpop.f32.mrf.mxu0
        %v4291 = vadd.f32 0.0, %v4290
        %v4292 = vpop.f32.mrf.mxu0
        %v4293 = vadd.f32 0.0, %v4292
        %4294 = vmatmul.bf16.gmra.mxu0 %v4112
        %v4295 = vpop.f32.mrf.mxu0
        %v4296 = vadd.f32 0.0, %v4295
        %v4297 = vpop.f32.mrf.mxu0
        %v4298 = vadd.f32 0.0, %v4297
        %4299 = vmatmul.bf16.gmra.mxu0 %v4115
        %v4300 = vpop.f32.mrf.mxu0
        %v4301 = vadd.f32 0.0, %v4300
        %v4302 = vpop.f32.mrf.mxu0
        %v4303 = vadd.f32 0.0, %v4302
        %4304 = vmatmul.bf16.gmra.mxu0 %v4118
        %v4305 = vpop.f32.mrf.mxu0
        %v4306 = vadd.f32 0.0, %v4305
        %v4307 = vpop.f32.mrf.mxu0
        %v4308 = vadd.f32 0.0, %v4307
        %4309 = vmatmul.bf16.gmra.mxu0 %v4121
        %v4310 = vpop.f32.mrf.mxu0
        %v4311 = vadd.f32 0.0, %v4310
        %v4312 = vpop.f32.mrf.mxu0
        %v4313 = vadd.f32 0.0, %v4312
        %4314 = vmatmul.bf16.gmra.mxu0 %v4124
        %v4315 = vpop.f32.mrf.mxu0
        %v4316 = vadd.f32 0.0, %v4315
        %v4317 = vpop.f32.mrf.mxu0
        %v4318 = vadd.f32 0.0, %v4317
        %4319 = vmatmul.bf16.gmra.mxu0 %v4127
        %v4320 = vpop.f32.mrf.mxu0
        %v4321 = vadd.f32 0.0, %v4320
        %v4322 = vpop.f32.mrf.mxu0
        %v4323 = vadd.f32 0.0, %v4322
        %4324 = vmatmul.bf16.gmra.mxu0 %v4130
        %v4325 = vpop.f32.mrf.mxu0
        %v4326 = vadd.f32 0.0, %v4325
        %v4327 = vpop.f32.mrf.mxu0
        %v4328 = vadd.f32 0.0, %v4327
        %4329 = vmatmul.bf16.gmra.mxu0 %v4133
        %v4330 = vpop.f32.mrf.mxu0
        %v4331 = vadd.f32 0.0, %v4330
        %v4332 = vpop.f32.mrf.mxu0
        %v4333 = vadd.f32 0.0, %v4332
        %4334 = vmatmul.bf16.gmra.mxu0 %v4136
        %v4335 = vpop.f32.mrf.mxu0
        %v4336 = vadd.f32 0.0, %v4335
        %v4337 = vpop.f32.mrf.mxu0
        %v4338 = vadd.f32 0.0, %v4337
        %4339 = vmatmul.bf16.gmra.mxu0 %v4139
        %v4340 = vpop.f32.mrf.mxu0
        %v4341 = vadd.f32 0.0, %v4340
        %v4342 = vpop.f32.mrf.mxu0
        %v4343 = vadd.f32 0.0, %v4342
        %4344 = vdwg.mxu0
        %v4345 = vadd.f32 %v3849, %v4151
        %v4346 = vadd.f32 %v3850, %v4153
        %v4347 = vadd.f32 %v3851, %v4156
        %v4348 = vadd.f32 %v3852, %v4158
        %v4349 = vadd.f32 %v3853, %v4161
        %v4350 = vadd.f32 %v3854, %v4163
        %v4351 = vadd.f32 %v3855, %v4166
        %v4352 = vadd.f32 %v3856, %v4168
        %v4353 = vadd.f32 %v3857, %v4171
        %v4354 = vadd.f32 %v3858, %v4173
        %v4355 = vadd.f32 %v3859, %v4176
        %v4356 = vadd.f32 %v3860, %v4178
        %v4357 = vadd.f32 %v3861, %v4181
        %v4358 = vadd.f32 %v3862, %v4183
        %v4359 = vadd.f32 %v3863, %v4186
        %v4360 = vadd.f32 %v3864, %v4188
        %v4361 = vadd.f32 %v3865, %v4191
        %v4362 = vadd.f32 %v3866, %v4193
        %v4363 = vadd.f32 %v3867, %v4196
        %v4364 = vadd.f32 %v3868, %v4198
        %v4365 = vadd.f32 %v3869, %v4201
        %v4366 = vadd.f32 %v3870, %v4203
        %v4367 = vadd.f32 %v3871, %v4206
        %v4368 = vadd.f32 %v3872, %v4208
        %v4369 = vadd.f32 %v3873, %v4211
        %v4370 = vadd.f32 %v3874, %v4213
        %v4371 = vadd.f32 %v3875, %v4216
        %v4372 = vadd.f32 %v3876, %v4218
        %v4373 = vadd.f32 %v3877, %v4221
        %v4374 = vadd.f32 %v3878, %v4223
        %v4375 = vadd.f32 %v3879, %v4226
        %v4376 = vadd.f32 %v3880, %v4228
        %v4377 = vadd.f32 %v3881, %v4231
        %v4378 = vadd.f32 %v3882, %v4233
        %v4379 = vadd.f32 %v3883, %v4236
        %v4380 = vadd.f32 %v3884, %v4238
        %v4381 = vadd.f32 %v3885, %v4241
        %v4382 = vadd.f32 %v3886, %v4243
        %v4383 = vadd.f32 %v3887, %v4246
        %v4384 = vadd.f32 %v3888, %v4248
        %v4385 = vadd.f32 %v3889, %v4251
        %v4386 = vadd.f32 %v3890, %v4253
        %v4387 = vadd.f32 %v3891, %v4256
        %v4388 = vadd.f32 %v3892, %v4258
        %v4389 = vadd.f32 %v3893, %v4261
        %v4390 = vadd.f32 %v3894, %v4263
        %v4391 = vadd.f32 %v3895, %v4266
        %v4392 = vadd.f32 %v3896, %v4268
        %v4393 = vadd.f32 %v3897, %v4271
        %v4394 = vadd.f32 %v3898, %v4273
        %v4395 = vadd.f32 %v3899, %v4276
        %v4396 = vadd.f32 %v3900, %v4278
        %v4397 = vadd.f32 %v3901, %v4281
        %v4398 = vadd.f32 %v3902, %v4283
        %v4399 = vadd.f32 %v3903, %v4286
        %v4400 = vadd.f32 %v3904, %v4288
        %v4401 = vadd.f32 %v3905, %v4291
        %v4402 = vadd.f32 %v3906, %v4293
        %v4403 = vadd.f32 %v3907, %v4296
        %v4404 = vadd.f32 %v3908, %v4298
        %v4405 = vadd.f32 %v3909, %v4301
        %v4406 = vadd.f32 %v3910, %v4303
        %v4407 = vadd.f32 %v3911, %v4306
        %v4408 = vadd.f32 %v3912, %v4308
        %v4409 = vadd.f32 %v3913, %v4311
        %v4410 = vadd.f32 %v3914, %v4313
        %v4411 = vadd.f32 %v3915, %v4316
        %v4412 = vadd.f32 %v3916, %v4318
        %v4413 = vadd.f32 %v3917, %v4321
        %v4414 = vadd.f32 %v3918, %v4323
        %v4415 = vadd.f32 %v3919, %v4326
        %v4416 = vadd.f32 %v3920, %v4328
        %v4417 = vadd.f32 %v3921, %v4331
        %v4418 = vadd.f32 %v3922, %v4333
        %v4419 = vadd.f32 %v3923, %v4336
        %v4420 = vadd.f32 %v3924, %v4338
        %v4421 = vadd.f32 %v3925, %v4341
        %v4422 = vadd.f32 %v3926, %v4343
        %v4423 = vpack.c.bf16 %v1040, %v1039
        %v4424 = vpack.c.bf16 %v1042, %v1041
        %v4425 = vpack.c.bf16 %v1044, %v1043
        %v4426 = vpack.c.bf16 %v1045, %v1045
        %s4427 = scalar_lea.vmem [#allocation7], 96
        %v4428 = vld [vmem:[%s4427] sm:$0xf]
        %v4429 = vld [vmem:[%s4427 + $0x4] sm:$0xf]
        %v4430 = vld [vmem:[%s4427 + $0x8] sm:$0xf]
        %v4431 = vld [vmem:[%s4427 + $0xc] sm:$0xf]
        %v4436 = vrot.slane %v1049, 2
        %v4437 = vrot.slane %v1050, 2
        %v4438 = vsel %vm3932, %v4436, %v4437
        %v4439 = vrot.slane %v1051, 2
        %v4440 = vsel %vm3932, %v4437, %v4439
        %v4441 = vrot.slane %v1052, 2
        %v4442 = vsel %vm3932, %v4439, %v4441
        %v4443 = vrot.slane %v1053, 2
        %v4444 = vsel %vm3932, %v4441, %v4443
        %v4445 = vrot.slane %v1054, 2
        %v4446 = vsel %vm3932, %v4443, %v4445
        %v4447 = vrot.slane %v1055, 2
        %v4448 = vsel %vm3932, %v4445, %v4447
        %v4449 = vrot.slane %v1056, 2
        %v4450 = vsel %vm3932, %v4447, %v4449
        %v4451 = vrot.slane %v1057, 2
        %v4452 = vsel %vm3932, %v4449, %v4451
        %v4453 = vrot.slane %v1058, 2
        %v4454 = vsel %vm3932, %v4451, %v4453
        %v4455 = vrot.slane %v1059, 2
        %v4456 = vsel %vm3932, %v4453, %v4455
        %v4457 = vrot.slane %v1060, 2
        %v4458 = vsel %vm3932, %v4455, %v4457
        %v4459 = vrot.slane %v1061, 2
        %v4460 = vsel %vm3932, %v4457, %v4459
        %v4461 = vrot.slane %v1062, 2
        %v4462 = vsel %vm3932, %v4459, %v4461
        %v4463 = vrot.slane %v1063, 2
        %v4464 = vsel %vm3932, %v4461, %v4463
        %v4465 = vrot.slane %v1064, 2
        %v4466 = vsel %vm3932, %v4463, %v4465
        %v4467 = vrot.slane %v1065, 2
        %v4468 = vsel %vm3932, %v4465, %v4467
        %v4469 = vrot.slane %v1066, 2
        %v4470 = vsel %vm3932, %v4467, %v4469
        %v4471 = vrot.slane %v1067, 2
        %v4472 = vsel %vm3932, %v4469, %v4471
        %v4473 = vrot.slane %v1068, 2
        %v4474 = vsel %vm3932, %v4471, %v4473
        %v4475 = vrot.slane %v1069, 2
        %v4476 = vsel %vm3932, %v4473, %v4475
        %v4477 = vrot.slane %v1070, 2
        %v4478 = vsel %vm3932, %v4475, %v4477
        %v4479 = vrot.slane %v1071, 2
        %v4480 = vsel %vm3932, %v4477, %v4479
        %v4481 = vrot.slane %v1072, 2
        %v4482 = vsel %vm3932, %v4479, %v4481
        %v4483 = vrot.slane %v1073, 2
        %v4484 = vsel %vm3932, %v4481, %v4483
        %v4485 = vrot.slane %v1074, 2
        %v4486 = vsel %vm3932, %v4483, %v4485
        %v4487 = vrot.slane %v1075, 2
        %v4488 = vsel %vm3932, %v4485, %v4487
        %v4489 = vrot.slane %v1076, 2
        %v4490 = vsel %vm3932, %v4487, %v4489
        %v4491 = vrot.slane %v1077, 2
        %v4492 = vsel %vm3932, %v4489, %v4491
        %v4493 = vrot.slane %v1078, 2
        %v4494 = vsel %vm3932, %v4491, %v4493
        %v4495 = vrot.slane %v1079, 2
        %v4496 = vsel %vm3932, %v4493, %v4495
        %v4497 = vrot.slane %v1080, 2
        %v4498 = vsel %vm3932, %v4495, %v4497
        %v4499 = vrot.slane %v1081, 2
        %v4500 = vsel %vm3932, %v4497, %v4499
        %v4501 = vrot.slane %v1082, 2
        %v4502 = vsel %vm3932, %v4499, %v4501
        %v4503 = vrot.slane %v1083, 2
        %v4504 = vsel %vm3932, %v4501, %v4503
        %v4505 = vrot.slane %v1084, 2
        %v4506 = vsel %vm3932, %v4503, %v4505
        %v4507 = vrot.slane %v4423, 2
        %v4508 = vsel %vm3932, %v4505, %v4507
        %v4509 = vrot.slane %v4424, 2
        %v4510 = vsel %vm3932, %v4507, %v4509
        %v4511 = vrot.slane %v4425, 2
        %v4512 = vsel %vm3932, %v4509, %v4511
        %v4513 = vrot.slane %v4426, 2
        %v4514 = vsel %vm3932, %v4511, %v4513
        %v4519 = vunpack.c.l.b16 %v4428
        %v4520 = vunpack.c.l.b16 %v4429
        %v4521 = vunpack.c.l.b16 %v4430
        %v4522 = vunpack.c.l.b16 %v4431
        %v4523 = vpack.c.b16 %v4520, %v4519
        %v4524 = vpack.c.b16 %v4522, %v4521
        %v4528 = vsel %vm1424, %v4438, 0
        %v4531 = vsel %vm1424, %v4440, 0
        %v4534 = vsel %vm1424, %v4442, 0
        %v4537 = vsel %vm1424, %v4444, 0
        %v4540 = vsel %vm1424, %v4446, 0
        %v4543 = vsel %vm1424, %v4448, 0
        %v4546 = vsel %vm1424, %v4450, 0
        %v4549 = vsel %vm1424, %v4452, 0
        %v4552 = vsel %vm1424, %v4454, 0
        %v4555 = vsel %vm1424, %v4456, 0
        %v4558 = vsel %vm1424, %v4458, 0
        %v4561 = vsel %vm1424, %v4460, 0
        %v4564 = vsel %vm1424, %v4462, 0
        %v4567 = vsel %vm1424, %v4464, 0
        %v4570 = vsel %vm1424, %v4466, 0
        %v4573 = vsel %vm1424, %v4468, 0
        %v4576 = vsel %vm1424, %v4470, 0
        %v4579 = vsel %vm1424, %v4472, 0
        %v4582 = vsel %vm1424, %v4474, 0
        %v4585 = vsel %vm1424, %v4476, 0
        %v4588 = vsel %vm1424, %v4478, 0
        %v4591 = vsel %vm1424, %v4480, 0
        %v4594 = vsel %vm1424, %v4482, 0
        %v4597 = vsel %vm1424, %v4484, 0
        %v4600 = vsel %vm1424, %v4486, 0
        %v4603 = vsel %vm1424, %v4488, 0
        %v4606 = vsel %vm1424, %v4490, 0
        %v4609 = vsel %vm1424, %v4492, 0
        %v4612 = vsel %vm1424, %v4494, 0
        %v4615 = vsel %vm1424, %v4496, 0
        %v4618 = vsel %vm1424, %v4498, 0
        %v4621 = vsel %vm1424, %v4500, 0
        %v4624 = vsel %vm1424, %v4502, 0
        %v4627 = vsel %vm1424, %v4504, 0
        %v4630 = vsel %vm1424, %v4506, 0
        %v4633 = vsel %vm1424, %v4508, 0
        %v4636 = vsel %vm1424, %v4510, 0
        %v4639 = vsel %vm1424, %v4512, 0
        %v4642 = vsel %vm1424, %v4514, 0
        %4644 = vmatpush.bf16.msra.mxu0 0
        %4645 = vmatpush.bf16.msra.mxu0 0
        %4646 = vmatpush.bf16.msra.mxu0 0
        %4647 = vmatpush.bf16.msra.mxu0 0
        %4648 = vmatpush.bf16.msra.mxu0 0
        %4649 = vmatpush.bf16.msra.mxu0 0
        %4650 = vmatpush.bf16.msra.mxu0 %v4524
        %4651 = vmatpush.bf16.msra.mxu0 %v4523
        %4652 = vmatmul.bf16.gmra.mxu0 %v4528
        %v4653 = vpop.f32.mrf.mxu0
        %v4654 = vadd.f32 0.0, %v4653
        %v4655 = vpop.f32.mrf.mxu0
        %v4656 = vadd.f32 0.0, %v4655
        %4657 = vmatmul.bf16.gmra.mxu0 %v4531
        %v4658 = vpop.f32.mrf.mxu0
        %v4659 = vadd.f32 0.0, %v4658
        %v4660 = vpop.f32.mrf.mxu0
        %v4661 = vadd.f32 0.0, %v4660
        %4662 = vmatmul.bf16.gmra.mxu0 %v4534
        %v4663 = vpop.f32.mrf.mxu0
        %v4664 = vadd.f32 0.0, %v4663
        %v4665 = vpop.f32.mrf.mxu0
        %v4666 = vadd.f32 0.0, %v4665
        %4667 = vmatmul.bf16.gmra.mxu0 %v4537
        %v4668 = vpop.f32.mrf.mxu0
        %v4669 = vadd.f32 0.0, %v4668
        %v4670 = vpop.f32.mrf.mxu0
        %v4671 = vadd.f32 0.0, %v4670
        %4672 = vmatmul.bf16.gmra.mxu0 %v4540
        %v4673 = vpop.f32.mrf.mxu0
        %v4674 = vadd.f32 0.0, %v4673
        %v4675 = vpop.f32.mrf.mxu0
        %v4676 = vadd.f32 0.0, %v4675
        %4677 = vmatmul.bf16.gmra.mxu0 %v4543
        %v4678 = vpop.f32.mrf.mxu0
        %v4679 = vadd.f32 0.0, %v4678
        %v4680 = vpop.f32.mrf.mxu0
        %v4681 = vadd.f32 0.0, %v4680
        %4682 = vmatmul.bf16.gmra.mxu0 %v4546
        %v4683 = vpop.f32.mrf.mxu0
        %v4684 = vadd.f32 0.0, %v4683
        %v4685 = vpop.f32.mrf.mxu0
        %v4686 = vadd.f32 0.0, %v4685
        %4687 = vmatmul.bf16.gmra.mxu0 %v4549
        %v4688 = vpop.f32.mrf.mxu0
        %v4689 = vadd.f32 0.0, %v4688
        %v4690 = vpop.f32.mrf.mxu0
        %v4691 = vadd.f32 0.0, %v4690
        %4692 = vmatmul.bf16.gmra.mxu0 %v4552
        %v4693 = vpop.f32.mrf.mxu0
        %v4694 = vadd.f32 0.0, %v4693
        %v4695 = vpop.f32.mrf.mxu0
        %v4696 = vadd.f32 0.0, %v4695
        %4697 = vmatmul.bf16.gmra.mxu0 %v4555
        %v4698 = vpop.f32.mrf.mxu0
        %v4699 = vadd.f32 0.0, %v4698
        %v4700 = vpop.f32.mrf.mxu0
        %v4701 = vadd.f32 0.0, %v4700
        %4702 = vmatmul.bf16.gmra.mxu0 %v4558
        %v4703 = vpop.f32.mrf.mxu0
        %v4704 = vadd.f32 0.0, %v4703
        %v4705 = vpop.f32.mrf.mxu0
        %v4706 = vadd.f32 0.0, %v4705
        %4707 = vmatmul.bf16.gmra.mxu0 %v4561
        %v4708 = vpop.f32.mrf.mxu0
        %v4709 = vadd.f32 0.0, %v4708
        %v4710 = vpop.f32.mrf.mxu0
        %v4711 = vadd.f32 0.0, %v4710
        %4712 = vmatmul.bf16.gmra.mxu0 %v4564
        %v4713 = vpop.f32.mrf.mxu0
        %v4714 = vadd.f32 0.0, %v4713
        %v4715 = vpop.f32.mrf.mxu0
        %v4716 = vadd.f32 0.0, %v4715
        %4717 = vmatmul.bf16.gmra.mxu0 %v4567
        %v4718 = vpop.f32.mrf.mxu0
        %v4719 = vadd.f32 0.0, %v4718
        %v4720 = vpop.f32.mrf.mxu0
        %v4721 = vadd.f32 0.0, %v4720
        %4722 = vmatmul.bf16.gmra.mxu0 %v4570
        %v4723 = vpop.f32.mrf.mxu0
        %v4724 = vadd.f32 0.0, %v4723
        %v4725 = vpop.f32.mrf.mxu0
        %v4726 = vadd.f32 0.0, %v4725
        %4727 = vmatmul.bf16.gmra.mxu0 %v4573
        %v4728 = vpop.f32.mrf.mxu0
        %v4729 = vadd.f32 0.0, %v4728
        %v4730 = vpop.f32.mrf.mxu0
        %v4731 = vadd.f32 0.0, %v4730
        %4732 = vmatmul.bf16.gmra.mxu0 %v4576
        %v4733 = vpop.f32.mrf.mxu0
        %v4734 = vadd.f32 0.0, %v4733
        %v4735 = vpop.f32.mrf.mxu0
        %v4736 = vadd.f32 0.0, %v4735
        %4737 = vmatmul.bf16.gmra.mxu0 %v4579
        %v4738 = vpop.f32.mrf.mxu0
        %v4739 = vadd.f32 0.0, %v4738
        %v4740 = vpop.f32.mrf.mxu0
        %v4741 = vadd.f32 0.0, %v4740
        %4742 = vmatmul.bf16.gmra.mxu0 %v4582
        %v4743 = vpop.f32.mrf.mxu0
        %v4744 = vadd.f32 0.0, %v4743
        %v4745 = vpop.f32.mrf.mxu0
        %v4746 = vadd.f32 0.0, %v4745
        %4747 = vmatmul.bf16.gmra.mxu0 %v4585
        %v4748 = vpop.f32.mrf.mxu0
        %v4749 = vadd.f32 0.0, %v4748
        %v4750 = vpop.f32.mrf.mxu0
        %v4751 = vadd.f32 0.0, %v4750
        %4752 = vmatmul.bf16.gmra.mxu0 %v4588
        %v4753 = vpop.f32.mrf.mxu0
        %v4754 = vadd.f32 0.0, %v4753
        %v4755 = vpop.f32.mrf.mxu0
        %v4756 = vadd.f32 0.0, %v4755
        %4757 = vmatmul.bf16.gmra.mxu0 %v4591
        %v4758 = vpop.f32.mrf.mxu0
        %v4759 = vadd.f32 0.0, %v4758
        %v4760 = vpop.f32.mrf.mxu0
        %v4761 = vadd.f32 0.0, %v4760
        %4762 = vmatmul.bf16.gmra.mxu0 %v4594
        %v4763 = vpop.f32.mrf.mxu0
        %v4764 = vadd.f32 0.0, %v4763
        %v4765 = vpop.f32.mrf.mxu0
        %v4766 = vadd.f32 0.0, %v4765
        %4767 = vmatmul.bf16.gmra.mxu0 %v4597
        %v4768 = vpop.f32.mrf.mxu0
        %v4769 = vadd.f32 0.0, %v4768
        %v4770 = vpop.f32.mrf.mxu0
        %v4771 = vadd.f32 0.0, %v4770
        %4772 = vmatmul.bf16.gmra.mxu0 %v4600
        %v4773 = vpop.f32.mrf.mxu0
        %v4774 = vadd.f32 0.0, %v4773
        %v4775 = vpop.f32.mrf.mxu0
        %v4776 = vadd.f32 0.0, %v4775
        %4777 = vmatmul.bf16.gmra.mxu0 %v4603
        %v4778 = vpop.f32.mrf.mxu0
        %v4779 = vadd.f32 0.0, %v4778
        %v4780 = vpop.f32.mrf.mxu0
        %v4781 = vadd.f32 0.0, %v4780
        %4782 = vmatmul.bf16.gmra.mxu0 %v4606
        %v4783 = vpop.f32.mrf.mxu0
        %v4784 = vadd.f32 0.0, %v4783
        %v4785 = vpop.f32.mrf.mxu0
        %v4786 = vadd.f32 0.0, %v4785
        %4787 = vmatmul.bf16.gmra.mxu0 %v4609
        %v4788 = vpop.f32.mrf.mxu0
        %v4789 = vadd.f32 0.0, %v4788
        %v4790 = vpop.f32.mrf.mxu0
        %v4791 = vadd.f32 0.0, %v4790
        %4792 = vmatmul.bf16.gmra.mxu0 %v4612
        %v4793 = vpop.f32.mrf.mxu0
        %v4794 = vadd.f32 0.0, %v4793
        %v4795 = vpop.f32.mrf.mxu0
        %v4796 = vadd.f32 0.0, %v4795
        %4797 = vmatmul.bf16.gmra.mxu0 %v4615
        %v4798 = vpop.f32.mrf.mxu0
        %v4799 = vadd.f32 0.0, %v4798
        %v4800 = vpop.f32.mrf.mxu0
        %v4801 = vadd.f32 0.0, %v4800
        %4802 = vmatmul.bf16.gmra.mxu0 %v4618
        %v4803 = vpop.f32.mrf.mxu0
        %v4804 = vadd.f32 0.0, %v4803
        %v4805 = vpop.f32.mrf.mxu0
        %v4806 = vadd.f32 0.0, %v4805
        %4807 = vmatmul.bf16.gmra.mxu0 %v4621
        %v4808 = vpop.f32.mrf.mxu0
        %v4809 = vadd.f32 0.0, %v4808
        %v4810 = vpop.f32.mrf.mxu0
        %v4811 = vadd.f32 0.0, %v4810
        %4812 = vmatmul.bf16.gmra.mxu0 %v4624
        %v4813 = vpop.f32.mrf.mxu0
        %v4814 = vadd.f32 0.0, %v4813
        %v4815 = vpop.f32.mrf.mxu0
        %v4816 = vadd.f32 0.0, %v4815
        %4817 = vmatmul.bf16.gmra.mxu0 %v4627
        %v4818 = vpop.f32.mrf.mxu0
        %v4819 = vadd.f32 0.0, %v4818
        %v4820 = vpop.f32.mrf.mxu0
        %v4821 = vadd.f32 0.0, %v4820
        %4822 = vmatmul.bf16.gmra.mxu0 %v4630
        %v4823 = vpop.f32.mrf.mxu0
        %v4824 = vadd.f32 0.0, %v4823
        %v4825 = vpop.f32.mrf.mxu0
        %v4826 = vadd.f32 0.0, %v4825
        %4827 = vmatmul.bf16.gmra.mxu0 %v4633
        %v4828 = vpop.f32.mrf.mxu0
        %v4829 = vadd.f32 0.0, %v4828
        %v4830 = vpop.f32.mrf.mxu0
        %v4831 = vadd.f32 0.0, %v4830
        %4832 = vmatmul.bf16.gmra.mxu0 %v4636
        %v4833 = vpop.f32.mrf.mxu0
        %v4834 = vadd.f32 0.0, %v4833
        %v4835 = vpop.f32.mrf.mxu0
        %v4836 = vadd.f32 0.0, %v4835
        %4837 = vmatmul.bf16.gmra.mxu0 %v4639
        %v4838 = vpop.f32.mrf.mxu0
        %v4839 = vadd.f32 0.0, %v4838
        %v4840 = vpop.f32.mrf.mxu0
        %v4841 = vadd.f32 0.0, %v4840
        %4842 = vmatmul.bf16.gmra.mxu0 %v4642
        %v4843 = vpop.f32.mrf.mxu0
        %v4844 = vadd.f32 0.0, %v4843
        %v4845 = vpop.f32.mrf.mxu0
        %v4846 = vadd.f32 0.0, %v4845
        %4847 = vdwg.mxu0
        %v4848 = vadd.f32 %v4345, %v4654
        %v4849 = vadd.f32 %v4346, %v4656
        %v4850 = vadd.f32 %v4347, %v4659
        %v4851 = vadd.f32 %v4348, %v4661
        %v4852 = vadd.f32 %v4349, %v4664
        %v4853 = vadd.f32 %v4350, %v4666
        %v4854 = vadd.f32 %v4351, %v4669
        %v4855 = vadd.f32 %v4352, %v4671
        %v4856 = vadd.f32 %v4353, %v4674
        %v4857 = vadd.f32 %v4354, %v4676
        %v4858 = vadd.f32 %v4355, %v4679
        %v4859 = vadd.f32 %v4356, %v4681
        %v4860 = vadd.f32 %v4357, %v4684
        %v4861 = vadd.f32 %v4358, %v4686
        %v4862 = vadd.f32 %v4359, %v4689
        %v4863 = vadd.f32 %v4360, %v4691
        %v4864 = vadd.f32 %v4361, %v4694
        %v4865 = vadd.f32 %v4362, %v4696
        %v4866 = vadd.f32 %v4363, %v4699
        %v4867 = vadd.f32 %v4364, %v4701
        %v4868 = vadd.f32 %v4365, %v4704
        %v4869 = vadd.f32 %v4366, %v4706
        %v4870 = vadd.f32 %v4367, %v4709
        %v4871 = vadd.f32 %v4368, %v4711
        %v4872 = vadd.f32 %v4369, %v4714
        %v4873 = vadd.f32 %v4370, %v4716
        %v4874 = vadd.f32 %v4371, %v4719
        %v4875 = vadd.f32 %v4372, %v4721
        %v4876 = vadd.f32 %v4373, %v4724
        %v4877 = vadd.f32 %v4374, %v4726
        %v4878 = vadd.f32 %v4375, %v4729
        %v4879 = vadd.f32 %v4376, %v4731
        %v4880 = vadd.f32 %v4377, %v4734
        %v4881 = vadd.f32 %v4378, %v4736
        %v4882 = vadd.f32 %v4379, %v4739
        %v4883 = vadd.f32 %v4380, %v4741
        %v4884 = vadd.f32 %v4381, %v4744
        %v4885 = vadd.f32 %v4382, %v4746
        %v4886 = vadd.f32 %v4383, %v4749
        %v4887 = vadd.f32 %v4384, %v4751
        %v4888 = vadd.f32 %v4385, %v4754
        %v4889 = vadd.f32 %v4386, %v4756
        %v4890 = vadd.f32 %v4387, %v4759
        %v4891 = vadd.f32 %v4388, %v4761
        %v4892 = vadd.f32 %v4389, %v4764
        %v4893 = vadd.f32 %v4390, %v4766
        %v4894 = vadd.f32 %v4391, %v4769
        %v4895 = vadd.f32 %v4392, %v4771
        %v4896 = vadd.f32 %v4393, %v4774
        %v4897 = vadd.f32 %v4394, %v4776
        %v4898 = vadd.f32 %v4395, %v4779
        %v4899 = vadd.f32 %v4396, %v4781
        %v4900 = vadd.f32 %v4397, %v4784
        %v4901 = vadd.f32 %v4398, %v4786
        %v4902 = vadd.f32 %v4399, %v4789
        %v4903 = vadd.f32 %v4400, %v4791
        %v4904 = vadd.f32 %v4401, %v4794
        %v4905 = vadd.f32 %v4402, %v4796
        %v4906 = vadd.f32 %v4403, %v4799
        %v4907 = vadd.f32 %v4404, %v4801
        %v4908 = vadd.f32 %v4405, %v4804
        %v4909 = vadd.f32 %v4406, %v4806
        %v4910 = vadd.f32 %v4407, %v4809
        %v4911 = vadd.f32 %v4408, %v4811
        %v4912 = vadd.f32 %v4409, %v4814
        %v4913 = vadd.f32 %v4410, %v4816
        %v4914 = vadd.f32 %v4411, %v4819
        %v4915 = vadd.f32 %v4412, %v4821
        %v4916 = vadd.f32 %v4413, %v4824
        %v4917 = vadd.f32 %v4414, %v4826
        %v4918 = vadd.f32 %v4415, %v4829
        %v4919 = vadd.f32 %v4416, %v4831
        %v4920 = vadd.f32 %v4417, %v4834
        %v4921 = vadd.f32 %v4418, %v4836
        %v4922 = vadd.f32 %v4419, %v4839
        %v4923 = vadd.f32 %v4420, %v4841
        %v4924 = vadd.f32 %v4421, %v4844
        %v4925 = vadd.f32 %v4422, %v4846
        %s4926 = scalar_lea.vmem [#allocation7], 112
        %v4927 = vld [vmem:[%s4926] sm:$0xf]
        %v4928 = vld [vmem:[%s4926 + $0x4] sm:$0xf]
        %v4929 = vld [vmem:[%s4926 + $0x8] sm:$0xf]
        %v4930 = vld [vmem:[%s4926 + $0xc] sm:$0xf]
        %vm4931 = vsmask.f32 5376
        %v4932 = vrot.slane %v1124, 2
        %v4933 = vrot.slane %v1120, 3
        %v4934 = vor.u32 %v4932, %v4933
        %v4935 = vrot.slane %v1132, 2
        %v4936 = vrot.slane %v1128, 3
        %v4937 = vor.u32 %v4935, %v4936
        %v4938 = vsel %vm4931, %v4934, %v4937
        %v4939 = vrot.slane %v1140, 2
        %v4940 = vrot.slane %v1136, 3
        %v4941 = vor.u32 %v4939, %v4940
        %v4942 = vsel %vm4931, %v4937, %v4941
        %v4943 = vrot.slane %v1148, 2
        %v4944 = vrot.slane %v1144, 3
        %v4945 = vor.u32 %v4943, %v4944
        %v4946 = vsel %vm4931, %v4941, %v4945
        %v4947 = vrot.slane %v1156, 2
        %v4948 = vrot.slane %v1152, 3
        %v4949 = vor.u32 %v4947, %v4948
        %v4950 = vsel %vm4931, %v4945, %v4949
        %v4951 = vrot.slane %v1164, 2
        %v4952 = vrot.slane %v1160, 3
        %v4953 = vor.u32 %v4951, %v4952
        %v4954 = vsel %vm4931, %v4949, %v4953
        %v4955 = vrot.slane %v1172, 2
        %v4956 = vrot.slane %v1168, 3
        %v4957 = vor.u32 %v4955, %v4956
        %v4958 = vsel %vm4931, %v4953, %v4957
        %v4959 = vrot.slane %v1180, 2
        %v4960 = vrot.slane %v1176, 3
        %v4961 = vor.u32 %v4959, %v4960
        %v4962 = vsel %vm4931, %v4957, %v4961
        %v4963 = vrot.slane %v1188, 2
        %v4964 = vrot.slane %v1184, 3
        %v4965 = vor.u32 %v4963, %v4964
        %v4966 = vsel %vm4931, %v4961, %v4965
        %v4967 = vrot.slane %v1196, 2
        %v4968 = vrot.slane %v1192, 3
        %v4969 = vor.u32 %v4967, %v4968
        %v4970 = vsel %vm4931, %v4965, %v4969
        %v4971 = vrot.slane %v1204, 2
        %v4972 = vrot.slane %v1200, 3
        %v4973 = vor.u32 %v4971, %v4972
        %v4974 = vsel %vm4931, %v4969, %v4973
        %v4975 = vrot.slane %v1212, 2
        %v4976 = vrot.slane %v1208, 3
        %v4977 = vor.u32 %v4975, %v4976
        %v4978 = vsel %vm4931, %v4973, %v4977
        %v4979 = vrot.slane %v1220, 2
        %v4980 = vrot.slane %v1216, 3
        %v4981 = vor.u32 %v4979, %v4980
        %v4982 = vsel %vm4931, %v4977, %v4981
        %v4983 = vrot.slane %v1228, 2
        %v4984 = vrot.slane %v1224, 3
        %v4985 = vor.u32 %v4983, %v4984
        %v4986 = vsel %vm4931, %v4981, %v4985
        %v4987 = vrot.slane %v1236, 2
        %v4988 = vrot.slane %v1232, 3
        %v4989 = vor.u32 %v4987, %v4988
        %v4990 = vsel %vm4931, %v4985, %v4989
        %v4991 = vrot.slane %v1244, 2
        %v4992 = vrot.slane %v1240, 3
        %v4993 = vor.u32 %v4991, %v4992
        %v4994 = vsel %vm4931, %v4989, %v4993
        %v4995 = vrot.slane %v1252, 2
        %v4996 = vrot.slane %v1248, 3
        %v4997 = vor.u32 %v4995, %v4996
        %v4998 = vsel %vm4931, %v4993, %v4997
        %v4999 = vrot.slane %v1260, 2
        %v5000 = vrot.slane %v1256, 3
        %v5001 = vor.u32 %v4999, %v5000
        %v5002 = vsel %vm4931, %v4997, %v5001
        %v5003 = vrot.slane %v1268, 2
        %v5004 = vrot.slane %v1264, 3
        %v5005 = vor.u32 %v5003, %v5004
        %v5006 = vsel %vm4931, %v5001, %v5005
        %v5007 = vrot.slane %v1276, 2
        %v5008 = vrot.slane %v1272, 3
        %v5009 = vor.u32 %v5007, %v5008
        %v5010 = vsel %vm4931, %v5005, %v5009
        %v5011 = vrot.slane %v1284, 2
        %v5012 = vrot.slane %v1280, 3
        %v5013 = vor.u32 %v5011, %v5012
        %v5014 = vsel %vm4931, %v5009, %v5013
        %v5015 = vrot.slane %v1292, 2
        %v5016 = vrot.slane %v1288, 3
        %v5017 = vor.u32 %v5015, %v5016
        %v5018 = vsel %vm4931, %v5013, %v5017
        %v5019 = vrot.slane %v1300, 2
        %v5020 = vrot.slane %v1296, 3
        %v5021 = vor.u32 %v5019, %v5020
        %v5022 = vsel %vm4931, %v5017, %v5021
        %v5023 = vrot.slane %v1308, 2
        %v5024 = vrot.slane %v1304, 3
        %v5025 = vor.u32 %v5023, %v5024
        %v5026 = vsel %vm4931, %v5021, %v5025
        %v5027 = vrot.slane %v1316, 2
        %v5028 = vrot.slane %v1312, 3
        %v5029 = vor.u32 %v5027, %v5028
        %v5030 = vsel %vm4931, %v5025, %v5029
        %v5031 = vrot.slane %v1324, 2
        %v5032 = vrot.slane %v1320, 3
        %v5033 = vor.u32 %v5031, %v5032
        %v5034 = vsel %vm4931, %v5029, %v5033
        %v5035 = vrot.slane %v1332, 2
        %v5036 = vrot.slane %v1328, 3
        %v5037 = vor.u32 %v5035, %v5036
        %v5038 = vsel %vm4931, %v5033, %v5037
        %v5039 = vrot.slane %v1340, 2
        %v5040 = vrot.slane %v1336, 3
        %v5041 = vor.u32 %v5039, %v5040
        %v5042 = vsel %vm4931, %v5037, %v5041
        %v5043 = vrot.slane %v1348, 2
        %v5044 = vrot.slane %v1344, 3
        %v5045 = vor.u32 %v5043, %v5044
        %v5046 = vsel %vm4931, %v5041, %v5045
        %v5047 = vrot.slane %v1356, 2
        %v5048 = vrot.slane %v1352, 3
        %v5049 = vor.u32 %v5047, %v5048
        %v5050 = vsel %vm4931, %v5045, %v5049
        %v5051 = vrot.slane %v1364, 2
        %v5052 = vrot.slane %v1360, 3
        %v5053 = vor.u32 %v5051, %v5052
        %v5054 = vsel %vm4931, %v5049, %v5053
        %v5055 = vrot.slane %v1372, 2
        %v5056 = vrot.slane %v1368, 3
        %v5057 = vor.u32 %v5055, %v5056
        %v5058 = vsel %vm4931, %v5053, %v5057
        %v5059 = vrot.slane %v1380, 2
        %v5060 = vrot.slane %v1376, 3
        %v5061 = vor.u32 %v5059, %v5060
        %v5062 = vsel %vm4931, %v5057, %v5061
        %v5063 = vrot.slane %v1388, 2
        %v5064 = vrot.slane %v1384, 3
        %v5065 = vor.u32 %v5063, %v5064
        %v5066 = vsel %vm4931, %v5061, %v5065
        %v5067 = vrot.slane %v1396, 2
        %v5068 = vrot.slane %v1392, 3
        %v5069 = vor.u32 %v5067, %v5068
        %v5070 = vsel %vm4931, %v5065, %v5069
        %v5071 = vrot.slane %v1404, 2
        %v5072 = vrot.slane %v1400, 3
        %v5073 = vor.u32 %v5071, %v5072
        %v5074 = vsel %vm4931, %v5069, %v5073
        %v5076 = vshrl.u32 %v4423, 16
        %v5078 = vrot.slane %v5076, 2
        %v5079 = vshll.u32 %v4423, 16
        %v5081 = vrot.slane %v5079, 3
        %v5082 = vor.u32 %v5078, %v5081
        %v5083 = vsel %vm4931, %v5073, %v5082
        %v5085 = vshrl.u32 %v4424, 16
        %v5087 = vrot.slane %v5085, 2
        %v5088 = vshll.u32 %v4424, 16
        %v5090 = vrot.slane %v5088, 3
        %v5091 = vor.u32 %v5087, %v5090
        %v5092 = vsel %vm4931, %v5082, %v5091
        %v5094 = vshrl.u32 %v4425, 16
        %v5096 = vrot.slane %v5094, 2
        %v5097 = vshll.u32 %v4425, 16
        %v5099 = vrot.slane %v5097, 3
        %v5100 = vor.u32 %v5096, %v5099
        %v5101 = vsel %vm4931, %v5091, %v5100
        %v5103 = vshrl.u32 %v4426, 16
        %v5105 = vrot.slane %v5103, 2
        %v5106 = vshll.u32 %v4426, 16
        %v5108 = vrot.slane %v5106, 3
        %v5109 = vor.u32 %v5105, %v5108
        %v5110 = vsel %vm4931, %v5100, %v5109
        %v5115 = vunpack.c.l.b16 %v4927
        %v5116 = vunpack.c.l.b16 %v4928
        %v5117 = vunpack.c.l.b16 %v4929
        %v5118 = vunpack.c.l.b16 %v4930
        %v5119 = vpack.c.b16 %v5116, %v5115
        %v5120 = vpack.c.b16 %v5118, %v5117
        %v5124 = vsel %vm1424, %v4938, 0
        %v5127 = vsel %vm1424, %v4942, 0
        %v5130 = vsel %vm1424, %v4946, 0
        %v5133 = vsel %vm1424, %v4950, 0
        %v5136 = vsel %vm1424, %v4954, 0
        %v5139 = vsel %vm1424, %v4958, 0
        %v5142 = vsel %vm1424, %v4962, 0
        %v5145 = vsel %vm1424, %v4966, 0
        %v5148 = vsel %vm1424, %v4970, 0
        %v5151 = vsel %vm1424, %v4974, 0
        %v5154 = vsel %vm1424, %v4978, 0
        %v5157 = vsel %vm1424, %v4982, 0
        %v5160 = vsel %vm1424, %v4986, 0
        %v5163 = vsel %vm1424, %v4990, 0
        %v5166 = vsel %vm1424, %v4994, 0
        %v5169 = vsel %vm1424, %v4998, 0
        %v5172 = vsel %vm1424, %v5002, 0
        %v5175 = vsel %vm1424, %v5006, 0
        %v5178 = vsel %vm1424, %v5010, 0
        %v5181 = vsel %vm1424, %v5014, 0
        %v5184 = vsel %vm1424, %v5018, 0
        %v5187 = vsel %vm1424, %v5022, 0
        %v5190 = vsel %vm1424, %v5026, 0
        %v5193 = vsel %vm1424, %v5030, 0
        %v5196 = vsel %vm1424, %v5034, 0
        %v5199 = vsel %vm1424, %v5038, 0
        %v5202 = vsel %vm1424, %v5042, 0
        %v5205 = vsel %vm1424, %v5046, 0
        %v5208 = vsel %vm1424, %v5050, 0
        %v5211 = vsel %vm1424, %v5054, 0
        %v5214 = vsel %vm1424, %v5058, 0
        %v5217 = vsel %vm1424, %v5062, 0
        %v5220 = vsel %vm1424, %v5066, 0
        %v5223 = vsel %vm1424, %v5070, 0
        %v5226 = vsel %vm1424, %v5074, 0
        %v5229 = vsel %vm1424, %v5083, 0
        %v5232 = vsel %vm1424, %v5092, 0
        %v5235 = vsel %vm1424, %v5101, 0
        %v5238 = vsel %vm1424, %v5110, 0
        %5240 = vmatpush.bf16.msra.mxu0 0
        %5241 = vmatpush.bf16.msra.mxu0 0
        %5242 = vmatpush.bf16.msra.mxu0 0
        %5243 = vmatpush.bf16.msra.mxu0 0
        %5244 = vmatpush.bf16.msra.mxu0 0
        %5245 = vmatpush.bf16.msra.mxu0 0
        %5246 = vmatpush.bf16.msra.mxu0 %v5120
        %5247 = vmatpush.bf16.msra.mxu0 %v5119
        %5248 = vmatmul.bf16.gmra.mxu0 %v5124
        %v5249 = vpop.f32.mrf.mxu0
        %v5250 = vadd.f32 0.0, %v5249
        %v5251 = vpop.f32.mrf.mxu0
        %v5252 = vadd.f32 0.0, %v5251
        %5253 = vmatmul.bf16.gmra.mxu0 %v5127
        %v5254 = vpop.f32.mrf.mxu0
        %v5255 = vadd.f32 0.0, %v5254
        %v5256 = vpop.f32.mrf.mxu0
        %v5257 = vadd.f32 0.0, %v5256
        %5258 = vmatmul.bf16.gmra.mxu0 %v5130
        %v5259 = vpop.f32.mrf.mxu0
        %v5260 = vadd.f32 0.0, %v5259
        %v5261 = vpop.f32.mrf.mxu0
        %v5262 = vadd.f32 0.0, %v5261
        %5263 = vmatmul.bf16.gmra.mxu0 %v5133
        %v5264 = vpop.f32.mrf.mxu0
        %v5265 = vadd.f32 0.0, %v5264
        %v5266 = vpop.f32.mrf.mxu0
        %v5267 = vadd.f32 0.0, %v5266
        %5268 = vmatmul.bf16.gmra.mxu0 %v5136
        %v5269 = vpop.f32.mrf.mxu0
        %v5270 = vadd.f32 0.0, %v5269
        %v5271 = vpop.f32.mrf.mxu0
        %v5272 = vadd.f32 0.0, %v5271
        %5273 = vmatmul.bf16.gmra.mxu0 %v5139
        %v5274 = vpop.f32.mrf.mxu0
        %v5275 = vadd.f32 0.0, %v5274
        %v5276 = vpop.f32.mrf.mxu0
        %v5277 = vadd.f32 0.0, %v5276
        %5278 = vmatmul.bf16.gmra.mxu0 %v5142
        %v5279 = vpop.f32.mrf.mxu0
        %v5280 = vadd.f32 0.0, %v5279
        %v5281 = vpop.f32.mrf.mxu0
        %v5282 = vadd.f32 0.0, %v5281
        %5283 = vmatmul.bf16.gmra.mxu0 %v5145
        %v5284 = vpop.f32.mrf.mxu0
        %v5285 = vadd.f32 0.0, %v5284
        %v5286 = vpop.f32.mrf.mxu0
        %v5287 = vadd.f32 0.0, %v5286
        %5288 = vmatmul.bf16.gmra.mxu0 %v5148
        %v5289 = vpop.f32.mrf.mxu0
        %v5290 = vadd.f32 0.0, %v5289
        %v5291 = vpop.f32.mrf.mxu0
        %v5292 = vadd.f32 0.0, %v5291
        %5293 = vmatmul.bf16.gmra.mxu0 %v5151
        %v5294 = vpop.f32.mrf.mxu0
        %v5295 = vadd.f32 0.0, %v5294
        %v5296 = vpop.f32.mrf.mxu0
        %v5297 = vadd.f32 0.0, %v5296
        %5298 = vmatmul.bf16.gmra.mxu0 %v5154
        %v5299 = vpop.f32.mrf.mxu0
        %v5300 = vadd.f32 0.0, %v5299
        %v5301 = vpop.f32.mrf.mxu0
        %v5302 = vadd.f32 0.0, %v5301
        %5303 = vmatmul.bf16.gmra.mxu0 %v5157
        %v5304 = vpop.f32.mrf.mxu0
        %v5305 = vadd.f32 0.0, %v5304
        %v5306 = vpop.f32.mrf.mxu0
        %v5307 = vadd.f32 0.0, %v5306
        %5308 = vmatmul.bf16.gmra.mxu0 %v5160
        %v5309 = vpop.f32.mrf.mxu0
        %v5310 = vadd.f32 0.0, %v5309
        %v5311 = vpop.f32.mrf.mxu0
        %v5312 = vadd.f32 0.0, %v5311
        %5313 = vmatmul.bf16.gmra.mxu0 %v5163
        %v5314 = vpop.f32.mrf.mxu0
        %v5315 = vadd.f32 0.0, %v5314
        %v5316 = vpop.f32.mrf.mxu0
        %v5317 = vadd.f32 0.0, %v5316
        %5318 = vmatmul.bf16.gmra.mxu0 %v5166
        %v5319 = vpop.f32.mrf.mxu0
        %v5320 = vadd.f32 0.0, %v5319
        %v5321 = vpop.f32.mrf.mxu0
        %v5322 = vadd.f32 0.0, %v5321
        %5323 = vmatmul.bf16.gmra.mxu0 %v5169
        %v5324 = vpop.f32.mrf.mxu0
        %v5325 = vadd.f32 0.0, %v5324
        %v5326 = vpop.f32.mrf.mxu0
        %v5327 = vadd.f32 0.0, %v5326
        %5328 = vmatmul.bf16.gmra.mxu0 %v5172
        %v5329 = vpop.f32.mrf.mxu0
        %v5330 = vadd.f32 0.0, %v5329
        %v5331 = vpop.f32.mrf.mxu0
        %v5332 = vadd.f32 0.0, %v5331
        %5333 = vmatmul.bf16.gmra.mxu0 %v5175
        %v5334 = vpop.f32.mrf.mxu0
        %v5335 = vadd.f32 0.0, %v5334
        %v5336 = vpop.f32.mrf.mxu0
        %v5337 = vadd.f32 0.0, %v5336
        %5338 = vmatmul.bf16.gmra.mxu0 %v5178
        %v5339 = vpop.f32.mrf.mxu0
        %v5340 = vadd.f32 0.0, %v5339
        %v5341 = vpop.f32.mrf.mxu0
        %v5342 = vadd.f32 0.0, %v5341
        %5343 = vmatmul.bf16.gmra.mxu0 %v5181
        %v5344 = vpop.f32.mrf.mxu0
        %v5345 = vadd.f32 0.0, %v5344
        %v5346 = vpop.f32.mrf.mxu0
        %v5347 = vadd.f32 0.0, %v5346
        %5348 = vmatmul.bf16.gmra.mxu0 %v5184
        %v5349 = vpop.f32.mrf.mxu0
        %v5350 = vadd.f32 0.0, %v5349
        %v5351 = vpop.f32.mrf.mxu0
        %v5352 = vadd.f32 0.0, %v5351
        %5353 = vmatmul.bf16.gmra.mxu0 %v5187
        %v5354 = vpop.f32.mrf.mxu0
        %v5355 = vadd.f32 0.0, %v5354
        %v5356 = vpop.f32.mrf.mxu0
        %v5357 = vadd.f32 0.0, %v5356
        %5358 = vmatmul.bf16.gmra.mxu0 %v5190
        %v5359 = vpop.f32.mrf.mxu0
        %v5360 = vadd.f32 0.0, %v5359
        %v5361 = vpop.f32.mrf.mxu0
        %v5362 = vadd.f32 0.0, %v5361
        %5363 = vmatmul.bf16.gmra.mxu0 %v5193
        %v5364 = vpop.f32.mrf.mxu0
        %v5365 = vadd.f32 0.0, %v5364
        %v5366 = vpop.f32.mrf.mxu0
        %v5367 = vadd.f32 0.0, %v5366
        %5368 = vmatmul.bf16.gmra.mxu0 %v5196
        %v5369 = vpop.f32.mrf.mxu0
        %v5370 = vadd.f32 0.0, %v5369
        %v5371 = vpop.f32.mrf.mxu0
        %v5372 = vadd.f32 0.0, %v5371
        %5373 = vmatmul.bf16.gmra.mxu0 %v5199
        %v5374 = vpop.f32.mrf.mxu0
        %v5375 = vadd.f32 0.0, %v5374
        %v5376 = vpop.f32.mrf.mxu0
        %v5377 = vadd.f32 0.0, %v5376
        %5378 = vmatmul.bf16.gmra.mxu0 %v5202
        %v5379 = vpop.f32.mrf.mxu0
        %v5380 = vadd.f32 0.0, %v5379
        %v5381 = vpop.f32.mrf.mxu0
        %v5382 = vadd.f32 0.0, %v5381
        %5383 = vmatmul.bf16.gmra.mxu0 %v5205
        %v5384 = vpop.f32.mrf.mxu0
        %v5385 = vadd.f32 0.0, %v5384
        %v5386 = vpop.f32.mrf.mxu0
        %v5387 = vadd.f32 0.0, %v5386
        %5388 = vmatmul.bf16.gmra.mxu0 %v5208
        %v5389 = vpop.f32.mrf.mxu0
        %v5390 = vadd.f32 0.0, %v5389
        %v5391 = vpop.f32.mrf.mxu0
        %v5392 = vadd.f32 0.0, %v5391
        %5393 = vmatmul.bf16.gmra.mxu0 %v5211
        %v5394 = vpop.f32.mrf.mxu0
        %v5395 = vadd.f32 0.0, %v5394
        %v5396 = vpop.f32.mrf.mxu0
        %v5397 = vadd.f32 0.0, %v5396
        %5398 = vmatmul.bf16.gmra.mxu0 %v5214
        %v5399 = vpop.f32.mrf.mxu0
        %v5400 = vadd.f32 0.0, %v5399
        %v5401 = vpop.f32.mrf.mxu0
        %v5402 = vadd.f32 0.0, %v5401
        %5403 = vmatmul.bf16.gmra.mxu0 %v5217
        %v5404 = vpop.f32.mrf.mxu0
        %v5405 = vadd.f32 0.0, %v5404
        %v5406 = vpop.f32.mrf.mxu0
        %v5407 = vadd.f32 0.0, %v5406
        %5408 = vmatmul.bf16.gmra.mxu0 %v5220
        %v5409 = vpop.f32.mrf.mxu0
        %v5410 = vadd.f32 0.0, %v5409
        %v5411 = vpop.f32.mrf.mxu0
        %v5412 = vadd.f32 0.0, %v5411
        %5413 = vmatmul.bf16.gmra.mxu0 %v5223
        %v5414 = vpop.f32.mrf.mxu0
        %v5415 = vadd.f32 0.0, %v5414
        %v5416 = vpop.f32.mrf.mxu0
        %v5417 = vadd.f32 0.0, %v5416
        %5418 = vmatmul.bf16.gmra.mxu0 %v5226
        %v5419 = vpop.f32.mrf.mxu0
        %v5420 = vadd.f32 0.0, %v5419
        %v5421 = vpop.f32.mrf.mxu0
        %v5422 = vadd.f32 0.0, %v5421
        %5423 = vmatmul.bf16.gmra.mxu0 %v5229
        %v5424 = vpop.f32.mrf.mxu0
        %v5425 = vadd.f32 0.0, %v5424
        %v5426 = vpop.f32.mrf.mxu0
        %v5427 = vadd.f32 0.0, %v5426
        %5428 = vmatmul.bf16.gmra.mxu0 %v5232
        %v5429 = vpop.f32.mrf.mxu0
        %v5430 = vadd.f32 0.0, %v5429
        %v5431 = vpop.f32.mrf.mxu0
        %v5432 = vadd.f32 0.0, %v5431
        %5433 = vmatmul.bf16.gmra.mxu0 %v5235
        %v5434 = vpop.f32.mrf.mxu0
        %v5435 = vadd.f32 0.0, %v5434
        %v5436 = vpop.f32.mrf.mxu0
        %v5437 = vadd.f32 0.0, %v5436
        %5438 = vmatmul.bf16.gmra.mxu0 %v5238
        %v5439 = vpop.f32.mrf.mxu0
        %v5440 = vadd.f32 0.0, %v5439
        %v5441 = vpop.f32.mrf.mxu0
        %v5442 = vadd.f32 0.0, %v5441
        %5443 = vdwg.mxu0
        %v5444 = vadd.f32 %v4848, %v5250
        %v5445 = vadd.f32 %v4849, %v5252
        %v5446 = vadd.f32 %v4850, %v5255
        %v5447 = vadd.f32 %v4851, %v5257
        %v5448 = vadd.f32 %v4852, %v5260
        %v5449 = vadd.f32 %v4853, %v5262
        %v5450 = vadd.f32 %v4854, %v5265
        %v5451 = vadd.f32 %v4855, %v5267
        %v5452 = vadd.f32 %v4856, %v5270
        %v5453 = vadd.f32 %v4857, %v5272
        %v5454 = vadd.f32 %v4858, %v5275
        %v5455 = vadd.f32 %v4859, %v5277
        %v5456 = vadd.f32 %v4860, %v5280
        %v5457 = vadd.f32 %v4861, %v5282
        %v5458 = vadd.f32 %v4862, %v5285
        %v5459 = vadd.f32 %v4863, %v5287
        %v5460 = vadd.f32 %v4864, %v5290
        %v5461 = vadd.f32 %v4865, %v5292
        %v5462 = vadd.f32 %v4866, %v5295
        %v5463 = vadd.f32 %v4867, %v5297
        %v5464 = vadd.f32 %v4868, %v5300
        %v5465 = vadd.f32 %v4869, %v5302
        %v5466 = vadd.f32 %v4870, %v5305
        %v5467 = vadd.f32 %v4871, %v5307
        %v5468 = vadd.f32 %v4872, %v5310
        %v5469 = vadd.f32 %v4873, %v5312
        %v5470 = vadd.f32 %v4874, %v5315
        %v5471 = vadd.f32 %v4875, %v5317
        %v5472 = vadd.f32 %v4876, %v5320
        %v5473 = vadd.f32 %v4877, %v5322
        %v5474 = vadd.f32 %v4878, %v5325
        %v5475 = vadd.f32 %v4879, %v5327
        %v5476 = vadd.f32 %v4880, %v5330
        %v5477 = vadd.f32 %v4881, %v5332
        %v5478 = vadd.f32 %v4882, %v5335
        %v5479 = vadd.f32 %v4883, %v5337
        %v5480 = vadd.f32 %v4884, %v5340
        %v5481 = vadd.f32 %v4885, %v5342
        %v5482 = vadd.f32 %v4886, %v5345
        %v5483 = vadd.f32 %v4887, %v5347
        %v5484 = vadd.f32 %v4888, %v5350
        %v5485 = vadd.f32 %v4889, %v5352
        %v5486 = vadd.f32 %v4890, %v5355
        %v5487 = vadd.f32 %v4891, %v5357
        %v5488 = vadd.f32 %v4892, %v5360
        %v5489 = vadd.f32 %v4893, %v5362
        %v5490 = vadd.f32 %v4894, %v5365
        %v5491 = vadd.f32 %v4895, %v5367
        %v5492 = vadd.f32 %v4896, %v5370
        %v5493 = vadd.f32 %v4897, %v5372
        %v5494 = vadd.f32 %v4898, %v5375
        %v5495 = vadd.f32 %v4899, %v5377
        %v5496 = vadd.f32 %v4900, %v5380
        %v5497 = vadd.f32 %v4901, %v5382
        %v5498 = vadd.f32 %v4902, %v5385
        %v5499 = vadd.f32 %v4903, %v5387
        %v5500 = vadd.f32 %v4904, %v5390
        %v5501 = vadd.f32 %v4905, %v5392
        %v5502 = vadd.f32 %v4906, %v5395
        %v5503 = vadd.f32 %v4907, %v5397
        %v5504 = vadd.f32 %v4908, %v5400
        %v5505 = vadd.f32 %v4909, %v5402
        %v5506 = vadd.f32 %v4910, %v5405
        %v5507 = vadd.f32 %v4911, %v5407
        %v5508 = vadd.f32 %v4912, %v5410
        %v5509 = vadd.f32 %v4913, %v5412
        %v5510 = vadd.f32 %v4914, %v5415
        %v5511 = vadd.f32 %v4915, %v5417
        %v5512 = vadd.f32 %v4916, %v5420
        %v5513 = vadd.f32 %v4917, %v5422
        %v5514 = vadd.f32 %v4918, %v5425
        %v5515 = vadd.f32 %v4919, %v5427
        %v5516 = vadd.f32 %v4920, %v5430
        %v5517 = vadd.f32 %v4921, %v5432
        %v5518 = vadd.f32 %v4922, %v5435
        %v5519 = vadd.f32 %v4923, %v5437
        %v5520 = vadd.f32 %v4924, %v5440
        %v5521 = vadd.f32 %v4925, %v5442
        %s5522 = scalar_lea.vmem [#allocation7], 128
        %v5523 = vld [vmem:[%s5522] sm:$0xf]
        %v5524 = vld [vmem:[%s5522 + $0x4] sm:$0xf]
        %v5525 = vld [vmem:[%s5522 + $0x8] sm:$0xf]
        %v5526 = vld [vmem:[%s5522 + $0xc] sm:$0xf]
        %vm5527 = vcmask 1044480
        %v5528 = vrot.slane %v1049, 3
        %v5529 = vrot.slane %v1050, 3
        %v5530 = vsel %vm5527, %v5528, %v5529
        %v5531 = vrot.slane %v1051, 3
        %v5532 = vsel %vm5527, %v5529, %v5531
        %v5533 = vrot.slane %v1052, 3
        %v5534 = vsel %vm5527, %v5531, %v5533
        %v5535 = vrot.slane %v1053, 3
        %v5536 = vsel %vm5527, %v5533, %v5535
        %v5537 = vrot.slane %v1054, 3
        %v5538 = vsel %vm5527, %v5535, %v5537
        %v5539 = vrot.slane %v1055, 3
        %v5540 = vsel %vm5527, %v5537, %v5539
        %v5541 = vrot.slane %v1056, 3
        %v5542 = vsel %vm5527, %v5539, %v5541
        %v5543 = vrot.slane %v1057, 3
        %v5544 = vsel %vm5527, %v5541, %v5543
        %v5545 = vrot.slane %v1058, 3
        %v5546 = vsel %vm5527, %v5543, %v5545
        %v5547 = vrot.slane %v1059, 3
        %v5548 = vsel %vm5527, %v5545, %v5547
        %v5549 = vrot.slane %v1060, 3
        %v5550 = vsel %vm5527, %v5547, %v5549
        %v5551 = vrot.slane %v1061, 3
        %v5552 = vsel %vm5527, %v5549, %v5551
        %v5553 = vrot.slane %v1062, 3
        %v5554 = vsel %vm5527, %v5551, %v5553
        %v5555 = vrot.slane %v1063, 3
        %v5556 = vsel %vm5527, %v5553, %v5555
        %v5557 = vrot.slane %v1064, 3
        %v5558 = vsel %vm5527, %v5555, %v5557
        %v5559 = vrot.slane %v1065, 3
        %v5560 = vsel %vm5527, %v5557, %v5559
        %v5561 = vrot.slane %v1066, 3
        %v5562 = vsel %vm5527, %v5559, %v5561
        %v5563 = vrot.slane %v1067, 3
        %v5564 = vsel %vm5527, %v5561, %v5563
        %v5565 = vrot.slane %v1068, 3
        %v5566 = vsel %vm5527, %v5563, %v5565
        %v5567 = vrot.slane %v1069, 3
        %v5568 = vsel %vm5527, %v5565, %v5567
        %v5569 = vrot.slane %v1070, 3
        %v5570 = vsel %vm5527, %v5567, %v5569
        %v5571 = vrot.slane %v1071, 3
        %v5572 = vsel %vm5527, %v5569, %v5571
        %v5573 = vrot.slane %v1072, 3
        %v5574 = vsel %vm5527, %v5571, %v5573
        %v5575 = vrot.slane %v1073, 3
        %v5576 = vsel %vm5527, %v5573, %v5575
        %v5577 = vrot.slane %v1074, 3
        %v5578 = vsel %vm5527, %v5575, %v5577
        %v5579 = vrot.slane %v1075, 3
        %v5580 = vsel %vm5527, %v5577, %v5579
        %v5581 = vrot.slane %v1076, 3
        %v5582 = vsel %vm5527, %v5579, %v5581
        %v5583 = vrot.slane %v1077, 3
        %v5584 = vsel %vm5527, %v5581, %v5583
        %v5585 = vrot.slane %v1078, 3
        %v5586 = vsel %vm5527, %v5583, %v5585
        %v5587 = vrot.slane %v1079, 3
        %v5588 = vsel %vm5527, %v5585, %v5587
        %v5589 = vrot.slane %v1080, 3
        %v5590 = vsel %vm5527, %v5587, %v5589
        %v5591 = vrot.slane %v1081, 3
        %v5592 = vsel %vm5527, %v5589, %v5591
        %v5593 = vrot.slane %v1082, 3
        %v5594 = vsel %vm5527, %v5591, %v5593
        %v5595 = vrot.slane %v1083, 3
        %v5596 = vsel %vm5527, %v5593, %v5595
        %v5597 = vrot.slane %v1084, 3
        %v5598 = vsel %vm5527, %v5595, %v5597
        %v5599 = vrot.slane %v4423, 3
        %v5600 = vsel %vm5527, %v5597, %v5599
        %v5601 = vrot.slane %v4424, 3
        %v5602 = vsel %vm5527, %v5599, %v5601
        %v5603 = vrot.slane %v4425, 3
        %v5604 = vsel %vm5527, %v5601, %v5603
        %v5605 = vrot.slane %v4426, 3
        %v5606 = vsel %vm5527, %v5603, %v5605
        %v5611 = vunpack.c.l.b16 %v5523
        %v5612 = vunpack.c.l.b16 %v5524
        %v5613 = vunpack.c.l.b16 %v5525
        %v5614 = vunpack.c.l.b16 %v5526
        %v5615 = vpack.c.b16 %v5612, %v5611
        %v5616 = vpack.c.b16 %v5614, %v5613
        %v5620 = vsel %vm1424, %v5530, 0
        %v5623 = vsel %vm1424, %v5532, 0
        %v5626 = vsel %vm1424, %v5534, 0
        %v5629 = vsel %vm1424, %v5536, 0
        %v5632 = vsel %vm1424, %v5538, 0
        %v5635 = vsel %vm1424, %v5540, 0
        %v5638 = vsel %vm1424, %v5542, 0
        %v5641 = vsel %vm1424, %v5544, 0
        %v5644 = vsel %vm1424, %v5546, 0
        %v5647 = vsel %vm1424, %v5548, 0
        %v5650 = vsel %vm1424, %v5550, 0
        %v5653 = vsel %vm1424, %v5552, 0
        %v5656 = vsel %vm1424, %v5554, 0
        %v5659 = vsel %vm1424, %v5556, 0
        %v5662 = vsel %vm1424, %v5558, 0
        %v5665 = vsel %vm1424, %v5560, 0
        %v5668 = vsel %vm1424, %v5562, 0
        %v5671 = vsel %vm1424, %v5564, 0
        %v5674 = vsel %vm1424, %v5566, 0
        %v5677 = vsel %vm1424, %v5568, 0
        %v5680 = vsel %vm1424, %v5570, 0
        %v5683 = vsel %vm1424, %v5572, 0
        %v5686 = vsel %vm1424, %v5574, 0
        %v5689 = vsel %vm1424, %v5576, 0
        %v5692 = vsel %vm1424, %v5578, 0
        %v5695 = vsel %vm1424, %v5580, 0
        %v5698 = vsel %vm1424, %v5582, 0
        %v5701 = vsel %vm1424, %v5584, 0
        %v5704 = vsel %vm1424, %v5586, 0
        %v5707 = vsel %vm1424, %v5588, 0
        %v5710 = vsel %vm1424, %v5590, 0
        %v5713 = vsel %vm1424, %v5592, 0
        %v5716 = vsel %vm1424, %v5594, 0
        %v5719 = vsel %vm1424, %v5596, 0
        %v5722 = vsel %vm1424, %v5598, 0
        %v5725 = vsel %vm1424, %v5600, 0
        %v5728 = vsel %vm1424, %v5602, 0
        %v5731 = vsel %vm1424, %v5604, 0
        %v5734 = vsel %vm1424, %v5606, 0
        %5736 = vmatpush.bf16.msra.mxu0 0
        %5737 = vmatpush.bf16.msra.mxu0 0
        %5738 = vmatpush.bf16.msra.mxu0 0
        %5739 = vmatpush.bf16.msra.mxu0 0
        %5740 = vmatpush.bf16.msra.mxu0 0
        %5741 = vmatpush.bf16.msra.mxu0 0
        %5742 = vmatpush.bf16.msra.mxu0 %v5616
        %5743 = vmatpush.bf16.msra.mxu0 %v5615
        %5744 = vmatmul.bf16.gmra.mxu0 %v5620
        %v5745 = vpop.f32.mrf.mxu0
        %v5746 = vadd.f32 0.0, %v5745
        %v5747 = vpop.f32.mrf.mxu0
        %v5748 = vadd.f32 0.0, %v5747
        %5749 = vmatmul.bf16.gmra.mxu0 %v5623
        %v5750 = vpop.f32.mrf.mxu0
        %v5751 = vadd.f32 0.0, %v5750
        %v5752 = vpop.f32.mrf.mxu0
        %v5753 = vadd.f32 0.0, %v5752
        %5754 = vmatmul.bf16.gmra.mxu0 %v5626
        %v5755 = vpop.f32.mrf.mxu0
        %v5756 = vadd.f32 0.0, %v5755
        %v5757 = vpop.f32.mrf.mxu0
        %v5758 = vadd.f32 0.0, %v5757
        %5759 = vmatmul.bf16.gmra.mxu0 %v5629
        %v5760 = vpop.f32.mrf.mxu0
        %v5761 = vadd.f32 0.0, %v5760
        %v5762 = vpop.f32.mrf.mxu0
        %v5763 = vadd.f32 0.0, %v5762
        %5764 = vmatmul.bf16.gmra.mxu0 %v5632
        %v5765 = vpop.f32.mrf.mxu0
        %v5766 = vadd.f32 0.0, %v5765
        %v5767 = vpop.f32.mrf.mxu0
        %v5768 = vadd.f32 0.0, %v5767
        %5769 = vmatmul.bf16.gmra.mxu0 %v5635
        %v5770 = vpop.f32.mrf.mxu0
        %v5771 = vadd.f32 0.0, %v5770
        %v5772 = vpop.f32.mrf.mxu0
        %v5773 = vadd.f32 0.0, %v5772
        %5774 = vmatmul.bf16.gmra.mxu0 %v5638
        %v5775 = vpop.f32.mrf.mxu0
        %v5776 = vadd.f32 0.0, %v5775
        %v5777 = vpop.f32.mrf.mxu0
        %v5778 = vadd.f32 0.0, %v5777
        %5779 = vmatmul.bf16.gmra.mxu0 %v5641
        %v5780 = vpop.f32.mrf.mxu0
        %v5781 = vadd.f32 0.0, %v5780
        %v5782 = vpop.f32.mrf.mxu0
        %v5783 = vadd.f32 0.0, %v5782
        %5784 = vmatmul.bf16.gmra.mxu0 %v5644
        %v5785 = vpop.f32.mrf.mxu0
        %v5786 = vadd.f32 0.0, %v5785
        %v5787 = vpop.f32.mrf.mxu0
        %v5788 = vadd.f32 0.0, %v5787
        %5789 = vmatmul.bf16.gmra.mxu0 %v5647
        %v5790 = vpop.f32.mrf.mxu0
        %v5791 = vadd.f32 0.0, %v5790
        %v5792 = vpop.f32.mrf.mxu0
        %v5793 = vadd.f32 0.0, %v5792
        %5794 = vmatmul.bf16.gmra.mxu0 %v5650
        %v5795 = vpop.f32.mrf.mxu0
        %v5796 = vadd.f32 0.0, %v5795
        %v5797 = vpop.f32.mrf.mxu0
        %v5798 = vadd.f32 0.0, %v5797
        %5799 = vmatmul.bf16.gmra.mxu0 %v5653
        %v5800 = vpop.f32.mrf.mxu0
        %v5801 = vadd.f32 0.0, %v5800
        %v5802 = vpop.f32.mrf.mxu0
        %v5803 = vadd.f32 0.0, %v5802
        %5804 = vmatmul.bf16.gmra.mxu0 %v5656
        %v5805 = vpop.f32.mrf.mxu0
        %v5806 = vadd.f32 0.0, %v5805
        %v5807 = vpop.f32.mrf.mxu0
        %v5808 = vadd.f32 0.0, %v5807
        %5809 = vmatmul.bf16.gmra.mxu0 %v5659
        %v5810 = vpop.f32.mrf.mxu0
        %v5811 = vadd.f32 0.0, %v5810
        %v5812 = vpop.f32.mrf.mxu0
        %v5813 = vadd.f32 0.0, %v5812
        %5814 = vmatmul.bf16.gmra.mxu0 %v5662
        %v5815 = vpop.f32.mrf.mxu0
        %v5816 = vadd.f32 0.0, %v5815
        %v5817 = vpop.f32.mrf.mxu0
        %v5818 = vadd.f32 0.0, %v5817
        %5819 = vmatmul.bf16.gmra.mxu0 %v5665
        %v5820 = vpop.f32.mrf.mxu0
        %v5821 = vadd.f32 0.0, %v5820
        %v5822 = vpop.f32.mrf.mxu0
        %v5823 = vadd.f32 0.0, %v5822
        %5824 = vmatmul.bf16.gmra.mxu0 %v5668
        %v5825 = vpop.f32.mrf.mxu0
        %v5826 = vadd.f32 0.0, %v5825
        %v5827 = vpop.f32.mrf.mxu0
        %v5828 = vadd.f32 0.0, %v5827
        %5829 = vmatmul.bf16.gmra.mxu0 %v5671
        %v5830 = vpop.f32.mrf.mxu0
        %v5831 = vadd.f32 0.0, %v5830
        %v5832 = vpop.f32.mrf.mxu0
        %v5833 = vadd.f32 0.0, %v5832
        %5834 = vmatmul.bf16.gmra.mxu0 %v5674
        %v5835 = vpop.f32.mrf.mxu0
        %v5836 = vadd.f32 0.0, %v5835
        %v5837 = vpop.f32.mrf.mxu0
        %v5838 = vadd.f32 0.0, %v5837
        %5839 = vmatmul.bf16.gmra.mxu0 %v5677
        %v5840 = vpop.f32.mrf.mxu0
        %v5841 = vadd.f32 0.0, %v5840
        %v5842 = vpop.f32.mrf.mxu0
        %v5843 = vadd.f32 0.0, %v5842
        %5844 = vmatmul.bf16.gmra.mxu0 %v5680
        %v5845 = vpop.f32.mrf.mxu0
        %v5846 = vadd.f32 0.0, %v5845
        %v5847 = vpop.f32.mrf.mxu0
        %v5848 = vadd.f32 0.0, %v5847
        %5849 = vmatmul.bf16.gmra.mxu0 %v5683
        %v5850 = vpop.f32.mrf.mxu0
        %v5851 = vadd.f32 0.0, %v5850
        %v5852 = vpop.f32.mrf.mxu0
        %v5853 = vadd.f32 0.0, %v5852
        %5854 = vmatmul.bf16.gmra.mxu0 %v5686
        %v5855 = vpop.f32.mrf.mxu0
        %v5856 = vadd.f32 0.0, %v5855
        %v5857 = vpop.f32.mrf.mxu0
        %v5858 = vadd.f32 0.0, %v5857
        %5859 = vmatmul.bf16.gmra.mxu0 %v5689
        %v5860 = vpop.f32.mrf.mxu0
        %v5861 = vadd.f32 0.0, %v5860
        %v5862 = vpop.f32.mrf.mxu0
        %v5863 = vadd.f32 0.0, %v5862
        %5864 = vmatmul.bf16.gmra.mxu0 %v5692
        %v5865 = vpop.f32.mrf.mxu0
        %v5866 = vadd.f32 0.0, %v5865
        %v5867 = vpop.f32.mrf.mxu0
        %v5868 = vadd.f32 0.0, %v5867
        %5869 = vmatmul.bf16.gmra.mxu0 %v5695
        %v5870 = vpop.f32.mrf.mxu0
        %v5871 = vadd.f32 0.0, %v5870
        %v5872 = vpop.f32.mrf.mxu0
        %v5873 = vadd.f32 0.0, %v5872
        %5874 = vmatmul.bf16.gmra.mxu0 %v5698
        %v5875 = vpop.f32.mrf.mxu0
        %v5876 = vadd.f32 0.0, %v5875
        %v5877 = vpop.f32.mrf.mxu0
        %v5878 = vadd.f32 0.0, %v5877
        %5879 = vmatmul.bf16.gmra.mxu0 %v5701
        %v5880 = vpop.f32.mrf.mxu0
        %v5881 = vadd.f32 0.0, %v5880
        %v5882 = vpop.f32.mrf.mxu0
        %v5883 = vadd.f32 0.0, %v5882
        %5884 = vmatmul.bf16.gmra.mxu0 %v5704
        %v5885 = vpop.f32.mrf.mxu0
        %v5886 = vadd.f32 0.0, %v5885
        %v5887 = vpop.f32.mrf.mxu0
        %v5888 = vadd.f32 0.0, %v5887
        %5889 = vmatmul.bf16.gmra.mxu0 %v5707
        %v5890 = vpop.f32.mrf.mxu0
        %v5891 = vadd.f32 0.0, %v5890
        %v5892 = vpop.f32.mrf.mxu0
        %v5893 = vadd.f32 0.0, %v5892
        %5894 = vmatmul.bf16.gmra.mxu0 %v5710
        %v5895 = vpop.f32.mrf.mxu0
        %v5896 = vadd.f32 0.0, %v5895
        %v5897 = vpop.f32.mrf.mxu0
        %v5898 = vadd.f32 0.0, %v5897
        %5899 = vmatmul.bf16.gmra.mxu0 %v5713
        %v5900 = vpop.f32.mrf.mxu0
        %v5901 = vadd.f32 0.0, %v5900
        %v5902 = vpop.f32.mrf.mxu0
        %v5903 = vadd.f32 0.0, %v5902
        %5904 = vmatmul.bf16.gmra.mxu0 %v5716
        %v5905 = vpop.f32.mrf.mxu0
        %v5906 = vadd.f32 0.0, %v5905
        %v5907 = vpop.f32.mrf.mxu0
        %v5908 = vadd.f32 0.0, %v5907
        %5909 = vmatmul.bf16.gmra.mxu0 %v5719
        %v5910 = vpop.f32.mrf.mxu0
        %v5911 = vadd.f32 0.0, %v5910
        %v5912 = vpop.f32.mrf.mxu0
        %v5913 = vadd.f32 0.0, %v5912
        %5914 = vmatmul.bf16.gmra.mxu0 %v5722
        %v5915 = vpop.f32.mrf.mxu0
        %v5916 = vadd.f32 0.0, %v5915
        %v5917 = vpop.f32.mrf.mxu0
        %v5918 = vadd.f32 0.0, %v5917
        %5919 = vmatmul.bf16.gmra.mxu0 %v5725
        %v5920 = vpop.f32.mrf.mxu0
        %v5921 = vadd.f32 0.0, %v5920
        %v5922 = vpop.f32.mrf.mxu0
        %v5923 = vadd.f32 0.0, %v5922
        %5924 = vmatmul.bf16.gmra.mxu0 %v5728
        %v5925 = vpop.f32.mrf.mxu0
        %v5926 = vadd.f32 0.0, %v5925
        %v5927 = vpop.f32.mrf.mxu0
        %v5928 = vadd.f32 0.0, %v5927
        %5929 = vmatmul.bf16.gmra.mxu0 %v5731
        %v5930 = vpop.f32.mrf.mxu0
        %v5931 = vadd.f32 0.0, %v5930
        %v5932 = vpop.f32.mrf.mxu0
        %v5933 = vadd.f32 0.0, %v5932
        %5934 = vmatmul.bf16.gmra.mxu0 %v5734
        %v5935 = vpop.f32.mrf.mxu0
        %v5936 = vadd.f32 0.0, %v5935
        %v5937 = vpop.f32.mrf.mxu0
        %v5938 = vadd.f32 0.0, %v5937
        %5939 = vdwg.mxu0
        %v5940 = vadd.f32 %v5444, %v5746
        %v5941 = vadd.f32 %v5445, %v5748
        %v5942 = vadd.f32 %v5446, %v5751
        %v5943 = vadd.f32 %v5447, %v5753
        %v5944 = vadd.f32 %v5448, %v5756
        %v5945 = vadd.f32 %v5449, %v5758
        %v5946 = vadd.f32 %v5450, %v5761
        %v5947 = vadd.f32 %v5451, %v5763
        %v5948 = vadd.f32 %v5452, %v5766
        %v5949 = vadd.f32 %v5453, %v5768
        %v5950 = vadd.f32 %v5454, %v5771
        %v5951 = vadd.f32 %v5455, %v5773
        %v5952 = vadd.f32 %v5456, %v5776
        %v5953 = vadd.f32 %v5457, %v5778
        %v5954 = vadd.f32 %v5458, %v5781
        %v5955 = vadd.f32 %v5459, %v5783
        %v5956 = vadd.f32 %v5460, %v5786
        %v5957 = vadd.f32 %v5461, %v5788
        %v5958 = vadd.f32 %v5462, %v5791
        %v5959 = vadd.f32 %v5463, %v5793
        %v5960 = vadd.f32 %v5464, %v5796
        %v5961 = vadd.f32 %v5465, %v5798
        %v5962 = vadd.f32 %v5466, %v5801
        %v5963 = vadd.f32 %v5467, %v5803
        %v5964 = vadd.f32 %v5468, %v5806
        %v5965 = vadd.f32 %v5469, %v5808
        %v5966 = vadd.f32 %v5470, %v5811
        %v5967 = vadd.f32 %v5471, %v5813
        %v5968 = vadd.f32 %v5472, %v5816
        %v5969 = vadd.f32 %v5473, %v5818
        %v5970 = vadd.f32 %v5474, %v5821
        %v5971 = vadd.f32 %v5475, %v5823
        %v5972 = vadd.f32 %v5476, %v5826
        %v5973 = vadd.f32 %v5477, %v5828
        %v5974 = vadd.f32 %v5478, %v5831
        %v5975 = vadd.f32 %v5479, %v5833
        %v5976 = vadd.f32 %v5480, %v5836
        %v5977 = vadd.f32 %v5481, %v5838
        %v5978 = vadd.f32 %v5482, %v5841
        %v5979 = vadd.f32 %v5483, %v5843
        %v5980 = vadd.f32 %v5484, %v5846
        %v5981 = vadd.f32 %v5485, %v5848
        %v5982 = vadd.f32 %v5486, %v5851
        %v5983 = vadd.f32 %v5487, %v5853
        %v5984 = vadd.f32 %v5488, %v5856
        %v5985 = vadd.f32 %v5489, %v5858
        %v5986 = vadd.f32 %v5490, %v5861
        %v5987 = vadd.f32 %v5491, %v5863
        %v5988 = vadd.f32 %v5492, %v5866
        %v5989 = vadd.f32 %v5493, %v5868
        %v5990 = vadd.f32 %v5494, %v5871
        %v5991 = vadd.f32 %v5495, %v5873
        %v5992 = vadd.f32 %v5496, %v5876
        %v5993 = vadd.f32 %v5497, %v5878
        %v5994 = vadd.f32 %v5498, %v5881
        %v5995 = vadd.f32 %v5499, %v5883
        %v5996 = vadd.f32 %v5500, %v5886
        %v5997 = vadd.f32 %v5501, %v5888
        %v5998 = vadd.f32 %v5502, %v5891
        %v5999 = vadd.f32 %v5503, %v5893
        %v6000 = vadd.f32 %v5504, %v5896
        %v6001 = vadd.f32 %v5505, %v5898
        %v6002 = vadd.f32 %v5506, %v5901
        %v6003 = vadd.f32 %v5507, %v5903
        %v6004 = vadd.f32 %v5508, %v5906
        %v6005 = vadd.f32 %v5509, %v5908
        %v6006 = vadd.f32 %v5510, %v5911
        %v6007 = vadd.f32 %v5511, %v5913
        %v6008 = vadd.f32 %v5512, %v5916
        %v6009 = vadd.f32 %v5513, %v5918
        %v6010 = vadd.f32 %v5514, %v5921
        %v6011 = vadd.f32 %v5515, %v5923
        %v6012 = vadd.f32 %v5516, %v5926
        %v6013 = vadd.f32 %v5517, %v5928
        %v6014 = vadd.f32 %v5518, %v5931
        %v6015 = vadd.f32 %v5519, %v5933
        %v6016 = vadd.f32 %v5520, %v5936
        %v6017 = vadd.f32 %v5521, %v5938
        %v6018 = vld [vmem:[#allocation8] sm:$0x1]
        %v6020 = vperm.slane %v6018, 0
        %v6022 = vadd.f32 %v5940, %v6020
        %v6023 = vadd.f32 %v5941, %v6020
        %v6024 = vadd.f32 %v5942, %v6020
        %v6025 = vadd.f32 %v5943, %v6020
        %v6026 = vadd.f32 %v5944, %v6020
        %v6027 = vadd.f32 %v5945, %v6020
        %v6028 = vadd.f32 %v5946, %v6020
        %v6029 = vadd.f32 %v5947, %v6020
        %v6030 = vadd.f32 %v5948, %v6020
        %v6031 = vadd.f32 %v5949, %v6020
        %v6032 = vadd.f32 %v5950, %v6020
        %v6033 = vadd.f32 %v5951, %v6020
        %v6034 = vadd.f32 %v5952, %v6020
        %v6035 = vadd.f32 %v5953, %v6020
        %v6036 = vadd.f32 %v5954, %v6020
        %v6037 = vadd.f32 %v5955, %v6020
        %v6038 = vadd.f32 %v5956, %v6020
        %v6039 = vadd.f32 %v5957, %v6020
        %v6040 = vadd.f32 %v5958, %v6020
        %v6041 = vadd.f32 %v5959, %v6020
        %v6042 = vadd.f32 %v5960, %v6020
        %v6043 = vadd.f32 %v5961, %v6020
        %v6044 = vadd.f32 %v5962, %v6020
        %v6045 = vadd.f32 %v5963, %v6020
        %v6046 = vadd.f32 %v5964, %v6020
        %v6047 = vadd.f32 %v5965, %v6020
        %v6048 = vadd.f32 %v5966, %v6020
        %v6049 = vadd.f32 %v5967, %v6020
        %v6050 = vadd.f32 %v5968, %v6020
        %v6051 = vadd.f32 %v5969, %v6020
        %v6052 = vadd.f32 %v5970, %v6020
        %v6053 = vadd.f32 %v5971, %v6020
        %v6054 = vadd.f32 %v5972, %v6020
        %v6055 = vadd.f32 %v5973, %v6020
        %v6056 = vadd.f32 %v5974, %v6020
        %v6057 = vadd.f32 %v5975, %v6020
        %v6058 = vadd.f32 %v5976, %v6020
        %v6059 = vadd.f32 %v5977, %v6020
        %v6060 = vadd.f32 %v5978, %v6020
        %v6061 = vadd.f32 %v5979, %v6020
        %v6062 = vadd.f32 %v5980, %v6020
        %v6063 = vadd.f32 %v5981, %v6020
        %v6064 = vadd.f32 %v5982, %v6020
        %v6065 = vadd.f32 %v5983, %v6020
        %v6066 = vadd.f32 %v5984, %v6020
        %v6067 = vadd.f32 %v5985, %v6020
        %v6068 = vadd.f32 %v5986, %v6020
        %v6069 = vadd.f32 %v5987, %v6020
        %v6070 = vadd.f32 %v5988, %v6020
        %v6071 = vadd.f32 %v5989, %v6020
        %v6072 = vadd.f32 %v5990, %v6020
        %v6073 = vadd.f32 %v5991, %v6020
        %v6074 = vadd.f32 %v5992, %v6020
        %v6075 = vadd.f32 %v5993, %v6020
        %v6076 = vadd.f32 %v5994, %v6020
        %v6077 = vadd.f32 %v5995, %v6020
        %v6078 = vadd.f32 %v5996, %v6020
        %v6079 = vadd.f32 %v5997, %v6020
        %v6080 = vadd.f32 %v5998, %v6020
        %v6081 = vadd.f32 %v5999, %v6020
        %v6082 = vadd.f32 %v6000, %v6020
        %v6083 = vadd.f32 %v6001, %v6020
        %v6084 = vadd.f32 %v6002, %v6020
        %v6085 = vadd.f32 %v6003, %v6020
        %v6086 = vadd.f32 %v6004, %v6020
        %v6087 = vadd.f32 %v6005, %v6020
        %v6088 = vadd.f32 %v6006, %v6020
        %v6089 = vadd.f32 %v6007, %v6020
        %v6090 = vadd.f32 %v6008, %v6020
        %v6091 = vadd.f32 %v6009, %v6020
        %v6092 = vadd.f32 %v6010, %v6020
        %v6093 = vadd.f32 %v6011, %v6020
        %v6094 = vadd.f32 %v6012, %v6020
        %v6095 = vadd.f32 %v6013, %v6020
        %v6096 = vadd.f32 %v6014, %v6020
        %v6097 = vadd.f32 %v6015, %v6020
        %v6098 = vadd.f32 %v6016, %v6020
        %v6099 = vadd.f32 %v6017, %v6020
        %vm6100 = vcmask 523264
        %6101 = vst.msk [vmem:[#allocation2] sm:$0xff] %vm6100, %v6022
        %6102 = vst.msk [vmem:[#allocation2 + $0x8] sm:$0xff] %vm6100, %v6023
        %6103 = vst.msk [vmem:[#allocation2 + $0x10] sm:$0xff] %vm6100, %v6024
        %6104 = vst.msk [vmem:[#allocation2 + $0x18] sm:$0xff] %vm6100, %v6025
        %6105 = vst.msk [vmem:[#allocation2 + $0x20] sm:$0xff] %vm6100, %v6026
        %6106 = vst.msk [vmem:[#allocation2 + $0x28] sm:$0xff] %vm6100, %v6027
        %6107 = vst.msk [vmem:[#allocation2 + $0x30] sm:$0xff] %vm6100, %v6028
        %6108 = vst.msk [vmem:[#allocation2 + $0x38] sm:$0xff] %vm6100, %v6029
        %6109 = vst.msk [vmem:[#allocation2 + $0x40] sm:$0xff] %vm6100, %v6030
        %6110 = vst.msk [vmem:[#allocation2 + $0x48] sm:$0xff] %vm6100, %v6031
        %6111 = vst.msk [vmem:[#allocation2 + $0x50] sm:$0xff] %vm6100, %v6032
        %6112 = vst.msk [vmem:[#allocation2 + $0x58] sm:$0xff] %vm6100, %v6033
        %6113 = vst.msk [vmem:[#allocation2 + $0x60] sm:$0xff] %vm6100, %v6034
        %6114 = vst.msk [vmem:[#allocation2 + $0x68] sm:$0xff] %vm6100, %v6035
        %6115 = vst.msk [vmem:[#allocation2 + $0x70] sm:$0xff] %vm6100, %v6036
        %6116 = vst.msk [vmem:[#allocation2 + $0x78] sm:$0xff] %vm6100, %v6037
        %6117 = vst.msk [vmem:[#allocation2 + $0x80] sm:$0xff] %vm6100, %v6038
        %6118 = vst.msk [vmem:[#allocation2 + $0x88] sm:$0xff] %vm6100, %v6039
        %6119 = vst.msk [vmem:[#allocation2 + $0x90] sm:$0xff] %vm6100, %v6040
        %6120 = vst.msk [vmem:[#allocation2 + $0x98] sm:$0xff] %vm6100, %v6041
        %6121 = vst.msk [vmem:[#allocation2 + $0xa0] sm:$0xff] %vm6100, %v6042
        %6122 = vst.msk [vmem:[#allocation2 + $0xa8] sm:$0xff] %vm6100, %v6043
        %6123 = vst.msk [vmem:[#allocation2 + $0xb0] sm:$0xff] %vm6100, %v6044
        %6124 = vst.msk [vmem:[#allocation2 + $0xb8] sm:$0xff] %vm6100, %v6045
        %6125 = vst.msk [vmem:[#allocation2 + $0xc0] sm:$0xff] %vm6100, %v6046
        %6126 = vst.msk [vmem:[#allocation2 + $0xc8] sm:$0xff] %vm6100, %v6047
        %6127 = vst.msk [vmem:[#allocation2 + $0xd0] sm:$0xff] %vm6100, %v6048
        %6128 = vst.msk [vmem:[#allocation2 + $0xd8] sm:$0xff] %vm6100, %v6049
        %6129 = vst.msk [vmem:[#allocation2 + $0xe0] sm:$0xff] %vm6100, %v6050
        %6130 = vst.msk [vmem:[#allocation2 + $0xe8] sm:$0xff] %vm6100, %v6051
        %6131 = vst.msk [vmem:[#allocation2 + $0xf0] sm:$0xff] %vm6100, %v6052
        %6132 = vst.msk [vmem:[#allocation2 + $0xf8] sm:$0xff] %vm6100, %v6053
        %6133 = vst.msk [vmem:[#allocation2 + $0x100] sm:$0xff] %vm6100, %v6054
        %6134 = vst.msk [vmem:[#allocation2 + $0x108] sm:$0xff] %vm6100, %v6055
        %6135 = vst.msk [vmem:[#allocation2 + $0x110] sm:$0xff] %vm6100, %v6056
        %6136 = vst.msk [vmem:[#allocation2 + $0x118] sm:$0xff] %vm6100, %v6057
        %6137 = vst.msk [vmem:[#allocation2 + $0x120] sm:$0xff] %vm6100, %v6058
        %6138 = vst.msk [vmem:[#allocation2 + $0x128] sm:$0xff] %vm6100, %v6059
        %6139 = vst.msk [vmem:[#allocation2 + $0x130] sm:$0xff] %vm6100, %v6060
        %6140 = vst.msk [vmem:[#allocation2 + $0x138] sm:$0xff] %vm6100, %v6061
        %6141 = vst.msk [vmem:[#allocation2 + $0x140] sm:$0xff] %vm6100, %v6062
        %6142 = vst.msk [vmem:[#allocation2 + $0x148] sm:$0xff] %vm6100, %v6063
        %6143 = vst.msk [vmem:[#allocation2 + $0x150] sm:$0xff] %vm6100, %v6064
        %6144 = vst.msk [vmem:[#allocation2 + $0x158] sm:$0xff] %vm6100, %v6065
        %6145 = vst.msk [vmem:[#allocation2 + $0x160] sm:$0xff] %vm6100, %v6066
        %6146 = vst.msk [vmem:[#allocation2 + $0x168] sm:$0xff] %vm6100, %v6067
        %6147 = vst.msk [vmem:[#allocation2 + $0x170] sm:$0xff] %vm6100, %v6068
        %6148 = vst.msk [vmem:[#allocation2 + $0x178] sm:$0xff] %vm6100, %v6069
        %6149 = vst.msk [vmem:[#allocation2 + $0x180] sm:$0xff] %vm6100, %v6070
        %6150 = vst.msk [vmem:[#allocation2 + $0x188] sm:$0xff] %vm6100, %v6071
        %6151 = vst.msk [vmem:[#allocation2 + $0x190] sm:$0xff] %vm6100, %v6072
        %6152 = vst.msk [vmem:[#allocation2 + $0x198] sm:$0xff] %vm6100, %v6073
        %6153 = vst.msk [vmem:[#allocation2 + $0x1a0] sm:$0xff] %vm6100, %v6074
        %6154 = vst.msk [vmem:[#allocation2 + $0x1a8] sm:$0xff] %vm6100, %v6075
        %6155 = vst.msk [vmem:[#allocation2 + $0x1b0] sm:$0xff] %vm6100, %v6076
        %6156 = vst.msk [vmem:[#allocation2 + $0x1b8] sm:$0xff] %vm6100, %v6077
        %6157 = vst.msk [vmem:[#allocation2 + $0x1c0] sm:$0xff] %vm6100, %v6078
        %6158 = vst.msk [vmem:[#allocation2 + $0x1c8] sm:$0xff] %vm6100, %v6079
        %6159 = vst.msk [vmem:[#allocation2 + $0x1d0] sm:$0xff] %vm6100, %v6080
        %6160 = vst.msk [vmem:[#allocation2 + $0x1d8] sm:$0xff] %vm6100, %v6081
        %6161 = vst.msk [vmem:[#allocation2 + $0x1e0] sm:$0xff] %vm6100, %v6082
        %6162 = vst.msk [vmem:[#allocation2 + $0x1e8] sm:$0xff] %vm6100, %v6083
        %6163 = vst.msk [vmem:[#allocation2 + $0x1f0] sm:$0xff] %vm6100, %v6084
        %6164 = vst.msk [vmem:[#allocation2 + $0x1f8] sm:$0xff] %vm6100, %v6085
        %6165 = vst.msk [vmem:[#allocation2 + $0x200] sm:$0xff] %vm6100, %v6086
        %6166 = vst.msk [vmem:[#allocation2 + $0x208] sm:$0xff] %vm6100, %v6087
        %6167 = vst.msk [vmem:[#allocation2 + $0x210] sm:$0xff] %vm6100, %v6088
        %6168 = vst.msk [vmem:[#allocation2 + $0x218] sm:$0xff] %vm6100, %v6089
        %6169 = vst.msk [vmem:[#allocation2 + $0x220] sm:$0xff] %vm6100, %v6090
        %6170 = vst.msk [vmem:[#allocation2 + $0x228] sm:$0xff] %vm6100, %v6091
        %6171 = vst.msk [vmem:[#allocation2 + $0x230] sm:$0xff] %vm6100, %v6092
        %6172 = vst.msk [vmem:[#allocation2 + $0x238] sm:$0xff] %vm6100, %v6093
        %6173 = vst.msk [vmem:[#allocation2 + $0x240] sm:$0xff] %vm6100, %v6094
        %6174 = vst.msk [vmem:[#allocation2 + $0x248] sm:$0xff] %vm6100, %v6095
        %6175 = vst.msk [vmem:[#allocation2 + $0x250] sm:$0xff] %vm6100, %v6096
        %6176 = vst.msk [vmem:[#allocation2 + $0x258] sm:$0xff] %vm6100, %v6097
        %6177 = vst.msk [vmem:[#allocation2 + $0x260] sm:$0xff] %vm6100, %v6098
        %6178 = vst.msk [vmem:[#allocation2 + $0x268] sm:$0xff] %vm6100, %v6099
        %v6179 = vld [vmem:[#allocation2] ss:$2 sm:$0xff]
        %s6180 = scalar_lea.vmem [#allocation2], 16
        %v6181 = vld [vmem:[%s6180] ss:$2 sm:$0xff]
        %s6182 = scalar_lea.vmem [#allocation2], 32
        %v6183 = vld [vmem:[%s6182] ss:$2 sm:$0xff]
        %s6184 = scalar_lea.vmem [#allocation2], 48
        %v6185 = vld [vmem:[%s6184] ss:$2 sm:$0xff]
        %s6186 = scalar_lea.vmem [#allocation2], 64
        %v6187 = vld [vmem:[%s6186] ss:$2 sm:$0xff]
        %s6188 = scalar_lea.vmem [#allocation2], 80
        %v6189 = vld [vmem:[%s6188] ss:$2 sm:$0xff]
        %s6190 = scalar_lea.vmem [#allocation2], 96
        %v6191 = vld [vmem:[%s6190] ss:$2 sm:$0xff]
        %s6192 = scalar_lea.vmem [#allocation2], 112
        %v6193 = vld [vmem:[%s6192] ss:$2 sm:$0xff]
        %s6194 = scalar_lea.vmem [#allocation2], 128
        %v6195 = vld [vmem:[%s6194] ss:$2 sm:$0xff]
        %s6196 = scalar_lea.vmem [#allocation2], 144
        %v6197 = vld [vmem:[%s6196] ss:$2 sm:$0xff]
        %s6198 = scalar_lea.vmem [#allocation2], 160
        %v6199 = vld [vmem:[%s6198] ss:$2 sm:$0xff]
        %s6200 = scalar_lea.vmem [#allocation2], 176
        %v6201 = vld [vmem:[%s6200] ss:$2 sm:$0xff]
        %s6202 = scalar_lea.vmem [#allocation2], 192
        %v6203 = vld [vmem:[%s6202] ss:$2 sm:$0xff]
        %s6204 = scalar_lea.vmem [#allocation2], 208
        %v6205 = vld [vmem:[%s6204] ss:$2 sm:$0xff]
        %s6206 = scalar_lea.vmem [#allocation2], 224
        %v6207 = vld [vmem:[%s6206] ss:$2 sm:$0xff]
        %s6208 = scalar_lea.vmem [#allocation2], 240
        %v6209 = vld [vmem:[%s6208] ss:$2 sm:$0xff]
        %s6210 = scalar_lea.vmem [#allocation2], 256
        %v6211 = vld [vmem:[%s6210] ss:$2 sm:$0xff]
        %s6212 = scalar_lea.vmem [#allocation2], 272
        %v6213 = vld [vmem:[%s6212] ss:$2 sm:$0xff]
        %s6214 = scalar_lea.vmem [#allocation2], 288
        %v6215 = vld [vmem:[%s6214] ss:$2 sm:$0xff]
        %s6216 = scalar_lea.vmem [#allocation2], 304
        %v6217 = vld [vmem:[%s6216] ss:$2 sm:$0xff]
        %s6218 = scalar_lea.vmem [#allocation2], 320
        %v6219 = vld [vmem:[%s6218] ss:$2 sm:$0xff]
        %s6220 = scalar_lea.vmem [#allocation2], 336
        %v6221 = vld [vmem:[%s6220] ss:$2 sm:$0xff]
        %s6222 = scalar_lea.vmem [#allocation2], 352
        %v6223 = vld [vmem:[%s6222] ss:$2 sm:$0xff]
        %s6224 = scalar_lea.vmem [#allocation2], 368
        %v6225 = vld [vmem:[%s6224] ss:$2 sm:$0xff]
        %s6226 = scalar_lea.vmem [#allocation2], 384
        %v6227 = vld [vmem:[%s6226] ss:$2 sm:$0xff]
        %s6228 = scalar_lea.vmem [#allocation2], 400
        %v6229 = vld [vmem:[%s6228] ss:$2 sm:$0xff]
        %s6230 = scalar_lea.vmem [#allocation2], 416
        %v6231 = vld [vmem:[%s6230] ss:$2 sm:$0xff]
        %s6232 = scalar_lea.vmem [#allocation2], 432
        %v6233 = vld [vmem:[%s6232] ss:$2 sm:$0xff]
        %s6234 = scalar_lea.vmem [#allocation2], 448
        %v6235 = vld [vmem:[%s6234] ss:$2 sm:$0xff]
        %s6236 = scalar_lea.vmem [#allocation2], 464
        %v6237 = vld [vmem:[%s6236] ss:$2 sm:$0xff]
        %s6238 = scalar_lea.vmem [#allocation2], 480
        %v6239 = vld [vmem:[%s6238] ss:$2 sm:$0xff]
        %s6240 = scalar_lea.vmem [#allocation2], 496
        %v6241 = vld [vmem:[%s6240] ss:$2 sm:$0xff]
        %s6242 = scalar_lea.vmem [#allocation2], 512
        %v6243 = vld [vmem:[%s6242] ss:$2 sm:$0xff]
        %s6244 = scalar_lea.vmem [#allocation2], 528
        %v6245 = vld [vmem:[%s6244] ss:$2 sm:$0xff]
        %s6246 = scalar_lea.vmem [#allocation2], 544
        %v6247 = vld [vmem:[%s6246] ss:$2 sm:$0xff]
        %s6248 = scalar_lea.vmem [#allocation2], 560
        %v6249 = vld [vmem:[%s6248] ss:$2 sm:$0xff]
        %s6250 = scalar_lea.vmem [#allocation2], 576
        %v6251 = vld [vmem:[%s6250] ss:$2 sm:$0xff]
        %s6252 = scalar_lea.vmem [#allocation2], 592
        %v6253 = vld [vmem:[%s6252] ss:$2 sm:$0xff]
        %s6254 = scalar_lea.vmem [#allocation2], 608
        %v6255 = vld [vmem:[%s6254] ss:$2 sm:$0xff]
        %s6256 = scalar_lea.vmem [#allocation2], 1
        %v6257 = vld [vmem:[%s6256] ss:$2 sm:$0xff]
        %s6258 = scalar_lea.vmem [#allocation2], 17
        %v6259 = vld [vmem:[%s6258] ss:$2 sm:$0xff]
        %s6260 = scalar_lea.vmem [#allocation2], 33
        %v6261 = vld [vmem:[%s6260] ss:$2 sm:$0xff]
        %s6262 = scalar_lea.vmem [#allocation2], 49
        %v6263 = vld [vmem:[%s6262] ss:$2 sm:$0xff]
        %s6264 = scalar_lea.vmem [#allocation2], 65
        %v6265 = vld [vmem:[%s6264] ss:$2 sm:$0xff]
        %s6266 = scalar_lea.vmem [#allocation2], 81
        %v6267 = vld [vmem:[%s6266] ss:$2 sm:$0xff]
        %s6268 = scalar_lea.vmem [#allocation2], 97
        %v6269 = vld [vmem:[%s6268] ss:$2 sm:$0xff]
        %s6270 = scalar_lea.vmem [#allocation2], 113
        %v6271 = vld [vmem:[%s6270] ss:$2 sm:$0xff]
        %s6272 = scalar_lea.vmem [#allocation2], 129
        %v6273 = vld [vmem:[%s6272] ss:$2 sm:$0xff]
        %s6274 = scalar_lea.vmem [#allocation2], 145
        %v6275 = vld [vmem:[%s6274] ss:$2 sm:$0xff]
        %s6276 = scalar_lea.vmem [#allocation2], 161
        %v6277 = vld [vmem:[%s6276] ss:$2 sm:$0xff]
        %s6278 = scalar_lea.vmem [#allocation2], 177
        %v6279 = vld [vmem:[%s6278] ss:$2 sm:$0xff]
        %s6280 = scalar_lea.vmem [#allocation2], 193
        %v6281 = vld [vmem:[%s6280] ss:$2 sm:$0xff]
        %s6282 = scalar_lea.vmem [#allocation2], 209
        %v6283 = vld [vmem:[%s6282] ss:$2 sm:$0xff]
        %s6284 = scalar_lea.vmem [#allocation2], 225
        %v6285 = vld [vmem:[%s6284] ss:$2 sm:$0xff]
        %s6286 = scalar_lea.vmem [#allocation2], 241
        %v6287 = vld [vmem:[%s6286] ss:$2 sm:$0xff]
        %s6288 = scalar_lea.vmem [#allocation2], 257
        %v6289 = vld [vmem:[%s6288] ss:$2 sm:$0xff]
        %s6290 = scalar_lea.vmem [#allocation2], 273
        %v6291 = vld [vmem:[%s6290] ss:$2 sm:$0xff]
        %s6292 = scalar_lea.vmem [#allocation2], 289
        %v6293 = vld [vmem:[%s6292] ss:$2 sm:$0xff]
        %s6294 = scalar_lea.vmem [#allocation2], 305
        %v6295 = vld [vmem:[%s6294] ss:$2 sm:$0xff]
        %s6296 = scalar_lea.vmem [#allocation2], 321
        %v6297 = vld [vmem:[%s6296] ss:$2 sm:$0xff]
        %s6298 = scalar_lea.vmem [#allocation2], 337
        %v6299 = vld [vmem:[%s6298] ss:$2 sm:$0xff]
        %s6300 = scalar_lea.vmem [#allocation2], 353
        %v6301 = vld [vmem:[%s6300] ss:$2 sm:$0xff]
        %s6302 = scalar_lea.vmem [#allocation2], 369
        %v6303 = vld [vmem:[%s6302] ss:$2 sm:$0xff]
        %s6304 = scalar_lea.vmem [#allocation2], 385
        %v6305 = vld [vmem:[%s6304] ss:$2 sm:$0xff]
        %s6306 = scalar_lea.vmem [#allocation2], 401
        %v6307 = vld [vmem:[%s6306] ss:$2 sm:$0xff]
        %s6308 = scalar_lea.vmem [#allocation2], 417
        %v6309 = vld [vmem:[%s6308] ss:$2 sm:$0xff]
        %s6310 = scalar_lea.vmem [#allocation2], 433
        %v6311 = vld [vmem:[%s6310] ss:$2 sm:$0xff]
        %s6312 = scalar_lea.vmem [#allocation2], 449
        %v6313 = vld [vmem:[%s6312] ss:$2 sm:$0xff]
        %s6314 = scalar_lea.vmem [#allocation2], 465
        %v6315 = vld [vmem:[%s6314] ss:$2 sm:$0xff]
        %s6316 = scalar_lea.vmem [#allocation2], 481
        %v6317 = vld [vmem:[%s6316] ss:$2 sm:$0xff]
        %s6318 = scalar_lea.vmem [#allocation2], 497
        %v6319 = vld [vmem:[%s6318] ss:$2 sm:$0xff]
        %s6320 = scalar_lea.vmem [#allocation2], 513
        %v6321 = vld [vmem:[%s6320] ss:$2 sm:$0xff]
        %s6322 = scalar_lea.vmem [#allocation2], 529
        %v6323 = vld [vmem:[%s6322] ss:$2 sm:$0xff]
        %s6324 = scalar_lea.vmem [#allocation2], 545
        %v6325 = vld [vmem:[%s6324] ss:$2 sm:$0xff]
        %s6326 = scalar_lea.vmem [#allocation2], 561
        %v6327 = vld [vmem:[%s6326] ss:$2 sm:$0xff]
        %s6328 = scalar_lea.vmem [#allocation2], 577
        %v6329 = vld [vmem:[%s6328] ss:$2 sm:$0xff]
        %s6330 = scalar_lea.vmem [#allocation2], 593
        %v6331 = vld [vmem:[%s6330] ss:$2 sm:$0xff]
        %s6332 = scalar_lea.vmem [#allocation2], 609
        %v6333 = vld [vmem:[%s6332] ss:$2 sm:$0xff]
        %v6334 = vmax.f32 %v6179, %v6257
        %v6335 = vmax.f32 %v6181, %v6259
        %v6336 = vmax.f32 %v6183, %v6261
        %v6337 = vmax.f32 %v6185, %v6263
        %v6338 = vmax.f32 %v6187, %v6265
        %v6339 = vmax.f32 %v6189, %v6267
        %v6340 = vmax.f32 %v6191, %v6269
        %v6341 = vmax.f32 %v6193, %v6271
        %v6342 = vmax.f32 %v6195, %v6273
        %v6343 = vmax.f32 %v6197, %v6275
        %v6344 = vmax.f32 %v6199, %v6277
        %v6345 = vmax.f32 %v6201, %v6279
        %v6346 = vmax.f32 %v6203, %v6281
        %v6347 = vmax.f32 %v6205, %v6283
        %v6348 = vmax.f32 %v6207, %v6285
        %v6349 = vmax.f32 %v6209, %v6287
        %v6350 = vmax.f32 %v6211, %v6289
        %v6351 = vmax.f32 %v6213, %v6291
        %v6352 = vmax.f32 %v6215, %v6293
        %v6353 = vmax.f32 %v6217, %v6295
        %v6354 = vmax.f32 %v6219, %v6297
        %v6355 = vmax.f32 %v6221, %v6299
        %v6356 = vmax.f32 %v6223, %v6301
        %v6357 = vmax.f32 %v6225, %v6303
        %v6358 = vmax.f32 %v6227, %v6305
        %v6359 = vmax.f32 %v6229, %v6307
        %v6360 = vmax.f32 %v6231, %v6309
        %v6361 = vmax.f32 %v6233, %v6311
        %v6362 = vmax.f32 %v6235, %v6313
        %v6363 = vmax.f32 %v6237, %v6315
        %v6364 = vmax.f32 %v6239, %v6317
        %v6365 = vmax.f32 %v6241, %v6319
        %v6366 = vmax.f32 %v6243, %v6321
        %v6367 = vmax.f32 %v6245, %v6323
        %v6368 = vmax.f32 %v6247, %v6325
        %v6369 = vmax.f32 %v6249, %v6327
        %v6370 = vmax.f32 %v6251, %v6329
        %v6371 = vmax.f32 %v6253, %v6331
        %v6372 = vmax.f32 %v6255, %v6333
        %vm6376 = vcmask 1042432
        %v6377 = vrot.slane %v6335, 5
        %v6378 = vrot.slane %v6336, 5
        %v6379 = vsel %vm6376, %v6377, %v6378
        %v6380 = vrot.slane %v6337, 5
        %v6381 = vsel %vm6376, %v6378, %v6380
        %v6384 = vmax.f32 %v6334, %v6379
        %v6385 = vmax.f32 %v6335, %v6381
        %v6389 = vrot.slane %v6338, 5
        %v6390 = vrot.slane %v6339, 5
        %v6391 = vsel %vm6376, %v6389, %v6390
        %v6392 = vrot.slane %v6340, 5
        %v6393 = vsel %vm6376, %v6390, %v6392
        %v6396 = vmax.f32 %v6337, %v6391
        %v6397 = vmax.f32 %v6338, %v6393
        %v6400 = vrot.slane %v6342, 5
        %v6401 = vrot.slane %v6343, 5
        %v6402 = vsel %vm6376, %v6400, %v6401
        %v6405 = vmax.f32 %v6340, %v6400
        %v6406 = vmax.f32 %v6341, %v6402
        %v6409 = vrot.slane %v6345, 5
        %v6410 = vrot.slane %v6346, 5
        %v6411 = vsel %vm6376, %v6409, %v6410
        %v6415 = vmax.f32 %v6343, %v6409
        %v6416 = vmax.f32 %v6344, %v6411
        %v6417 = vmax.f32 %v6345, %v6410
        %v6421 = vrot.slane %v6348, 5
        %v6422 = vrot.slane %v6349, 5
        %v6423 = vsel %vm6376, %v6421, %v6422
        %v6424 = vrot.slane %v6350, 5
        %v6425 = vsel %vm6376, %v6422, %v6424
        %v6428 = vmax.f32 %v6347, %v6423
        %v6429 = vmax.f32 %v6348, %v6425
        %v6433 = vrot.slane %v6351, 5
        %v6434 = vrot.slane %v6352, 5
        %v6435 = vsel %vm6376, %v6433, %v6434
        %v6436 = vrot.slane %v6353, 5
        %v6437 = vsel %vm6376, %v6434, %v6436
        %v6440 = vmax.f32 %v6350, %v6435
        %v6441 = vmax.f32 %v6351, %v6437
        %v6444 = vrot.slane %v6355, 5
        %v6445 = vrot.slane %v6356, 5
        %v6446 = vsel %vm6376, %v6444, %v6445
        %v6449 = vmax.f32 %v6353, %v6444
        %v6450 = vmax.f32 %v6354, %v6446
        %v6453 = vrot.slane %v6358, 5
        %v6454 = vrot.slane %v6359, 5
        %v6455 = vsel %vm6376, %v6453, %v6454
        %v6459 = vmax.f32 %v6356, %v6453
        %v6460 = vmax.f32 %v6357, %v6455
        %v6461 = vmax.f32 %v6358, %v6454
        %v6465 = vrot.slane %v6361, 5
        %v6466 = vrot.slane %v6362, 5
        %v6467 = vsel %vm6376, %v6465, %v6466
        %v6468 = vrot.slane %v6363, 5
        %v6469 = vsel %vm6376, %v6466, %v6468
        %v6472 = vmax.f32 %v6360, %v6467
        %v6473 = vmax.f32 %v6361, %v6469
        %v6477 = vrot.slane %v6364, 5
        %v6478 = vrot.slane %v6365, 5
        %v6479 = vsel %vm6376, %v6477, %v6478
        %v6480 = vrot.slane %v6366, 5
        %v6481 = vsel %vm6376, %v6478, %v6480
        %v6484 = vmax.f32 %v6363, %v6479
        %v6485 = vmax.f32 %v6364, %v6481
        %v6488 = vrot.slane %v6368, 5
        %v6489 = vrot.slane %v6369, 5
        %v6490 = vsel %vm6376, %v6488, %v6489
        %v6493 = vmax.f32 %v6366, %v6488
        %v6494 = vmax.f32 %v6367, %v6490
        %v6497 = vrot.slane %v6371, 5
        %v6498 = vrot.slane %v6372, 5
        %v6499 = vsel %vm6376, %v6497, %v6498
        %v6503 = vmax.f32 %v6369, %v6497
        %v6504 = vmax.f32 %v6370, %v6499
        %v6505 = vmax.f32 %v6371, %v6498
        %vm6508 = vcmask 1041408
        %v6509 = vrot.slane %v6396, 6
        %v6510 = vrot.slane %v6397, 6
        %v6511 = vsel %vm6508, %v6509, %v6510
        %v6516 = vrot.slane %v6405, 4
        %v6517 = vrot.slane %v6406, 4
        %v6518 = vsel %vm731, %v6516, %v6517
        %vm6524 = vcmask 1045504
        %v6525 = vrot.slane %v6415, 2
        %v6526 = vrot.slane %v6416, 2
        %v6527 = vsel %vm6524, %v6525, %v6526
        %v6528 = vrot.slane %v6417, 2
        %v6529 = vsel %vm6524, %v6526, %v6528
        %v6534 = vrot.slane %v6440, 6
        %v6535 = vrot.slane %v6441, 6
        %v6536 = vsel %vm6508, %v6534, %v6535
        %v6541 = vrot.slane %v6449, 4
        %v6542 = vrot.slane %v6450, 4
        %v6543 = vsel %vm731, %v6541, %v6542
        %v6549 = vrot.slane %v6459, 2
        %v6550 = vrot.slane %v6460, 2
        %v6551 = vsel %vm6524, %v6549, %v6550
        %v6552 = vrot.slane %v6461, 2
        %v6553 = vsel %vm6524, %v6550, %v6552
        %v6558 = vrot.slane %v6484, 6
        %v6559 = vrot.slane %v6485, 6
        %v6560 = vsel %vm6508, %v6558, %v6559
        %v6565 = vrot.slane %v6493, 4
        %v6566 = vrot.slane %v6494, 4
        %v6567 = vsel %vm731, %v6565, %v6566
        %v6573 = vrot.slane %v6503, 2
        %v6574 = vrot.slane %v6504, 2
        %v6575 = vsel %vm6524, %v6573, %v6574
        %v6576 = vrot.slane %v6505, 2
        %v6577 = vsel %vm6524, %v6574, %v6576
        %v6580 = vsel %vm731, %v6385, %v6509
        %v6581 = vsel %vm731, %v6517, %v6527
        %v6582 = vsel %vm731, %v6429, %v6534
        %v6583 = vsel %vm731, %v6542, %v6551
        %v6584 = vsel %vm731, %v6473, %v6558
        %v6585 = vsel %vm731, %v6566, %v6575
        %v6586 = vpack.c.bf16 %v6384, %v6384
        %v6587 = vpack.c.bf16 %v6580, %v6580
        %v6588 = vpack.c.bf16 %v6511, %v6511
        %v6589 = vpack.c.bf16 %v6518, %v6518
        %v6590 = vpack.c.bf16 %v6581, %v6581
        %v6591 = vpack.c.bf16 %v6529, %v6529
        %v6592 = vpack.c.bf16 %v6428, %v6428
        %v6593 = vpack.c.bf16 %v6582, %v6582
        %v6594 = vpack.c.bf16 %v6536, %v6536
        %v6595 = vpack.c.bf16 %v6543, %v6543
        %v6596 = vpack.c.bf16 %v6583, %v6583
        %v6597 = vpack.c.bf16 %v6553, %v6553
        %v6598 = vpack.c.bf16 %v6472, %v6472
        %v6599 = vpack.c.bf16 %v6584, %v6584
        %v6600 = vpack.c.bf16 %v6560, %v6560
        %v6601 = vpack.c.bf16 %v6567, %v6567
        %v6602 = vpack.c.bf16 %v6585, %v6585
        %v6603 = vpack.c.bf16 %v6577, %v6577
        %vm6604 = vcmask 519168
        %6605 = vst.msk [vmem:[%s289] sm:$0xf] %vm6604, %v6586
        %6606 = vst.msk [vmem:[%s289 + $0x4] sm:$0xf] %vm6604, %v6587
        %6607 = vst.msk [vmem:[%s289 + $0x8] sm:$0xf] %vm6604, %v6588
        %6608 = vst.msk [vmem:[%s289 + $0xc] sm:$0xf] %vm6604, %v6589
        %6609 = vst.msk [vmem:[%s289 + $0x10] sm:$0xf] %vm6604, %v6590
        %6610 = vst.msk [vmem:[%s289 + $0x14] sm:$0xf] %vm6604, %v6591
        %6611 = vst.msk [vmem:[%s289 + $0x18] sm:$0xf] %vm6604, %v6592
        %6612 = vst.msk [vmem:[%s289 + $0x1c] sm:$0xf] %vm6604, %v6593
        %6613 = vst.msk [vmem:[%s289 + $0x20] sm:$0xf] %vm6604, %v6594
        %6614 = vst.msk [vmem:[%s289 + $0x24] sm:$0xf] %vm6604, %v6595
        %6615 = vst.msk [vmem:[%s289 + $0x28] sm:$0xf] %vm6604, %v6596
        %6616 = vst.msk [vmem:[%s289 + $0x2c] sm:$0xf] %vm6604, %v6597
        %6617 = vst.msk [vmem:[%s289 + $0x30] sm:$0xf] %vm6604, %v6598
        %6618 = vst.msk [vmem:[%s289 + $0x34] sm:$0xf] %vm6604, %v6599
        %6619 = vst.msk [vmem:[%s289 + $0x38] sm:$0xf] %vm6604, %v6600
        %6620 = vst.msk [vmem:[%s289 + $0x3c] sm:$0xf] %vm6604, %v6601
        %6621 = vst.msk [vmem:[%s289 + $0x40] sm:$0xf] %vm6604, %v6602
        %6622 = vst.msk [vmem:[%s289 + $0x44] sm:$0xf] %vm6604, %v6603
        %s6623 = smul.u32 18, %s19
        %p6624 = scmp.lt.s32.totalorder %s6623, 35
        %s6625 = scalar_select %p6624, %s6623, 35
        %s6626 = smul.addr %s6625, 4
        %s6627 = scalar_lea.vmem %s5, %s6626
        // Predicated region
        $region57: #{trainer_net_forward.2} parent=39 // pred_check
          %p6628 = pneg %p147
        $region58: #{trainer_net_forward.2} parent=39 // pred_check_branch
          %6630 = sbr.rel (%p6628) target = $region60
        $region59: #{trainer_net_forward.2} parent=39 // pred_region
          %s6631 = smul.u32 18, %s19
        $region60: #{trainer_net_forward.2} parent=39 // pred_fallthru
          _
      $region40: #{trainer_net_forward.2} parent=5 // pred_fallthru
        _
      %p6632 = scmp.le.s32.totalorder 2, %s14
      // Predicated region
      $region61: #{trainer_net_forward.2} parent=5 // pred_check
        %p6633 = pneg %p6632
      $region62: #{trainer_net_forward.2} parent=5 // pred_check_branch
        %6635 = sbr.rel (%p6633) target = $region64
      $region63: #{trainer_net_forward.2} parent=5 // pred_region
        %s6636 = ssub.s32 %s14, 2
        // Predicated region
        $region65: #{trainer_net_forward.2} parent=63 // pred_check
          %p6637 = pneg %p153
        $region66: #{trainer_net_forward.2} parent=63 // pred_check_branch
          %6639 = sbr.rel (%p6637) target = $region68
        $region67: #{trainer_net_forward.2} parent=63 // pred_region
          %s6640 = smul.u32 18, %s20
          %p6641 = scmp.lt.s32.totalorder %s6640, 35
          %s6642 = scalar_select %p6641, %s6640, 35
          %s6643 = smul.addr %s6642, 4
          %s6644 = scalar_lea.vmem %s5, %s6643
        $region68: #{trainer_net_forward.2} parent=63 // pred_fallthru
          _
      $region64: #{trainer_net_forward.2} parent=5 // pred_fallthru
        _
    $region6: #{trainer_net_forward.2} parent=1 // loop_footer
      %s18 = sadd.s32 1, %s14
    $region7: #{trainer_net_forward.2} parent=1 // loop_footer_branch
      %13 = sbr.rel target = $region3
    $region8: #{trainer_net_forward.2} parent=1 // loop_exit
      _
    %6645 = vsyncpa [#allocation4], 1
    %s6646 = scalar_lea.sflag [#allocation4], 1
    %6647 = vsyncpa %s6646, 1
    %6648 = vsyncpa [#allocation6], 1
    %6649 = vsyncpa [#allocation9], 1

</llo_original>
